<compile_context>
chip_gen: v5e
topology: v5e:2x2
jax: 0.10.0
libtpu: 0.0.40
codegen_flags: <defaults>
</compile_context>

<pallas_src>
import functools

import jax
import jax.numpy as jnp
from jax.experimental import pallas as pl
from jax.experimental.pallas import tpu as pltpu


def _round_up(a, b):
    return ((a + b - 1) // b) * b


# ----------------------------- conv-stack kernel -----------------------------
def _fcn_body_kernel(x_ref, w1_ref, b1_ref, w2_ref, b2_ref, w3_ref, b3_ref,
                     pooled_ref, a1_ref, a2_ref, *, w_valid, wide_k):
    H1, Nt, Wp, K1 = x_ref.shape
    C1 = w1_ref.shape[1]
    C2 = w2_ref.shape[1]
    C3 = w3_ref.shape[1]
    K2 = w2_ref.shape[0] // C1            # 5
    K3 = w3_ref.shape[0] // C2            # 3
    p2, p3 = K2 // 2, K3 // 2             # 2, 1
    R = H1 * Nt * Wp

    # ---- conv1 (8x1, Cin=1) + folded bn1 + relu: one MXU matmul over the
    #      pre-im2col'd bf16 input (rows ordered (h, n, w), contraction = K1) ----
    lhs1 = x_ref[...].reshape(R, K1)                        # already bf16
    acc1 = jnp.dot(lhs1, w1_ref[...], preferred_element_type=jnp.float32)
    a1 = jnp.maximum(acc1 + b1_ref[...], 0.0)

    # Stage into the H-padded bf16 scratch; zero ONLY the padding rows, every grid
    # step (scratch persists across steps and is per-core under "parallel").
    zpad1 = jnp.zeros((p2, Nt, Wp, C1), jnp.bfloat16)
    a1_ref[0:p2] = zpad1
    a1_ref[p2 + H1:] = zpad1
    a1_ref[p2:p2 + H1] = a1.astype(jnp.bfloat16).reshape(H1, Nt, Wp, C1)

    def contract(a_ref, w_ref, K, Cin):
        """H-conv as matmul over the H-shifted bf16 scratch slices.

        wide_k=True : lane-axis im2col -> single wide-K matmul (256-deep MXU).
        wide_k=False: K accumulating depth-Cin matmuls (128-deep MXU, v5e/v4),
                      skipping the pure-staging concat on the 1-vst-slot chip.
        """
        if wide_k:
            lhs = jnp.concatenate(
                [a_ref[dk:dk + H1].reshape(R, Cin) for dk in range(K)], axis=1)
            return jnp.dot(lhs, w_ref[...], preferred_element_type=jnp.float32)
        acc = jnp.dot(a_ref[0:H1].reshape(R, Cin), w_ref[0:Cin, :],
                      preferred_element_type=jnp.float32)
        for dk in range(1, K):
            acc += jnp.dot(a_ref[dk:dk + H1].reshape(R, Cin),
                           w_ref[dk * Cin:(dk + 1) * Cin, :],
                           preferred_element_type=jnp.float32)
        return acc

    # ---- conv2 (5x1) + folded bn2 + relu ----
    a2 = jnp.maximum(contract(a1_ref, w2_ref, K2, C1) + b2_ref[...], 0.0)
    zpad2 = jnp.zeros((p3, Nt, Wp, C2), jnp.bfloat16)
    a2_ref[0:p3] = zpad2
    a2_ref[p3 + H1:] = zpad2
    a2_ref[p3:p3 + H1] = a2.astype(jnp.bfloat16).reshape(H1, Nt, Wp, C2)

    # ---- conv3 (3x1) + folded bn3 + relu ----
    a3 = jnp.maximum(contract(a2_ref, w3_ref, K3, C2) + b3_ref[...], 0.0)
    a3 = a3.reshape(H1, Nt, Wp, C3)

    # ---- avg_pool2d(4) followed by mean over both pooled dims
    #      == mean over the cropped region [0:4*(H1//4), 0:4*(w_valid//4)] ----
    Hc = 4 * (H1 // 4)
    Wc = 4 * (w_valid // 4)
    region = a3[:Hc, :, :Wc, :]                      # (Hc, Nt, Wc, C3)
    s = jnp.sum(jnp.sum(region, axis=0), axis=1)     # (Nt, C3)
    pooled_ref[...] = (s * (1.0 / float(Hc * Wc))).reshape(pooled_ref.shape)


# --------------------- fc4 + log_softmax (whole batch) -----------------------
def _head_kernel(p_ref, w4_ref, b4_ref, o_ref):
    # Padded class columns carry bias -1e30 -> exp() is exactly 0, lse stays exact.
    logits = jnp.dot(p_ref[...].astype(jnp.bfloat16), w4_ref[...],
                     preferred_element_type=jnp.float32) + b4_ref[...]
    z = logits - jnp.max(logits, axis=1, keepdims=True)
    lse = jnp.log(jnp.sum(jnp.exp(z), axis=1, keepdims=True))
    o_ref[...] = z - lse


# --------------------------------- wrapper -----------------------------------
def fcn_forward_pallas(x, kp, *, n_classes, n_tile=None, wide_k=None):
    # x: (N, n_in, n_features) float32
    N, n_in, w_valid = x.shape
    H1 = n_in - 1                              # conv1: H + 2*3 - 8 + 1
    K1, C1 = kp["w1"].shape
    C2 = kp["w2"].shape[1]
    C3 = kp["w3"].shape[1]
    K2 = kp["w2"].shape[0] // C1
    K3 = kp["w3"].shape[0] // C2
    Cpad = kp["w4"].shape[1]

    if H1 < 4 or w_valid < 4:
        raise ValueError(
            f"avg_pool2d(4) degenerates for conv-H={H1}, n_features={w_valid}")

    # n_features padded to a multiple of 8 (sublane aligned); padded columns are
    # cropped out before pooling.
    Wp = _round_up(w_valid, 8)

    # ---- device-dependent knobs ------------------------------------------------
    try:
        kind = jax.devices()[0].device_kind.lower()
    except Exception:
        kind = ""
    if wide_k is None:
        # 256-deep MXU (v6e/v7x) benefits from one wide-K matmul; 128-deep MXU
        # (v5e/v4) executes it as K passes anyway, so skip the staging concat.
        wide_k = not any(t in kind for t in ("v5", "v4"))
    # v7x has 64 MiB VMEM per TensorCore; v5e/v6e have 128 MiB.
    vmem_cap = (48 << 20) if "v7" in kind else (100 << 20)

    # Rough per-grid-step VMEM estimate (scratch + matmul temps + dbl-buffered
    # input and weights), used to size the batch tile and vmem_limit_bytes.
    per_row = (C1 * 4              # conv1 f32 accumulator
               + C1 * 2 * 2        # a1 bf16 scratch (sublane-pad factor)
               + K2 * C1 * 2       # conv2 im2col / slice reads (bf16)
               + C2 * 4            # conv2 f32 accumulator
               + C2 * 2 * 2        # a2 bf16 scratch
               + K3 * C2 * 2       # conv3 im2col (bf16)
               + C3 * 4)           # conv3 f32 accumulator
    x_slab = _round_up(Wp, 16) * 128 * 2          # padded bf16 tile per (h, n)
    weight_bytes = 4 * (kp["w1"].size + kp["w2"].size + kp["w3"].size)

    def est_vmem(nt):
        return int(1.25 * (H1 * nt * Wp * per_row + 2 * H1 * nt * x_slab
                           + weight_bytes)) + (2 << 20)

    # ---- batch tile: as large as the VMEM budget allows (amortizes the ~0.35us
    #      per-step overhead, fills the MXU); multiple of 8 for sublane-full stores.
    if n_tile is None:
        n_tile = _round_up(N, 8) if N <= 32 else 32
    n_tile = max(8, _round_up(int(n_tile), 8))
    while n_tile > 8 and est_vmem(n_tile) > vmem_cap:
        n_tile -= 8
    Np = _round_up(N, n_tile)
    num_tiles = Np // n_tile
    if num_tiles > 1 and n_tile % 16 != 0:
        n_tile = _round_up(n_tile, 16)            # bf16-friendly tile when blocked
        Np = _round_up(N, n_tile)
        num_tiles = Np // n_tile
    if num_tiles == 1:
        n_tile = Np
    vmem_limit = max(32 << 20, min(est_vmem(n_tile), vmem_cap))

    # ---- conv1 H-padding (+3 each side, as in the module) + im2col along H,
    #      pre-cast to bf16 in the wrapper (halves HBM bytes, no in-kernel cast) --
    xw = jnp.pad(x, ((0, Np - N), (0, 0), (0, Wp - w_valid)))
    xh = jnp.transpose(jnp.pad(xw, ((0, 0), (3, 3), (0, 0))), (1, 0, 2))
    xcol = jnp.stack([xh[dk:dk + H1] for dk in range(K1)], axis=-1)  # (H1,Np,Wp,K1)
    xcol = xcol.astype(jnp.bfloat16)

    kernel = functools.partial(_fcn_body_kernel, w_valid=w_valid, wide_k=wide_k)

    def const_spec(shape):
        # Constant index map -> block stays VMEM-resident across grid steps.
        return pl.BlockSpec(shape, lambda i: (0,) * len(shape))

    pooled = pl.pallas_call(
        kernel,
        out_shape=jax.ShapeDtypeStruct((num_tiles, n_tile, C3), jnp.float32),
        grid=(num_tiles,),
        in_specs=[
            pl.BlockSpec((H1, n_tile, Wp, K1), lambda i: (0, i, 0, 0)),  # x tile
            const_spec(kp["w1"].shape), const_spec(kp["b1"].shape),
            const_spec(kp["w2"].shape), const_spec(kp["b2"].shape),
            const_spec(kp["w3"].shape), const_spec(kp["b3"].shape),
        ],
        out_specs=pl.BlockSpec((1, n_tile, C3), lambda i: (i, 0, 0)),
        scratch_shapes=[
            pltpu.VMEM((H1 + K2 - 1, n_tile, Wp, C1), jnp.bfloat16),  # conv2 input
            pltpu.VMEM((H1 + K3 - 1, n_tile, Wp, C2), jnp.bfloat16),  # conv3 input
        ],
        compiler_params=pltpu.CompilerParams(
            dimension_semantics=("parallel",),   # shard batch tiles across TCs
            vmem_limit_bytes=int(vmem_limit)),
    )(xcol, kp["w1"], kp["b1"], kp["w2"], kp["b2"], kp["w3"], kp["b3"])

    # ---- fc4 + log_softmax once over the whole (padded) batch -------------------
    pooled2d = pooled.reshape(Np, C3)
    logp = pl.pallas_call(
        _head_kernel,
        out_shape=jax.ShapeDtypeStruct((Np, Cpad), jnp.float32),
        grid=(1,),
        in_specs=[pl.BlockSpec((Np, C3), lambda i: (0, 0)),
                  pl.BlockSpec(kp["w4"].shape, lambda i: (0, 0)),
                  pl.BlockSpec(kp["b4"].shape, lambda i: (0, 0))],
        out_specs=pl.BlockSpec((Np, Cpad), lambda i: (0, 0)),
    )(pooled2d, kp["w4"], kp["b4"])

    return logp[:N, :n_classes]


# ----------------- deterministic parameter setup + folding -------------------
def init_raw_params(key, n_classes):
    ks = iter(jax.random.split(key, 32))

    def nrm(shape, scale):
        return scale * jax.random.normal(next(ks), shape, jnp.float32)

    def conv_bn(cin, cout, kh):
        fan = float(cin * kh)
        return dict(
            w=nrm((cout, cin, kh, 1), 1.0 / (fan ** 0.5)),
            b=nrm((cout,), 0.05),
            gamma=1.0 + nrm((cout,), 0.1),
            beta=nrm((cout,), 0.1),
            mean=nrm((cout,), 0.1),
            var=jax.random.uniform(next(ks), (cout,), jnp.float32, 0.5, 1.5),
        )

    return dict(
        c1=conv_bn(1, 128, 8),
        c2=conv_bn(128, 256, 5),
        c3=conv_bn(256, 128, 3),
        fc_w=nrm((n_classes, 128), 1.0 / (128.0 ** 0.5)),
        fc_b=nrm((n_classes,), 0.05),
    )


def fold_params(raw):
    """Fold eval-mode BN into conv weights (scale) + per-channel bias; pre-cast MXU
    weights to bf16; pad fc to 128 lane-dense classes (pad bias = -1e30)."""
    eps = 1e-5

    def fold(p):
        scale = p["gamma"] / jnp.sqrt(p["var"] + eps)              # (cout,)
        bias = (p["b"] - p["mean"]) * scale + p["beta"]            # (cout,)
        wk = jnp.transpose(p["w"][:, :, :, 0], (2, 1, 0))          # (kh, cin, cout)
        wk = wk * scale[None, None, :]                             # fold BN scale
        kh, cin, cout = wk.shape
        return wk.reshape(kh * cin, cout).astype(jnp.bfloat16), bias.reshape(1, -1)

    w1, b1 = fold(raw["c1"])
    w2, b2 = fold(raw["c2"])
    w3, b3 = fold(raw["c3"])

    n_classes = raw["fc_w"].shape[0]
    cpad = 128 * ((n_classes + 127) // 128)
    w4 = jnp.zeros((128, cpad), jnp.float32).at[:, :n_classes].set(raw["fc_w"].T)
    b4 = jnp.full((1, cpad), -1e30, jnp.float32).at[0, :n_classes].set(raw["fc_b"])
    return dict(w1=w1, b1=b1, w2=w2, b2=b2, w3=w3, b3=b3,
                w4=w4.astype(jnp.bfloat16), b4=b4)


# ----------------------------- pure-JAX reference ----------------------------
def ref_forward(x, raw, n_in, n_features):
    eps = 1e-5
    h = x.reshape(-1, 1, n_in, n_features)

    def block(h, p, pad):
        y = jax.lax.conv_general_dilated(
            h, p["w"], (1, 1), [(pad, pad), (0, 0)],
            dimension_numbers=("NCHW", "OIHW", "NCHW"))
        y = y + p["b"].reshape(1, -1, 1, 1)
        y = (y - p["mean"].reshape(1, -1, 1, 1)) / jnp.sqrt(
            p["var"].reshape(1, -1, 1, 1) + eps)
        y = y * p["gamma"].reshape(1, -1, 1, 1) + p["beta"].reshape(1, -1, 1, 1)
        return jax.nn.relu(y)

    h = block(h, raw["c1"], 3)
    h = block(h, raw["c2"], 2)
    h = block(h, raw["c3"], 1)
    Nb, C, Hc, Wc = h.shape
    Hp, Wpool = Hc // 4, Wc // 4
    h = h[:, :, :4 * Hp, :4 * Wpool].reshape(Nb, C, Hp, 4, Wpool, 4).mean(axis=(3, 5))
    h = h.mean(axis=2).mean(axis=2)
    logits = h @ raw["fc_w"].T + raw["fc_b"]
    return jax.nn.log_softmax(logits, axis=1)


if __name__ == "__main__":
    N, n_in, n_features, n_classes = 8, 16, 8, 5

    key = jax.random.PRNGKey(0)
    kx, kparam = jax.random.split(key)
    x = jax.random.normal(kx, (N, n_in, n_features), jnp.float32)

    raw = init_raw_params(kparam, n_classes)
    kp = fold_params(raw)

    fwd = jax.jit(functools.partial(fcn_forward_pallas, n_classes=n_classes))
    out = jax.block_until_ready(fwd(x, kp))

    ref = ref_forward(x, raw, n_in, n_features)
    assert out.shape == (N, n_classes)
    # Tolerance sized for bf16 MXU operands / bf16 activation staging with f32 acc.
    err = float(jnp.max(jnp.abs(out - ref)))
    assert err < 5e-2, f"max abs err {err}"

    print("KERNEL_OK")
</pallas_src>

<mosaic_0001>
module attributes {stable_mosaic.version = 11 : i64} {
  func.func @_fcn_body_kernel(%arg0: i32, %arg1: memref<15x8x8x8xbf16, #tpu.memory_space<vmem>>, %arg2: memref<8x128xbf16, #tpu.memory_space<vmem>>, %arg3: memref<1x128xf32, #tpu.memory_space<vmem>>, %arg4: memref<640x256xbf16, #tpu.memory_space<vmem>>, %arg5: memref<1x256xf32, #tpu.memory_space<vmem>>, %arg6: memref<768x128xbf16, #tpu.memory_space<vmem>>, %arg7: memref<1x128xf32, #tpu.memory_space<vmem>>, %arg8: memref<1x8x128xf32, #tpu.memory_space<vmem>>, %arg9: memref<19x8x8x128xbf16, #tpu.memory_space<vmem>>, %arg10: memref<17x8x8x256xbf16, #tpu.memory_space<vmem>>) attributes {dimension_semantics = [#tpu.dimension_semantics<parallel>], iteration_bounds = array<i64: 1>, scalar_prefetch = 0 : i64, scratch_operands = 2 : i64, tpu.core_type = #tpu.core_type<tc>, window_params = [{transform_indices = @transform_0, window_bounds = array<i64: 15, 8, 8, 8>}, {pipeline_mode = #tpu.pipeline_mode<synchronous>, transform_indices = @transform_1, window_bounds = array<i64: 8, 128>}, {pipeline_mode = #tpu.pipeline_mode<synchronous>, transform_indices = @transform_2, window_bounds = array<i64: 1, 128>}, {pipeline_mode = #tpu.pipeline_mode<synchronous>, transform_indices = @transform_3, window_bounds = array<i64: 640, 256>}, {pipeline_mode = #tpu.pipeline_mode<synchronous>, transform_indices = @transform_4, window_bounds = array<i64: 1, 256>}, {pipeline_mode = #tpu.pipeline_mode<synchronous>, transform_indices = @transform_5, window_bounds = array<i64: 768, 128>}, {pipeline_mode = #tpu.pipeline_mode<synchronous>, transform_indices = @transform_6, window_bounds = array<i64: 1, 128>}, {transform_indices = @transform_7, window_bounds = array<i64: 1, 8, 128>}]} {
    %c0 = arith.constant 0 : index
    %c0_0 = arith.constant 0 : index
    %c0_1 = arith.constant 0 : index
    %c0_2 = arith.constant 0 : index
    %0 = vector.load %arg1[%c0, %c0_0, %c0_1, %c0_2] : memref<15x8x8x8xbf16, #tpu.memory_space<vmem>>, vector<15x8x8x8xbf16>
    %1 = vector.shape_cast %0 : vector<15x8x8x8xbf16> to vector<960x8xbf16>
    %c0_3 = arith.constant 0 : index
    %c0_4 = arith.constant 0 : index
    %2 = vector.load %arg2[%c0_3, %c0_4] : memref<8x128xbf16, #tpu.memory_space<vmem>>, vector<8x128xbf16>
    %cst = arith.constant dense<0.000000e+00> : vector<960x128xf32>
    %3 = tpu.matmul %1, %2, %cst {dimension_numbers = #tpu.dot_dimension_numbers<[1], [0], [0], [1], [0, 0, 1, 1], [], []>} : vector<960x8xbf16>, vector<8x128xbf16>, vector<960x128xf32> -> vector<960x128xf32>
    %c0_5 = arith.constant 0 : index
    %c0_6 = arith.constant 0 : index
    %4 = vector.load %arg3[%c0_5, %c0_6] : memref<1x128xf32, #tpu.memory_space<vmem>>, vector<1x128xf32>
    %5 = vector.broadcast %4 : vector<1x128xf32> to vector<960x128xf32>
    %6 = arith.addf %3, %5 : vector<960x128xf32>
    %cst_7 = arith.constant 0.000000e+00 : f32
    %7 = vector.broadcast %cst_7 : f32 to vector<960x128xf32>
    %8 = arith.maximumf %6, %7 : vector<960x128xf32>
    %cst_8 = arith.constant 0.000000e+00 : bf16
    %9 = vector.broadcast %cst_8 : bf16 to vector<2x8x8x128xbf16>
    %c0_9 = arith.constant 0 : index
    %c0_10 = arith.constant 0 : index
    %c0_11 = arith.constant 0 : index
    %c0_12 = arith.constant 0 : index
    %10 = vector.load %arg9[%c0_9, %c0_10, %c0_11, %c0_12] : memref<19x8x8x128xbf16, #tpu.memory_space<vmem>>, vector<2x8x8x128xbf16>
    tpu.vector_store %arg9[%c0_9, %c0_10, %c0_11, %c0_12], %9 {strides = array<i32>} : memref<19x8x8x128xbf16, #tpu.memory_space<vmem>>, vector<2x8x8x128xbf16>,
    %c17 = arith.constant 17 : index
    %c0_13 = arith.constant 0 : index
    %c0_14 = arith.constant 0 : index
    %c0_15 = arith.constant 0 : index
    %11 = vector.load %arg9[%c17, %c0_13, %c0_14, %c0_15] : memref<19x8x8x128xbf16, #tpu.memory_space<vmem>>, vector<2x8x8x128xbf16>
    tpu.vector_store %arg9[%c17, %c0_13, %c0_14, %c0_15], %9 {strides = array<i32>} : memref<19x8x8x128xbf16, #tpu.memory_space<vmem>>, vector<2x8x8x128xbf16>,
    %12 = arith.truncf %8 : vector<960x128xf32> to vector<960x128xbf16>
    %13 = vector.shape_cast %12 : vector<960x128xbf16> to vector<15x8x8x128xbf16>
    %c2 = arith.constant 2 : index
    %c0_16 = arith.constant 0 : index
    %c0_17 = arith.constant 0 : index
    %c0_18 = arith.constant 0 : index
    %14 = vector.load %arg9[%c2, %c0_16, %c0_17, %c0_18] : memref<19x8x8x128xbf16, #tpu.memory_space<vmem>>, vector<15x8x8x128xbf16>
    tpu.vector_store %arg9[%c2, %c0_16, %c0_17, %c0_18], %13 {strides = array<i32>} : memref<19x8x8x128xbf16, #tpu.memory_space<vmem>>, vector<15x8x8x128xbf16>,
    %c0_19 = arith.constant 0 : index
    %c0_20 = arith.constant 0 : index
    %c0_21 = arith.constant 0 : index
    %c0_22 = arith.constant 0 : index
    %15 = vector.load %arg9[%c0_19, %c0_20, %c0_21, %c0_22] : memref<19x8x8x128xbf16, #tpu.memory_space<vmem>>, vector<15x8x8x128xbf16>
    %16 = vector.shape_cast %15 : vector<15x8x8x128xbf16> to vector<960x128xbf16>
    %c1 = arith.constant 1 : index
    %c0_23 = arith.constant 0 : index
    %c0_24 = arith.constant 0 : index
    %c0_25 = arith.constant 0 : index
    %17 = vector.load %arg9[%c1, %c0_23, %c0_24, %c0_25] : memref<19x8x8x128xbf16, #tpu.memory_space<vmem>>, vector<15x8x8x128xbf16>
    %18 = vector.shape_cast %17 : vector<15x8x8x128xbf16> to vector<960x128xbf16>
    %c2_26 = arith.constant 2 : index
    %c0_27 = arith.constant 0 : index
    %c0_28 = arith.constant 0 : index
    %c0_29 = arith.constant 0 : index
    %19 = vector.load %arg9[%c2_26, %c0_27, %c0_28, %c0_29] : memref<19x8x8x128xbf16, #tpu.memory_space<vmem>>, vector<15x8x8x128xbf16>
    %20 = vector.shape_cast %19 : vector<15x8x8x128xbf16> to vector<960x128xbf16>
    %c3 = arith.constant 3 : index
    %c0_30 = arith.constant 0 : index
    %c0_31 = arith.constant 0 : index
    %c0_32 = arith.constant 0 : index
    %21 = vector.load %arg9[%c3, %c0_30, %c0_31, %c0_32] : memref<19x8x8x128xbf16, #tpu.memory_space<vmem>>, vector<15x8x8x128xbf16>
    %22 = vector.shape_cast %21 : vector<15x8x8x128xbf16> to vector<960x128xbf16>
    %c4 = arith.constant 4 : index
    %c0_33 = arith.constant 0 : index
    %c0_34 = arith.constant 0 : index
    %c0_35 = arith.constant 0 : index
    %23 = vector.load %arg9[%c4, %c0_33, %c0_34, %c0_35] : memref<19x8x8x128xbf16, #tpu.memory_space<vmem>>, vector<15x8x8x128xbf16>
    %24 = vector.shape_cast %23 : vector<15x8x8x128xbf16> to vector<960x128xbf16>
    %25 = tpu.concatenate %16, %18, %20, %22, %24 in 1 : vector<960x128xbf16>, vector<960x128xbf16>, vector<960x128xbf16>, vector<960x128xbf16>, vector<960x128xbf16> -> vector<960x640xbf16>
    %c0_36 = arith.constant 0 : index
    %c0_37 = arith.constant 0 : index
    %26 = vector.load %arg4[%c0_36, %c0_37] : memref<640x256xbf16, #tpu.memory_space<vmem>>, vector<640x256xbf16>
    %cst_38 = arith.constant dense<0.000000e+00> : vector<960x256xf32>
    %27 = tpu.matmul %25, %26, %cst_38 {dimension_numbers = #tpu.dot_dimension_numbers<[1], [0], [0], [1], [0, 0, 1, 1], [], []>} : vector<960x640xbf16>, vector<640x256xbf16>, vector<960x256xf32> -> vector<960x256xf32>
    %c0_39 = arith.constant 0 : index
    %c0_40 = arith.constant 0 : index
    %28 = vector.load %arg5[%c0_39, %c0_40] : memref<1x256xf32, #tpu.memory_space<vmem>>, vector<1x256xf32>
    %29 = vector.broadcast %28 : vector<1x256xf32> to vector<960x256xf32>
    %30 = arith.addf %27, %29 : vector<960x256xf32>
    %cst_41 = arith.constant 0.000000e+00 : f32
    %31 = vector.broadcast %cst_41 : f32 to vector<960x256xf32>
    %32 = arith.maximumf %30, %31 : vector<960x256xf32>
    %cst_42 = arith.constant 0.000000e+00 : bf16
    %33 = vector.broadcast %cst_42 : bf16 to vector<1x8x8x256xbf16>
    %c0_43 = arith.constant 0 : index
    %c0_44 = arith.constant 0 : index
    %c0_45 = arith.constant 0 : index
    %c0_46 = arith.constant 0 : index
    %34 = vector.load %arg10[%c0_43, %c0_44, %c0_45, %c0_46] : memref<17x8x8x256xbf16, #tpu.memory_space<vmem>>, vector<1x8x8x256xbf16>
    tpu.vector_store %arg10[%c0_43, %c0_44, %c0_45, %c0_46], %33 {strides = array<i32>} : memref<17x8x8x256xbf16, #tpu.memory_space<vmem>>, vector<1x8x8x256xbf16>,
    %c16 = arith.constant 16 : index
    %c0_47 = arith.constant 0 : index
    %c0_48 = arith.constant 0 : index
    %c0_49 = arith.constant 0 : index
    %35 = vector.load %arg10[%c16, %c0_47, %c0_48, %c0_49] : memref<17x8x8x256xbf16, #tpu.memory_space<vmem>>, vector<1x8x8x256xbf16>
    tpu.vector_store %arg10[%c16, %c0_47, %c0_48, %c0_49], %33 {strides = array<i32>} : memref<17x8x8x256xbf16, #tpu.memory_space<vmem>>, vector<1x8x8x256xbf16>,
    %36 = arith.truncf %32 : vector<960x256xf32> to vector<960x256xbf16>
    %37 = vector.shape_cast %36 : vector<960x256xbf16> to vector<15x8x8x256xbf16>
    %c1_50 = arith.constant 1 : index
    %c0_51 = arith.constant 0 : index
    %c0_52 = arith.constant 0 : index
    %c0_53 = arith.constant 0 : index
    %38 = vector.load %arg10[%c1_50, %c0_51, %c0_52, %c0_53] : memref<17x8x8x256xbf16, #tpu.memory_space<vmem>>, vector<15x8x8x256xbf16>
    tpu.vector_store %arg10[%c1_50, %c0_51, %c0_52, %c0_53], %37 {strides = array<i32>} : memref<17x8x8x256xbf16, #tpu.memory_space<vmem>>, vector<15x8x8x256xbf16>,
    %c0_54 = arith.constant 0 : index
    %c0_55 = arith.constant 0 : index
    %c0_56 = arith.constant 0 : index
    %c0_57 = arith.constant 0 : index
    %39 = vector.load %arg10[%c0_54, %c0_55, %c0_56, %c0_57] : memref<17x8x8x256xbf16, #tpu.memory_space<vmem>>, vector<15x8x8x256xbf16>
    %40 = vector.shape_cast %39 : vector<15x8x8x256xbf16> to vector<960x256xbf16>
    %c1_58 = arith.constant 1 : index
    %c0_59 = arith.constant 0 : index
    %c0_60 = arith.constant 0 : index
    %c0_61 = arith.constant 0 : index
    %41 = vector.load %arg10[%c1_58, %c0_59, %c0_60, %c0_61] : memref<17x8x8x256xbf16, #tpu.memory_space<vmem>>, vector<15x8x8x256xbf16>
    %42 = vector.shape_cast %41 : vector<15x8x8x256xbf16> to vector<960x256xbf16>
    %c2_62 = arith.constant 2 : index
    %c0_63 = arith.constant 0 : index
    %c0_64 = arith.constant 0 : index
    %c0_65 = arith.constant 0 : index
    %43 = vector.load %arg10[%c2_62, %c0_63, %c0_64, %c0_65] : memref<17x8x8x256xbf16, #tpu.memory_space<vmem>>, vector<15x8x8x256xbf16>
    %44 = vector.shape_cast %43 : vector<15x8x8x256xbf16> to vector<960x256xbf16>
    %45 = tpu.concatenate %40, %42, %44 in 1 : vector<960x256xbf16>, vector<960x256xbf16>, vector<960x256xbf16> -> vector<960x768xbf16>
    %c0_66 = arith.constant 0 : index
    %c0_67 = arith.constant 0 : index
    %46 = vector.load %arg6[%c0_66, %c0_67] : memref<768x128xbf16, #tpu.memory_space<vmem>>, vector<768x128xbf16>
    %cst_68 = arith.constant dense<0.000000e+00> : vector<960x128xf32>
    %47 = tpu.matmul %45, %46, %cst_68 {dimension_numbers = #tpu.dot_dimension_numbers<[1], [0], [0], [1], [0, 0, 1, 1], [], []>} : vector<960x768xbf16>, vector<768x128xbf16>, vector<960x128xf32> -> vector<960x128xf32>
    %c0_69 = arith.constant 0 : index
    %c0_70 = arith.constant 0 : index
    %48 = vector.load %arg7[%c0_69, %c0_70] : memref<1x128xf32, #tpu.memory_space<vmem>>, vector<1x128xf32>
    %49 = vector.broadcast %48 : vector<1x128xf32> to vector<960x128xf32>
    %50 = arith.addf %47, %49 : vector<960x128xf32>
    %cst_71 = arith.constant 0.000000e+00 : f32
    %51 = vector.broadcast %cst_71 : f32 to vector<960x128xf32>
    %52 = arith.maximumf %50, %51 : vector<960x128xf32>
    %53 = vector.shape_cast %52 : vector<960x128xf32> to vector<15x8x8x128xf32>
    %54 = vector.extract_strided_slice %53 {offsets = [0, 0, 0, 0], sizes = [12, 8, 8, 128], strides = [1, 1, 1, 1]} : vector<15x8x8x128xf32> to vector<12x8x8x128xf32>
    %cst_72 = arith.constant dense<0.000000e+00> : vector<8x8x128xf32>
    %55 = vector.multi_reduction <add>, %54, %cst_72 [0] : vector<12x8x8x128xf32> to vector<8x8x128xf32>
    %cst_73 = arith.constant dense<0.000000e+00> : vector<8x128xf32>
    %56 = vector.multi_reduction <add>, %55, %cst_73 [1] : vector<8x8x128xf32> to vector<8x128xf32>
    %cst_74 = arith.constant 0.010416667 : f32
    %57 = vector.broadcast %cst_74 : f32 to vector<8x128xf32>
    %58 = arith.mulf %56, %57 : vector<8x128xf32>
    %59 = vector.shape_cast %58 : vector<8x128xf32> to vector<1x8x128xf32>
    %c0_75 = arith.constant 0 : index
    %c0_76 = arith.constant 0 : index
    %c0_77 = arith.constant 0 : index
    %60 = vector.load %arg8[%c0_75, %c0_76, %c0_77] : memref<1x8x128xf32, #tpu.memory_space<vmem>>, vector<1x8x128xf32>
    tpu.vector_store %arg8[%c0_75, %c0_76, %c0_77], %59 {strides = array<i32>} : memref<1x8x128xf32, #tpu.memory_space<vmem>>, vector<1x8x128xf32>,
    return
  }
  func.func @transform_0(%arg0: i32) -> (i32, i32, i32, i32) {
    %c0_i32 = arith.constant 0 : i32
    %c0_i32_0 = arith.constant 0 : i32
    %c0_i32_1 = arith.constant 0 : i32
    %c0_i32_2 = arith.constant 0 : i32
    return %c0_i32, %arg0, %c0_i32_0, %c0_i32_1 : i32, i32, i32, i32
  }
  func.func @transform_1(%arg0: i32) -> (i32, i32) {
    %c0_i32 = arith.constant 0 : i32
    %c0_i32_0 = arith.constant 0 : i32
    %c0_i32_1 = arith.constant 0 : i32
    return %c0_i32, %c0_i32_0 : i32, i32
  }
  func.func @transform_2(%arg0: i32) -> (i32, i32) {
    %c0_i32 = arith.constant 0 : i32
    %c0_i32_0 = arith.constant 0 : i32
    %c0_i32_1 = arith.constant 0 : i32
    return %c0_i32, %c0_i32_0 : i32, i32
  }
  func.func @transform_3(%arg0: i32) -> (i32, i32) {
    %c0_i32 = arith.constant 0 : i32
    %c0_i32_0 = arith.constant 0 : i32
    %c0_i32_1 = arith.constant 0 : i32
    return %c0_i32, %c0_i32_0 : i32, i32
  }
  func.func @transform_4(%arg0: i32) -> (i32, i32) {
    %c0_i32 = arith.constant 0 : i32
    %c0_i32_0 = arith.constant 0 : i32
    %c0_i32_1 = arith.constant 0 : i32
    return %c0_i32, %c0_i32_0 : i32, i32
  }
  func.func @transform_5(%arg0: i32) -> (i32, i32) {
    %c0_i32 = arith.constant 0 : i32
    %c0_i32_0 = arith.constant 0 : i32
    %c0_i32_1 = arith.constant 0 : i32
    return %c0_i32, %c0_i32_0 : i32, i32
  }
  func.func @transform_6(%arg0: i32) -> (i32, i32) {
    %c0_i32 = arith.constant 0 : i32
    %c0_i32_0 = arith.constant 0 : i32
    %c0_i32_1 = arith.constant 0 : i32
    return %c0_i32, %c0_i32_0 : i32, i32
  }
  func.func @transform_7(%arg0: i32) -> (i32, i32, i32) {
    %c0_i32 = arith.constant 0 : i32
    %c0_i32_0 = arith.constant 0 : i32
    %c0_i32_1 = arith.constant 0 : i32
    return %arg0, %c0_i32, %c0_i32_0 : i32, i32, i32
  }
}

module attributes {stable_mosaic.version = 11 : i64} {
  func.func @_head_kernel(%arg0: i32, %arg1: memref<8x128xf32, #tpu.memory_space<vmem>>, %arg2: memref<128x128xbf16, #tpu.memory_space<vmem>>, %arg3: memref<1x128xf32, #tpu.memory_space<vmem>>, %arg4: memref<8x128xf32, #tpu.memory_space<vmem>>) attributes {dimension_semantics = [#tpu.dimension_semantics<arbitrary>], iteration_bounds = array<i64: 1>, scalar_prefetch = 0 : i64, scratch_operands = 0 : i64, tpu.core_type = #tpu.core_type<tc>, window_params = [{pipeline_mode = #tpu.pipeline_mode<synchronous>, transform_indices = @transform_0, window_bounds = array<i64: 8, 128>}, {pipeline_mode = #tpu.pipeline_mode<synchronous>, transform_indices = @transform_1, window_bounds = array<i64: 128, 128>}, {pipeline_mode = #tpu.pipeline_mode<synchronous>, transform_indices = @transform_2, window_bounds = array<i64: 1, 128>}, {pipeline_mode = #tpu.pipeline_mode<synchronous>, transform_indices = @transform_3, window_bounds = array<i64: 8, 128>}]} {
    %c0 = arith.constant 0 : index
    %c0_0 = arith.constant 0 : index
    %0 = vector.load %arg1[%c0, %c0_0] : memref<8x128xf32, #tpu.memory_space<vmem>>, vector<8x128xf32>
    %1 = arith.truncf %0 : vector<8x128xf32> to vector<8x128xbf16>
    %c0_1 = arith.constant 0 : index
    %c0_2 = arith.constant 0 : index
    %2 = vector.load %arg2[%c0_1, %c0_2] : memref<128x128xbf16, #tpu.memory_space<vmem>>, vector<128x128xbf16>
    %cst = arith.constant dense<0.000000e+00> : vector<8x128xf32>
    %3 = tpu.matmul %1, %2, %cst {dimension_numbers = #tpu.dot_dimension_numbers<[1], [0], [0], [1], [0, 0, 1, 1], [], []>} : vector<8x128xbf16>, vector<128x128xbf16>, vector<8x128xf32> -> vector<8x128xf32>
    %c0_3 = arith.constant 0 : index
    %c0_4 = arith.constant 0 : index
    %4 = vector.load %arg3[%c0_3, %c0_4] : memref<1x128xf32, #tpu.memory_space<vmem>>, vector<1x128xf32>
    %5 = vector.broadcast %4 : vector<1x128xf32> to vector<8x128xf32>
    %6 = arith.addf %3, %5 : vector<8x128xf32>
    %cst_5 = arith.constant dense<0xFF800000> : vector<8xf32>
    %7 = vector.multi_reduction <maximumf>, %6, %cst_5 [1] : vector<8x128xf32> to vector<8xf32>
    %8 = vector.shape_cast %7 : vector<8xf32> to vector<8x1xf32>
    %9 = vector.broadcast %8 : vector<8x1xf32> to vector<8x128xf32>
    %10 = arith.subf %6, %9 : vector<8x128xf32>
    %11 = math.exp %10 : vector<8x128xf32>
    %cst_6 = arith.constant dense<0.000000e+00> : vector<8xf32>
    %12 = vector.multi_reduction <add>, %11, %cst_6 [1] : vector<8x128xf32> to vector<8xf32>
    %13 = vector.shape_cast %12 : vector<8xf32> to vector<8x1xf32>
    %14 = math.log %13 : vector<8x1xf32>
    %15 = vector.broadcast %14 : vector<8x1xf32> to vector<8x128xf32>
    %16 = arith.subf %10, %15 : vector<8x128xf32>
    %c0_7 = arith.constant 0 : index
    %c0_8 = arith.constant 0 : index
    %17 = vector.load %arg4[%c0_7, %c0_8] : memref<8x128xf32, #tpu.memory_space<vmem>>, vector<8x128xf32>
    tpu.vector_store %arg4[%c0_7, %c0_8], %16 {strides = array<i32>} : memref<8x128xf32, #tpu.memory_space<vmem>>, vector<8x128xf32>,
    return
  }
  func.func @transform_0(%arg0: i32) -> (i32, i32) {
    %c0_i32 = arith.constant 0 : i32
    %c0_i32_0 = arith.constant 0 : i32
    %c0_i32_1 = arith.constant 0 : i32
    return %c0_i32, %c0_i32_0 : i32, i32
  }
  func.func @transform_1(%arg0: i32) -> (i32, i32) {
    %c0_i32 = arith.constant 0 : i32
    %c0_i32_0 = arith.constant 0 : i32
    %c0_i32_1 = arith.constant 0 : i32
    return %c0_i32, %c0_i32_0 : i32, i32
  }
  func.func @transform_2(%arg0: i32) -> (i32, i32) {
    %c0_i32 = arith.constant 0 : i32
    %c0_i32_0 = arith.constant 0 : i32
    %c0_i32_1 = arith.constant 0 : i32
    return %c0_i32, %c0_i32_0 : i32, i32
  }
  func.func @transform_3(%arg0: i32) -> (i32, i32) {
    %c0_i32 = arith.constant 0 : i32
    %c0_i32_0 = arith.constant 0 : i32
    %c0_i32_1 = arith.constant 0 : i32
    return %c0_i32, %c0_i32_0 : i32, i32
  }
}

</mosaic_0001>

<llo_original>
// kernel: fcn_forward_pallas.3
$region0: #{fcn_forward_pallas.3}
  #allocation0 [shape = 'u32[]', space=smem, size = 0x4, offset = 0x4, fixed_abs, tag = 'smem constant byte address 0x4 - core index']
  #allocation1 [shape = 'u32[72,128]{1,0:T(1,128)}', space=vmem, size = 0x9000, scoped, tag = 'internal scratch']
  %s0 = inlined_call_operand.vmem [shape: f32[8,128], index: 0, kind: input, shape index: {}]
  %s1 = inlined_call_operand.vmem [shape: bf16[128,128], index: 1, kind: input, shape index: {}]
  %s2 = inlined_call_operand.vmem [shape: f32[1,128], index: 2, kind: input, shape index: {}]
  %s3 = inlined_call_operand.hbm [shape: f32[8,128], index: 3, kind: output, shape index: {}]
  %s4 = sld [smem:[#allocation0]]
  $region22: #{fcn_forward_pallas.3} parent=0
    _
  %s6 = ssub.s32 1, %s4
  %s7 = scalar_select 0, %s6, %s4
  $region1: #{fcn_forward_pallas.3} parent=0
    #allocation2 [shape = 'u8[4096]{0}', space=vmem, size = 0x1000, scoped, tag = 'output window, operand 0, single buffered']
    #allocation3 [shape = 's32[1]{0}', space=sflag, size = 0x4, scoped, tag = 'scoped memory for fcn_forward_pallas.3']
    %8 = vsyncpa [#allocation3], 0
    // Predicated region
    $region2: #{fcn_forward_pallas.3} parent=1 // pred_check
      _
    $region3: #{fcn_forward_pallas.3} parent=1 // pred_check_branch
      %10 = sbr.rel (0) target = $region5
    $region4: #{fcn_forward_pallas.3} parent=1 // pred_region
      _
    $region5: #{fcn_forward_pallas.3} parent=1 // pred_fallthru
      _
    // Predicated region
    $region6: #{fcn_forward_pallas.3} parent=1 // pred_check
      _
    $region7: #{fcn_forward_pallas.3} parent=1 // pred_check_branch
      %12 = sbr.rel (0) target = $region9
    $region8: #{fcn_forward_pallas.3} parent=1 // pred_region
      _
    $region9: #{fcn_forward_pallas.3} parent=1 // pred_fallthru
      _
    // Predicated region
    $region10: #{fcn_forward_pallas.3} parent=1 // pred_check
      _
    $region11: #{fcn_forward_pallas.3} parent=1 // pred_check_branch
      %14 = sbr.rel (0) target = $region13
    $region12: #{fcn_forward_pallas.3} parent=1 // pred_region
      _
    $region13: #{fcn_forward_pallas.3} parent=1 // pred_fallthru
      _
    %v15 = vld [vmem:[%s0] sm:$0xff]
    %v16 = vpack.c.bf16 %v15, %v15
    %v17 = vld [vmem:[%s1] sm:$0xf]
    %v18 = vld [vmem:[%s1 + $0x4] sm:$0xf]
    %v19 = vld [vmem:[%s1 + $0x8] sm:$0xf]
    %v20 = vld [vmem:[%s1 + $0xc] sm:$0xf]
    %v21 = vld [vmem:[%s1 + $0x10] sm:$0xf]
    %v22 = vld [vmem:[%s1 + $0x14] sm:$0xf]
    %v23 = vld [vmem:[%s1 + $0x18] sm:$0xf]
    %v24 = vld [vmem:[%s1 + $0x1c] sm:$0xf]
    %v25 = vld [vmem:[%s1 + $0x20] sm:$0xf]
    %v26 = vld [vmem:[%s1 + $0x24] sm:$0xf]
    %v27 = vld [vmem:[%s1 + $0x28] sm:$0xf]
    %v28 = vld [vmem:[%s1 + $0x2c] sm:$0xf]
    %v29 = vld [vmem:[%s1 + $0x30] sm:$0xf]
    %v30 = vld [vmem:[%s1 + $0x34] sm:$0xf]
    %v31 = vld [vmem:[%s1 + $0x38] sm:$0xf]
    %v32 = vld [vmem:[%s1 + $0x3c] sm:$0xf]
    %v33 = vld [vmem:[%s2] sm:$0x1]
    %v35 = vperm.slane %v33, 0
    %v53 = vunpack.c.l.b16 %v17
    %v54 = vunpack.c.l.b16 %v18
    %v55 = vunpack.c.l.b16 %v19
    %v56 = vunpack.c.l.b16 %v20
    %v57 = vunpack.c.l.b16 %v21
    %v58 = vunpack.c.l.b16 %v22
    %v59 = vunpack.c.l.b16 %v23
    %v60 = vunpack.c.l.b16 %v24
    %v61 = vunpack.c.l.b16 %v25
    %v62 = vunpack.c.l.b16 %v26
    %v63 = vunpack.c.l.b16 %v27
    %v64 = vunpack.c.l.b16 %v28
    %v65 = vunpack.c.l.b16 %v29
    %v66 = vunpack.c.l.b16 %v30
    %v67 = vunpack.c.l.b16 %v31
    %v68 = vunpack.c.l.b16 %v32
    %v69 = vpack.c.b16 %v54, %v53
    %v70 = vpack.c.b16 %v56, %v55
    %v71 = vpack.c.b16 %v58, %v57
    %v72 = vpack.c.b16 %v60, %v59
    %v73 = vpack.c.b16 %v62, %v61
    %v74 = vpack.c.b16 %v64, %v63
    %v75 = vpack.c.b16 %v66, %v65
    %v76 = vpack.c.b16 %v68, %v67
    %85 = vmatpush.bf16.msra.mxu0 %v76
    %86 = vmatpush.bf16.msra.mxu0 %v75
    %87 = vmatpush.bf16.msra.mxu0 %v74
    %88 = vmatpush.bf16.msra.mxu0 %v73
    %89 = vmatpush.bf16.msra.mxu0 %v72
    %90 = vmatpush.bf16.msra.mxu0 %v71
    %91 = vmatpush.bf16.msra.mxu0 %v70
    %92 = vmatpush.bf16.msra.mxu0 %v69
    %93 = vmatmul.bf16.gmra.mxu0 %v16
    %v94 = vpop.f32.mrf.mxu0
    %v95 = vadd.f32 %v35, %v94
    %v96 = vpop.f32.mrf.mxu0
    %97 = vdwg.mxu0
    %98 = vmax.xlane.f32.xlu0 %v95
    %v99 = vpop.xlane.xlu0 %98
    %v100 = vsub.f32 %v95, %v99
    %v101 = vmul.f32 %v100, 1.442695
    %v102 = vpow.pop %v101
    %103 = vadd.xlane.f32.xlu0 %v102
    %v104 = vpop.xlane.xlu0 %103
    %v105 = vlog2.pop %v104
    %v106 = vmul.f32 %v105, 0.6931472
    %v107 = vsub.f32 %v100, %v106
    %108 = vst [vmem:[#allocation2] sm:$0xff] %v107
    // Predicated region
    $region14: #{fcn_forward_pallas.3} parent=1 // pred_check
      _
    $region15: #{fcn_forward_pallas.3} parent=1 // pred_check_branch
      %110 = sbr.rel (0) target = $region17
    $region16: #{fcn_forward_pallas.3} parent=1 // pred_region
      %112 = vsyncadd [#allocation3], 0
      %s114 = sshll.u32 [#allocation2], 4
      %s115 = int_to_ptr.vmem [resolvable:$true] %s114
      %s116 = sshll.u32 %s3, 4
      %s117 = int_to_ptr.hbm [resolvable:$true] %s116
      %119 = dma.vmem_to_hbm [thread:$0]  %s115, 128, %s117, [#allocation3]
    $region17: #{fcn_forward_pallas.3} parent=1 // pred_fallthru
      _
    // Predicated region
    $region18: #{fcn_forward_pallas.3} parent=1 // pred_check
      _
    $region19: #{fcn_forward_pallas.3} parent=1 // pred_check_branch
      %121 = sbr.rel (0) target = $region21
    $region20: #{fcn_forward_pallas.3} parent=1 // pred_region
      %123 = dma.done [#allocation3], 128
    $region21: #{fcn_forward_pallas.3} parent=1 // pred_fallthru
      _
    %124 = vsyncpa [#allocation3], 1

// kernel: fcn_forward_pallas.2
$region0: #{fcn_forward_pallas.2}
  #allocation0 [shape = 'u32[]', space=smem, size = 0x4, offset = 0x4, fixed_abs, tag = 'smem constant byte address 0x4 - core index']
  #allocation1 [shape = 'u32[72,128]{1,0:T(1,128)}', space=vmem, size = 0x9000, scoped, tag = 'internal scratch']
  #allocation2 [shape = 'bf16[19,8,8,128]{3,2,1,0:T(8,128)(2,1)}', space=vmem, size = 0x4c000, scoped, tag = 'scratch operand']
  #allocation3 [shape = 'bf16[17,8,8,256]{3,2,1,0:T(8,128)(2,1)}', space=vmem, size = 0x88000, scoped, tag = 'scratch operand']
  %s0 = inlined_call_operand.vmem [shape: bf16[15,8,8,8], index: 0, kind: input, shape index: {}]
  %s1 = inlined_call_operand.vmem [shape: bf16[8,128], index: 1, kind: input, shape index: {}]
  %s2 = inlined_call_operand.vmem [shape: f32[1,128], index: 2, kind: input, shape index: {}]
  %s3 = inlined_call_operand.vmem [shape: bf16[640,256], index: 3, kind: input, shape index: {}]
  %s4 = inlined_call_operand.vmem [shape: f32[1,256], index: 4, kind: input, shape index: {}]
  %s5 = inlined_call_operand.vmem [shape: bf16[768,128], index: 5, kind: input, shape index: {}]
  %s6 = inlined_call_operand.vmem [shape: f32[1,128], index: 6, kind: input, shape index: {}]
  %s7 = inlined_call_operand.vmem [shape: f32[1,8,128], index: 7, kind: output, shape index: {}]
  %s8 = sld [smem:[#allocation0]]
  $region38: #{fcn_forward_pallas.2} parent=0
    _
  %s10 = ssub.s32 1, %s8
  %s11 = scalar_select 0, %s10, %s8
  // Predicated region
  $region2: #{fcn_forward_pallas.2} parent=0 // pred_check
    _
  $region3: #{fcn_forward_pallas.2} parent=0 // pred_check_branch
    %13 = sbr.rel (0) target = $region5
  $region4: #{fcn_forward_pallas.2} parent=0 // pred_region
    _
  $region5: #{fcn_forward_pallas.2} parent=0 // pred_fallthru
    _
  // Predicated region
  $region6: #{fcn_forward_pallas.2} parent=0 // pred_check
    _
  $region7: #{fcn_forward_pallas.2} parent=0 // pred_check_branch
    %15 = sbr.rel (0) target = $region9
  $region8: #{fcn_forward_pallas.2} parent=0 // pred_region
    _
  $region9: #{fcn_forward_pallas.2} parent=0 // pred_fallthru
    _
  // Predicated region
  $region10: #{fcn_forward_pallas.2} parent=0 // pred_check
    _
  $region11: #{fcn_forward_pallas.2} parent=0 // pred_check_branch
    %17 = sbr.rel (0) target = $region13
  $region12: #{fcn_forward_pallas.2} parent=0 // pred_region
    _
  $region13: #{fcn_forward_pallas.2} parent=0 // pred_fallthru
    _
  // Predicated region
  $region14: #{fcn_forward_pallas.2} parent=0 // pred_check
    _
  $region15: #{fcn_forward_pallas.2} parent=0 // pred_check_branch
    %19 = sbr.rel (0) target = $region17
  $region16: #{fcn_forward_pallas.2} parent=0 // pred_region
    _
  $region17: #{fcn_forward_pallas.2} parent=0 // pred_fallthru
    _
  // Predicated region
  $region18: #{fcn_forward_pallas.2} parent=0 // pred_check
    _
  $region19: #{fcn_forward_pallas.2} parent=0 // pred_check_branch
    %21 = sbr.rel (0) target = $region21
  $region20: #{fcn_forward_pallas.2} parent=0 // pred_region
    _
  $region21: #{fcn_forward_pallas.2} parent=0 // pred_fallthru
    _
  // Predicated region
  $region22: #{fcn_forward_pallas.2} parent=0 // pred_check
    _
  $region23: #{fcn_forward_pallas.2} parent=0 // pred_check_branch
    %23 = sbr.rel (0) target = $region25
  $region24: #{fcn_forward_pallas.2} parent=0 // pred_region
    _
  $region25: #{fcn_forward_pallas.2} parent=0 // pred_fallthru
    _
  // Predicated region
  $region26: #{fcn_forward_pallas.2} parent=0 // pred_check
    _
  $region27: #{fcn_forward_pallas.2} parent=0 // pred_check_branch
    %25 = sbr.rel (0) target = $region29
  $region28: #{fcn_forward_pallas.2} parent=0 // pred_region
    _
  $region29: #{fcn_forward_pallas.2} parent=0 // pred_fallthru
    _
  %v27 = vld [vmem:[%s0] sm:$0xf]
  %v28 = vld [vmem:[%s0 + $0x4] sm:$0xf]
  %v29 = vld [vmem:[%s0 + $0x8] sm:$0xf]
  %v30 = vld [vmem:[%s0 + $0xc] sm:$0xf]
  %v31 = vld [vmem:[%s0 + $0x10] sm:$0xf]
  %v32 = vld [vmem:[%s0 + $0x14] sm:$0xf]
  %v33 = vld [vmem:[%s0 + $0x18] sm:$0xf]
  %v34 = vld [vmem:[%s0 + $0x1c] sm:$0xf]
  %v35 = vld [vmem:[%s0 + $0x20] sm:$0xf]
  %v36 = vld [vmem:[%s0 + $0x24] sm:$0xf]
  %v37 = vld [vmem:[%s0 + $0x28] sm:$0xf]
  %v38 = vld [vmem:[%s0 + $0x2c] sm:$0xf]
  %v39 = vld [vmem:[%s0 + $0x30] sm:$0xf]
  %v40 = vld [vmem:[%s0 + $0x34] sm:$0xf]
  %v41 = vld [vmem:[%s0 + $0x38] sm:$0xf]
  %v42 = vld [vmem:[%s0 + $0x3c] sm:$0xf]
  %v43 = vld [vmem:[%s0 + $0x40] sm:$0xf]
  %v44 = vld [vmem:[%s0 + $0x44] sm:$0xf]
  %v45 = vld [vmem:[%s0 + $0x48] sm:$0xf]
  %v46 = vld [vmem:[%s0 + $0x4c] sm:$0xf]
  %v47 = vld [vmem:[%s0 + $0x50] sm:$0xf]
  %v48 = vld [vmem:[%s0 + $0x54] sm:$0xf]
  %v49 = vld [vmem:[%s0 + $0x58] sm:$0xf]
  %v50 = vld [vmem:[%s0 + $0x5c] sm:$0xf]
  %v51 = vld [vmem:[%s0 + $0x60] sm:$0xf]
  %v52 = vld [vmem:[%s0 + $0x64] sm:$0xf]
  %v53 = vld [vmem:[%s0 + $0x68] sm:$0xf]
  %v54 = vld [vmem:[%s0 + $0x6c] sm:$0xf]
  %v55 = vld [vmem:[%s0 + $0x70] sm:$0xf]
  %v56 = vld [vmem:[%s0 + $0x74] sm:$0xf]
  %v57 = vld [vmem:[%s0 + $0x78] sm:$0xf]
  %v58 = vld [vmem:[%s0 + $0x7c] sm:$0xf]
  %v59 = vld [vmem:[%s0 + $0x80] sm:$0xf]
  %v60 = vld [vmem:[%s0 + $0x84] sm:$0xf]
  %v61 = vld [vmem:[%s0 + $0x88] sm:$0xf]
  %v62 = vld [vmem:[%s0 + $0x8c] sm:$0xf]
  %v63 = vld [vmem:[%s0 + $0x90] sm:$0xf]
  %v64 = vld [vmem:[%s0 + $0x94] sm:$0xf]
  %v65 = vld [vmem:[%s0 + $0x98] sm:$0xf]
  %v66 = vld [vmem:[%s0 + $0x9c] sm:$0xf]
  %v67 = vld [vmem:[%s0 + $0xa0] sm:$0xf]
  %v68 = vld [vmem:[%s0 + $0xa4] sm:$0xf]
  %v69 = vld [vmem:[%s0 + $0xa8] sm:$0xf]
  %v70 = vld [vmem:[%s0 + $0xac] sm:$0xf]
  %v71 = vld [vmem:[%s0 + $0xb0] sm:$0xf]
  %v72 = vld [vmem:[%s0 + $0xb4] sm:$0xf]
  %v73 = vld [vmem:[%s0 + $0xb8] sm:$0xf]
  %v74 = vld [vmem:[%s0 + $0xbc] sm:$0xf]
  %v75 = vld [vmem:[%s0 + $0xc0] sm:$0xf]
  %v76 = vld [vmem:[%s0 + $0xc4] sm:$0xf]
  %v77 = vld [vmem:[%s0 + $0xc8] sm:$0xf]
  %v78 = vld [vmem:[%s0 + $0xcc] sm:$0xf]
  %v79 = vld [vmem:[%s0 + $0xd0] sm:$0xf]
  %v80 = vld [vmem:[%s0 + $0xd4] sm:$0xf]
  %v81 = vld [vmem:[%s0 + $0xd8] sm:$0xf]
  %v82 = vld [vmem:[%s0 + $0xdc] sm:$0xf]
  %v83 = vld [vmem:[%s0 + $0xe0] sm:$0xf]
  %v84 = vld [vmem:[%s0 + $0xe4] sm:$0xf]
  %v85 = vld [vmem:[%s0 + $0xe8] sm:$0xf]
  %v86 = vld [vmem:[%s0 + $0xec] sm:$0xf]
  %v87 = vld [vmem:[%s0 + $0xf0] sm:$0xf]
  %v88 = vld [vmem:[%s0 + $0xf4] sm:$0xf]
  %v89 = vld [vmem:[%s0 + $0xf8] sm:$0xf]
  %v90 = vld [vmem:[%s0 + $0xfc] sm:$0xf]
  %v91 = vld [vmem:[%s0 + $0x100] sm:$0xf]
  %v92 = vld [vmem:[%s0 + $0x104] sm:$0xf]
  %v93 = vld [vmem:[%s0 + $0x108] sm:$0xf]
  %v94 = vld [vmem:[%s0 + $0x10c] sm:$0xf]
  %v95 = vld [vmem:[%s0 + $0x110] sm:$0xf]
  %v96 = vld [vmem:[%s0 + $0x114] sm:$0xf]
  %v97 = vld [vmem:[%s0 + $0x118] sm:$0xf]
  %v98 = vld [vmem:[%s0 + $0x11c] sm:$0xf]
  %v99 = vld [vmem:[%s0 + $0x120] sm:$0xf]
  %v100 = vld [vmem:[%s0 + $0x124] sm:$0xf]
  %v101 = vld [vmem:[%s0 + $0x128] sm:$0xf]
  %v102 = vld [vmem:[%s0 + $0x12c] sm:$0xf]
  %v103 = vld [vmem:[%s0 + $0x130] sm:$0xf]
  %v104 = vld [vmem:[%s0 + $0x134] sm:$0xf]
  %v105 = vld [vmem:[%s0 + $0x138] sm:$0xf]
  %v106 = vld [vmem:[%s0 + $0x13c] sm:$0xf]
  %v107 = vld [vmem:[%s0 + $0x140] sm:$0xf]
  %v108 = vld [vmem:[%s0 + $0x144] sm:$0xf]
  %v109 = vld [vmem:[%s0 + $0x148] sm:$0xf]
  %v110 = vld [vmem:[%s0 + $0x14c] sm:$0xf]
  %v111 = vld [vmem:[%s0 + $0x150] sm:$0xf]
  %v112 = vld [vmem:[%s0 + $0x154] sm:$0xf]
  %v113 = vld [vmem:[%s0 + $0x158] sm:$0xf]
  %v114 = vld [vmem:[%s0 + $0x15c] sm:$0xf]
  %v115 = vld [vmem:[%s0 + $0x160] sm:$0xf]
  %v116 = vld [vmem:[%s0 + $0x164] sm:$0xf]
  %v117 = vld [vmem:[%s0 + $0x168] sm:$0xf]
  %v118 = vld [vmem:[%s0 + $0x16c] sm:$0xf]
  %v119 = vld [vmem:[%s0 + $0x170] sm:$0xf]
  %v120 = vld [vmem:[%s0 + $0x174] sm:$0xf]
  %v121 = vld [vmem:[%s0 + $0x178] sm:$0xf]
  %v122 = vld [vmem:[%s0 + $0x17c] sm:$0xf]
  %v123 = vld [vmem:[%s0 + $0x180] sm:$0xf]
  %v124 = vld [vmem:[%s0 + $0x184] sm:$0xf]
  %v125 = vld [vmem:[%s0 + $0x188] sm:$0xf]
  %v126 = vld [vmem:[%s0 + $0x18c] sm:$0xf]
  %v127 = vld [vmem:[%s0 + $0x190] sm:$0xf]
  %v128 = vld [vmem:[%s0 + $0x194] sm:$0xf]
  %v129 = vld [vmem:[%s0 + $0x198] sm:$0xf]
  %v130 = vld [vmem:[%s0 + $0x19c] sm:$0xf]
  %v131 = vld [vmem:[%s0 + $0x1a0] sm:$0xf]
  %v132 = vld [vmem:[%s0 + $0x1a4] sm:$0xf]
  %v133 = vld [vmem:[%s0 + $0x1a8] sm:$0xf]
  %v134 = vld [vmem:[%s0 + $0x1ac] sm:$0xf]
  %v135 = vld [vmem:[%s0 + $0x1b0] sm:$0xf]
  %v136 = vld [vmem:[%s0 + $0x1b4] sm:$0xf]
  %v137 = vld [vmem:[%s0 + $0x1b8] sm:$0xf]
  %v138 = vld [vmem:[%s0 + $0x1bc] sm:$0xf]
  %v139 = vld [vmem:[%s0 + $0x1c0] sm:$0xf]
  %v140 = vld [vmem:[%s0 + $0x1c4] sm:$0xf]
  %v141 = vld [vmem:[%s0 + $0x1c8] sm:$0xf]
  %v142 = vld [vmem:[%s0 + $0x1cc] sm:$0xf]
  %v143 = vld [vmem:[%s0 + $0x1d0] sm:$0xf]
  %v144 = vld [vmem:[%s0 + $0x1d4] sm:$0xf]
  %v145 = vld [vmem:[%s0 + $0x1d8] sm:$0xf]
  %v146 = vld [vmem:[%s0 + $0x1dc] sm:$0xf]
  %v147 = vld [vmem:[%s1] sm:$0xf]
  %v148 = vld [vmem:[%s2] sm:$0x1]
  %v150 = vperm.slane %v148, 0
  %v272 = vunpack.c.l.b16 %v27
  %v273 = vunpack.c.l.b16 %v28
  %v274 = vunpack.c.l.b16 %v29
  %v275 = vunpack.c.l.b16 %v30
  %v276 = vunpack.c.l.b16 %v31
  %v277 = vunpack.c.l.b16 %v32
  %v278 = vunpack.c.l.b16 %v33
  %v279 = vunpack.c.l.b16 %v34
  %v280 = vunpack.c.l.b16 %v35
  %v281 = vunpack.c.l.b16 %v36
  %v282 = vunpack.c.l.b16 %v37
  %v283 = vunpack.c.l.b16 %v38
  %v284 = vunpack.c.l.b16 %v39
  %v285 = vunpack.c.l.b16 %v40
  %v286 = vunpack.c.l.b16 %v41
  %v287 = vunpack.c.l.b16 %v42
  %v288 = vunpack.c.l.b16 %v43
  %v289 = vunpack.c.l.b16 %v44
  %v290 = vunpack.c.l.b16 %v45
  %v291 = vunpack.c.l.b16 %v46
  %v292 = vunpack.c.l.b16 %v47
  %v293 = vunpack.c.l.b16 %v48
  %v294 = vunpack.c.l.b16 %v49
  %v295 = vunpack.c.l.b16 %v50
  %v296 = vunpack.c.l.b16 %v51
  %v297 = vunpack.c.l.b16 %v52
  %v298 = vunpack.c.l.b16 %v53
  %v299 = vunpack.c.l.b16 %v54
  %v300 = vunpack.c.l.b16 %v55
  %v301 = vunpack.c.l.b16 %v56
  %v302 = vunpack.c.l.b16 %v57
  %v303 = vunpack.c.l.b16 %v58
  %v304 = vunpack.c.l.b16 %v59
  %v305 = vunpack.c.l.b16 %v60
  %v306 = vunpack.c.l.b16 %v61
  %v307 = vunpack.c.l.b16 %v62
  %v308 = vunpack.c.l.b16 %v63
  %v309 = vunpack.c.l.b16 %v64
  %v310 = vunpack.c.l.b16 %v65
  %v311 = vunpack.c.l.b16 %v66
  %v312 = vunpack.c.l.b16 %v67
  %v313 = vunpack.c.l.b16 %v68
  %v314 = vunpack.c.l.b16 %v69
  %v315 = vunpack.c.l.b16 %v70
  %v316 = vunpack.c.l.b16 %v71
  %v317 = vunpack.c.l.b16 %v72
  %v318 = vunpack.c.l.b16 %v73
  %v319 = vunpack.c.l.b16 %v74
  %v320 = vunpack.c.l.b16 %v75
  %v321 = vunpack.c.l.b16 %v76
  %v322 = vunpack.c.l.b16 %v77
  %v323 = vunpack.c.l.b16 %v78
  %v324 = vunpack.c.l.b16 %v79
  %v325 = vunpack.c.l.b16 %v80
  %v326 = vunpack.c.l.b16 %v81
  %v327 = vunpack.c.l.b16 %v82
  %v328 = vunpack.c.l.b16 %v83
  %v329 = vunpack.c.l.b16 %v84
  %v330 = vunpack.c.l.b16 %v85
  %v331 = vunpack.c.l.b16 %v86
  %v332 = vunpack.c.l.b16 %v87
  %v333 = vunpack.c.l.b16 %v88
  %v334 = vunpack.c.l.b16 %v89
  %v335 = vunpack.c.l.b16 %v90
  %v336 = vunpack.c.l.b16 %v91
  %v337 = vunpack.c.l.b16 %v92
  %v338 = vunpack.c.l.b16 %v93
  %v339 = vunpack.c.l.b16 %v94
  %v340 = vunpack.c.l.b16 %v95
  %v341 = vunpack.c.l.b16 %v96
  %v342 = vunpack.c.l.b16 %v97
  %v343 = vunpack.c.l.b16 %v98
  %v344 = vunpack.c.l.b16 %v99
  %v345 = vunpack.c.l.b16 %v100
  %v346 = vunpack.c.l.b16 %v101
  %v347 = vunpack.c.l.b16 %v102
  %v348 = vunpack.c.l.b16 %v103
  %v349 = vunpack.c.l.b16 %v104
  %v350 = vunpack.c.l.b16 %v105
  %v351 = vunpack.c.l.b16 %v106
  %v352 = vunpack.c.l.b16 %v107
  %v353 = vunpack.c.l.b16 %v108
  %v354 = vunpack.c.l.b16 %v109
  %v355 = vunpack.c.l.b16 %v110
  %v356 = vunpack.c.l.b16 %v111
  %v357 = vunpack.c.l.b16 %v112
  %v358 = vunpack.c.l.b16 %v113
  %v359 = vunpack.c.l.b16 %v114
  %v360 = vunpack.c.l.b16 %v115
  %v361 = vunpack.c.l.b16 %v116
  %v362 = vunpack.c.l.b16 %v117
  %v363 = vunpack.c.l.b16 %v118
  %v364 = vunpack.c.l.b16 %v119
  %v365 = vunpack.c.l.b16 %v120
  %v366 = vunpack.c.l.b16 %v121
  %v367 = vunpack.c.l.b16 %v122
  %v368 = vunpack.c.l.b16 %v123
  %v369 = vunpack.c.l.b16 %v124
  %v370 = vunpack.c.l.b16 %v125
  %v371 = vunpack.c.l.b16 %v126
  %v372 = vunpack.c.l.b16 %v127
  %v373 = vunpack.c.l.b16 %v128
  %v374 = vunpack.c.l.b16 %v129
  %v375 = vunpack.c.l.b16 %v130
  %v376 = vunpack.c.l.b16 %v131
  %v377 = vunpack.c.l.b16 %v132
  %v378 = vunpack.c.l.b16 %v133
  %v379 = vunpack.c.l.b16 %v134
  %v380 = vunpack.c.l.b16 %v135
  %v381 = vunpack.c.l.b16 %v136
  %v382 = vunpack.c.l.b16 %v137
  %v383 = vunpack.c.l.b16 %v138
  %v384 = vunpack.c.l.b16 %v139
  %v385 = vunpack.c.l.b16 %v140
  %v386 = vunpack.c.l.b16 %v141
  %v387 = vunpack.c.l.b16 %v142
  %v388 = vunpack.c.l.b16 %v143
  %v389 = vunpack.c.l.b16 %v144
  %v390 = vunpack.c.l.b16 %v145
  %v391 = vunpack.c.l.b16 %v146
  %v392 = vpack.c.b16 %v273, %v272
  %v393 = vpack.c.b16 %v275, %v274
  %v394 = vpack.c.b16 %v277, %v276
  %v395 = vpack.c.b16 %v279, %v278
  %v396 = vpack.c.b16 %v281, %v280
  %v397 = vpack.c.b16 %v283, %v282
  %v398 = vpack.c.b16 %v285, %v284
  %v399 = vpack.c.b16 %v287, %v286
  %v400 = vpack.c.b16 %v289, %v288
  %v401 = vpack.c.b16 %v291, %v290
  %v402 = vpack.c.b16 %v293, %v292
  %v403 = vpack.c.b16 %v295, %v294
  %v404 = vpack.c.b16 %v297, %v296
  %v405 = vpack.c.b16 %v299, %v298
  %v406 = vpack.c.b16 %v301, %v300
  %v407 = vpack.c.b16 %v303, %v302
  %v408 = vpack.c.b16 %v305, %v304
  %v409 = vpack.c.b16 %v307, %v306
  %v410 = vpack.c.b16 %v309, %v308
  %v411 = vpack.c.b16 %v311, %v310
  %v412 = vpack.c.b16 %v313, %v312
  %v413 = vpack.c.b16 %v315, %v314
  %v414 = vpack.c.b16 %v317, %v316
  %v415 = vpack.c.b16 %v319, %v318
  %v416 = vpack.c.b16 %v321, %v320
  %v417 = vpack.c.b16 %v323, %v322
  %v418 = vpack.c.b16 %v325, %v324
  %v419 = vpack.c.b16 %v327, %v326
  %v420 = vpack.c.b16 %v329, %v328
  %v421 = vpack.c.b16 %v331, %v330
  %v422 = vpack.c.b16 %v333, %v332
  %v423 = vpack.c.b16 %v335, %v334
  %v424 = vpack.c.b16 %v337, %v336
  %v425 = vpack.c.b16 %v339, %v338
  %v426 = vpack.c.b16 %v341, %v340
  %v427 = vpack.c.b16 %v343, %v342
  %v428 = vpack.c.b16 %v345, %v344
  %v429 = vpack.c.b16 %v347, %v346
  %v430 = vpack.c.b16 %v349, %v348
  %v431 = vpack.c.b16 %v351, %v350
  %v432 = vpack.c.b16 %v353, %v352
  %v433 = vpack.c.b16 %v355, %v354
  %v434 = vpack.c.b16 %v357, %v356
  %v435 = vpack.c.b16 %v359, %v358
  %v436 = vpack.c.b16 %v361, %v360
  %v437 = vpack.c.b16 %v363, %v362
  %v438 = vpack.c.b16 %v365, %v364
  %v439 = vpack.c.b16 %v367, %v366
  %v440 = vpack.c.b16 %v369, %v368
  %v441 = vpack.c.b16 %v371, %v370
  %v442 = vpack.c.b16 %v373, %v372
  %v443 = vpack.c.b16 %v375, %v374
  %v444 = vpack.c.b16 %v377, %v376
  %v445 = vpack.c.b16 %v379, %v378
  %v446 = vpack.c.b16 %v381, %v380
  %v447 = vpack.c.b16 %v383, %v382
  %v448 = vpack.c.b16 %v385, %v384
  %v449 = vpack.c.b16 %v387, %v386
  %v450 = vpack.c.b16 %v389, %v388
  %v451 = vpack.c.b16 %v391, %v390
  %vm452 = vcmask 64512
  %v454 = vsel %vm452, %v392, 0
  %v457 = vsel %vm452, %v393, 0
  %v460 = vsel %vm452, %v394, 0
  %v463 = vsel %vm452, %v395, 0
  %v466 = vsel %vm452, %v396, 0
  %v469 = vsel %vm452, %v397, 0
  %v472 = vsel %vm452, %v398, 0
  %v475 = vsel %vm452, %v399, 0
  %v478 = vsel %vm452, %v400, 0
  %v481 = vsel %vm452, %v401, 0
  %v484 = vsel %vm452, %v402, 0
  %v487 = vsel %vm452, %v403, 0
  %v490 = vsel %vm452, %v404, 0
  %v493 = vsel %vm452, %v405, 0
  %v496 = vsel %vm452, %v406, 0
  %v499 = vsel %vm452, %v407, 0
  %v502 = vsel %vm452, %v408, 0
  %v505 = vsel %vm452, %v409, 0
  %v508 = vsel %vm452, %v410, 0
  %v511 = vsel %vm452, %v411, 0
  %v514 = vsel %vm452, %v412, 0
  %v517 = vsel %vm452, %v413, 0
  %v520 = vsel %vm452, %v414, 0
  %v523 = vsel %vm452, %v415, 0
  %v526 = vsel %vm452, %v416, 0
  %v529 = vsel %vm452, %v417, 0
  %v532 = vsel %vm452, %v418, 0
  %v535 = vsel %vm452, %v419, 0
  %v538 = vsel %vm452, %v420, 0
  %v541 = vsel %vm452, %v421, 0
  %v544 = vsel %vm452, %v422, 0
  %v547 = vsel %vm452, %v423, 0
  %v550 = vsel %vm452, %v424, 0
  %v553 = vsel %vm452, %v425, 0
  %v556 = vsel %vm452, %v426, 0
  %v559 = vsel %vm452, %v427, 0
  %v562 = vsel %vm452, %v428, 0
  %v565 = vsel %vm452, %v429, 0
  %v568 = vsel %vm452, %v430, 0
  %v571 = vsel %vm452, %v431, 0
  %v574 = vsel %vm452, %v432, 0
  %v577 = vsel %vm452, %v433, 0
  %v580 = vsel %vm452, %v434, 0
  %v583 = vsel %vm452, %v435, 0
  %v586 = vsel %vm452, %v436, 0
  %v589 = vsel %vm452, %v437, 0
  %v592 = vsel %vm452, %v438, 0
  %v595 = vsel %vm452, %v439, 0
  %v598 = vsel %vm452, %v440, 0
  %v601 = vsel %vm452, %v441, 0
  %v604 = vsel %vm452, %v442, 0
  %v607 = vsel %vm452, %v443, 0
  %v610 = vsel %vm452, %v444, 0
  %v613 = vsel %vm452, %v445, 0
  %v616 = vsel %vm452, %v446, 0
  %v619 = vsel %vm452, %v447, 0
  %v622 = vsel %vm452, %v448, 0
  %v625 = vsel %vm452, %v449, 0
  %v628 = vsel %vm452, %v450, 0
  %v631 = vsel %vm452, %v451, 0
  %vm633 = vcmask 1043456
  %v635 = vsel %vm633, %v147, 0
  %637 = vmatpush.bf16.msra.mxu0 0
  %638 = vmatpush.bf16.msra.mxu0 0
  %639 = vmatpush.bf16.msra.mxu0 0
  %640 = vmatpush.bf16.msra.mxu0 0
  %641 = vmatpush.bf16.msra.mxu0 0
  %642 = vmatpush.bf16.msra.mxu0 0
  %643 = vmatpush.bf16.msra.mxu0 0
  %644 = vmatpush.bf16.msra.mxu0 %v635
  %645 = vmatmul.bf16.gmra.mxu0 %v454
  %v646 = vpop.f32.mrf.mxu0
  %v647 = vadd.f32 %v150, %v646
  %v648 = vpop.f32.mrf.mxu0
  %v649 = vadd.f32 %v150, %v648
  %650 = vmatmul.bf16.gmra.mxu0 %v457
  %v651 = vpop.f32.mrf.mxu0
  %v652 = vadd.f32 %v150, %v651
  %v653 = vpop.f32.mrf.mxu0
  %v654 = vadd.f32 %v150, %v653
  %655 = vmatmul.bf16.gmra.mxu0 %v460
  %v656 = vpop.f32.mrf.mxu0
  %v657 = vadd.f32 %v150, %v656
  %v658 = vpop.f32.mrf.mxu0
  %v659 = vadd.f32 %v150, %v658
  %660 = vmatmul.bf16.gmra.mxu0 %v463
  %v661 = vpop.f32.mrf.mxu0
  %v662 = vadd.f32 %v150, %v661
  %v663 = vpop.f32.mrf.mxu0
  %v664 = vadd.f32 %v150, %v663
  %665 = vmatmul.bf16.gmra.mxu0 %v466
  %v666 = vpop.f32.mrf.mxu0
  %v667 = vadd.f32 %v150, %v666
  %v668 = vpop.f32.mrf.mxu0
  %v669 = vadd.f32 %v150, %v668
  %670 = vmatmul.bf16.gmra.mxu0 %v469
  %v671 = vpop.f32.mrf.mxu0
  %v672 = vadd.f32 %v150, %v671
  %v673 = vpop.f32.mrf.mxu0
  %v674 = vadd.f32 %v150, %v673
  %675 = vmatmul.bf16.gmra.mxu0 %v472
  %v676 = vpop.f32.mrf.mxu0
  %v677 = vadd.f32 %v150, %v676
  %v678 = vpop.f32.mrf.mxu0
  %v679 = vadd.f32 %v150, %v678
  %680 = vmatmul.bf16.gmra.mxu0 %v475
  %v681 = vpop.f32.mrf.mxu0
  %v682 = vadd.f32 %v150, %v681
  %v683 = vpop.f32.mrf.mxu0
  %v684 = vadd.f32 %v150, %v683
  %685 = vmatmul.bf16.gmra.mxu0 %v478
  %v686 = vpop.f32.mrf.mxu0
  %v687 = vadd.f32 %v150, %v686
  %v688 = vpop.f32.mrf.mxu0
  %v689 = vadd.f32 %v150, %v688
  %690 = vmatmul.bf16.gmra.mxu0 %v481
  %v691 = vpop.f32.mrf.mxu0
  %v692 = vadd.f32 %v150, %v691
  %v693 = vpop.f32.mrf.mxu0
  %v694 = vadd.f32 %v150, %v693
  %695 = vmatmul.bf16.gmra.mxu0 %v484
  %v696 = vpop.f32.mrf.mxu0
  %v697 = vadd.f32 %v150, %v696
  %v698 = vpop.f32.mrf.mxu0
  %v699 = vadd.f32 %v150, %v698
  %700 = vmatmul.bf16.gmra.mxu0 %v487
  %v701 = vpop.f32.mrf.mxu0
  %v702 = vadd.f32 %v150, %v701
  %v703 = vpop.f32.mrf.mxu0
  %v704 = vadd.f32 %v150, %v703
  %705 = vmatmul.bf16.gmra.mxu0 %v490
  %v706 = vpop.f32.mrf.mxu0
  %v707 = vadd.f32 %v150, %v706
  %v708 = vpop.f32.mrf.mxu0
  %v709 = vadd.f32 %v150, %v708
  %710 = vmatmul.bf16.gmra.mxu0 %v493
  %v711 = vpop.f32.mrf.mxu0
  %v712 = vadd.f32 %v150, %v711
  %v713 = vpop.f32.mrf.mxu0
  %v714 = vadd.f32 %v150, %v713
  %715 = vmatmul.bf16.gmra.mxu0 %v496
  %v716 = vpop.f32.mrf.mxu0
  %v717 = vadd.f32 %v150, %v716
  %v718 = vpop.f32.mrf.mxu0
  %v719 = vadd.f32 %v150, %v718
  %720 = vmatmul.bf16.gmra.mxu0 %v499
  %v721 = vpop.f32.mrf.mxu0
  %v722 = vadd.f32 %v150, %v721
  %v723 = vpop.f32.mrf.mxu0
  %v724 = vadd.f32 %v150, %v723
  %725 = vmatmul.bf16.gmra.mxu0 %v502
  %v726 = vpop.f32.mrf.mxu0
  %v727 = vadd.f32 %v150, %v726
  %v728 = vpop.f32.mrf.mxu0
  %v729 = vadd.f32 %v150, %v728
  %730 = vmatmul.bf16.gmra.mxu0 %v505
  %v731 = vpop.f32.mrf.mxu0
  %v732 = vadd.f32 %v150, %v731
  %v733 = vpop.f32.mrf.mxu0
  %v734 = vadd.f32 %v150, %v733
  %735 = vmatmul.bf16.gmra.mxu0 %v508
  %v736 = vpop.f32.mrf.mxu0
  %v737 = vadd.f32 %v150, %v736
  %v738 = vpop.f32.mrf.mxu0
  %v739 = vadd.f32 %v150, %v738
  %740 = vmatmul.bf16.gmra.mxu0 %v511
  %v741 = vpop.f32.mrf.mxu0
  %v742 = vadd.f32 %v150, %v741
  %v743 = vpop.f32.mrf.mxu0
  %v744 = vadd.f32 %v150, %v743
  %745 = vmatmul.bf16.gmra.mxu0 %v514
  %v746 = vpop.f32.mrf.mxu0
  %v747 = vadd.f32 %v150, %v746
  %v748 = vpop.f32.mrf.mxu0
  %v749 = vadd.f32 %v150, %v748
  %750 = vmatmul.bf16.gmra.mxu0 %v517
  %v751 = vpop.f32.mrf.mxu0
  %v752 = vadd.f32 %v150, %v751
  %v753 = vpop.f32.mrf.mxu0
  %v754 = vadd.f32 %v150, %v753
  %755 = vmatmul.bf16.gmra.mxu0 %v520
  %v756 = vpop.f32.mrf.mxu0
  %v757 = vadd.f32 %v150, %v756
  %v758 = vpop.f32.mrf.mxu0
  %v759 = vadd.f32 %v150, %v758
  %760 = vmatmul.bf16.gmra.mxu0 %v523
  %v761 = vpop.f32.mrf.mxu0
  %v762 = vadd.f32 %v150, %v761
  %v763 = vpop.f32.mrf.mxu0
  %v764 = vadd.f32 %v150, %v763
  %765 = vmatmul.bf16.gmra.mxu0 %v526
  %v766 = vpop.f32.mrf.mxu0
  %v767 = vadd.f32 %v150, %v766
  %v768 = vpop.f32.mrf.mxu0
  %v769 = vadd.f32 %v150, %v768
  %770 = vmatmul.bf16.gmra.mxu0 %v529
  %v771 = vpop.f32.mrf.mxu0
  %v772 = vadd.f32 %v150, %v771
  %v773 = vpop.f32.mrf.mxu0
  %v774 = vadd.f32 %v150, %v773
  %775 = vmatmul.bf16.gmra.mxu0 %v532
  %v776 = vpop.f32.mrf.mxu0
  %v777 = vadd.f32 %v150, %v776
  %v778 = vpop.f32.mrf.mxu0
  %v779 = vadd.f32 %v150, %v778
  %780 = vmatmul.bf16.gmra.mxu0 %v535
  %v781 = vpop.f32.mrf.mxu0
  %v782 = vadd.f32 %v150, %v781
  %v783 = vpop.f32.mrf.mxu0
  %v784 = vadd.f32 %v150, %v783
  %785 = vmatmul.bf16.gmra.mxu0 %v538
  %v786 = vpop.f32.mrf.mxu0
  %v787 = vadd.f32 %v150, %v786
  %v788 = vpop.f32.mrf.mxu0
  %v789 = vadd.f32 %v150, %v788
  %790 = vmatmul.bf16.gmra.mxu0 %v541
  %v791 = vpop.f32.mrf.mxu0
  %v792 = vadd.f32 %v150, %v791
  %v793 = vpop.f32.mrf.mxu0
  %v794 = vadd.f32 %v150, %v793
  %795 = vmatmul.bf16.gmra.mxu0 %v544
  %v796 = vpop.f32.mrf.mxu0
  %v797 = vadd.f32 %v150, %v796
  %v798 = vpop.f32.mrf.mxu0
  %v799 = vadd.f32 %v150, %v798
  %800 = vmatmul.bf16.gmra.mxu0 %v547
  %v801 = vpop.f32.mrf.mxu0
  %v802 = vadd.f32 %v150, %v801
  %v803 = vpop.f32.mrf.mxu0
  %v804 = vadd.f32 %v150, %v803
  %805 = vmatmul.bf16.gmra.mxu0 %v550
  %v806 = vpop.f32.mrf.mxu0
  %v807 = vadd.f32 %v150, %v806
  %v808 = vpop.f32.mrf.mxu0
  %v809 = vadd.f32 %v150, %v808
  %810 = vmatmul.bf16.gmra.mxu0 %v553
  %v811 = vpop.f32.mrf.mxu0
  %v812 = vadd.f32 %v150, %v811
  %v813 = vpop.f32.mrf.mxu0
  %v814 = vadd.f32 %v150, %v813
  %815 = vmatmul.bf16.gmra.mxu0 %v556
  %v816 = vpop.f32.mrf.mxu0
  %v817 = vadd.f32 %v150, %v816
  %v818 = vpop.f32.mrf.mxu0
  %v819 = vadd.f32 %v150, %v818
  %820 = vmatmul.bf16.gmra.mxu0 %v559
  %v821 = vpop.f32.mrf.mxu0
  %v822 = vadd.f32 %v150, %v821
  %v823 = vpop.f32.mrf.mxu0
  %v824 = vadd.f32 %v150, %v823
  %825 = vmatmul.bf16.gmra.mxu0 %v562
  %v826 = vpop.f32.mrf.mxu0
  %v827 = vadd.f32 %v150, %v826
  %v828 = vpop.f32.mrf.mxu0
  %v829 = vadd.f32 %v150, %v828
  %830 = vmatmul.bf16.gmra.mxu0 %v565
  %v831 = vpop.f32.mrf.mxu0
  %v832 = vadd.f32 %v150, %v831
  %v833 = vpop.f32.mrf.mxu0
  %v834 = vadd.f32 %v150, %v833
  %835 = vmatmul.bf16.gmra.mxu0 %v568
  %v836 = vpop.f32.mrf.mxu0
  %v837 = vadd.f32 %v150, %v836
  %v838 = vpop.f32.mrf.mxu0
  %v839 = vadd.f32 %v150, %v838
  %840 = vmatmul.bf16.gmra.mxu0 %v571
  %v841 = vpop.f32.mrf.mxu0
  %v842 = vadd.f32 %v150, %v841
  %v843 = vpop.f32.mrf.mxu0
  %v844 = vadd.f32 %v150, %v843
  %845 = vmatmul.bf16.gmra.mxu0 %v574
  %v846 = vpop.f32.mrf.mxu0
  %v847 = vadd.f32 %v150, %v846
  %v848 = vpop.f32.mrf.mxu0
  %v849 = vadd.f32 %v150, %v848
  %850 = vmatmul.bf16.gmra.mxu0 %v577
  %v851 = vpop.f32.mrf.mxu0
  %v852 = vadd.f32 %v150, %v851
  %v853 = vpop.f32.mrf.mxu0
  %v854 = vadd.f32 %v150, %v853
  %855 = vmatmul.bf16.gmra.mxu0 %v580
  %v856 = vpop.f32.mrf.mxu0
  %v857 = vadd.f32 %v150, %v856
  %v858 = vpop.f32.mrf.mxu0
  %v859 = vadd.f32 %v150, %v858
  %860 = vmatmul.bf16.gmra.mxu0 %v583
  %v861 = vpop.f32.mrf.mxu0
  %v862 = vadd.f32 %v150, %v861
  %v863 = vpop.f32.mrf.mxu0
  %v864 = vadd.f32 %v150, %v863
  %865 = vmatmul.bf16.gmra.mxu0 %v586
  %v866 = vpop.f32.mrf.mxu0
  %v867 = vadd.f32 %v150, %v866
  %v868 = vpop.f32.mrf.mxu0
  %v869 = vadd.f32 %v150, %v868
  %870 = vmatmul.bf16.gmra.mxu0 %v589
  %v871 = vpop.f32.mrf.mxu0
  %v872 = vadd.f32 %v150, %v871
  %v873 = vpop.f32.mrf.mxu0
  %v874 = vadd.f32 %v150, %v873
  %875 = vmatmul.bf16.gmra.mxu0 %v592
  %v876 = vpop.f32.mrf.mxu0
  %v877 = vadd.f32 %v150, %v876
  %v878 = vpop.f32.mrf.mxu0
  %v879 = vadd.f32 %v150, %v878
  %880 = vmatmul.bf16.gmra.mxu0 %v595
  %v881 = vpop.f32.mrf.mxu0
  %v882 = vadd.f32 %v150, %v881
  %v883 = vpop.f32.mrf.mxu0
  %v884 = vadd.f32 %v150, %v883
  %885 = vmatmul.bf16.gmra.mxu0 %v598
  %v886 = vpop.f32.mrf.mxu0
  %v887 = vadd.f32 %v150, %v886
  %v888 = vpop.f32.mrf.mxu0
  %v889 = vadd.f32 %v150, %v888
  %890 = vmatmul.bf16.gmra.mxu0 %v601
  %v891 = vpop.f32.mrf.mxu0
  %v892 = vadd.f32 %v150, %v891
  %v893 = vpop.f32.mrf.mxu0
  %v894 = vadd.f32 %v150, %v893
  %895 = vmatmul.bf16.gmra.mxu0 %v604
  %v896 = vpop.f32.mrf.mxu0
  %v897 = vadd.f32 %v150, %v896
  %v898 = vpop.f32.mrf.mxu0
  %v899 = vadd.f32 %v150, %v898
  %900 = vmatmul.bf16.gmra.mxu0 %v607
  %v901 = vpop.f32.mrf.mxu0
  %v902 = vadd.f32 %v150, %v901
  %v903 = vpop.f32.mrf.mxu0
  %v904 = vadd.f32 %v150, %v903
  %905 = vmatmul.bf16.gmra.mxu0 %v610
  %v906 = vpop.f32.mrf.mxu0
  %v907 = vadd.f32 %v150, %v906
  %v908 = vpop.f32.mrf.mxu0
  %v909 = vadd.f32 %v150, %v908
  %910 = vmatmul.bf16.gmra.mxu0 %v613
  %v911 = vpop.f32.mrf.mxu0
  %v912 = vadd.f32 %v150, %v911
  %v913 = vpop.f32.mrf.mxu0
  %v914 = vadd.f32 %v150, %v913
  %915 = vmatmul.bf16.gmra.mxu0 %v616
  %v916 = vpop.f32.mrf.mxu0
  %v917 = vadd.f32 %v150, %v916
  %v918 = vpop.f32.mrf.mxu0
  %v919 = vadd.f32 %v150, %v918
  %920 = vmatmul.bf16.gmra.mxu0 %v619
  %v921 = vpop.f32.mrf.mxu0
  %v922 = vadd.f32 %v150, %v921
  %v923 = vpop.f32.mrf.mxu0
  %v924 = vadd.f32 %v150, %v923
  %925 = vmatmul.bf16.gmra.mxu0 %v622
  %v926 = vpop.f32.mrf.mxu0
  %v927 = vadd.f32 %v150, %v926
  %v928 = vpop.f32.mrf.mxu0
  %v929 = vadd.f32 %v150, %v928
  %930 = vmatmul.bf16.gmra.mxu0 %v625
  %v931 = vpop.f32.mrf.mxu0
  %v932 = vadd.f32 %v150, %v931
  %v933 = vpop.f32.mrf.mxu0
  %v934 = vadd.f32 %v150, %v933
  %935 = vmatmul.bf16.gmra.mxu0 %v628
  %v936 = vpop.f32.mrf.mxu0
  %v937 = vadd.f32 %v150, %v936
  %v938 = vpop.f32.mrf.mxu0
  %v939 = vadd.f32 %v150, %v938
  %940 = vmatmul.bf16.gmra.mxu0 %v631
  %v941 = vpop.f32.mrf.mxu0
  %v942 = vadd.f32 %v150, %v941
  %v943 = vpop.f32.mrf.mxu0
  %v944 = vadd.f32 %v150, %v943
  %945 = vdwg.mxu0
  %v946 = vmax.f32 %v647, 0.0
  %v947 = vmax.f32 %v649, 0.0
  %v948 = vmax.f32 %v652, 0.0
  %v949 = vmax.f32 %v654, 0.0
  %v950 = vmax.f32 %v657, 0.0
  %v951 = vmax.f32 %v659, 0.0
  %v952 = vmax.f32 %v662, 0.0
  %v953 = vmax.f32 %v664, 0.0
  %v954 = vmax.f32 %v667, 0.0
  %v955 = vmax.f32 %v669, 0.0
  %v956 = vmax.f32 %v672, 0.0
  %v957 = vmax.f32 %v674, 0.0
  %v958 = vmax.f32 %v677, 0.0
  %v959 = vmax.f32 %v679, 0.0
  %v960 = vmax.f32 %v682, 0.0
  %v961 = vmax.f32 %v684, 0.0
  %v962 = vmax.f32 %v687, 0.0
  %v963 = vmax.f32 %v689, 0.0
  %v964 = vmax.f32 %v692, 0.0
  %v965 = vmax.f32 %v694, 0.0
  %v966 = vmax.f32 %v697, 0.0
  %v967 = vmax.f32 %v699, 0.0
  %v968 = vmax.f32 %v702, 0.0
  %v969 = vmax.f32 %v704, 0.0
  %v970 = vmax.f32 %v707, 0.0
  %v971 = vmax.f32 %v709, 0.0
  %v972 = vmax.f32 %v712, 0.0
  %v973 = vmax.f32 %v714, 0.0
  %v974 = vmax.f32 %v717, 0.0
  %v975 = vmax.f32 %v719, 0.0
  %v976 = vmax.f32 %v722, 0.0
  %v977 = vmax.f32 %v724, 0.0
  %v978 = vmax.f32 %v727, 0.0
  %v979 = vmax.f32 %v729, 0.0
  %v980 = vmax.f32 %v732, 0.0
  %v981 = vmax.f32 %v734, 0.0
  %v982 = vmax.f32 %v737, 0.0
  %v983 = vmax.f32 %v739, 0.0
  %v984 = vmax.f32 %v742, 0.0
  %v985 = vmax.f32 %v744, 0.0
  %v986 = vmax.f32 %v747, 0.0
  %v987 = vmax.f32 %v749, 0.0
  %v988 = vmax.f32 %v752, 0.0
  %v989 = vmax.f32 %v754, 0.0
  %v990 = vmax.f32 %v757, 0.0
  %v991 = vmax.f32 %v759, 0.0
  %v992 = vmax.f32 %v762, 0.0
  %v993 = vmax.f32 %v764, 0.0
  %v994 = vmax.f32 %v767, 0.0
  %v995 = vmax.f32 %v769, 0.0
  %v996 = vmax.f32 %v772, 0.0
  %v997 = vmax.f32 %v774, 0.0
  %v998 = vmax.f32 %v777, 0.0
  %v999 = vmax.f32 %v779, 0.0
  %v1000 = vmax.f32 %v782, 0.0
  %v1001 = vmax.f32 %v784, 0.0
  %v1002 = vmax.f32 %v787, 0.0
  %v1003 = vmax.f32 %v789, 0.0
  %v1004 = vmax.f32 %v792, 0.0
  %v1005 = vmax.f32 %v794, 0.0
  %v1006 = vmax.f32 %v797, 0.0
  %v1007 = vmax.f32 %v799, 0.0
  %v1008 = vmax.f32 %v802, 0.0
  %v1009 = vmax.f32 %v804, 0.0
  %v1010 = vmax.f32 %v807, 0.0
  %v1011 = vmax.f32 %v809, 0.0
  %v1012 = vmax.f32 %v812, 0.0
  %v1013 = vmax.f32 %v814, 0.0
  %v1014 = vmax.f32 %v817, 0.0
  %v1015 = vmax.f32 %v819, 0.0
  %v1016 = vmax.f32 %v822, 0.0
  %v1017 = vmax.f32 %v824, 0.0
  %v1018 = vmax.f32 %v827, 0.0
  %v1019 = vmax.f32 %v829, 0.0
  %v1020 = vmax.f32 %v832, 0.0
  %v1021 = vmax.f32 %v834, 0.0
  %v1022 = vmax.f32 %v837, 0.0
  %v1023 = vmax.f32 %v839, 0.0
  %v1024 = vmax.f32 %v842, 0.0
  %v1025 = vmax.f32 %v844, 0.0
  %v1026 = vmax.f32 %v847, 0.0
  %v1027 = vmax.f32 %v849, 0.0
  %v1028 = vmax.f32 %v852, 0.0
  %v1029 = vmax.f32 %v854, 0.0
  %v1030 = vmax.f32 %v857, 0.0
  %v1031 = vmax.f32 %v859, 0.0
  %v1032 = vmax.f32 %v862, 0.0
  %v1033 = vmax.f32 %v864, 0.0
  %v1034 = vmax.f32 %v867, 0.0
  %v1035 = vmax.f32 %v869, 0.0
  %v1036 = vmax.f32 %v872, 0.0
  %v1037 = vmax.f32 %v874, 0.0
  %v1038 = vmax.f32 %v877, 0.0
  %v1039 = vmax.f32 %v879, 0.0
  %v1040 = vmax.f32 %v882, 0.0
  %v1041 = vmax.f32 %v884, 0.0
  %v1042 = vmax.f32 %v887, 0.0
  %v1043 = vmax.f32 %v889, 0.0
  %v1044 = vmax.f32 %v892, 0.0
  %v1045 = vmax.f32 %v894, 0.0
  %v1046 = vmax.f32 %v897, 0.0
  %v1047 = vmax.f32 %v899, 0.0
  %v1048 = vmax.f32 %v902, 0.0
  %v1049 = vmax.f32 %v904, 0.0
  %v1050 = vmax.f32 %v907, 0.0
  %v1051 = vmax.f32 %v909, 0.0
  %v1052 = vmax.f32 %v912, 0.0
  %v1053 = vmax.f32 %v914, 0.0
  %v1054 = vmax.f32 %v917, 0.0
  %v1055 = vmax.f32 %v919, 0.0
  %v1056 = vmax.f32 %v922, 0.0
  %v1057 = vmax.f32 %v924, 0.0
  %v1058 = vmax.f32 %v927, 0.0
  %v1059 = vmax.f32 %v929, 0.0
  %v1060 = vmax.f32 %v932, 0.0
  %v1061 = vmax.f32 %v934, 0.0
  %v1062 = vmax.f32 %v937, 0.0
  %v1063 = vmax.f32 %v939, 0.0
  %v1064 = vmax.f32 %v942, 0.0
  %v1065 = vmax.f32 %v944, 0.0
  %1066 = vst [vmem:[#allocation2] sm:$0xf] 0
  %1067 = vst [vmem:[#allocation2 + $0x4] sm:$0xf] 0
  %1068 = vst [vmem:[#allocation2 + $0x8] sm:$0xf] 0
  %1069 = vst [vmem:[#allocation2 + $0xc] sm:$0xf] 0
  %1070 = vst [vmem:[#allocation2 + $0x10] sm:$0xf] 0
  %1071 = vst [vmem:[#allocation2 + $0x14] sm:$0xf] 0
  %1072 = vst [vmem:[#allocation2 + $0x18] sm:$0xf] 0
  %1073 = vst [vmem:[#allocation2 + $0x1c] sm:$0xf] 0
  %1074 = vst [vmem:[#allocation2 + $0x20] sm:$0xf] 0
  %1075 = vst [vmem:[#allocation2 + $0x24] sm:$0xf] 0
  %1076 = vst [vmem:[#allocation2 + $0x28] sm:$0xf] 0
  %1077 = vst [vmem:[#allocation2 + $0x2c] sm:$0xf] 0
  %1078 = vst [vmem:[#allocation2 + $0x30] sm:$0xf] 0
  %1079 = vst [vmem:[#allocation2 + $0x34] sm:$0xf] 0
  %1080 = vst [vmem:[#allocation2 + $0x38] sm:$0xf] 0
  %1081 = vst [vmem:[#allocation2 + $0x3c] sm:$0xf] 0
  %s1082 = scalar_lea.vmem [#allocation2], 544
  %1083 = vst [vmem:[%s1082] sm:$0xf] 0
  %1084 = vst [vmem:[%s1082 + $0x4] sm:$0xf] 0
  %1085 = vst [vmem:[%s1082 + $0x8] sm:$0xf] 0
  %1086 = vst [vmem:[%s1082 + $0xc] sm:$0xf] 0
  %1087 = vst [vmem:[%s1082 + $0x10] sm:$0xf] 0
  %1088 = vst [vmem:[%s1082 + $0x14] sm:$0xf] 0
  %1089 = vst [vmem:[%s1082 + $0x18] sm:$0xf] 0
  %1090 = vst [vmem:[%s1082 + $0x1c] sm:$0xf] 0
  %1091 = vst [vmem:[%s1082 + $0x20] sm:$0xf] 0
  %1092 = vst [vmem:[%s1082 + $0x24] sm:$0xf] 0
  %1093 = vst [vmem:[%s1082 + $0x28] sm:$0xf] 0
  %1094 = vst [vmem:[%s1082 + $0x2c] sm:$0xf] 0
  %1095 = vst [vmem:[%s1082 + $0x30] sm:$0xf] 0
  %1096 = vst [vmem:[%s1082 + $0x34] sm:$0xf] 0
  %1097 = vst [vmem:[%s1082 + $0x38] sm:$0xf] 0
  %1098 = vst [vmem:[%s1082 + $0x3c] sm:$0xf] 0
  %v1099 = vpack.c.bf16 %v946, %v946
  %v1100 = vpack.c.bf16 %v947, %v947
  %v1101 = vpack.c.bf16 %v948, %v948
  %v1102 = vpack.c.bf16 %v949, %v949
  %v1103 = vpack.c.bf16 %v950, %v950
  %v1104 = vpack.c.bf16 %v951, %v951
  %v1105 = vpack.c.bf16 %v952, %v952
  %v1106 = vpack.c.bf16 %v953, %v953
  %v1107 = vpack.c.bf16 %v954, %v954
  %v1108 = vpack.c.bf16 %v955, %v955
  %v1109 = vpack.c.bf16 %v956, %v956
  %v1110 = vpack.c.bf16 %v957, %v957
  %v1111 = vpack.c.bf16 %v958, %v958
  %v1112 = vpack.c.bf16 %v959, %v959
  %v1113 = vpack.c.bf16 %v960, %v960
  %v1114 = vpack.c.bf16 %v961, %v961
  %v1115 = vpack.c.bf16 %v962, %v962
  %v1116 = vpack.c.bf16 %v963, %v963
  %v1117 = vpack.c.bf16 %v964, %v964
  %v1118 = vpack.c.bf16 %v965, %v965
  %v1119 = vpack.c.bf16 %v966, %v966
  %v1120 = vpack.c.bf16 %v967, %v967
  %v1121 = vpack.c.bf16 %v968, %v968
  %v1122 = vpack.c.bf16 %v969, %v969
  %v1123 = vpack.c.bf16 %v970, %v970
  %v1124 = vpack.c.bf16 %v971, %v971
  %v1125 = vpack.c.bf16 %v972, %v972
  %v1126 = vpack.c.bf16 %v973, %v973
  %v1127 = vpack.c.bf16 %v974, %v974
  %v1128 = vpack.c.bf16 %v975, %v975
  %v1129 = vpack.c.bf16 %v976, %v976
  %v1130 = vpack.c.bf16 %v977, %v977
  %v1131 = vpack.c.bf16 %v978, %v978
  %v1132 = vpack.c.bf16 %v979, %v979
  %v1133 = vpack.c.bf16 %v980, %v980
  %v1134 = vpack.c.bf16 %v981, %v981
  %v1135 = vpack.c.bf16 %v982, %v982
  %v1136 = vpack.c.bf16 %v983, %v983
  %v1137 = vpack.c.bf16 %v984, %v984
  %v1138 = vpack.c.bf16 %v985, %v985
  %v1139 = vpack.c.bf16 %v986, %v986
  %v1140 = vpack.c.bf16 %v987, %v987
  %v1141 = vpack.c.bf16 %v988, %v988
  %v1142 = vpack.c.bf16 %v989, %v989
  %v1143 = vpack.c.bf16 %v990, %v990
  %v1144 = vpack.c.bf16 %v991, %v991
  %v1145 = vpack.c.bf16 %v992, %v992
  %v1146 = vpack.c.bf16 %v993, %v993
  %v1147 = vpack.c.bf16 %v994, %v994
  %v1148 = vpack.c.bf16 %v995, %v995
  %v1149 = vpack.c.bf16 %v996, %v996
  %v1150 = vpack.c.bf16 %v997, %v997
  %v1151 = vpack.c.bf16 %v998, %v998
  %v1152 = vpack.c.bf16 %v999, %v999
  %v1153 = vpack.c.bf16 %v1000, %v1000
  %v1154 = vpack.c.bf16 %v1001, %v1001
  %v1155 = vpack.c.bf16 %v1002, %v1002
  %v1156 = vpack.c.bf16 %v1003, %v1003
  %v1157 = vpack.c.bf16 %v1004, %v1004
  %v1158 = vpack.c.bf16 %v1005, %v1005
  %v1159 = vpack.c.bf16 %v1006, %v1006
  %v1160 = vpack.c.bf16 %v1007, %v1007
  %v1161 = vpack.c.bf16 %v1008, %v1008
  %v1162 = vpack.c.bf16 %v1009, %v1009
  %v1163 = vpack.c.bf16 %v1010, %v1010
  %v1164 = vpack.c.bf16 %v1011, %v1011
  %v1165 = vpack.c.bf16 %v1012, %v1012
  %v1166 = vpack.c.bf16 %v1013, %v1013
  %v1167 = vpack.c.bf16 %v1014, %v1014
  %v1168 = vpack.c.bf16 %v1015, %v1015
  %v1169 = vpack.c.bf16 %v1016, %v1016
  %v1170 = vpack.c.bf16 %v1017, %v1017
  %v1171 = vpack.c.bf16 %v1018, %v1018
  %v1172 = vpack.c.bf16 %v1019, %v1019
  %v1173 = vpack.c.bf16 %v1020, %v1020
  %v1174 = vpack.c.bf16 %v1021, %v1021
  %v1175 = vpack.c.bf16 %v1022, %v1022
  %v1176 = vpack.c.bf16 %v1023, %v1023
  %v1177 = vpack.c.bf16 %v1024, %v1024
  %v1178 = vpack.c.bf16 %v1025, %v1025
  %v1179 = vpack.c.bf16 %v1026, %v1026
  %v1180 = vpack.c.bf16 %v1027, %v1027
  %v1181 = vpack.c.bf16 %v1028, %v1028
  %v1182 = vpack.c.bf16 %v1029, %v1029
  %v1183 = vpack.c.bf16 %v1030, %v1030
  %v1184 = vpack.c.bf16 %v1031, %v1031
  %v1185 = vpack.c.bf16 %v1032, %v1032
  %v1186 = vpack.c.bf16 %v1033, %v1033
  %v1187 = vpack.c.bf16 %v1034, %v1034
  %v1188 = vpack.c.bf16 %v1035, %v1035
  %v1189 = vpack.c.bf16 %v1036, %v1036
  %v1190 = vpack.c.bf16 %v1037, %v1037
  %v1191 = vpack.c.bf16 %v1038, %v1038
  %v1192 = vpack.c.bf16 %v1039, %v1039
  %v1193 = vpack.c.bf16 %v1040, %v1040
  %v1194 = vpack.c.bf16 %v1041, %v1041
  %v1195 = vpack.c.bf16 %v1042, %v1042
  %v1196 = vpack.c.bf16 %v1043, %v1043
  %v1197 = vpack.c.bf16 %v1044, %v1044
  %v1198 = vpack.c.bf16 %v1045, %v1045
  %v1199 = vpack.c.bf16 %v1046, %v1046
  %v1200 = vpack.c.bf16 %v1047, %v1047
  %v1201 = vpack.c.bf16 %v1048, %v1048
  %v1202 = vpack.c.bf16 %v1049, %v1049
  %v1203 = vpack.c.bf16 %v1050, %v1050
  %v1204 = vpack.c.bf16 %v1051, %v1051
  %v1205 = vpack.c.bf16 %v1052, %v1052
  %v1206 = vpack.c.bf16 %v1053, %v1053
  %v1207 = vpack.c.bf16 %v1054, %v1054
  %v1208 = vpack.c.bf16 %v1055, %v1055
  %v1209 = vpack.c.bf16 %v1056, %v1056
  %v1210 = vpack.c.bf16 %v1057, %v1057
  %v1211 = vpack.c.bf16 %v1058, %v1058
  %v1212 = vpack.c.bf16 %v1059, %v1059
  %v1213 = vpack.c.bf16 %v1060, %v1060
  %v1214 = vpack.c.bf16 %v1061, %v1061
  %v1215 = vpack.c.bf16 %v1062, %v1062
  %v1216 = vpack.c.bf16 %v1063, %v1063
  %v1217 = vpack.c.bf16 %v1064, %v1064
  %v1218 = vpack.c.bf16 %v1065, %v1065
  %s1219 = scalar_lea.vmem [#allocation2], 64
  %1220 = vst [vmem:[%s1219] sm:$0xf] %v1099
  %1221 = vst [vmem:[%s1219 + $0x4] sm:$0xf] %v1100
  %1222 = vst [vmem:[%s1219 + $0x8] sm:$0xf] %v1101
  %1223 = vst [vmem:[%s1219 + $0xc] sm:$0xf] %v1102
  %1224 = vst [vmem:[%s1219 + $0x10] sm:$0xf] %v1103
  %1225 = vst [vmem:[%s1219 + $0x14] sm:$0xf] %v1104
  %1226 = vst [vmem:[%s1219 + $0x18] sm:$0xf] %v1105
  %1227 = vst [vmem:[%s1219 + $0x1c] sm:$0xf] %v1106
  %1228 = vst [vmem:[%s1219 + $0x20] sm:$0xf] %v1107
  %1229 = vst [vmem:[%s1219 + $0x24] sm:$0xf] %v1108
  %1230 = vst [vmem:[%s1219 + $0x28] sm:$0xf] %v1109
  %1231 = vst [vmem:[%s1219 + $0x2c] sm:$0xf] %v1110
  %1232 = vst [vmem:[%s1219 + $0x30] sm:$0xf] %v1111
  %1233 = vst [vmem:[%s1219 + $0x34] sm:$0xf] %v1112
  %1234 = vst [vmem:[%s1219 + $0x38] sm:$0xf] %v1113
  %1235 = vst [vmem:[%s1219 + $0x3c] sm:$0xf] %v1114
  %1236 = vst [vmem:[%s1219 + $0x40] sm:$0xf] %v1115
  %1237 = vst [vmem:[%s1219 + $0x44] sm:$0xf] %v1116
  %1238 = vst [vmem:[%s1219 + $0x48] sm:$0xf] %v1117
  %1239 = vst [vmem:[%s1219 + $0x4c] sm:$0xf] %v1118
  %1240 = vst [vmem:[%s1219 + $0x50] sm:$0xf] %v1119
  %1241 = vst [vmem:[%s1219 + $0x54] sm:$0xf] %v1120
  %1242 = vst [vmem:[%s1219 + $0x58] sm:$0xf] %v1121
  %1243 = vst [vmem:[%s1219 + $0x5c] sm:$0xf] %v1122
  %1244 = vst [vmem:[%s1219 + $0x60] sm:$0xf] %v1123
  %1245 = vst [vmem:[%s1219 + $0x64] sm:$0xf] %v1124
  %1246 = vst [vmem:[%s1219 + $0x68] sm:$0xf] %v1125
  %1247 = vst [vmem:[%s1219 + $0x6c] sm:$0xf] %v1126
  %1248 = vst [vmem:[%s1219 + $0x70] sm:$0xf] %v1127
  %1249 = vst [vmem:[%s1219 + $0x74] sm:$0xf] %v1128
  %1250 = vst [vmem:[%s1219 + $0x78] sm:$0xf] %v1129
  %1251 = vst [vmem:[%s1219 + $0x7c] sm:$0xf] %v1130
  %1252 = vst [vmem:[%s1219 + $0x80] sm:$0xf] %v1131
  %1253 = vst [vmem:[%s1219 + $0x84] sm:$0xf] %v1132
  %1254 = vst [vmem:[%s1219 + $0x88] sm:$0xf] %v1133
  %1255 = vst [vmem:[%s1219 + $0x8c] sm:$0xf] %v1134
  %1256 = vst [vmem:[%s1219 + $0x90] sm:$0xf] %v1135
  %1257 = vst [vmem:[%s1219 + $0x94] sm:$0xf] %v1136
  %1258 = vst [vmem:[%s1219 + $0x98] sm:$0xf] %v1137
  %1259 = vst [vmem:[%s1219 + $0x9c] sm:$0xf] %v1138
  %1260 = vst [vmem:[%s1219 + $0xa0] sm:$0xf] %v1139
  %1261 = vst [vmem:[%s1219 + $0xa4] sm:$0xf] %v1140
  %1262 = vst [vmem:[%s1219 + $0xa8] sm:$0xf] %v1141
  %1263 = vst [vmem:[%s1219 + $0xac] sm:$0xf] %v1142
  %1264 = vst [vmem:[%s1219 + $0xb0] sm:$0xf] %v1143
  %1265 = vst [vmem:[%s1219 + $0xb4] sm:$0xf] %v1144
  %1266 = vst [vmem:[%s1219 + $0xb8] sm:$0xf] %v1145
  %1267 = vst [vmem:[%s1219 + $0xbc] sm:$0xf] %v1146
  %1268 = vst [vmem:[%s1219 + $0xc0] sm:$0xf] %v1147
  %1269 = vst [vmem:[%s1219 + $0xc4] sm:$0xf] %v1148
  %1270 = vst [vmem:[%s1219 + $0xc8] sm:$0xf] %v1149
  %1271 = vst [vmem:[%s1219 + $0xcc] sm:$0xf] %v1150
  %1272 = vst [vmem:[%s1219 + $0xd0] sm:$0xf] %v1151
  %1273 = vst [vmem:[%s1219 + $0xd4] sm:$0xf] %v1152
  %1274 = vst [vmem:[%s1219 + $0xd8] sm:$0xf] %v1153
  %1275 = vst [vmem:[%s1219 + $0xdc] sm:$0xf] %v1154
  %1276 = vst [vmem:[%s1219 + $0xe0] sm:$0xf] %v1155
  %1277 = vst [vmem:[%s1219 + $0xe4] sm:$0xf] %v1156
  %1278 = vst [vmem:[%s1219 + $0xe8] sm:$0xf] %v1157
  %1279 = vst [vmem:[%s1219 + $0xec] sm:$0xf] %v1158
  %1280 = vst [vmem:[%s1219 + $0xf0] sm:$0xf] %v1159
  %1281 = vst [vmem:[%s1219 + $0xf4] sm:$0xf] %v1160
  %1282 = vst [vmem:[%s1219 + $0xf8] sm:$0xf] %v1161
  %1283 = vst [vmem:[%s1219 + $0xfc] sm:$0xf] %v1162
  %1284 = vst [vmem:[%s1219 + $0x100] sm:$0xf] %v1163
  %1285 = vst [vmem:[%s1219 + $0x104] sm:$0xf] %v1164
  %1286 = vst [vmem:[%s1219 + $0x108] sm:$0xf] %v1165
  %1287 = vst [vmem:[%s1219 + $0x10c] sm:$0xf] %v1166
  %1288 = vst [vmem:[%s1219 + $0x110] sm:$0xf] %v1167
  %1289 = vst [vmem:[%s1219 + $0x114] sm:$0xf] %v1168
  %1290 = vst [vmem:[%s1219 + $0x118] sm:$0xf] %v1169
  %1291 = vst [vmem:[%s1219 + $0x11c] sm:$0xf] %v1170
  %1292 = vst [vmem:[%s1219 + $0x120] sm:$0xf] %v1171
  %1293 = vst [vmem:[%s1219 + $0x124] sm:$0xf] %v1172
  %1294 = vst [vmem:[%s1219 + $0x128] sm:$0xf] %v1173
  %1295 = vst [vmem:[%s1219 + $0x12c] sm:$0xf] %v1174
  %1296 = vst [vmem:[%s1219 + $0x130] sm:$0xf] %v1175
  %1297 = vst [vmem:[%s1219 + $0x134] sm:$0xf] %v1176
  %1298 = vst [vmem:[%s1219 + $0x138] sm:$0xf] %v1177
  %1299 = vst [vmem:[%s1219 + $0x13c] sm:$0xf] %v1178
  %1300 = vst [vmem:[%s1219 + $0x140] sm:$0xf] %v1179
  %1301 = vst [vmem:[%s1219 + $0x144] sm:$0xf] %v1180
  %1302 = vst [vmem:[%s1219 + $0x148] sm:$0xf] %v1181
  %1303 = vst [vmem:[%s1219 + $0x14c] sm:$0xf] %v1182
  %1304 = vst [vmem:[%s1219 + $0x150] sm:$0xf] %v1183
  %1305 = vst [vmem:[%s1219 + $0x154] sm:$0xf] %v1184
  %1306 = vst [vmem:[%s1219 + $0x158] sm:$0xf] %v1185
  %1307 = vst [vmem:[%s1219 + $0x15c] sm:$0xf] %v1186
  %1308 = vst [vmem:[%s1219 + $0x160] sm:$0xf] %v1187
  %1309 = vst [vmem:[%s1219 + $0x164] sm:$0xf] %v1188
  %1310 = vst [vmem:[%s1219 + $0x168] sm:$0xf] %v1189
  %1311 = vst [vmem:[%s1219 + $0x16c] sm:$0xf] %v1190
  %1312 = vst [vmem:[%s1219 + $0x170] sm:$0xf] %v1191
  %1313 = vst [vmem:[%s1219 + $0x174] sm:$0xf] %v1192
  %1314 = vst [vmem:[%s1219 + $0x178] sm:$0xf] %v1193
  %1315 = vst [vmem:[%s1219 + $0x17c] sm:$0xf] %v1194
  %1316 = vst [vmem:[%s1219 + $0x180] sm:$0xf] %v1195
  %1317 = vst [vmem:[%s1219 + $0x184] sm:$0xf] %v1196
  %1318 = vst [vmem:[%s1219 + $0x188] sm:$0xf] %v1197
  %1319 = vst [vmem:[%s1219 + $0x18c] sm:$0xf] %v1198
  %1320 = vst [vmem:[%s1219 + $0x190] sm:$0xf] %v1199
  %1321 = vst [vmem:[%s1219 + $0x194] sm:$0xf] %v1200
  %1322 = vst [vmem:[%s1219 + $0x198] sm:$0xf] %v1201
  %1323 = vst [vmem:[%s1219 + $0x19c] sm:$0xf] %v1202
  %1324 = vst [vmem:[%s1219 + $0x1a0] sm:$0xf] %v1203
  %1325 = vst [vmem:[%s1219 + $0x1a4] sm:$0xf] %v1204
  %1326 = vst [vmem:[%s1219 + $0x1a8] sm:$0xf] %v1205
  %1327 = vst [vmem:[%s1219 + $0x1ac] sm:$0xf] %v1206
  %1328 = vst [vmem:[%s1219 + $0x1b0] sm:$0xf] %v1207
  %1329 = vst [vmem:[%s1219 + $0x1b4] sm:$0xf] %v1208
  %1330 = vst [vmem:[%s1219 + $0x1b8] sm:$0xf] %v1209
  %1331 = vst [vmem:[%s1219 + $0x1bc] sm:$0xf] %v1210
  %1332 = vst [vmem:[%s1219 + $0x1c0] sm:$0xf] %v1211
  %1333 = vst [vmem:[%s1219 + $0x1c4] sm:$0xf] %v1212
  %1334 = vst [vmem:[%s1219 + $0x1c8] sm:$0xf] %v1213
  %1335 = vst [vmem:[%s1219 + $0x1cc] sm:$0xf] %v1214
  %1336 = vst [vmem:[%s1219 + $0x1d0] sm:$0xf] %v1215
  %1337 = vst [vmem:[%s1219 + $0x1d4] sm:$0xf] %v1216
  %1338 = vst [vmem:[%s1219 + $0x1d8] sm:$0xf] %v1217
  %1339 = vst [vmem:[%s1219 + $0x1dc] sm:$0xf] %v1218
  %v1340 = vld [vmem:[#allocation2] sm:$0xf]
  %v1341 = vld [vmem:[#allocation2 + $0x4] sm:$0xf]
  %v1342 = vld [vmem:[#allocation2 + $0x8] sm:$0xf]
  %v1343 = vld [vmem:[#allocation2 + $0xc] sm:$0xf]
  %v1344 = vld [vmem:[#allocation2 + $0x10] sm:$0xf]
  %v1345 = vld [vmem:[#allocation2 + $0x14] sm:$0xf]
  %v1346 = vld [vmem:[#allocation2 + $0x18] sm:$0xf]
  %v1347 = vld [vmem:[#allocation2 + $0x1c] sm:$0xf]
  %v1348 = vld [vmem:[#allocation2 + $0x20] sm:$0xf]
  %v1349 = vld [vmem:[#allocation2 + $0x24] sm:$0xf]
  %v1350 = vld [vmem:[#allocation2 + $0x28] sm:$0xf]
  %v1351 = vld [vmem:[#allocation2 + $0x2c] sm:$0xf]
  %v1352 = vld [vmem:[#allocation2 + $0x30] sm:$0xf]
  %v1353 = vld [vmem:[#allocation2 + $0x34] sm:$0xf]
  %v1354 = vld [vmem:[#allocation2 + $0x38] sm:$0xf]
  %v1355 = vld [vmem:[#allocation2 + $0x3c] sm:$0xf]
  %v1356 = vld [vmem:[#allocation2 + $0x40] sm:$0xf]
  %v1357 = vld [vmem:[#allocation2 + $0x44] sm:$0xf]
  %v1358 = vld [vmem:[#allocation2 + $0x48] sm:$0xf]
  %v1359 = vld [vmem:[#allocation2 + $0x4c] sm:$0xf]
  %v1360 = vld [vmem:[#allocation2 + $0x50] sm:$0xf]
  %v1361 = vld [vmem:[#allocation2 + $0x54] sm:$0xf]
  %v1362 = vld [vmem:[#allocation2 + $0x58] sm:$0xf]
  %v1363 = vld [vmem:[#allocation2 + $0x5c] sm:$0xf]
  %v1364 = vld [vmem:[#allocation2 + $0x60] sm:$0xf]
  %v1365 = vld [vmem:[#allocation2 + $0x64] sm:$0xf]
  %v1366 = vld [vmem:[#allocation2 + $0x68] sm:$0xf]
  %v1367 = vld [vmem:[#allocation2 + $0x6c] sm:$0xf]
  %v1368 = vld [vmem:[#allocation2 + $0x70] sm:$0xf]
  %v1369 = vld [vmem:[#allocation2 + $0x74] sm:$0xf]
  %v1370 = vld [vmem:[#allocation2 + $0x78] sm:$0xf]
  %v1371 = vld [vmem:[#allocation2 + $0x7c] sm:$0xf]
  %v1372 = vld [vmem:[#allocation2 + $0x80] sm:$0xf]
  %v1373 = vld [vmem:[#allocation2 + $0x84] sm:$0xf]
  %v1374 = vld [vmem:[#allocation2 + $0x88] sm:$0xf]
  %v1375 = vld [vmem:[#allocation2 + $0x8c] sm:$0xf]
  %v1376 = vld [vmem:[#allocation2 + $0x90] sm:$0xf]
  %v1377 = vld [vmem:[#allocation2 + $0x94] sm:$0xf]
  %v1378 = vld [vmem:[#allocation2 + $0x98] sm:$0xf]
  %v1379 = vld [vmem:[#allocation2 + $0x9c] sm:$0xf]
  %v1380 = vld [vmem:[#allocation2 + $0xa0] sm:$0xf]
  %v1381 = vld [vmem:[#allocation2 + $0xa4] sm:$0xf]
  %v1382 = vld [vmem:[#allocation2 + $0xa8] sm:$0xf]
  %v1383 = vld [vmem:[#allocation2 + $0xac] sm:$0xf]
  %v1384 = vld [vmem:[#allocation2 + $0xb0] sm:$0xf]
  %v1385 = vld [vmem:[#allocation2 + $0xb4] sm:$0xf]
  %v1386 = vld [vmem:[#allocation2 + $0xb8] sm:$0xf]
  %v1387 = vld [vmem:[#allocation2 + $0xbc] sm:$0xf]
  %v1388 = vld [vmem:[#allocation2 + $0xc0] sm:$0xf]
  %v1389 = vld [vmem:[#allocation2 + $0xc4] sm:$0xf]
  %v1390 = vld [vmem:[#allocation2 + $0xc8] sm:$0xf]
  %v1391 = vld [vmem:[#allocation2 + $0xcc] sm:$0xf]
  %v1392 = vld [vmem:[#allocation2 + $0xd0] sm:$0xf]
  %v1393 = vld [vmem:[#allocation2 + $0xd4] sm:$0xf]
  %v1394 = vld [vmem:[#allocation2 + $0xd8] sm:$0xf]
  %v1395 = vld [vmem:[#allocation2 + $0xdc] sm:$0xf]
  %v1396 = vld [vmem:[#allocation2 + $0xe0] sm:$0xf]
  %v1397 = vld [vmem:[#allocation2 + $0xe4] sm:$0xf]
  %v1398 = vld [vmem:[#allocation2 + $0xe8] sm:$0xf]
  %v1399 = vld [vmem:[#allocation2 + $0xec] sm:$0xf]
  %v1400 = vld [vmem:[#allocation2 + $0xf0] sm:$0xf]
  %v1401 = vld [vmem:[#allocation2 + $0xf4] sm:$0xf]
  %v1402 = vld [vmem:[#allocation2 + $0xf8] sm:$0xf]
  %v1403 = vld [vmem:[#allocation2 + $0xfc] sm:$0xf]
  %v1404 = vld [vmem:[#allocation2 + $0x100] sm:$0xf]
  %v1405 = vld [vmem:[#allocation2 + $0x104] sm:$0xf]
  %v1406 = vld [vmem:[#allocation2 + $0x108] sm:$0xf]
  %v1407 = vld [vmem:[#allocation2 + $0x10c] sm:$0xf]
  %v1408 = vld [vmem:[#allocation2 + $0x110] sm:$0xf]
  %v1409 = vld [vmem:[#allocation2 + $0x114] sm:$0xf]
  %v1410 = vld [vmem:[#allocation2 + $0x118] sm:$0xf]
  %v1411 = vld [vmem:[#allocation2 + $0x11c] sm:$0xf]
  %v1412 = vld [vmem:[#allocation2 + $0x120] sm:$0xf]
  %v1413 = vld [vmem:[#allocation2 + $0x124] sm:$0xf]
  %v1414 = vld [vmem:[#allocation2 + $0x128] sm:$0xf]
  %v1415 = vld [vmem:[#allocation2 + $0x12c] sm:$0xf]
  %v1416 = vld [vmem:[#allocation2 + $0x130] sm:$0xf]
  %v1417 = vld [vmem:[#allocation2 + $0x134] sm:$0xf]
  %v1418 = vld [vmem:[#allocation2 + $0x138] sm:$0xf]
  %v1419 = vld [vmem:[#allocation2 + $0x13c] sm:$0xf]
  %v1420 = vld [vmem:[#allocation2 + $0x140] sm:$0xf]
  %v1421 = vld [vmem:[#allocation2 + $0x144] sm:$0xf]
  %v1422 = vld [vmem:[#allocation2 + $0x148] sm:$0xf]
  %v1423 = vld [vmem:[#allocation2 + $0x14c] sm:$0xf]
  %v1424 = vld [vmem:[#allocation2 + $0x150] sm:$0xf]
  %v1425 = vld [vmem:[#allocation2 + $0x154] sm:$0xf]
  %v1426 = vld [vmem:[#allocation2 + $0x158] sm:$0xf]
  %v1427 = vld [vmem:[#allocation2 + $0x15c] sm:$0xf]
  %v1428 = vld [vmem:[#allocation2 + $0x160] sm:$0xf]
  %v1429 = vld [vmem:[#allocation2 + $0x164] sm:$0xf]
  %v1430 = vld [vmem:[#allocation2 + $0x168] sm:$0xf]
  %v1431 = vld [vmem:[#allocation2 + $0x16c] sm:$0xf]
  %v1432 = vld [vmem:[#allocation2 + $0x170] sm:$0xf]
  %v1433 = vld [vmem:[#allocation2 + $0x174] sm:$0xf]
  %v1434 = vld [vmem:[#allocation2 + $0x178] sm:$0xf]
  %v1435 = vld [vmem:[#allocation2 + $0x17c] sm:$0xf]
  %v1436 = vld [vmem:[#allocation2 + $0x180] sm:$0xf]
  %v1437 = vld [vmem:[#allocation2 + $0x184] sm:$0xf]
  %v1438 = vld [vmem:[#allocation2 + $0x188] sm:$0xf]
  %v1439 = vld [vmem:[#allocation2 + $0x18c] sm:$0xf]
  %v1440 = vld [vmem:[#allocation2 + $0x190] sm:$0xf]
  %v1441 = vld [vmem:[#allocation2 + $0x194] sm:$0xf]
  %v1442 = vld [vmem:[#allocation2 + $0x198] sm:$0xf]
  %v1443 = vld [vmem:[#allocation2 + $0x19c] sm:$0xf]
  %v1444 = vld [vmem:[#allocation2 + $0x1a0] sm:$0xf]
  %v1445 = vld [vmem:[#allocation2 + $0x1a4] sm:$0xf]
  %v1446 = vld [vmem:[#allocation2 + $0x1a8] sm:$0xf]
  %v1447 = vld [vmem:[#allocation2 + $0x1ac] sm:$0xf]
  %v1448 = vld [vmem:[#allocation2 + $0x1b0] sm:$0xf]
  %v1449 = vld [vmem:[#allocation2 + $0x1b4] sm:$0xf]
  %v1450 = vld [vmem:[#allocation2 + $0x1b8] sm:$0xf]
  %v1451 = vld [vmem:[#allocation2 + $0x1bc] sm:$0xf]
  %v1452 = vld [vmem:[#allocation2 + $0x1c0] sm:$0xf]
  %v1453 = vld [vmem:[#allocation2 + $0x1c4] sm:$0xf]
  %v1454 = vld [vmem:[#allocation2 + $0x1c8] sm:$0xf]
  %v1455 = vld [vmem:[#allocation2 + $0x1cc] sm:$0xf]
  %v1456 = vld [vmem:[#allocation2 + $0x1d0] sm:$0xf]
  %v1457 = vld [vmem:[#allocation2 + $0x1d4] sm:$0xf]
  %v1458 = vld [vmem:[#allocation2 + $0x1d8] sm:$0xf]
  %v1459 = vld [vmem:[#allocation2 + $0x1dc] sm:$0xf]
  %s1460 = scalar_lea.vmem [#allocation2], 32
  %v1461 = vld [vmem:[%s1460] sm:$0xf]
  %v1462 = vld [vmem:[%s1460 + $0x4] sm:$0xf]
  %v1463 = vld [vmem:[%s1460 + $0x8] sm:$0xf]
  %v1464 = vld [vmem:[%s1460 + $0xc] sm:$0xf]
  %v1465 = vld [vmem:[%s1460 + $0x10] sm:$0xf]
  %v1466 = vld [vmem:[%s1460 + $0x14] sm:$0xf]
  %v1467 = vld [vmem:[%s1460 + $0x18] sm:$0xf]
  %v1468 = vld [vmem:[%s1460 + $0x1c] sm:$0xf]
  %v1469 = vld [vmem:[%s1460 + $0x20] sm:$0xf]
  %v1470 = vld [vmem:[%s1460 + $0x24] sm:$0xf]
  %v1471 = vld [vmem:[%s1460 + $0x28] sm:$0xf]
  %v1472 = vld [vmem:[%s1460 + $0x2c] sm:$0xf]
  %v1473 = vld [vmem:[%s1460 + $0x30] sm:$0xf]
  %v1474 = vld [vmem:[%s1460 + $0x34] sm:$0xf]
  %v1475 = vld [vmem:[%s1460 + $0x38] sm:$0xf]
  %v1476 = vld [vmem:[%s1460 + $0x3c] sm:$0xf]
  %v1477 = vld [vmem:[%s1460 + $0x40] sm:$0xf]
  %v1478 = vld [vmem:[%s1460 + $0x44] sm:$0xf]
  %v1479 = vld [vmem:[%s1460 + $0x48] sm:$0xf]
  %v1480 = vld [vmem:[%s1460 + $0x4c] sm:$0xf]
  %v1481 = vld [vmem:[%s1460 + $0x50] sm:$0xf]
  %v1482 = vld [vmem:[%s1460 + $0x54] sm:$0xf]
  %v1483 = vld [vmem:[%s1460 + $0x58] sm:$0xf]
  %v1484 = vld [vmem:[%s1460 + $0x5c] sm:$0xf]
  %v1485 = vld [vmem:[%s1460 + $0x60] sm:$0xf]
  %v1486 = vld [vmem:[%s1460 + $0x64] sm:$0xf]
  %v1487 = vld [vmem:[%s1460 + $0x68] sm:$0xf]
  %v1488 = vld [vmem:[%s1460 + $0x6c] sm:$0xf]
  %v1489 = vld [vmem:[%s1460 + $0x70] sm:$0xf]
  %v1490 = vld [vmem:[%s1460 + $0x74] sm:$0xf]
  %v1491 = vld [vmem:[%s1460 + $0x78] sm:$0xf]
  %v1492 = vld [vmem:[%s1460 + $0x7c] sm:$0xf]
  %v1493 = vld [vmem:[%s1460 + $0x80] sm:$0xf]
  %v1494 = vld [vmem:[%s1460 + $0x84] sm:$0xf]
  %v1495 = vld [vmem:[%s1460 + $0x88] sm:$0xf]
  %v1496 = vld [vmem:[%s1460 + $0x8c] sm:$0xf]
  %v1497 = vld [vmem:[%s1460 + $0x90] sm:$0xf]
  %v1498 = vld [vmem:[%s1460 + $0x94] sm:$0xf]
  %v1499 = vld [vmem:[%s1460 + $0x98] sm:$0xf]
  %v1500 = vld [vmem:[%s1460 + $0x9c] sm:$0xf]
  %v1501 = vld [vmem:[%s1460 + $0xa0] sm:$0xf]
  %v1502 = vld [vmem:[%s1460 + $0xa4] sm:$0xf]
  %v1503 = vld [vmem:[%s1460 + $0xa8] sm:$0xf]
  %v1504 = vld [vmem:[%s1460 + $0xac] sm:$0xf]
  %v1505 = vld [vmem:[%s1460 + $0xb0] sm:$0xf]
  %v1506 = vld [vmem:[%s1460 + $0xb4] sm:$0xf]
  %v1507 = vld [vmem:[%s1460 + $0xb8] sm:$0xf]
  %v1508 = vld [vmem:[%s1460 + $0xbc] sm:$0xf]
  %v1509 = vld [vmem:[%s1460 + $0xc0] sm:$0xf]
  %v1510 = vld [vmem:[%s1460 + $0xc4] sm:$0xf]
  %v1511 = vld [vmem:[%s1460 + $0xc8] sm:$0xf]
  %v1512 = vld [vmem:[%s1460 + $0xcc] sm:$0xf]
  %v1513 = vld [vmem:[%s1460 + $0xd0] sm:$0xf]
  %v1514 = vld [vmem:[%s1460 + $0xd4] sm:$0xf]
  %v1515 = vld [vmem:[%s1460 + $0xd8] sm:$0xf]
  %v1516 = vld [vmem:[%s1460 + $0xdc] sm:$0xf]
  %v1517 = vld [vmem:[%s1460 + $0xe0] sm:$0xf]
  %v1518 = vld [vmem:[%s1460 + $0xe4] sm:$0xf]
  %v1519 = vld [vmem:[%s1460 + $0xe8] sm:$0xf]
  %v1520 = vld [vmem:[%s1460 + $0xec] sm:$0xf]
  %v1521 = vld [vmem:[%s1460 + $0xf0] sm:$0xf]
  %v1522 = vld [vmem:[%s1460 + $0xf4] sm:$0xf]
  %v1523 = vld [vmem:[%s1460 + $0xf8] sm:$0xf]
  %v1524 = vld [vmem:[%s1460 + $0xfc] sm:$0xf]
  %v1525 = vld [vmem:[%s1460 + $0x100] sm:$0xf]
  %v1526 = vld [vmem:[%s1460 + $0x104] sm:$0xf]
  %v1527 = vld [vmem:[%s1460 + $0x108] sm:$0xf]
  %v1528 = vld [vmem:[%s1460 + $0x10c] sm:$0xf]
  %v1529 = vld [vmem:[%s1460 + $0x110] sm:$0xf]
  %v1530 = vld [vmem:[%s1460 + $0x114] sm:$0xf]
  %v1531 = vld [vmem:[%s1460 + $0x118] sm:$0xf]
  %v1532 = vld [vmem:[%s1460 + $0x11c] sm:$0xf]
  %v1533 = vld [vmem:[%s1460 + $0x120] sm:$0xf]
  %v1534 = vld [vmem:[%s1460 + $0x124] sm:$0xf]
  %v1535 = vld [vmem:[%s1460 + $0x128] sm:$0xf]
  %v1536 = vld [vmem:[%s1460 + $0x12c] sm:$0xf]
  %v1537 = vld [vmem:[%s1460 + $0x130] sm:$0xf]
  %v1538 = vld [vmem:[%s1460 + $0x134] sm:$0xf]
  %v1539 = vld [vmem:[%s1460 + $0x138] sm:$0xf]
  %v1540 = vld [vmem:[%s1460 + $0x13c] sm:$0xf]
  %v1541 = vld [vmem:[%s1460 + $0x140] sm:$0xf]
  %v1542 = vld [vmem:[%s1460 + $0x144] sm:$0xf]
  %v1543 = vld [vmem:[%s1460 + $0x148] sm:$0xf]
  %v1544 = vld [vmem:[%s1460 + $0x14c] sm:$0xf]
  %v1545 = vld [vmem:[%s1460 + $0x150] sm:$0xf]
  %v1546 = vld [vmem:[%s1460 + $0x154] sm:$0xf]
  %v1547 = vld [vmem:[%s1460 + $0x158] sm:$0xf]
  %v1548 = vld [vmem:[%s1460 + $0x15c] sm:$0xf]
  %v1549 = vld [vmem:[%s1460 + $0x160] sm:$0xf]
  %v1550 = vld [vmem:[%s1460 + $0x164] sm:$0xf]
  %v1551 = vld [vmem:[%s1460 + $0x168] sm:$0xf]
  %v1552 = vld [vmem:[%s1460 + $0x16c] sm:$0xf]
  %v1553 = vld [vmem:[%s1460 + $0x170] sm:$0xf]
  %v1554 = vld [vmem:[%s1460 + $0x174] sm:$0xf]
  %v1555 = vld [vmem:[%s1460 + $0x178] sm:$0xf]
  %v1556 = vld [vmem:[%s1460 + $0x17c] sm:$0xf]
  %v1557 = vld [vmem:[%s1460 + $0x180] sm:$0xf]
  %v1558 = vld [vmem:[%s1460 + $0x184] sm:$0xf]
  %v1559 = vld [vmem:[%s1460 + $0x188] sm:$0xf]
  %v1560 = vld [vmem:[%s1460 + $0x18c] sm:$0xf]
  %v1561 = vld [vmem:[%s1460 + $0x190] sm:$0xf]
  %v1562 = vld [vmem:[%s1460 + $0x194] sm:$0xf]
  %v1563 = vld [vmem:[%s1460 + $0x198] sm:$0xf]
  %v1564 = vld [vmem:[%s1460 + $0x19c] sm:$0xf]
  %v1565 = vld [vmem:[%s1460 + $0x1a0] sm:$0xf]
  %v1566 = vld [vmem:[%s1460 + $0x1a4] sm:$0xf]
  %v1567 = vld [vmem:[%s1460 + $0x1a8] sm:$0xf]
  %v1568 = vld [vmem:[%s1460 + $0x1ac] sm:$0xf]
  %v1569 = vld [vmem:[%s1460 + $0x1b0] sm:$0xf]
  %v1570 = vld [vmem:[%s1460 + $0x1b4] sm:$0xf]
  %v1571 = vld [vmem:[%s1460 + $0x1b8] sm:$0xf]
  %v1572 = vld [vmem:[%s1460 + $0x1bc] sm:$0xf]
  %v1573 = vld [vmem:[%s1460 + $0x1c0] sm:$0xf]
  %v1574 = vld [vmem:[%s1460 + $0x1c4] sm:$0xf]
  %v1575 = vld [vmem:[%s1460 + $0x1c8] sm:$0xf]
  %v1576 = vld [vmem:[%s1460 + $0x1cc] sm:$0xf]
  %v1577 = vld [vmem:[%s1460 + $0x1d0] sm:$0xf]
  %v1578 = vld [vmem:[%s1460 + $0x1d4] sm:$0xf]
  %v1579 = vld [vmem:[%s1460 + $0x1d8] sm:$0xf]
  %v1580 = vld [vmem:[%s1460 + $0x1dc] sm:$0xf]
  %v1581 = vld [vmem:[%s1219] sm:$0xf]
  %v1582 = vld [vmem:[%s1219 + $0x4] sm:$0xf]
  %v1583 = vld [vmem:[%s1219 + $0x8] sm:$0xf]
  %v1584 = vld [vmem:[%s1219 + $0xc] sm:$0xf]
  %v1585 = vld [vmem:[%s1219 + $0x10] sm:$0xf]
  %v1586 = vld [vmem:[%s1219 + $0x14] sm:$0xf]
  %v1587 = vld [vmem:[%s1219 + $0x18] sm:$0xf]
  %v1588 = vld [vmem:[%s1219 + $0x1c] sm:$0xf]
  %v1589 = vld [vmem:[%s1219 + $0x20] sm:$0xf]
  %v1590 = vld [vmem:[%s1219 + $0x24] sm:$0xf]
  %v1591 = vld [vmem:[%s1219 + $0x28] sm:$0xf]
  %v1592 = vld [vmem:[%s1219 + $0x2c] sm:$0xf]
  %v1593 = vld [vmem:[%s1219 + $0x30] sm:$0xf]
  %v1594 = vld [vmem:[%s1219 + $0x34] sm:$0xf]
  %v1595 = vld [vmem:[%s1219 + $0x38] sm:$0xf]
  %v1596 = vld [vmem:[%s1219 + $0x3c] sm:$0xf]
  %v1597 = vld [vmem:[%s1219 + $0x40] sm:$0xf]
  %v1598 = vld [vmem:[%s1219 + $0x44] sm:$0xf]
  %v1599 = vld [vmem:[%s1219 + $0x48] sm:$0xf]
  %v1600 = vld [vmem:[%s1219 + $0x4c] sm:$0xf]
  %v1601 = vld [vmem:[%s1219 + $0x50] sm:$0xf]
  %v1602 = vld [vmem:[%s1219 + $0x54] sm:$0xf]
  %v1603 = vld [vmem:[%s1219 + $0x58] sm:$0xf]
  %v1604 = vld [vmem:[%s1219 + $0x5c] sm:$0xf]
  %v1605 = vld [vmem:[%s1219 + $0x60] sm:$0xf]
  %v1606 = vld [vmem:[%s1219 + $0x64] sm:$0xf]
  %v1607 = vld [vmem:[%s1219 + $0x68] sm:$0xf]
  %v1608 = vld [vmem:[%s1219 + $0x6c] sm:$0xf]
  %v1609 = vld [vmem:[%s1219 + $0x70] sm:$0xf]
  %v1610 = vld [vmem:[%s1219 + $0x74] sm:$0xf]
  %v1611 = vld [vmem:[%s1219 + $0x78] sm:$0xf]
  %v1612 = vld [vmem:[%s1219 + $0x7c] sm:$0xf]
  %v1613 = vld [vmem:[%s1219 + $0x80] sm:$0xf]
  %v1614 = vld [vmem:[%s1219 + $0x84] sm:$0xf]
  %v1615 = vld [vmem:[%s1219 + $0x88] sm:$0xf]
  %v1616 = vld [vmem:[%s1219 + $0x8c] sm:$0xf]
  %v1617 = vld [vmem:[%s1219 + $0x90] sm:$0xf]
  %v1618 = vld [vmem:[%s1219 + $0x94] sm:$0xf]
  %v1619 = vld [vmem:[%s1219 + $0x98] sm:$0xf]
  %v1620 = vld [vmem:[%s1219 + $0x9c] sm:$0xf]
  %v1621 = vld [vmem:[%s1219 + $0xa0] sm:$0xf]
  %v1622 = vld [vmem:[%s1219 + $0xa4] sm:$0xf]
  %v1623 = vld [vmem:[%s1219 + $0xa8] sm:$0xf]
  %v1624 = vld [vmem:[%s1219 + $0xac] sm:$0xf]
  %v1625 = vld [vmem:[%s1219 + $0xb0] sm:$0xf]
  %v1626 = vld [vmem:[%s1219 + $0xb4] sm:$0xf]
  %v1627 = vld [vmem:[%s1219 + $0xb8] sm:$0xf]
  %v1628 = vld [vmem:[%s1219 + $0xbc] sm:$0xf]
  %v1629 = vld [vmem:[%s1219 + $0xc0] sm:$0xf]
  %v1630 = vld [vmem:[%s1219 + $0xc4] sm:$0xf]
  %v1631 = vld [vmem:[%s1219 + $0xc8] sm:$0xf]
  %v1632 = vld [vmem:[%s1219 + $0xcc] sm:$0xf]
  %v1633 = vld [vmem:[%s1219 + $0xd0] sm:$0xf]
  %v1634 = vld [vmem:[%s1219 + $0xd4] sm:$0xf]
  %v1635 = vld [vmem:[%s1219 + $0xd8] sm:$0xf]
  %v1636 = vld [vmem:[%s1219 + $0xdc] sm:$0xf]
  %v1637 = vld [vmem:[%s1219 + $0xe0] sm:$0xf]
  %v1638 = vld [vmem:[%s1219 + $0xe4] sm:$0xf]
  %v1639 = vld [vmem:[%s1219 + $0xe8] sm:$0xf]
  %v1640 = vld [vmem:[%s1219 + $0xec] sm:$0xf]
  %v1641 = vld [vmem:[%s1219 + $0xf0] sm:$0xf]
  %v1642 = vld [vmem:[%s1219 + $0xf4] sm:$0xf]
  %v1643 = vld [vmem:[%s1219 + $0xf8] sm:$0xf]
  %v1644 = vld [vmem:[%s1219 + $0xfc] sm:$0xf]
  %v1645 = vld [vmem:[%s1219 + $0x100] sm:$0xf]
  %v1646 = vld [vmem:[%s1219 + $0x104] sm:$0xf]
  %v1647 = vld [vmem:[%s1219 + $0x108] sm:$0xf]
  %v1648 = vld [vmem:[%s1219 + $0x10c] sm:$0xf]
  %v1649 = vld [vmem:[%s1219 + $0x110] sm:$0xf]
  %v1650 = vld [vmem:[%s1219 + $0x114] sm:$0xf]
  %v1651 = vld [vmem:[%s1219 + $0x118] sm:$0xf]
  %v1652 = vld [vmem:[%s1219 + $0x11c] sm:$0xf]
  %v1653 = vld [vmem:[%s1219 + $0x120] sm:$0xf]
  %v1654 = vld [vmem:[%s1219 + $0x124] sm:$0xf]
  %v1655 = vld [vmem:[%s1219 + $0x128] sm:$0xf]
  %v1656 = vld [vmem:[%s1219 + $0x12c] sm:$0xf]
  %v1657 = vld [vmem:[%s1219 + $0x130] sm:$0xf]
  %v1658 = vld [vmem:[%s1219 + $0x134] sm:$0xf]
  %v1659 = vld [vmem:[%s1219 + $0x138] sm:$0xf]
  %v1660 = vld [vmem:[%s1219 + $0x13c] sm:$0xf]
  %v1661 = vld [vmem:[%s1219 + $0x140] sm:$0xf]
  %v1662 = vld [vmem:[%s1219 + $0x144] sm:$0xf]
  %v1663 = vld [vmem:[%s1219 + $0x148] sm:$0xf]
  %v1664 = vld [vmem:[%s1219 + $0x14c] sm:$0xf]
  %v1665 = vld [vmem:[%s1219 + $0x150] sm:$0xf]
  %v1666 = vld [vmem:[%s1219 + $0x154] sm:$0xf]
  %v1667 = vld [vmem:[%s1219 + $0x158] sm:$0xf]
  %v1668 = vld [vmem:[%s1219 + $0x15c] sm:$0xf]
  %v1669 = vld [vmem:[%s1219 + $0x160] sm:$0xf]
  %v1670 = vld [vmem:[%s1219 + $0x164] sm:$0xf]
  %v1671 = vld [vmem:[%s1219 + $0x168] sm:$0xf]
  %v1672 = vld [vmem:[%s1219 + $0x16c] sm:$0xf]
  %v1673 = vld [vmem:[%s1219 + $0x170] sm:$0xf]
  %v1674 = vld [vmem:[%s1219 + $0x174] sm:$0xf]
  %v1675 = vld [vmem:[%s1219 + $0x178] sm:$0xf]
  %v1676 = vld [vmem:[%s1219 + $0x17c] sm:$0xf]
  %v1677 = vld [vmem:[%s1219 + $0x180] sm:$0xf]
  %v1678 = vld [vmem:[%s1219 + $0x184] sm:$0xf]
  %v1679 = vld [vmem:[%s1219 + $0x188] sm:$0xf]
  %v1680 = vld [vmem:[%s1219 + $0x18c] sm:$0xf]
  %v1681 = vld [vmem:[%s1219 + $0x190] sm:$0xf]
  %v1682 = vld [vmem:[%s1219 + $0x194] sm:$0xf]
  %v1683 = vld [vmem:[%s1219 + $0x198] sm:$0xf]
  %v1684 = vld [vmem:[%s1219 + $0x19c] sm:$0xf]
  %v1685 = vld [vmem:[%s1219 + $0x1a0] sm:$0xf]
  %v1686 = vld [vmem:[%s1219 + $0x1a4] sm:$0xf]
  %v1687 = vld [vmem:[%s1219 + $0x1a8] sm:$0xf]
  %v1688 = vld [vmem:[%s1219 + $0x1ac] sm:$0xf]
  %v1689 = vld [vmem:[%s1219 + $0x1b0] sm:$0xf]
  %v1690 = vld [vmem:[%s1219 + $0x1b4] sm:$0xf]
  %v1691 = vld [vmem:[%s1219 + $0x1b8] sm:$0xf]
  %v1692 = vld [vmem:[%s1219 + $0x1bc] sm:$0xf]
  %v1693 = vld [vmem:[%s1219 + $0x1c0] sm:$0xf]
  %v1694 = vld [vmem:[%s1219 + $0x1c4] sm:$0xf]
  %v1695 = vld [vmem:[%s1219 + $0x1c8] sm:$0xf]
  %v1696 = vld [vmem:[%s1219 + $0x1cc] sm:$0xf]
  %v1697 = vld [vmem:[%s1219 + $0x1d0] sm:$0xf]
  %v1698 = vld [vmem:[%s1219 + $0x1d4] sm:$0xf]
  %v1699 = vld [vmem:[%s1219 + $0x1d8] sm:$0xf]
  %v1700 = vld [vmem:[%s1219 + $0x1dc] sm:$0xf]
  %s1701 = scalar_lea.vmem [#allocation2], 96
  %v1702 = vld [vmem:[%s1701] sm:$0xf]
  %v1703 = vld [vmem:[%s1701 + $0x4] sm:$0xf]
  %v1704 = vld [vmem:[%s1701 + $0x8] sm:$0xf]
  %v1705 = vld [vmem:[%s1701 + $0xc] sm:$0xf]
  %v1706 = vld [vmem:[%s1701 + $0x10] sm:$0xf]
  %v1707 = vld [vmem:[%s1701 + $0x14] sm:$0xf]
  %v1708 = vld [vmem:[%s1701 + $0x18] sm:$0xf]
  %v1709 = vld [vmem:[%s1701 + $0x1c] sm:$0xf]
  %v1710 = vld [vmem:[%s1701 + $0x20] sm:$0xf]
  %v1711 = vld [vmem:[%s1701 + $0x24] sm:$0xf]
  %v1712 = vld [vmem:[%s1701 + $0x28] sm:$0xf]
  %v1713 = vld [vmem:[%s1701 + $0x2c] sm:$0xf]
  %v1714 = vld [vmem:[%s1701 + $0x30] sm:$0xf]
  %v1715 = vld [vmem:[%s1701 + $0x34] sm:$0xf]
  %v1716 = vld [vmem:[%s1701 + $0x38] sm:$0xf]
  %v1717 = vld [vmem:[%s1701 + $0x3c] sm:$0xf]
  %v1718 = vld [vmem:[%s1701 + $0x40] sm:$0xf]
  %v1719 = vld [vmem:[%s1701 + $0x44] sm:$0xf]
  %v1720 = vld [vmem:[%s1701 + $0x48] sm:$0xf]
  %v1721 = vld [vmem:[%s1701 + $0x4c] sm:$0xf]
  %v1722 = vld [vmem:[%s1701 + $0x50] sm:$0xf]
  %v1723 = vld [vmem:[%s1701 + $0x54] sm:$0xf]
  %v1724 = vld [vmem:[%s1701 + $0x58] sm:$0xf]
  %v1725 = vld [vmem:[%s1701 + $0x5c] sm:$0xf]
  %v1726 = vld [vmem:[%s1701 + $0x60] sm:$0xf]
  %v1727 = vld [vmem:[%s1701 + $0x64] sm:$0xf]
  %v1728 = vld [vmem:[%s1701 + $0x68] sm:$0xf]
  %v1729 = vld [vmem:[%s1701 + $0x6c] sm:$0xf]
  %v1730 = vld [vmem:[%s1701 + $0x70] sm:$0xf]
  %v1731 = vld [vmem:[%s1701 + $0x74] sm:$0xf]
  %v1732 = vld [vmem:[%s1701 + $0x78] sm:$0xf]
  %v1733 = vld [vmem:[%s1701 + $0x7c] sm:$0xf]
  %v1734 = vld [vmem:[%s1701 + $0x80] sm:$0xf]
  %v1735 = vld [vmem:[%s1701 + $0x84] sm:$0xf]
  %v1736 = vld [vmem:[%s1701 + $0x88] sm:$0xf]
  %v1737 = vld [vmem:[%s1701 + $0x8c] sm:$0xf]
  %v1738 = vld [vmem:[%s1701 + $0x90] sm:$0xf]
  %v1739 = vld [vmem:[%s1701 + $0x94] sm:$0xf]
  %v1740 = vld [vmem:[%s1701 + $0x98] sm:$0xf]
  %v1741 = vld [vmem:[%s1701 + $0x9c] sm:$0xf]
  %v1742 = vld [vmem:[%s1701 + $0xa0] sm:$0xf]
  %v1743 = vld [vmem:[%s1701 + $0xa4] sm:$0xf]
  %v1744 = vld [vmem:[%s1701 + $0xa8] sm:$0xf]
  %v1745 = vld [vmem:[%s1701 + $0xac] sm:$0xf]
  %v1746 = vld [vmem:[%s1701 + $0xb0] sm:$0xf]
  %v1747 = vld [vmem:[%s1701 + $0xb4] sm:$0xf]
  %v1748 = vld [vmem:[%s1701 + $0xb8] sm:$0xf]
  %v1749 = vld [vmem:[%s1701 + $0xbc] sm:$0xf]
  %v1750 = vld [vmem:[%s1701 + $0xc0] sm:$0xf]
  %v1751 = vld [vmem:[%s1701 + $0xc4] sm:$0xf]
  %v1752 = vld [vmem:[%s1701 + $0xc8] sm:$0xf]
  %v1753 = vld [vmem:[%s1701 + $0xcc] sm:$0xf]
  %v1754 = vld [vmem:[%s1701 + $0xd0] sm:$0xf]
  %v1755 = vld [vmem:[%s1701 + $0xd4] sm:$0xf]
  %v1756 = vld [vmem:[%s1701 + $0xd8] sm:$0xf]
  %v1757 = vld [vmem:[%s1701 + $0xdc] sm:$0xf]
  %v1758 = vld [vmem:[%s1701 + $0xe0] sm:$0xf]
  %v1759 = vld [vmem:[%s1701 + $0xe4] sm:$0xf]
  %v1760 = vld [vmem:[%s1701 + $0xe8] sm:$0xf]
  %v1761 = vld [vmem:[%s1701 + $0xec] sm:$0xf]
  %v1762 = vld [vmem:[%s1701 + $0xf0] sm:$0xf]
  %v1763 = vld [vmem:[%s1701 + $0xf4] sm:$0xf]
  %v1764 = vld [vmem:[%s1701 + $0xf8] sm:$0xf]
  %v1765 = vld [vmem:[%s1701 + $0xfc] sm:$0xf]
  %v1766 = vld [vmem:[%s1701 + $0x100] sm:$0xf]
  %v1767 = vld [vmem:[%s1701 + $0x104] sm:$0xf]
  %v1768 = vld [vmem:[%s1701 + $0x108] sm:$0xf]
  %v1769 = vld [vmem:[%s1701 + $0x10c] sm:$0xf]
  %v1770 = vld [vmem:[%s1701 + $0x110] sm:$0xf]
  %v1771 = vld [vmem:[%s1701 + $0x114] sm:$0xf]
  %v1772 = vld [vmem:[%s1701 + $0x118] sm:$0xf]
  %v1773 = vld [vmem:[%s1701 + $0x11c] sm:$0xf]
  %v1774 = vld [vmem:[%s1701 + $0x120] sm:$0xf]
  %v1775 = vld [vmem:[%s1701 + $0x124] sm:$0xf]
  %v1776 = vld [vmem:[%s1701 + $0x128] sm:$0xf]
  %v1777 = vld [vmem:[%s1701 + $0x12c] sm:$0xf]
  %v1778 = vld [vmem:[%s1701 + $0x130] sm:$0xf]
  %v1779 = vld [vmem:[%s1701 + $0x134] sm:$0xf]
  %v1780 = vld [vmem:[%s1701 + $0x138] sm:$0xf]
  %v1781 = vld [vmem:[%s1701 + $0x13c] sm:$0xf]
  %v1782 = vld [vmem:[%s1701 + $0x140] sm:$0xf]
  %v1783 = vld [vmem:[%s1701 + $0x144] sm:$0xf]
  %v1784 = vld [vmem:[%s1701 + $0x148] sm:$0xf]
  %v1785 = vld [vmem:[%s1701 + $0x14c] sm:$0xf]
  %v1786 = vld [vmem:[%s1701 + $0x150] sm:$0xf]
  %v1787 = vld [vmem:[%s1701 + $0x154] sm:$0xf]
  %v1788 = vld [vmem:[%s1701 + $0x158] sm:$0xf]
  %v1789 = vld [vmem:[%s1701 + $0x15c] sm:$0xf]
  %v1790 = vld [vmem:[%s1701 + $0x160] sm:$0xf]
  %v1791 = vld [vmem:[%s1701 + $0x164] sm:$0xf]
  %v1792 = vld [vmem:[%s1701 + $0x168] sm:$0xf]
  %v1793 = vld [vmem:[%s1701 + $0x16c] sm:$0xf]
  %v1794 = vld [vmem:[%s1701 + $0x170] sm:$0xf]
  %v1795 = vld [vmem:[%s1701 + $0x174] sm:$0xf]
  %v1796 = vld [vmem:[%s1701 + $0x178] sm:$0xf]
  %v1797 = vld [vmem:[%s1701 + $0x17c] sm:$0xf]
  %v1798 = vld [vmem:[%s1701 + $0x180] sm:$0xf]
  %v1799 = vld [vmem:[%s1701 + $0x184] sm:$0xf]
  %v1800 = vld [vmem:[%s1701 + $0x188] sm:$0xf]
  %v1801 = vld [vmem:[%s1701 + $0x18c] sm:$0xf]
  %v1802 = vld [vmem:[%s1701 + $0x190] sm:$0xf]
  %v1803 = vld [vmem:[%s1701 + $0x194] sm:$0xf]
  %v1804 = vld [vmem:[%s1701 + $0x198] sm:$0xf]
  %v1805 = vld [vmem:[%s1701 + $0x19c] sm:$0xf]
  %v1806 = vld [vmem:[%s1701 + $0x1a0] sm:$0xf]
  %v1807 = vld [vmem:[%s1701 + $0x1a4] sm:$0xf]
  %v1808 = vld [vmem:[%s1701 + $0x1a8] sm:$0xf]
  %v1809 = vld [vmem:[%s1701 + $0x1ac] sm:$0xf]
  %v1810 = vld [vmem:[%s1701 + $0x1b0] sm:$0xf]
  %v1811 = vld [vmem:[%s1701 + $0x1b4] sm:$0xf]
  %v1812 = vld [vmem:[%s1701 + $0x1b8] sm:$0xf]
  %v1813 = vld [vmem:[%s1701 + $0x1bc] sm:$0xf]
  %v1814 = vld [vmem:[%s1701 + $0x1c0] sm:$0xf]
  %v1815 = vld [vmem:[%s1701 + $0x1c4] sm:$0xf]
  %v1816 = vld [vmem:[%s1701 + $0x1c8] sm:$0xf]
  %v1817 = vld [vmem:[%s1701 + $0x1cc] sm:$0xf]
  %v1818 = vld [vmem:[%s1701 + $0x1d0] sm:$0xf]
  %v1819 = vld [vmem:[%s1701 + $0x1d4] sm:$0xf]
  %v1820 = vld [vmem:[%s1701 + $0x1d8] sm:$0xf]
  %v1821 = vld [vmem:[%s1701 + $0x1dc] sm:$0xf]
  %s1822 = scalar_lea.vmem [#allocation2], 128
  %v1823 = vld [vmem:[%s1822] sm:$0xf]
  %v1824 = vld [vmem:[%s1822 + $0x4] sm:$0xf]
  %v1825 = vld [vmem:[%s1822 + $0x8] sm:$0xf]
  %v1826 = vld [vmem:[%s1822 + $0xc] sm:$0xf]
  %v1827 = vld [vmem:[%s1822 + $0x10] sm:$0xf]
  %v1828 = vld [vmem:[%s1822 + $0x14] sm:$0xf]
  %v1829 = vld [vmem:[%s1822 + $0x18] sm:$0xf]
  %v1830 = vld [vmem:[%s1822 + $0x1c] sm:$0xf]
  %v1831 = vld [vmem:[%s1822 + $0x20] sm:$0xf]
  %v1832 = vld [vmem:[%s1822 + $0x24] sm:$0xf]
  %v1833 = vld [vmem:[%s1822 + $0x28] sm:$0xf]
  %v1834 = vld [vmem:[%s1822 + $0x2c] sm:$0xf]
  %v1835 = vld [vmem:[%s1822 + $0x30] sm:$0xf]
  %v1836 = vld [vmem:[%s1822 + $0x34] sm:$0xf]
  %v1837 = vld [vmem:[%s1822 + $0x38] sm:$0xf]
  %v1838 = vld [vmem:[%s1822 + $0x3c] sm:$0xf]
  %v1839 = vld [vmem:[%s1822 + $0x40] sm:$0xf]
  %v1840 = vld [vmem:[%s1822 + $0x44] sm:$0xf]
  %v1841 = vld [vmem:[%s1822 + $0x48] sm:$0xf]
  %v1842 = vld [vmem:[%s1822 + $0x4c] sm:$0xf]
  %v1843 = vld [vmem:[%s1822 + $0x50] sm:$0xf]
  %v1844 = vld [vmem:[%s1822 + $0x54] sm:$0xf]
  %v1845 = vld [vmem:[%s1822 + $0x58] sm:$0xf]
  %v1846 = vld [vmem:[%s1822 + $0x5c] sm:$0xf]
  %v1847 = vld [vmem:[%s1822 + $0x60] sm:$0xf]
  %v1848 = vld [vmem:[%s1822 + $0x64] sm:$0xf]
  %v1849 = vld [vmem:[%s1822 + $0x68] sm:$0xf]
  %v1850 = vld [vmem:[%s1822 + $0x6c] sm:$0xf]
  %v1851 = vld [vmem:[%s1822 + $0x70] sm:$0xf]
  %v1852 = vld [vmem:[%s1822 + $0x74] sm:$0xf]
  %v1853 = vld [vmem:[%s1822 + $0x78] sm:$0xf]
  %v1854 = vld [vmem:[%s1822 + $0x7c] sm:$0xf]
  %v1855 = vld [vmem:[%s1822 + $0x80] sm:$0xf]
  %v1856 = vld [vmem:[%s1822 + $0x84] sm:$0xf]
  %v1857 = vld [vmem:[%s1822 + $0x88] sm:$0xf]
  %v1858 = vld [vmem:[%s1822 + $0x8c] sm:$0xf]
  %v1859 = vld [vmem:[%s1822 + $0x90] sm:$0xf]
  %v1860 = vld [vmem:[%s1822 + $0x94] sm:$0xf]
  %v1861 = vld [vmem:[%s1822 + $0x98] sm:$0xf]
  %v1862 = vld [vmem:[%s1822 + $0x9c] sm:$0xf]
  %v1863 = vld [vmem:[%s1822 + $0xa0] sm:$0xf]
  %v1864 = vld [vmem:[%s1822 + $0xa4] sm:$0xf]
  %v1865 = vld [vmem:[%s1822 + $0xa8] sm:$0xf]
  %v1866 = vld [vmem:[%s1822 + $0xac] sm:$0xf]
  %v1867 = vld [vmem:[%s1822 + $0xb0] sm:$0xf]
  %v1868 = vld [vmem:[%s1822 + $0xb4] sm:$0xf]
  %v1869 = vld [vmem:[%s1822 + $0xb8] sm:$0xf]
  %v1870 = vld [vmem:[%s1822 + $0xbc] sm:$0xf]
  %v1871 = vld [vmem:[%s1822 + $0xc0] sm:$0xf]
  %v1872 = vld [vmem:[%s1822 + $0xc4] sm:$0xf]
  %v1873 = vld [vmem:[%s1822 + $0xc8] sm:$0xf]
  %v1874 = vld [vmem:[%s1822 + $0xcc] sm:$0xf]
  %v1875 = vld [vmem:[%s1822 + $0xd0] sm:$0xf]
  %v1876 = vld [vmem:[%s1822 + $0xd4] sm:$0xf]
  %v1877 = vld [vmem:[%s1822 + $0xd8] sm:$0xf]
  %v1878 = vld [vmem:[%s1822 + $0xdc] sm:$0xf]
  %v1879 = vld [vmem:[%s1822 + $0xe0] sm:$0xf]
  %v1880 = vld [vmem:[%s1822 + $0xe4] sm:$0xf]
  %v1881 = vld [vmem:[%s1822 + $0xe8] sm:$0xf]
  %v1882 = vld [vmem:[%s1822 + $0xec] sm:$0xf]
  %v1883 = vld [vmem:[%s1822 + $0xf0] sm:$0xf]
  %v1884 = vld [vmem:[%s1822 + $0xf4] sm:$0xf]
  %v1885 = vld [vmem:[%s1822 + $0xf8] sm:$0xf]
  %v1886 = vld [vmem:[%s1822 + $0xfc] sm:$0xf]
  %v1887 = vld [vmem:[%s1822 + $0x100] sm:$0xf]
  %v1888 = vld [vmem:[%s1822 + $0x104] sm:$0xf]
  %v1889 = vld [vmem:[%s1822 + $0x108] sm:$0xf]
  %v1890 = vld [vmem:[%s1822 + $0x10c] sm:$0xf]
  %v1891 = vld [vmem:[%s1822 + $0x110] sm:$0xf]
  %v1892 = vld [vmem:[%s1822 + $0x114] sm:$0xf]
  %v1893 = vld [vmem:[%s1822 + $0x118] sm:$0xf]
  %v1894 = vld [vmem:[%s1822 + $0x11c] sm:$0xf]
  %v1895 = vld [vmem:[%s1822 + $0x120] sm:$0xf]
  %v1896 = vld [vmem:[%s1822 + $0x124] sm:$0xf]
  %v1897 = vld [vmem:[%s1822 + $0x128] sm:$0xf]
  %v1898 = vld [vmem:[%s1822 + $0x12c] sm:$0xf]
  %v1899 = vld [vmem:[%s1822 + $0x130] sm:$0xf]
  %v1900 = vld [vmem:[%s1822 + $0x134] sm:$0xf]
  %v1901 = vld [vmem:[%s1822 + $0x138] sm:$0xf]
  %v1902 = vld [vmem:[%s1822 + $0x13c] sm:$0xf]
  %v1903 = vld [vmem:[%s1822 + $0x140] sm:$0xf]
  %v1904 = vld [vmem:[%s1822 + $0x144] sm:$0xf]
  %v1905 = vld [vmem:[%s1822 + $0x148] sm:$0xf]
  %v1906 = vld [vmem:[%s1822 + $0x14c] sm:$0xf]
  %v1907 = vld [vmem:[%s1822 + $0x150] sm:$0xf]
  %v1908 = vld [vmem:[%s1822 + $0x154] sm:$0xf]
  %v1909 = vld [vmem:[%s1822 + $0x158] sm:$0xf]
  %v1910 = vld [vmem:[%s1822 + $0x15c] sm:$0xf]
  %v1911 = vld [vmem:[%s1822 + $0x160] sm:$0xf]
  %v1912 = vld [vmem:[%s1822 + $0x164] sm:$0xf]
  %v1913 = vld [vmem:[%s1822 + $0x168] sm:$0xf]
  %v1914 = vld [vmem:[%s1822 + $0x16c] sm:$0xf]
  %v1915 = vld [vmem:[%s1822 + $0x170] sm:$0xf]
  %v1916 = vld [vmem:[%s1822 + $0x174] sm:$0xf]
  %v1917 = vld [vmem:[%s1822 + $0x178] sm:$0xf]
  %v1918 = vld [vmem:[%s1822 + $0x17c] sm:$0xf]
  %v1919 = vld [vmem:[%s1822 + $0x180] sm:$0xf]
  %v1920 = vld [vmem:[%s1822 + $0x184] sm:$0xf]
  %v1921 = vld [vmem:[%s1822 + $0x188] sm:$0xf]
  %v1922 = vld [vmem:[%s1822 + $0x18c] sm:$0xf]
  %v1923 = vld [vmem:[%s1822 + $0x190] sm:$0xf]
  %v1924 = vld [vmem:[%s1822 + $0x194] sm:$0xf]
  %v1925 = vld [vmem:[%s1822 + $0x198] sm:$0xf]
  %v1926 = vld [vmem:[%s1822 + $0x19c] sm:$0xf]
  %v1927 = vld [vmem:[%s1822 + $0x1a0] sm:$0xf]
  %v1928 = vld [vmem:[%s1822 + $0x1a4] sm:$0xf]
  %v1929 = vld [vmem:[%s1822 + $0x1a8] sm:$0xf]
  %v1930 = vld [vmem:[%s1822 + $0x1ac] sm:$0xf]
  %v1931 = vld [vmem:[%s1822 + $0x1b0] sm:$0xf]
  %v1932 = vld [vmem:[%s1822 + $0x1b4] sm:$0xf]
  %v1933 = vld [vmem:[%s1822 + $0x1b8] sm:$0xf]
  %v1934 = vld [vmem:[%s1822 + $0x1bc] sm:$0xf]
  %v1935 = vld [vmem:[%s1822 + $0x1c0] sm:$0xf]
  %v1936 = vld [vmem:[%s1822 + $0x1c4] sm:$0xf]
  %v1937 = vld [vmem:[%s1822 + $0x1c8] sm:$0xf]
  %v1938 = vld [vmem:[%s1822 + $0x1cc] sm:$0xf]
  %v1939 = vld [vmem:[%s1822 + $0x1d0] sm:$0xf]
  %v1940 = vld [vmem:[%s1822 + $0x1d4] sm:$0xf]
  %v1941 = vld [vmem:[%s1822 + $0x1d8] sm:$0xf]
  %v1942 = vld [vmem:[%s1822 + $0x1dc] sm:$0xf]
  %v2063 = vunpack.c.l.b16 %v1340
  %v2064 = vunpack.c.l.b16 %v1341
  %v2065 = vunpack.c.l.b16 %v1342
  %v2066 = vunpack.c.l.b16 %v1343
  %v2067 = vunpack.c.l.b16 %v1344
  %v2068 = vunpack.c.l.b16 %v1345
  %v2069 = vunpack.c.l.b16 %v1346
  %v2070 = vunpack.c.l.b16 %v1347
  %v2071 = vunpack.c.l.b16 %v1348
  %v2072 = vunpack.c.l.b16 %v1349
  %v2073 = vunpack.c.l.b16 %v1350
  %v2074 = vunpack.c.l.b16 %v1351
  %v2075 = vunpack.c.l.b16 %v1352
  %v2076 = vunpack.c.l.b16 %v1353
  %v2077 = vunpack.c.l.b16 %v1354
  %v2078 = vunpack.c.l.b16 %v1355
  %v2079 = vunpack.c.l.b16 %v1356
  %v2080 = vunpack.c.l.b16 %v1357
  %v2081 = vunpack.c.l.b16 %v1358
  %v2082 = vunpack.c.l.b16 %v1359
  %v2083 = vunpack.c.l.b16 %v1360
  %v2084 = vunpack.c.l.b16 %v1361
  %v2085 = vunpack.c.l.b16 %v1362
  %v2086 = vunpack.c.l.b16 %v1363
  %v2087 = vunpack.c.l.b16 %v1364
  %v2088 = vunpack.c.l.b16 %v1365
  %v2089 = vunpack.c.l.b16 %v1366
  %v2090 = vunpack.c.l.b16 %v1367
  %v2091 = vunpack.c.l.b16 %v1368
  %v2092 = vunpack.c.l.b16 %v1369
  %v2093 = vunpack.c.l.b16 %v1370
  %v2094 = vunpack.c.l.b16 %v1371
  %v2095 = vunpack.c.l.b16 %v1372
  %v2096 = vunpack.c.l.b16 %v1373
  %v2097 = vunpack.c.l.b16 %v1374
  %v2098 = vunpack.c.l.b16 %v1375
  %v2099 = vunpack.c.l.b16 %v1376
  %v2100 = vunpack.c.l.b16 %v1377
  %v2101 = vunpack.c.l.b16 %v1378
  %v2102 = vunpack.c.l.b16 %v1379
  %v2103 = vunpack.c.l.b16 %v1380
  %v2104 = vunpack.c.l.b16 %v1381
  %v2105 = vunpack.c.l.b16 %v1382
  %v2106 = vunpack.c.l.b16 %v1383
  %v2107 = vunpack.c.l.b16 %v1384
  %v2108 = vunpack.c.l.b16 %v1385
  %v2109 = vunpack.c.l.b16 %v1386
  %v2110 = vunpack.c.l.b16 %v1387
  %v2111 = vunpack.c.l.b16 %v1388
  %v2112 = vunpack.c.l.b16 %v1389
  %v2113 = vunpack.c.l.b16 %v1390
  %v2114 = vunpack.c.l.b16 %v1391
  %v2115 = vunpack.c.l.b16 %v1392
  %v2116 = vunpack.c.l.b16 %v1393
  %v2117 = vunpack.c.l.b16 %v1394
  %v2118 = vunpack.c.l.b16 %v1395
  %v2119 = vunpack.c.l.b16 %v1396
  %v2120 = vunpack.c.l.b16 %v1397
  %v2121 = vunpack.c.l.b16 %v1398
  %v2122 = vunpack.c.l.b16 %v1399
  %v2123 = vunpack.c.l.b16 %v1400
  %v2124 = vunpack.c.l.b16 %v1401
  %v2125 = vunpack.c.l.b16 %v1402
  %v2126 = vunpack.c.l.b16 %v1403
  %v2127 = vunpack.c.l.b16 %v1404
  %v2128 = vunpack.c.l.b16 %v1405
  %v2129 = vunpack.c.l.b16 %v1406
  %v2130 = vunpack.c.l.b16 %v1407
  %v2131 = vunpack.c.l.b16 %v1408
  %v2132 = vunpack.c.l.b16 %v1409
  %v2133 = vunpack.c.l.b16 %v1410
  %v2134 = vunpack.c.l.b16 %v1411
  %v2135 = vunpack.c.l.b16 %v1412
  %v2136 = vunpack.c.l.b16 %v1413
  %v2137 = vunpack.c.l.b16 %v1414
  %v2138 = vunpack.c.l.b16 %v1415
  %v2139 = vunpack.c.l.b16 %v1416
  %v2140 = vunpack.c.l.b16 %v1417
  %v2141 = vunpack.c.l.b16 %v1418
  %v2142 = vunpack.c.l.b16 %v1419
  %v2143 = vunpack.c.l.b16 %v1420
  %v2144 = vunpack.c.l.b16 %v1421
  %v2145 = vunpack.c.l.b16 %v1422
  %v2146 = vunpack.c.l.b16 %v1423
  %v2147 = vunpack.c.l.b16 %v1424
  %v2148 = vunpack.c.l.b16 %v1425
  %v2149 = vunpack.c.l.b16 %v1426
  %v2150 = vunpack.c.l.b16 %v1427
  %v2151 = vunpack.c.l.b16 %v1428
  %v2152 = vunpack.c.l.b16 %v1429
  %v2153 = vunpack.c.l.b16 %v1430
  %v2154 = vunpack.c.l.b16 %v1431
  %v2155 = vunpack.c.l.b16 %v1432
  %v2156 = vunpack.c.l.b16 %v1433
  %v2157 = vunpack.c.l.b16 %v1434
  %v2158 = vunpack.c.l.b16 %v1435
  %v2159 = vunpack.c.l.b16 %v1436
  %v2160 = vunpack.c.l.b16 %v1437
  %v2161 = vunpack.c.l.b16 %v1438
  %v2162 = vunpack.c.l.b16 %v1439
  %v2163 = vunpack.c.l.b16 %v1440
  %v2164 = vunpack.c.l.b16 %v1441
  %v2165 = vunpack.c.l.b16 %v1442
  %v2166 = vunpack.c.l.b16 %v1443
  %v2167 = vunpack.c.l.b16 %v1444
  %v2168 = vunpack.c.l.b16 %v1445
  %v2169 = vunpack.c.l.b16 %v1446
  %v2170 = vunpack.c.l.b16 %v1447
  %v2171 = vunpack.c.l.b16 %v1448
  %v2172 = vunpack.c.l.b16 %v1449
  %v2173 = vunpack.c.l.b16 %v1450
  %v2174 = vunpack.c.l.b16 %v1451
  %v2175 = vunpack.c.l.b16 %v1452
  %v2176 = vunpack.c.l.b16 %v1453
  %v2177 = vunpack.c.l.b16 %v1454
  %v2178 = vunpack.c.l.b16 %v1455
  %v2179 = vunpack.c.l.b16 %v1456
  %v2180 = vunpack.c.l.b16 %v1457
  %v2181 = vunpack.c.l.b16 %v1458
  %v2182 = vunpack.c.l.b16 %v1459
  %v2183 = vpack.c.b16 %v2064, %v2063
  %v2184 = vpack.c.b16 %v2066, %v2065
  %v2185 = vpack.c.b16 %v2068, %v2067
  %v2186 = vpack.c.b16 %v2070, %v2069
  %v2187 = vpack.c.b16 %v2072, %v2071
  %v2188 = vpack.c.b16 %v2074, %v2073
  %v2189 = vpack.c.b16 %v2076, %v2075
  %v2190 = vpack.c.b16 %v2078, %v2077
  %v2191 = vpack.c.b16 %v2080, %v2079
  %v2192 = vpack.c.b16 %v2082, %v2081
  %v2193 = vpack.c.b16 %v2084, %v2083
  %v2194 = vpack.c.b16 %v2086, %v2085
  %v2195 = vpack.c.b16 %v2088, %v2087
  %v2196 = vpack.c.b16 %v2090, %v2089
  %v2197 = vpack.c.b16 %v2092, %v2091
  %v2198 = vpack.c.b16 %v2094, %v2093
  %v2199 = vpack.c.b16 %v2096, %v2095
  %v2200 = vpack.c.b16 %v2098, %v2097
  %v2201 = vpack.c.b16 %v2100, %v2099
  %v2202 = vpack.c.b16 %v2102, %v2101
  %v2203 = vpack.c.b16 %v2104, %v2103
  %v2204 = vpack.c.b16 %v2106, %v2105
  %v2205 = vpack.c.b16 %v2108, %v2107
  %v2206 = vpack.c.b16 %v2110, %v2109
  %v2207 = vpack.c.b16 %v2112, %v2111
  %v2208 = vpack.c.b16 %v2114, %v2113
  %v2209 = vpack.c.b16 %v2116, %v2115
  %v2210 = vpack.c.b16 %v2118, %v2117
  %v2211 = vpack.c.b16 %v2120, %v2119
  %v2212 = vpack.c.b16 %v2122, %v2121
  %v2213 = vpack.c.b16 %v2124, %v2123
  %v2214 = vpack.c.b16 %v2126, %v2125
  %v2215 = vpack.c.b16 %v2128, %v2127
  %v2216 = vpack.c.b16 %v2130, %v2129
  %v2217 = vpack.c.b16 %v2132, %v2131
  %v2218 = vpack.c.b16 %v2134, %v2133
  %v2219 = vpack.c.b16 %v2136, %v2135
  %v2220 = vpack.c.b16 %v2138, %v2137
  %v2221 = vpack.c.b16 %v2140, %v2139
  %v2222 = vpack.c.b16 %v2142, %v2141
  %v2223 = vpack.c.b16 %v2144, %v2143
  %v2224 = vpack.c.b16 %v2146, %v2145
  %v2225 = vpack.c.b16 %v2148, %v2147
  %v2226 = vpack.c.b16 %v2150, %v2149
  %v2227 = vpack.c.b16 %v2152, %v2151
  %v2228 = vpack.c.b16 %v2154, %v2153
  %v2229 = vpack.c.b16 %v2156, %v2155
  %v2230 = vpack.c.b16 %v2158, %v2157
  %v2231 = vpack.c.b16 %v2160, %v2159
  %v2232 = vpack.c.b16 %v2162, %v2161
  %v2233 = vpack.c.b16 %v2164, %v2163
  %v2234 = vpack.c.b16 %v2166, %v2165
  %v2235 = vpack.c.b16 %v2168, %v2167
  %v2236 = vpack.c.b16 %v2170, %v2169
  %v2237 = vpack.c.b16 %v2172, %v2171
  %v2238 = vpack.c.b16 %v2174, %v2173
  %v2239 = vpack.c.b16 %v2176, %v2175
  %v2240 = vpack.c.b16 %v2178, %v2177
  %v2241 = vpack.c.b16 %v2180, %v2179
  %v2242 = vpack.c.b16 %v2182, %v2181
  %v2423 = vunpack.c.l.b16 %v1461
  %v2424 = vunpack.c.l.b16 %v1462
  %v2425 = vunpack.c.l.b16 %v1463
  %v2426 = vunpack.c.l.b16 %v1464
  %v2427 = vunpack.c.l.b16 %v1465
  %v2428 = vunpack.c.l.b16 %v1466
  %v2429 = vunpack.c.l.b16 %v1467
  %v2430 = vunpack.c.l.b16 %v1468
  %v2431 = vunpack.c.l.b16 %v1469
  %v2432 = vunpack.c.l.b16 %v1470
  %v2433 = vunpack.c.l.b16 %v1471
  %v2434 = vunpack.c.l.b16 %v1472
  %v2435 = vunpack.c.l.b16 %v1473
  %v2436 = vunpack.c.l.b16 %v1474
  %v2437 = vunpack.c.l.b16 %v1475
  %v2438 = vunpack.c.l.b16 %v1476
  %v2439 = vunpack.c.l.b16 %v1477
  %v2440 = vunpack.c.l.b16 %v1478
  %v2441 = vunpack.c.l.b16 %v1479
  %v2442 = vunpack.c.l.b16 %v1480
  %v2443 = vunpack.c.l.b16 %v1481
  %v2444 = vunpack.c.l.b16 %v1482
  %v2445 = vunpack.c.l.b16 %v1483
  %v2446 = vunpack.c.l.b16 %v1484
  %v2447 = vunpack.c.l.b16 %v1485
  %v2448 = vunpack.c.l.b16 %v1486
  %v2449 = vunpack.c.l.b16 %v1487
  %v2450 = vunpack.c.l.b16 %v1488
  %v2451 = vunpack.c.l.b16 %v1489
  %v2452 = vunpack.c.l.b16 %v1490
  %v2453 = vunpack.c.l.b16 %v1491
  %v2454 = vunpack.c.l.b16 %v1492
  %v2455 = vunpack.c.l.b16 %v1493
  %v2456 = vunpack.c.l.b16 %v1494
  %v2457 = vunpack.c.l.b16 %v1495
  %v2458 = vunpack.c.l.b16 %v1496
  %v2459 = vunpack.c.l.b16 %v1497
  %v2460 = vunpack.c.l.b16 %v1498
  %v2461 = vunpack.c.l.b16 %v1499
  %v2462 = vunpack.c.l.b16 %v1500
  %v2463 = vunpack.c.l.b16 %v1501
  %v2464 = vunpack.c.l.b16 %v1502
  %v2465 = vunpack.c.l.b16 %v1503
  %v2466 = vunpack.c.l.b16 %v1504
  %v2467 = vunpack.c.l.b16 %v1505
  %v2468 = vunpack.c.l.b16 %v1506
  %v2469 = vunpack.c.l.b16 %v1507
  %v2470 = vunpack.c.l.b16 %v1508
  %v2471 = vunpack.c.l.b16 %v1509
  %v2472 = vunpack.c.l.b16 %v1510
  %v2473 = vunpack.c.l.b16 %v1511
  %v2474 = vunpack.c.l.b16 %v1512
  %v2475 = vunpack.c.l.b16 %v1513
  %v2476 = vunpack.c.l.b16 %v1514
  %v2477 = vunpack.c.l.b16 %v1515
  %v2478 = vunpack.c.l.b16 %v1516
  %v2479 = vunpack.c.l.b16 %v1517
  %v2480 = vunpack.c.l.b16 %v1518
  %v2481 = vunpack.c.l.b16 %v1519
  %v2482 = vunpack.c.l.b16 %v1520
  %v2483 = vunpack.c.l.b16 %v1521
  %v2484 = vunpack.c.l.b16 %v1522
  %v2485 = vunpack.c.l.b16 %v1523
  %v2486 = vunpack.c.l.b16 %v1524
  %v2487 = vunpack.c.l.b16 %v1525
  %v2488 = vunpack.c.l.b16 %v1526
  %v2489 = vunpack.c.l.b16 %v1527
  %v2490 = vunpack.c.l.b16 %v1528
  %v2491 = vunpack.c.l.b16 %v1529
  %v2492 = vunpack.c.l.b16 %v1530
  %v2493 = vunpack.c.l.b16 %v1531
  %v2494 = vunpack.c.l.b16 %v1532
  %v2495 = vunpack.c.l.b16 %v1533
  %v2496 = vunpack.c.l.b16 %v1534
  %v2497 = vunpack.c.l.b16 %v1535
  %v2498 = vunpack.c.l.b16 %v1536
  %v2499 = vunpack.c.l.b16 %v1537
  %v2500 = vunpack.c.l.b16 %v1538
  %v2501 = vunpack.c.l.b16 %v1539
  %v2502 = vunpack.c.l.b16 %v1540
  %v2503 = vunpack.c.l.b16 %v1541
  %v2504 = vunpack.c.l.b16 %v1542
  %v2505 = vunpack.c.l.b16 %v1543
  %v2506 = vunpack.c.l.b16 %v1544
  %v2507 = vunpack.c.l.b16 %v1545
  %v2508 = vunpack.c.l.b16 %v1546
  %v2509 = vunpack.c.l.b16 %v1547
  %v2510 = vunpack.c.l.b16 %v1548
  %v2511 = vunpack.c.l.b16 %v1549
  %v2512 = vunpack.c.l.b16 %v1550
  %v2513 = vunpack.c.l.b16 %v1551
  %v2514 = vunpack.c.l.b16 %v1552
  %v2515 = vunpack.c.l.b16 %v1553
  %v2516 = vunpack.c.l.b16 %v1554
  %v2517 = vunpack.c.l.b16 %v1555
  %v2518 = vunpack.c.l.b16 %v1556
  %v2519 = vunpack.c.l.b16 %v1557
  %v2520 = vunpack.c.l.b16 %v1558
  %v2521 = vunpack.c.l.b16 %v1559
  %v2522 = vunpack.c.l.b16 %v1560
  %v2523 = vunpack.c.l.b16 %v1561
  %v2524 = vunpack.c.l.b16 %v1562
  %v2525 = vunpack.c.l.b16 %v1563
  %v2526 = vunpack.c.l.b16 %v1564
  %v2527 = vunpack.c.l.b16 %v1565
  %v2528 = vunpack.c.l.b16 %v1566
  %v2529 = vunpack.c.l.b16 %v1567
  %v2530 = vunpack.c.l.b16 %v1568
  %v2531 = vunpack.c.l.b16 %v1569
  %v2532 = vunpack.c.l.b16 %v1570
  %v2533 = vunpack.c.l.b16 %v1571
  %v2534 = vunpack.c.l.b16 %v1572
  %v2535 = vunpack.c.l.b16 %v1573
  %v2536 = vunpack.c.l.b16 %v1574
  %v2537 = vunpack.c.l.b16 %v1575
  %v2538 = vunpack.c.l.b16 %v1576
  %v2539 = vunpack.c.l.b16 %v1577
  %v2540 = vunpack.c.l.b16 %v1578
  %v2541 = vunpack.c.l.b16 %v1579
  %v2542 = vunpack.c.l.b16 %v1580
  %v2543 = vpack.c.b16 %v2424, %v2423
  %v2544 = vpack.c.b16 %v2426, %v2425
  %v2545 = vpack.c.b16 %v2428, %v2427
  %v2546 = vpack.c.b16 %v2430, %v2429
  %v2547 = vpack.c.b16 %v2432, %v2431
  %v2548 = vpack.c.b16 %v2434, %v2433
  %v2549 = vpack.c.b16 %v2436, %v2435
  %v2550 = vpack.c.b16 %v2438, %v2437
  %v2551 = vpack.c.b16 %v2440, %v2439
  %v2552 = vpack.c.b16 %v2442, %v2441
  %v2553 = vpack.c.b16 %v2444, %v2443
  %v2554 = vpack.c.b16 %v2446, %v2445
  %v2555 = vpack.c.b16 %v2448, %v2447
  %v2556 = vpack.c.b16 %v2450, %v2449
  %v2557 = vpack.c.b16 %v2452, %v2451
  %v2558 = vpack.c.b16 %v2454, %v2453
  %v2559 = vpack.c.b16 %v2456, %v2455
  %v2560 = vpack.c.b16 %v2458, %v2457
  %v2561 = vpack.c.b16 %v2460, %v2459
  %v2562 = vpack.c.b16 %v2462, %v2461
  %v2563 = vpack.c.b16 %v2464, %v2463
  %v2564 = vpack.c.b16 %v2466, %v2465
  %v2565 = vpack.c.b16 %v2468, %v2467
  %v2566 = vpack.c.b16 %v2470, %v2469
  %v2567 = vpack.c.b16 %v2472, %v2471
  %v2568 = vpack.c.b16 %v2474, %v2473
  %v2569 = vpack.c.b16 %v2476, %v2475
  %v2570 = vpack.c.b16 %v2478, %v2477
  %v2571 = vpack.c.b16 %v2480, %v2479
  %v2572 = vpack.c.b16 %v2482, %v2481
  %v2573 = vpack.c.b16 %v2484, %v2483
  %v2574 = vpack.c.b16 %v2486, %v2485
  %v2575 = vpack.c.b16 %v2488, %v2487
  %v2576 = vpack.c.b16 %v2490, %v2489
  %v2577 = vpack.c.b16 %v2492, %v2491
  %v2578 = vpack.c.b16 %v2494, %v2493
  %v2579 = vpack.c.b16 %v2496, %v2495
  %v2580 = vpack.c.b16 %v2498, %v2497
  %v2581 = vpack.c.b16 %v2500, %v2499
  %v2582 = vpack.c.b16 %v2502, %v2501
  %v2583 = vpack.c.b16 %v2504, %v2503
  %v2584 = vpack.c.b16 %v2506, %v2505
  %v2585 = vpack.c.b16 %v2508, %v2507
  %v2586 = vpack.c.b16 %v2510, %v2509
  %v2587 = vpack.c.b16 %v2512, %v2511
  %v2588 = vpack.c.b16 %v2514, %v2513
  %v2589 = vpack.c.b16 %v2516, %v2515
  %v2590 = vpack.c.b16 %v2518, %v2517
  %v2591 = vpack.c.b16 %v2520, %v2519
  %v2592 = vpack.c.b16 %v2522, %v2521
  %v2593 = vpack.c.b16 %v2524, %v2523
  %v2594 = vpack.c.b16 %v2526, %v2525
  %v2595 = vpack.c.b16 %v2528, %v2527
  %v2596 = vpack.c.b16 %v2530, %v2529
  %v2597 = vpack.c.b16 %v2532, %v2531
  %v2598 = vpack.c.b16 %v2534, %v2533
  %v2599 = vpack.c.b16 %v2536, %v2535
  %v2600 = vpack.c.b16 %v2538, %v2537
  %v2601 = vpack.c.b16 %v2540, %v2539
  %v2602 = vpack.c.b16 %v2542, %v2541
  %v2783 = vunpack.c.l.b16 %v1581
  %v2784 = vunpack.c.l.b16 %v1582
  %v2785 = vunpack.c.l.b16 %v1583
  %v2786 = vunpack.c.l.b16 %v1584
  %v2787 = vunpack.c.l.b16 %v1585
  %v2788 = vunpack.c.l.b16 %v1586
  %v2789 = vunpack.c.l.b16 %v1587
  %v2790 = vunpack.c.l.b16 %v1588
  %v2791 = vunpack.c.l.b16 %v1589
  %v2792 = vunpack.c.l.b16 %v1590
  %v2793 = vunpack.c.l.b16 %v1591
  %v2794 = vunpack.c.l.b16 %v1592
  %v2795 = vunpack.c.l.b16 %v1593
  %v2796 = vunpack.c.l.b16 %v1594
  %v2797 = vunpack.c.l.b16 %v1595
  %v2798 = vunpack.c.l.b16 %v1596
  %v2799 = vunpack.c.l.b16 %v1597
  %v2800 = vunpack.c.l.b16 %v1598
  %v2801 = vunpack.c.l.b16 %v1599
  %v2802 = vunpack.c.l.b16 %v1600
  %v2803 = vunpack.c.l.b16 %v1601
  %v2804 = vunpack.c.l.b16 %v1602
  %v2805 = vunpack.c.l.b16 %v1603
  %v2806 = vunpack.c.l.b16 %v1604
  %v2807 = vunpack.c.l.b16 %v1605
  %v2808 = vunpack.c.l.b16 %v1606
  %v2809 = vunpack.c.l.b16 %v1607
  %v2810 = vunpack.c.l.b16 %v1608
  %v2811 = vunpack.c.l.b16 %v1609
  %v2812 = vunpack.c.l.b16 %v1610
  %v2813 = vunpack.c.l.b16 %v1611
  %v2814 = vunpack.c.l.b16 %v1612
  %v2815 = vunpack.c.l.b16 %v1613
  %v2816 = vunpack.c.l.b16 %v1614
  %v2817 = vunpack.c.l.b16 %v1615
  %v2818 = vunpack.c.l.b16 %v1616
  %v2819 = vunpack.c.l.b16 %v1617
  %v2820 = vunpack.c.l.b16 %v1618
  %v2821 = vunpack.c.l.b16 %v1619
  %v2822 = vunpack.c.l.b16 %v1620
  %v2823 = vunpack.c.l.b16 %v1621
  %v2824 = vunpack.c.l.b16 %v1622
  %v2825 = vunpack.c.l.b16 %v1623
  %v2826 = vunpack.c.l.b16 %v1624
  %v2827 = vunpack.c.l.b16 %v1625
  %v2828 = vunpack.c.l.b16 %v1626
  %v2829 = vunpack.c.l.b16 %v1627
  %v2830 = vunpack.c.l.b16 %v1628
  %v2831 = vunpack.c.l.b16 %v1629
  %v2832 = vunpack.c.l.b16 %v1630
  %v2833 = vunpack.c.l.b16 %v1631
  %v2834 = vunpack.c.l.b16 %v1632
  %v2835 = vunpack.c.l.b16 %v1633
  %v2836 = vunpack.c.l.b16 %v1634
  %v2837 = vunpack.c.l.b16 %v1635
  %v2838 = vunpack.c.l.b16 %v1636
  %v2839 = vunpack.c.l.b16 %v1637
  %v2840 = vunpack.c.l.b16 %v1638
  %v2841 = vunpack.c.l.b16 %v1639
  %v2842 = vunpack.c.l.b16 %v1640
  %v2843 = vunpack.c.l.b16 %v1641
  %v2844 = vunpack.c.l.b16 %v1642
  %v2845 = vunpack.c.l.b16 %v1643
  %v2846 = vunpack.c.l.b16 %v1644
  %v2847 = vunpack.c.l.b16 %v1645
  %v2848 = vunpack.c.l.b16 %v1646
  %v2849 = vunpack.c.l.b16 %v1647
  %v2850 = vunpack.c.l.b16 %v1648
  %v2851 = vunpack.c.l.b16 %v1649
  %v2852 = vunpack.c.l.b16 %v1650
  %v2853 = vunpack.c.l.b16 %v1651
  %v2854 = vunpack.c.l.b16 %v1652
  %v2855 = vunpack.c.l.b16 %v1653
  %v2856 = vunpack.c.l.b16 %v1654
  %v2857 = vunpack.c.l.b16 %v1655
  %v2858 = vunpack.c.l.b16 %v1656
  %v2859 = vunpack.c.l.b16 %v1657
  %v2860 = vunpack.c.l.b16 %v1658
  %v2861 = vunpack.c.l.b16 %v1659
  %v2862 = vunpack.c.l.b16 %v1660
  %v2863 = vunpack.c.l.b16 %v1661
  %v2864 = vunpack.c.l.b16 %v1662
  %v2865 = vunpack.c.l.b16 %v1663
  %v2866 = vunpack.c.l.b16 %v1664
  %v2867 = vunpack.c.l.b16 %v1665
  %v2868 = vunpack.c.l.b16 %v1666
  %v2869 = vunpack.c.l.b16 %v1667
  %v2870 = vunpack.c.l.b16 %v1668
  %v2871 = vunpack.c.l.b16 %v1669
  %v2872 = vunpack.c.l.b16 %v1670
  %v2873 = vunpack.c.l.b16 %v1671
  %v2874 = vunpack.c.l.b16 %v1672
  %v2875 = vunpack.c.l.b16 %v1673
  %v2876 = vunpack.c.l.b16 %v1674
  %v2877 = vunpack.c.l.b16 %v1675
  %v2878 = vunpack.c.l.b16 %v1676
  %v2879 = vunpack.c.l.b16 %v1677
  %v2880 = vunpack.c.l.b16 %v1678
  %v2881 = vunpack.c.l.b16 %v1679
  %v2882 = vunpack.c.l.b16 %v1680
  %v2883 = vunpack.c.l.b16 %v1681
  %v2884 = vunpack.c.l.b16 %v1682
  %v2885 = vunpack.c.l.b16 %v1683
  %v2886 = vunpack.c.l.b16 %v1684
  %v2887 = vunpack.c.l.b16 %v1685
  %v2888 = vunpack.c.l.b16 %v1686
  %v2889 = vunpack.c.l.b16 %v1687
  %v2890 = vunpack.c.l.b16 %v1688
  %v2891 = vunpack.c.l.b16 %v1689
  %v2892 = vunpack.c.l.b16 %v1690
  %v2893 = vunpack.c.l.b16 %v1691
  %v2894 = vunpack.c.l.b16 %v1692
  %v2895 = vunpack.c.l.b16 %v1693
  %v2896 = vunpack.c.l.b16 %v1694
  %v2897 = vunpack.c.l.b16 %v1695
  %v2898 = vunpack.c.l.b16 %v1696
  %v2899 = vunpack.c.l.b16 %v1697
  %v2900 = vunpack.c.l.b16 %v1698
  %v2901 = vunpack.c.l.b16 %v1699
  %v2902 = vunpack.c.l.b16 %v1700
  %v2903 = vpack.c.b16 %v2784, %v2783
  %v2904 = vpack.c.b16 %v2786, %v2785
  %v2905 = vpack.c.b16 %v2788, %v2787
  %v2906 = vpack.c.b16 %v2790, %v2789
  %v2907 = vpack.c.b16 %v2792, %v2791
  %v2908 = vpack.c.b16 %v2794, %v2793
  %v2909 = vpack.c.b16 %v2796, %v2795
  %v2910 = vpack.c.b16 %v2798, %v2797
  %v2911 = vpack.c.b16 %v2800, %v2799
  %v2912 = vpack.c.b16 %v2802, %v2801
  %v2913 = vpack.c.b16 %v2804, %v2803
  %v2914 = vpack.c.b16 %v2806, %v2805
  %v2915 = vpack.c.b16 %v2808, %v2807
  %v2916 = vpack.c.b16 %v2810, %v2809
  %v2917 = vpack.c.b16 %v2812, %v2811
  %v2918 = vpack.c.b16 %v2814, %v2813
  %v2919 = vpack.c.b16 %v2816, %v2815
  %v2920 = vpack.c.b16 %v2818, %v2817
  %v2921 = vpack.c.b16 %v2820, %v2819
  %v2922 = vpack.c.b16 %v2822, %v2821
  %v2923 = vpack.c.b16 %v2824, %v2823
  %v2924 = vpack.c.b16 %v2826, %v2825
  %v2925 = vpack.c.b16 %v2828, %v2827
  %v2926 = vpack.c.b16 %v2830, %v2829
  %v2927 = vpack.c.b16 %v2832, %v2831
  %v2928 = vpack.c.b16 %v2834, %v2833
  %v2929 = vpack.c.b16 %v2836, %v2835
  %v2930 = vpack.c.b16 %v2838, %v2837
  %v2931 = vpack.c.b16 %v2840, %v2839
  %v2932 = vpack.c.b16 %v2842, %v2841
  %v2933 = vpack.c.b16 %v2844, %v2843
  %v2934 = vpack.c.b16 %v2846, %v2845
  %v2935 = vpack.c.b16 %v2848, %v2847
  %v2936 = vpack.c.b16 %v2850, %v2849
  %v2937 = vpack.c.b16 %v2852, %v2851
  %v2938 = vpack.c.b16 %v2854, %v2853
  %v2939 = vpack.c.b16 %v2856, %v2855
  %v2940 = vpack.c.b16 %v2858, %v2857
  %v2941 = vpack.c.b16 %v2860, %v2859
  %v2942 = vpack.c.b16 %v2862, %v2861
  %v2943 = vpack.c.b16 %v2864, %v2863
  %v2944 = vpack.c.b16 %v2866, %v2865
  %v2945 = vpack.c.b16 %v2868, %v2867
  %v2946 = vpack.c.b16 %v2870, %v2869
  %v2947 = vpack.c.b16 %v2872, %v2871
  %v2948 = vpack.c.b16 %v2874, %v2873
  %v2949 = vpack.c.b16 %v2876, %v2875
  %v2950 = vpack.c.b16 %v2878, %v2877
  %v2951 = vpack.c.b16 %v2880, %v2879
  %v2952 = vpack.c.b16 %v2882, %v2881
  %v2953 = vpack.c.b16 %v2884, %v2883
  %v2954 = vpack.c.b16 %v2886, %v2885
  %v2955 = vpack.c.b16 %v2888, %v2887
  %v2956 = vpack.c.b16 %v2890, %v2889
  %v2957 = vpack.c.b16 %v2892, %v2891
  %v2958 = vpack.c.b16 %v2894, %v2893
  %v2959 = vpack.c.b16 %v2896, %v2895
  %v2960 = vpack.c.b16 %v2898, %v2897
  %v2961 = vpack.c.b16 %v2900, %v2899
  %v2962 = vpack.c.b16 %v2902, %v2901
  %v3143 = vunpack.c.l.b16 %v1702
  %v3144 = vunpack.c.l.b16 %v1703
  %v3145 = vunpack.c.l.b16 %v1704
  %v3146 = vunpack.c.l.b16 %v1705
  %v3147 = vunpack.c.l.b16 %v1706
  %v3148 = vunpack.c.l.b16 %v1707
  %v3149 = vunpack.c.l.b16 %v1708
  %v3150 = vunpack.c.l.b16 %v1709
  %v3151 = vunpack.c.l.b16 %v1710
  %v3152 = vunpack.c.l.b16 %v1711
  %v3153 = vunpack.c.l.b16 %v1712
  %v3154 = vunpack.c.l.b16 %v1713
  %v3155 = vunpack.c.l.b16 %v1714
  %v3156 = vunpack.c.l.b16 %v1715
  %v3157 = vunpack.c.l.b16 %v1716
  %v3158 = vunpack.c.l.b16 %v1717
  %v3159 = vunpack.c.l.b16 %v1718
  %v3160 = vunpack.c.l.b16 %v1719
  %v3161 = vunpack.c.l.b16 %v1720
  %v3162 = vunpack.c.l.b16 %v1721
  %v3163 = vunpack.c.l.b16 %v1722
  %v3164 = vunpack.c.l.b16 %v1723
  %v3165 = vunpack.c.l.b16 %v1724
  %v3166 = vunpack.c.l.b16 %v1725
  %v3167 = vunpack.c.l.b16 %v1726
  %v3168 = vunpack.c.l.b16 %v1727
  %v3169 = vunpack.c.l.b16 %v1728
  %v3170 = vunpack.c.l.b16 %v1729
  %v3171 = vunpack.c.l.b16 %v1730
  %v3172 = vunpack.c.l.b16 %v1731
  %v3173 = vunpack.c.l.b16 %v1732
  %v3174 = vunpack.c.l.b16 %v1733
  %v3175 = vunpack.c.l.b16 %v1734
  %v3176 = vunpack.c.l.b16 %v1735
  %v3177 = vunpack.c.l.b16 %v1736
  %v3178 = vunpack.c.l.b16 %v1737
  %v3179 = vunpack.c.l.b16 %v1738
  %v3180 = vunpack.c.l.b16 %v1739
  %v3181 = vunpack.c.l.b16 %v1740
  %v3182 = vunpack.c.l.b16 %v1741
  %v3183 = vunpack.c.l.b16 %v1742
  %v3184 = vunpack.c.l.b16 %v1743
  %v3185 = vunpack.c.l.b16 %v1744
  %v3186 = vunpack.c.l.b16 %v1745
  %v3187 = vunpack.c.l.b16 %v1746
  %v3188 = vunpack.c.l.b16 %v1747
  %v3189 = vunpack.c.l.b16 %v1748
  %v3190 = vunpack.c.l.b16 %v1749
  %v3191 = vunpack.c.l.b16 %v1750
  %v3192 = vunpack.c.l.b16 %v1751
  %v3193 = vunpack.c.l.b16 %v1752
  %v3194 = vunpack.c.l.b16 %v1753
  %v3195 = vunpack.c.l.b16 %v1754
  %v3196 = vunpack.c.l.b16 %v1755
  %v3197 = vunpack.c.l.b16 %v1756
  %v3198 = vunpack.c.l.b16 %v1757
  %v3199 = vunpack.c.l.b16 %v1758
  %v3200 = vunpack.c.l.b16 %v1759
  %v3201 = vunpack.c.l.b16 %v1760
  %v3202 = vunpack.c.l.b16 %v1761
  %v3203 = vunpack.c.l.b16 %v1762
  %v3204 = vunpack.c.l.b16 %v1763
  %v3205 = vunpack.c.l.b16 %v1764
  %v3206 = vunpack.c.l.b16 %v1765
  %v3207 = vunpack.c.l.b16 %v1766
  %v3208 = vunpack.c.l.b16 %v1767
  %v3209 = vunpack.c.l.b16 %v1768
  %v3210 = vunpack.c.l.b16 %v1769
  %v3211 = vunpack.c.l.b16 %v1770
  %v3212 = vunpack.c.l.b16 %v1771
  %v3213 = vunpack.c.l.b16 %v1772
  %v3214 = vunpack.c.l.b16 %v1773
  %v3215 = vunpack.c.l.b16 %v1774
  %v3216 = vunpack.c.l.b16 %v1775
  %v3217 = vunpack.c.l.b16 %v1776
  %v3218 = vunpack.c.l.b16 %v1777
  %v3219 = vunpack.c.l.b16 %v1778
  %v3220 = vunpack.c.l.b16 %v1779
  %v3221 = vunpack.c.l.b16 %v1780
  %v3222 = vunpack.c.l.b16 %v1781
  %v3223 = vunpack.c.l.b16 %v1782
  %v3224 = vunpack.c.l.b16 %v1783
  %v3225 = vunpack.c.l.b16 %v1784
  %v3226 = vunpack.c.l.b16 %v1785
  %v3227 = vunpack.c.l.b16 %v1786
  %v3228 = vunpack.c.l.b16 %v1787
  %v3229 = vunpack.c.l.b16 %v1788
  %v3230 = vunpack.c.l.b16 %v1789
  %v3231 = vunpack.c.l.b16 %v1790
  %v3232 = vunpack.c.l.b16 %v1791
  %v3233 = vunpack.c.l.b16 %v1792
  %v3234 = vunpack.c.l.b16 %v1793
  %v3235 = vunpack.c.l.b16 %v1794
  %v3236 = vunpack.c.l.b16 %v1795
  %v3237 = vunpack.c.l.b16 %v1796
  %v3238 = vunpack.c.l.b16 %v1797
  %v3239 = vunpack.c.l.b16 %v1798
  %v3240 = vunpack.c.l.b16 %v1799
  %v3241 = vunpack.c.l.b16 %v1800
  %v3242 = vunpack.c.l.b16 %v1801
  %v3243 = vunpack.c.l.b16 %v1802
  %v3244 = vunpack.c.l.b16 %v1803
  %v3245 = vunpack.c.l.b16 %v1804
  %v3246 = vunpack.c.l.b16 %v1805
  %v3247 = vunpack.c.l.b16 %v1806
  %v3248 = vunpack.c.l.b16 %v1807
  %v3249 = vunpack.c.l.b16 %v1808
  %v3250 = vunpack.c.l.b16 %v1809
  %v3251 = vunpack.c.l.b16 %v1810
  %v3252 = vunpack.c.l.b16 %v1811
  %v3253 = vunpack.c.l.b16 %v1812
  %v3254 = vunpack.c.l.b16 %v1813
  %v3255 = vunpack.c.l.b16 %v1814
  %v3256 = vunpack.c.l.b16 %v1815
  %v3257 = vunpack.c.l.b16 %v1816
  %v3258 = vunpack.c.l.b16 %v1817
  %v3259 = vunpack.c.l.b16 %v1818
  %v3260 = vunpack.c.l.b16 %v1819
  %v3261 = vunpack.c.l.b16 %v1820
  %v3262 = vunpack.c.l.b16 %v1821
  %v3263 = vpack.c.b16 %v3144, %v3143
  %v3264 = vpack.c.b16 %v3146, %v3145
  %v3265 = vpack.c.b16 %v3148, %v3147
  %v3266 = vpack.c.b16 %v3150, %v3149
  %v3267 = vpack.c.b16 %v3152, %v3151
  %v3268 = vpack.c.b16 %v3154, %v3153
  %v3269 = vpack.c.b16 %v3156, %v3155
  %v3270 = vpack.c.b16 %v3158, %v3157
  %v3271 = vpack.c.b16 %v3160, %v3159
  %v3272 = vpack.c.b16 %v3162, %v3161
  %v3273 = vpack.c.b16 %v3164, %v3163
  %v3274 = vpack.c.b16 %v3166, %v3165
  %v3275 = vpack.c.b16 %v3168, %v3167
  %v3276 = vpack.c.b16 %v3170, %v3169
  %v3277 = vpack.c.b16 %v3172, %v3171
  %v3278 = vpack.c.b16 %v3174, %v3173
  %v3279 = vpack.c.b16 %v3176, %v3175
  %v3280 = vpack.c.b16 %v3178, %v3177
  %v3281 = vpack.c.b16 %v3180, %v3179
  %v3282 = vpack.c.b16 %v3182, %v3181
  %v3283 = vpack.c.b16 %v3184, %v3183
  %v3284 = vpack.c.b16 %v3186, %v3185
  %v3285 = vpack.c.b16 %v3188, %v3187
  %v3286 = vpack.c.b16 %v3190, %v3189
  %v3287 = vpack.c.b16 %v3192, %v3191
  %v3288 = vpack.c.b16 %v3194, %v3193
  %v3289 = vpack.c.b16 %v3196, %v3195
  %v3290 = vpack.c.b16 %v3198, %v3197
  %v3291 = vpack.c.b16 %v3200, %v3199
  %v3292 = vpack.c.b16 %v3202, %v3201
  %v3293 = vpack.c.b16 %v3204, %v3203
  %v3294 = vpack.c.b16 %v3206, %v3205
  %v3295 = vpack.c.b16 %v3208, %v3207
  %v3296 = vpack.c.b16 %v3210, %v3209
  %v3297 = vpack.c.b16 %v3212, %v3211
  %v3298 = vpack.c.b16 %v3214, %v3213
  %v3299 = vpack.c.b16 %v3216, %v3215
  %v3300 = vpack.c.b16 %v3218, %v3217
  %v3301 = vpack.c.b16 %v3220, %v3219
  %v3302 = vpack.c.b16 %v3222, %v3221
  %v3303 = vpack.c.b16 %v3224, %v3223
  %v3304 = vpack.c.b16 %v3226, %v3225
  %v3305 = vpack.c.b16 %v3228, %v3227
  %v3306 = vpack.c.b16 %v3230, %v3229
  %v3307 = vpack.c.b16 %v3232, %v3231
  %v3308 = vpack.c.b16 %v3234, %v3233
  %v3309 = vpack.c.b16 %v3236, %v3235
  %v3310 = vpack.c.b16 %v3238, %v3237
  %v3311 = vpack.c.b16 %v3240, %v3239
  %v3312 = vpack.c.b16 %v3242, %v3241
  %v3313 = vpack.c.b16 %v3244, %v3243
  %v3314 = vpack.c.b16 %v3246, %v3245
  %v3315 = vpack.c.b16 %v3248, %v3247
  %v3316 = vpack.c.b16 %v3250, %v3249
  %v3317 = vpack.c.b16 %v3252, %v3251
  %v3318 = vpack.c.b16 %v3254, %v3253
  %v3319 = vpack.c.b16 %v3256, %v3255
  %v3320 = vpack.c.b16 %v3258, %v3257
  %v3321 = vpack.c.b16 %v3260, %v3259
  %v3322 = vpack.c.b16 %v3262, %v3261
  %v3503 = vunpack.c.l.b16 %v1823
  %v3504 = vunpack.c.l.b16 %v1824
  %v3505 = vunpack.c.l.b16 %v1825
  %v3506 = vunpack.c.l.b16 %v1826
  %v3507 = vunpack.c.l.b16 %v1827
  %v3508 = vunpack.c.l.b16 %v1828
  %v3509 = vunpack.c.l.b16 %v1829
  %v3510 = vunpack.c.l.b16 %v1830
  %v3511 = vunpack.c.l.b16 %v1831
  %v3512 = vunpack.c.l.b16 %v1832
  %v3513 = vunpack.c.l.b16 %v1833
  %v3514 = vunpack.c.l.b16 %v1834
  %v3515 = vunpack.c.l.b16 %v1835
  %v3516 = vunpack.c.l.b16 %v1836
  %v3517 = vunpack.c.l.b16 %v1837
  %v3518 = vunpack.c.l.b16 %v1838
  %v3519 = vunpack.c.l.b16 %v1839
  %v3520 = vunpack.c.l.b16 %v1840
  %v3521 = vunpack.c.l.b16 %v1841
  %v3522 = vunpack.c.l.b16 %v1842
  %v3523 = vunpack.c.l.b16 %v1843
  %v3524 = vunpack.c.l.b16 %v1844
  %v3525 = vunpack.c.l.b16 %v1845
  %v3526 = vunpack.c.l.b16 %v1846
  %v3527 = vunpack.c.l.b16 %v1847
  %v3528 = vunpack.c.l.b16 %v1848
  %v3529 = vunpack.c.l.b16 %v1849
  %v3530 = vunpack.c.l.b16 %v1850
  %v3531 = vunpack.c.l.b16 %v1851
  %v3532 = vunpack.c.l.b16 %v1852
  %v3533 = vunpack.c.l.b16 %v1853
  %v3534 = vunpack.c.l.b16 %v1854
  %v3535 = vunpack.c.l.b16 %v1855
  %v3536 = vunpack.c.l.b16 %v1856
  %v3537 = vunpack.c.l.b16 %v1857
  %v3538 = vunpack.c.l.b16 %v1858
  %v3539 = vunpack.c.l.b16 %v1859
  %v3540 = vunpack.c.l.b16 %v1860
  %v3541 = vunpack.c.l.b16 %v1861
  %v3542 = vunpack.c.l.b16 %v1862
  %v3543 = vunpack.c.l.b16 %v1863
  %v3544 = vunpack.c.l.b16 %v1864
  %v3545 = vunpack.c.l.b16 %v1865
  %v3546 = vunpack.c.l.b16 %v1866
  %v3547 = vunpack.c.l.b16 %v1867
  %v3548 = vunpack.c.l.b16 %v1868
  %v3549 = vunpack.c.l.b16 %v1869
  %v3550 = vunpack.c.l.b16 %v1870
  %v3551 = vunpack.c.l.b16 %v1871
  %v3552 = vunpack.c.l.b16 %v1872
  %v3553 = vunpack.c.l.b16 %v1873
  %v3554 = vunpack.c.l.b16 %v1874
  %v3555 = vunpack.c.l.b16 %v1875
  %v3556 = vunpack.c.l.b16 %v1876
  %v3557 = vunpack.c.l.b16 %v1877
  %v3558 = vunpack.c.l.b16 %v1878
  %v3559 = vunpack.c.l.b16 %v1879
  %v3560 = vunpack.c.l.b16 %v1880
  %v3561 = vunpack.c.l.b16 %v1881
  %v3562 = vunpack.c.l.b16 %v1882
  %v3563 = vunpack.c.l.b16 %v1883
  %v3564 = vunpack.c.l.b16 %v1884
  %v3565 = vunpack.c.l.b16 %v1885
  %v3566 = vunpack.c.l.b16 %v1886
  %v3567 = vunpack.c.l.b16 %v1887
  %v3568 = vunpack.c.l.b16 %v1888
  %v3569 = vunpack.c.l.b16 %v1889
  %v3570 = vunpack.c.l.b16 %v1890
  %v3571 = vunpack.c.l.b16 %v1891
  %v3572 = vunpack.c.l.b16 %v1892
  %v3573 = vunpack.c.l.b16 %v1893
  %v3574 = vunpack.c.l.b16 %v1894
  %v3575 = vunpack.c.l.b16 %v1895
  %v3576 = vunpack.c.l.b16 %v1896
  %v3577 = vunpack.c.l.b16 %v1897
  %v3578 = vunpack.c.l.b16 %v1898
  %v3579 = vunpack.c.l.b16 %v1899
  %v3580 = vunpack.c.l.b16 %v1900
  %v3581 = vunpack.c.l.b16 %v1901
  %v3582 = vunpack.c.l.b16 %v1902
  %v3583 = vunpack.c.l.b16 %v1903
  %v3584 = vunpack.c.l.b16 %v1904
  %v3585 = vunpack.c.l.b16 %v1905
  %v3586 = vunpack.c.l.b16 %v1906
  %v3587 = vunpack.c.l.b16 %v1907
  %v3588 = vunpack.c.l.b16 %v1908
  %v3589 = vunpack.c.l.b16 %v1909
  %v3590 = vunpack.c.l.b16 %v1910
  %v3591 = vunpack.c.l.b16 %v1911
  %v3592 = vunpack.c.l.b16 %v1912
  %v3593 = vunpack.c.l.b16 %v1913
  %v3594 = vunpack.c.l.b16 %v1914
  %v3595 = vunpack.c.l.b16 %v1915
  %v3596 = vunpack.c.l.b16 %v1916
  %v3597 = vunpack.c.l.b16 %v1917
  %v3598 = vunpack.c.l.b16 %v1918
  %v3599 = vunpack.c.l.b16 %v1919
  %v3600 = vunpack.c.l.b16 %v1920
  %v3601 = vunpack.c.l.b16 %v1921
  %v3602 = vunpack.c.l.b16 %v1922
  %v3603 = vunpack.c.l.b16 %v1923
  %v3604 = vunpack.c.l.b16 %v1924
  %v3605 = vunpack.c.l.b16 %v1925
  %v3606 = vunpack.c.l.b16 %v1926
  %v3607 = vunpack.c.l.b16 %v1927
  %v3608 = vunpack.c.l.b16 %v1928
  %v3609 = vunpack.c.l.b16 %v1929
  %v3610 = vunpack.c.l.b16 %v1930
  %v3611 = vunpack.c.l.b16 %v1931
  %v3612 = vunpack.c.l.b16 %v1932
  %v3613 = vunpack.c.l.b16 %v1933
  %v3614 = vunpack.c.l.b16 %v1934
  %v3615 = vunpack.c.l.b16 %v1935
  %v3616 = vunpack.c.l.b16 %v1936
  %v3617 = vunpack.c.l.b16 %v1937
  %v3618 = vunpack.c.l.b16 %v1938
  %v3619 = vunpack.c.l.b16 %v1939
  %v3620 = vunpack.c.l.b16 %v1940
  %v3621 = vunpack.c.l.b16 %v1941
  %v3622 = vunpack.c.l.b16 %v1942
  %v3623 = vpack.c.b16 %v3504, %v3503
  %v3624 = vpack.c.b16 %v3506, %v3505
  %v3625 = vpack.c.b16 %v3508, %v3507
  %v3626 = vpack.c.b16 %v3510, %v3509
  %v3627 = vpack.c.b16 %v3512, %v3511
  %v3628 = vpack.c.b16 %v3514, %v3513
  %v3629 = vpack.c.b16 %v3516, %v3515
  %v3630 = vpack.c.b16 %v3518, %v3517
  %v3631 = vpack.c.b16 %v3520, %v3519
  %v3632 = vpack.c.b16 %v3522, %v3521
  %v3633 = vpack.c.b16 %v3524, %v3523
  %v3634 = vpack.c.b16 %v3526, %v3525
  %v3635 = vpack.c.b16 %v3528, %v3527
  %v3636 = vpack.c.b16 %v3530, %v3529
  %v3637 = vpack.c.b16 %v3532, %v3531
  %v3638 = vpack.c.b16 %v3534, %v3533
  %v3639 = vpack.c.b16 %v3536, %v3535
  %v3640 = vpack.c.b16 %v3538, %v3537
  %v3641 = vpack.c.b16 %v3540, %v3539
  %v3642 = vpack.c.b16 %v3542, %v3541
  %v3643 = vpack.c.b16 %v3544, %v3543
  %v3644 = vpack.c.b16 %v3546, %v3545
  %v3645 = vpack.c.b16 %v3548, %v3547
  %v3646 = vpack.c.b16 %v3550, %v3549
  %v3647 = vpack.c.b16 %v3552, %v3551
  %v3648 = vpack.c.b16 %v3554, %v3553
  %v3649 = vpack.c.b16 %v3556, %v3555
  %v3650 = vpack.c.b16 %v3558, %v3557
  %v3651 = vpack.c.b16 %v3560, %v3559
  %v3652 = vpack.c.b16 %v3562, %v3561
  %v3653 = vpack.c.b16 %v3564, %v3563
  %v3654 = vpack.c.b16 %v3566, %v3565
  %v3655 = vpack.c.b16 %v3568, %v3567
  %v3656 = vpack.c.b16 %v3570, %v3569
  %v3657 = vpack.c.b16 %v3572, %v3571
  %v3658 = vpack.c.b16 %v3574, %v3573
  %v3659 = vpack.c.b16 %v3576, %v3575
  %v3660 = vpack.c.b16 %v3578, %v3577
  %v3661 = vpack.c.b16 %v3580, %v3579
  %v3662 = vpack.c.b16 %v3582, %v3581
  %v3663 = vpack.c.b16 %v3584, %v3583
  %v3664 = vpack.c.b16 %v3586, %v3585
  %v3665 = vpack.c.b16 %v3588, %v3587
  %v3666 = vpack.c.b16 %v3590, %v3589
  %v3667 = vpack.c.b16 %v3592, %v3591
  %v3668 = vpack.c.b16 %v3594, %v3593
  %v3669 = vpack.c.b16 %v3596, %v3595
  %v3670 = vpack.c.b16 %v3598, %v3597
  %v3671 = vpack.c.b16 %v3600, %v3599
  %v3672 = vpack.c.b16 %v3602, %v3601
  %v3673 = vpack.c.b16 %v3604, %v3603
  %v3674 = vpack.c.b16 %v3606, %v3605
  %v3675 = vpack.c.b16 %v3608, %v3607
  %v3676 = vpack.c.b16 %v3610, %v3609
  %v3677 = vpack.c.b16 %v3612, %v3611
  %v3678 = vpack.c.b16 %v3614, %v3613
  %v3679 = vpack.c.b16 %v3616, %v3615
  %v3680 = vpack.c.b16 %v3618, %v3617
  %v3681 = vpack.c.b16 %v3620, %v3619
  %v3682 = vpack.c.b16 %v3622, %v3621
  %v3743 = vld [vmem:[%s3] sm:$0xff]
  %v3744 = vld [vmem:[%s3 + $0x8] sm:$0xff]
  %v3745 = vld [vmem:[%s3 + $0x10] sm:$0xff]
  %v3746 = vld [vmem:[%s3 + $0x18] sm:$0xff]
  %v3747 = vld [vmem:[%s3 + $0x20] sm:$0xff]
  %v3748 = vld [vmem:[%s3 + $0x28] sm:$0xff]
  %v3749 = vld [vmem:[%s3 + $0x30] sm:$0xff]
  %v3750 = vld [vmem:[%s3 + $0x38] sm:$0xff]
  %v3751 = vld [vmem:[%s3 + $0x40] sm:$0xff]
  %v3752 = vld [vmem:[%s3 + $0x48] sm:$0xff]
  %v3753 = vld [vmem:[%s3 + $0x50] sm:$0xff]
  %v3754 = vld [vmem:[%s3 + $0x58] sm:$0xff]
  %v3755 = vld [vmem:[%s3 + $0x60] sm:$0xff]
  %v3756 = vld [vmem:[%s3 + $0x68] sm:$0xff]
  %v3757 = vld [vmem:[%s3 + $0x70] sm:$0xff]
  %v3758 = vld [vmem:[%s3 + $0x78] sm:$0xff]
  %v3759 = vld [vmem:[%s3 + $0x80] sm:$0xff]
  %v3760 = vld [vmem:[%s3 + $0x88] sm:$0xff]
  %v3761 = vld [vmem:[%s3 + $0x90] sm:$0xff]
  %v3762 = vld [vmem:[%s3 + $0x98] sm:$0xff]
  %v3763 = vld [vmem:[%s3 + $0xa0] sm:$0xff]
  %v3764 = vld [vmem:[%s3 + $0xa8] sm:$0xff]
  %v3765 = vld [vmem:[%s3 + $0xb0] sm:$0xff]
  %v3766 = vld [vmem:[%s3 + $0xb8] sm:$0xff]
  %v3767 = vld [vmem:[%s3 + $0xc0] sm:$0xff]
  %v3768 = vld [vmem:[%s3 + $0xc8] sm:$0xff]
  %v3769 = vld [vmem:[%s3 + $0xd0] sm:$0xff]
  %v3770 = vld [vmem:[%s3 + $0xd8] sm:$0xff]
  %v3771 = vld [vmem:[%s3 + $0xe0] sm:$0xff]
  %v3772 = vld [vmem:[%s3 + $0xe8] sm:$0xff]
  %v3773 = vld [vmem:[%s3 + $0xf0] sm:$0xff]
  %v3774 = vld [vmem:[%s3 + $0xf8] sm:$0xff]
  %v3775 = vld [vmem:[%s3 + $0x100] sm:$0xff]
  %v3776 = vld [vmem:[%s3 + $0x108] sm:$0xff]
  %v3777 = vld [vmem:[%s3 + $0x110] sm:$0xff]
  %v3778 = vld [vmem:[%s3 + $0x118] sm:$0xff]
  %v3779 = vld [vmem:[%s3 + $0x120] sm:$0xff]
  %v3780 = vld [vmem:[%s3 + $0x128] sm:$0xff]
  %v3781 = vld [vmem:[%s3 + $0x130] sm:$0xff]
  %v3782 = vld [vmem:[%s3 + $0x138] sm:$0xff]
  %v3783 = vld [vmem:[%s3 + $0x140] sm:$0xff]
  %v3784 = vld [vmem:[%s3 + $0x148] sm:$0xff]
  %v3785 = vld [vmem:[%s3 + $0x150] sm:$0xff]
  %v3786 = vld [vmem:[%s3 + $0x158] sm:$0xff]
  %v3787 = vld [vmem:[%s3 + $0x160] sm:$0xff]
  %v3788 = vld [vmem:[%s3 + $0x168] sm:$0xff]
  %v3789 = vld [vmem:[%s3 + $0x170] sm:$0xff]
  %v3790 = vld [vmem:[%s3 + $0x178] sm:$0xff]
  %v3791 = vld [vmem:[%s3 + $0x180] sm:$0xff]
  %v3792 = vld [vmem:[%s3 + $0x188] sm:$0xff]
  %v3793 = vld [vmem:[%s3 + $0x190] sm:$0xff]
  %v3794 = vld [vmem:[%s3 + $0x198] sm:$0xff]
  %v3795 = vld [vmem:[%s3 + $0x1a0] sm:$0xff]
  %v3796 = vld [vmem:[%s3 + $0x1a8] sm:$0xff]
  %v3797 = vld [vmem:[%s3 + $0x1b0] sm:$0xff]
  %v3798 = vld [vmem:[%s3 + $0x1b8] sm:$0xff]
  %v3799 = vld [vmem:[%s3 + $0x1c0] sm:$0xff]
  %v3800 = vld [vmem:[%s3 + $0x1c8] sm:$0xff]
  %v3801 = vld [vmem:[%s3 + $0x1d0] sm:$0xff]
  %v3802 = vld [vmem:[%s3 + $0x1d8] sm:$0xff]
  %v3803 = vld [vmem:[%s3 + $0x1e0] sm:$0xff]
  %v3804 = vld [vmem:[%s3 + $0x1e8] sm:$0xff]
  %v3805 = vld [vmem:[%s3 + $0x1f0] sm:$0xff]
  %v3806 = vld [vmem:[%s3 + $0x1f8] sm:$0xff]
  %v3807 = vld [vmem:[%s3 + $0x200] sm:$0xff]
  %v3808 = vld [vmem:[%s3 + $0x208] sm:$0xff]
  %v3809 = vld [vmem:[%s3 + $0x210] sm:$0xff]
  %v3810 = vld [vmem:[%s3 + $0x218] sm:$0xff]
  %v3811 = vld [vmem:[%s3 + $0x220] sm:$0xff]
  %v3812 = vld [vmem:[%s3 + $0x228] sm:$0xff]
  %v3813 = vld [vmem:[%s3 + $0x230] sm:$0xff]
  %v3814 = vld [vmem:[%s3 + $0x238] sm:$0xff]
  %v3815 = vld [vmem:[%s3 + $0x240] sm:$0xff]
  %v3816 = vld [vmem:[%s3 + $0x248] sm:$0xff]
  %v3817 = vld [vmem:[%s3 + $0x250] sm:$0xff]
  %v3818 = vld [vmem:[%s3 + $0x258] sm:$0xff]
  %v3819 = vld [vmem:[%s3 + $0x260] sm:$0xff]
  %v3820 = vld [vmem:[%s3 + $0x268] sm:$0xff]
  %v3821 = vld [vmem:[%s3 + $0x270] sm:$0xff]
  %v3822 = vld [vmem:[%s3 + $0x278] sm:$0xff]
  %v3823 = vld [vmem:[%s4] sm:$0x3]
  %v3825 = vperm.slane %v3823, 0
  %v3826 = vperm.slane %v3823, 1
  %v3909 = vunpack.c.l.b16 %v3743
  %v3910 = vunpack.c.h.b16 %v3743
  %v3911 = vunpack.c.l.b16 %v3744
  %v3912 = vunpack.c.h.b16 %v3744
  %v3913 = vunpack.c.l.b16 %v3745
  %v3914 = vunpack.c.h.b16 %v3745
  %v3915 = vunpack.c.l.b16 %v3746
  %v3916 = vunpack.c.h.b16 %v3746
  %v3917 = vunpack.c.l.b16 %v3747
  %v3918 = vunpack.c.h.b16 %v3747
  %v3919 = vunpack.c.l.b16 %v3748
  %v3920 = vunpack.c.h.b16 %v3748
  %v3921 = vunpack.c.l.b16 %v3749
  %v3922 = vunpack.c.h.b16 %v3749
  %v3923 = vunpack.c.l.b16 %v3750
  %v3924 = vunpack.c.h.b16 %v3750
  %v3925 = vunpack.c.l.b16 %v3751
  %v3926 = vunpack.c.h.b16 %v3751
  %v3927 = vunpack.c.l.b16 %v3752
  %v3928 = vunpack.c.h.b16 %v3752
  %v3929 = vunpack.c.l.b16 %v3753
  %v3930 = vunpack.c.h.b16 %v3753
  %v3931 = vunpack.c.l.b16 %v3754
  %v3932 = vunpack.c.h.b16 %v3754
  %v3933 = vunpack.c.l.b16 %v3755
  %v3934 = vunpack.c.h.b16 %v3755
  %v3935 = vunpack.c.l.b16 %v3756
  %v3936 = vunpack.c.h.b16 %v3756
  %v3937 = vunpack.c.l.b16 %v3757
  %v3938 = vunpack.c.h.b16 %v3757
  %v3939 = vunpack.c.l.b16 %v3758
  %v3940 = vunpack.c.h.b16 %v3758
  %v3941 = vunpack.c.l.b16 %v3759
  %v3942 = vunpack.c.h.b16 %v3759
  %v3943 = vunpack.c.l.b16 %v3760
  %v3944 = vunpack.c.h.b16 %v3760
  %v3945 = vunpack.c.l.b16 %v3761
  %v3946 = vunpack.c.h.b16 %v3761
  %v3947 = vunpack.c.l.b16 %v3762
  %v3948 = vunpack.c.h.b16 %v3762
  %v3949 = vunpack.c.l.b16 %v3763
  %v3950 = vunpack.c.h.b16 %v3763
  %v3951 = vunpack.c.l.b16 %v3764
  %v3952 = vunpack.c.h.b16 %v3764
  %v3953 = vunpack.c.l.b16 %v3765
  %v3954 = vunpack.c.h.b16 %v3765
  %v3955 = vunpack.c.l.b16 %v3766
  %v3956 = vunpack.c.h.b16 %v3766
  %v3957 = vunpack.c.l.b16 %v3767
  %v3958 = vunpack.c.h.b16 %v3767
  %v3959 = vunpack.c.l.b16 %v3768
  %v3960 = vunpack.c.h.b16 %v3768
  %v3961 = vunpack.c.l.b16 %v3769
  %v3962 = vunpack.c.h.b16 %v3769
  %v3963 = vunpack.c.l.b16 %v3770
  %v3964 = vunpack.c.h.b16 %v3770
  %v3965 = vunpack.c.l.b16 %v3771
  %v3966 = vunpack.c.h.b16 %v3771
  %v3967 = vunpack.c.l.b16 %v3772
  %v3968 = vunpack.c.h.b16 %v3772
  %v3969 = vunpack.c.l.b16 %v3773
  %v3970 = vunpack.c.h.b16 %v3773
  %v3971 = vunpack.c.l.b16 %v3774
  %v3972 = vunpack.c.h.b16 %v3774
  %v3973 = vunpack.c.l.b16 %v3775
  %v3974 = vunpack.c.h.b16 %v3775
  %v3975 = vunpack.c.l.b16 %v3776
  %v3976 = vunpack.c.h.b16 %v3776
  %v3977 = vunpack.c.l.b16 %v3777
  %v3978 = vunpack.c.h.b16 %v3777
  %v3979 = vunpack.c.l.b16 %v3778
  %v3980 = vunpack.c.h.b16 %v3778
  %v3981 = vunpack.c.l.b16 %v3779
  %v3982 = vunpack.c.h.b16 %v3779
  %v3983 = vunpack.c.l.b16 %v3780
  %v3984 = vunpack.c.h.b16 %v3780
  %v3985 = vunpack.c.l.b16 %v3781
  %v3986 = vunpack.c.h.b16 %v3781
  %v3987 = vunpack.c.l.b16 %v3782
  %v3988 = vunpack.c.h.b16 %v3782
  %v3989 = vunpack.c.l.b16 %v3783
  %v3990 = vunpack.c.h.b16 %v3783
  %v3991 = vunpack.c.l.b16 %v3784
  %v3992 = vunpack.c.h.b16 %v3784
  %v3993 = vunpack.c.l.b16 %v3785
  %v3994 = vunpack.c.h.b16 %v3785
  %v3995 = vunpack.c.l.b16 %v3786
  %v3996 = vunpack.c.h.b16 %v3786
  %v3997 = vunpack.c.l.b16 %v3787
  %v3998 = vunpack.c.h.b16 %v3787
  %v3999 = vunpack.c.l.b16 %v3788
  %v4000 = vunpack.c.h.b16 %v3788
  %v4001 = vunpack.c.l.b16 %v3789
  %v4002 = vunpack.c.h.b16 %v3789
  %v4003 = vunpack.c.l.b16 %v3790
  %v4004 = vunpack.c.h.b16 %v3790
  %v4005 = vunpack.c.l.b16 %v3791
  %v4006 = vunpack.c.h.b16 %v3791
  %v4007 = vunpack.c.l.b16 %v3792
  %v4008 = vunpack.c.h.b16 %v3792
  %v4009 = vunpack.c.l.b16 %v3793
  %v4010 = vunpack.c.h.b16 %v3793
  %v4011 = vunpack.c.l.b16 %v3794
  %v4012 = vunpack.c.h.b16 %v3794
  %v4013 = vunpack.c.l.b16 %v3795
  %v4014 = vunpack.c.h.b16 %v3795
  %v4015 = vunpack.c.l.b16 %v3796
  %v4016 = vunpack.c.h.b16 %v3796
  %v4017 = vunpack.c.l.b16 %v3797
  %v4018 = vunpack.c.h.b16 %v3797
  %v4019 = vunpack.c.l.b16 %v3798
  %v4020 = vunpack.c.h.b16 %v3798
  %v4021 = vunpack.c.l.b16 %v3799
  %v4022 = vunpack.c.h.b16 %v3799
  %v4023 = vunpack.c.l.b16 %v3800
  %v4024 = vunpack.c.h.b16 %v3800
  %v4025 = vunpack.c.l.b16 %v3801
  %v4026 = vunpack.c.h.b16 %v3801
  %v4027 = vunpack.c.l.b16 %v3802
  %v4028 = vunpack.c.h.b16 %v3802
  %v4029 = vunpack.c.l.b16 %v3803
  %v4030 = vunpack.c.h.b16 %v3803
  %v4031 = vunpack.c.l.b16 %v3804
  %v4032 = vunpack.c.h.b16 %v3804
  %v4033 = vunpack.c.l.b16 %v3805
  %v4034 = vunpack.c.h.b16 %v3805
  %v4035 = vunpack.c.l.b16 %v3806
  %v4036 = vunpack.c.h.b16 %v3806
  %v4037 = vunpack.c.l.b16 %v3807
  %v4038 = vunpack.c.h.b16 %v3807
  %v4039 = vunpack.c.l.b16 %v3808
  %v4040 = vunpack.c.h.b16 %v3808
  %v4041 = vunpack.c.l.b16 %v3809
  %v4042 = vunpack.c.h.b16 %v3809
  %v4043 = vunpack.c.l.b16 %v3810
  %v4044 = vunpack.c.h.b16 %v3810
  %v4045 = vunpack.c.l.b16 %v3811
  %v4046 = vunpack.c.h.b16 %v3811
  %v4047 = vunpack.c.l.b16 %v3812
  %v4048 = vunpack.c.h.b16 %v3812
  %v4049 = vunpack.c.l.b16 %v3813
  %v4050 = vunpack.c.h.b16 %v3813
  %v4051 = vunpack.c.l.b16 %v3814
  %v4052 = vunpack.c.h.b16 %v3814
  %v4053 = vunpack.c.l.b16 %v3815
  %v4054 = vunpack.c.h.b16 %v3815
  %v4055 = vunpack.c.l.b16 %v3816
  %v4056 = vunpack.c.h.b16 %v3816
  %v4057 = vunpack.c.l.b16 %v3817
  %v4058 = vunpack.c.h.b16 %v3817
  %v4059 = vunpack.c.l.b16 %v3818
  %v4060 = vunpack.c.h.b16 %v3818
  %v4061 = vunpack.c.l.b16 %v3819
  %v4062 = vunpack.c.h.b16 %v3819
  %v4063 = vunpack.c.l.b16 %v3820
  %v4064 = vunpack.c.h.b16 %v3820
  %v4065 = vunpack.c.l.b16 %v3821
  %v4066 = vunpack.c.h.b16 %v3821
  %v4067 = vunpack.c.l.b16 %v3822
  %v4068 = vunpack.c.h.b16 %v3822
  %v4069 = vpack.c.b16 %v3911, %v3909
  %v4070 = vpack.c.b16 %v3912, %v3910
  %v4071 = vpack.c.b16 %v3915, %v3913
  %v4072 = vpack.c.b16 %v3916, %v3914
  %v4073 = vpack.c.b16 %v3919, %v3917
  %v4074 = vpack.c.b16 %v3920, %v3918
  %v4075 = vpack.c.b16 %v3923, %v3921
  %v4076 = vpack.c.b16 %v3924, %v3922
  %v4077 = vpack.c.b16 %v3927, %v3925
  %v4078 = vpack.c.b16 %v3928, %v3926
  %v4079 = vpack.c.b16 %v3931, %v3929
  %v4080 = vpack.c.b16 %v3932, %v3930
  %v4081 = vpack.c.b16 %v3935, %v3933
  %v4082 = vpack.c.b16 %v3936, %v3934
  %v4083 = vpack.c.b16 %v3939, %v3937
  %v4084 = vpack.c.b16 %v3940, %v3938
  %v4085 = vpack.c.b16 %v3943, %v3941
  %v4086 = vpack.c.b16 %v3944, %v3942
  %v4087 = vpack.c.b16 %v3947, %v3945
  %v4088 = vpack.c.b16 %v3948, %v3946
  %v4089 = vpack.c.b16 %v3951, %v3949
  %v4090 = vpack.c.b16 %v3952, %v3950
  %v4091 = vpack.c.b16 %v3955, %v3953
  %v4092 = vpack.c.b16 %v3956, %v3954
  %v4093 = vpack.c.b16 %v3959, %v3957
  %v4094 = vpack.c.b16 %v3960, %v3958
  %v4095 = vpack.c.b16 %v3963, %v3961
  %v4096 = vpack.c.b16 %v3964, %v3962
  %v4097 = vpack.c.b16 %v3967, %v3965
  %v4098 = vpack.c.b16 %v3968, %v3966
  %v4099 = vpack.c.b16 %v3971, %v3969
  %v4100 = vpack.c.b16 %v3972, %v3970
  %v4101 = vpack.c.b16 %v3975, %v3973
  %v4102 = vpack.c.b16 %v3976, %v3974
  %v4103 = vpack.c.b16 %v3979, %v3977
  %v4104 = vpack.c.b16 %v3980, %v3978
  %v4105 = vpack.c.b16 %v3983, %v3981
  %v4106 = vpack.c.b16 %v3984, %v3982
  %v4107 = vpack.c.b16 %v3987, %v3985
  %v4108 = vpack.c.b16 %v3988, %v3986
  %v4109 = vpack.c.b16 %v3991, %v3989
  %v4110 = vpack.c.b16 %v3992, %v3990
  %v4111 = vpack.c.b16 %v3995, %v3993
  %v4112 = vpack.c.b16 %v3996, %v3994
  %v4113 = vpack.c.b16 %v3999, %v3997
  %v4114 = vpack.c.b16 %v4000, %v3998
  %v4115 = vpack.c.b16 %v4003, %v4001
  %v4116 = vpack.c.b16 %v4004, %v4002
  %v4117 = vpack.c.b16 %v4007, %v4005
  %v4118 = vpack.c.b16 %v4008, %v4006
  %v4119 = vpack.c.b16 %v4011, %v4009
  %v4120 = vpack.c.b16 %v4012, %v4010
  %v4121 = vpack.c.b16 %v4015, %v4013
  %v4122 = vpack.c.b16 %v4016, %v4014
  %v4123 = vpack.c.b16 %v4019, %v4017
  %v4124 = vpack.c.b16 %v4020, %v4018
  %v4125 = vpack.c.b16 %v4023, %v4021
  %v4126 = vpack.c.b16 %v4024, %v4022
  %v4127 = vpack.c.b16 %v4027, %v4025
  %v4128 = vpack.c.b16 %v4028, %v4026
  %v4129 = vpack.c.b16 %v4031, %v4029
  %v4130 = vpack.c.b16 %v4032, %v4030
  %v4131 = vpack.c.b16 %v4035, %v4033
  %v4132 = vpack.c.b16 %v4036, %v4034
  %v4133 = vpack.c.b16 %v4039, %v4037
  %v4134 = vpack.c.b16 %v4040, %v4038
  %v4135 = vpack.c.b16 %v4043, %v4041
  %v4136 = vpack.c.b16 %v4044, %v4042
  %v4137 = vpack.c.b16 %v4047, %v4045
  %v4138 = vpack.c.b16 %v4048, %v4046
  %v4139 = vpack.c.b16 %v4051, %v4049
  %v4140 = vpack.c.b16 %v4052, %v4050
  %v4141 = vpack.c.b16 %v4055, %v4053
  %v4142 = vpack.c.b16 %v4056, %v4054
  %v4143 = vpack.c.b16 %v4059, %v4057
  %v4144 = vpack.c.b16 %v4060, %v4058
  %v4145 = vpack.c.b16 %v4063, %v4061
  %v4146 = vpack.c.b16 %v4064, %v4062
  %v4147 = vpack.c.b16 %v4067, %v4065
  %v4148 = vpack.c.b16 %v4068, %v4066
  %4229 = vmatpush.bf16.msra.mxu0 %v4083
  %4230 = vmatpush.bf16.msra.mxu0 %v4081
  %4231 = vmatpush.bf16.msra.mxu0 %v4079
  %4232 = vmatpush.bf16.msra.mxu0 %v4077
  %4233 = vmatpush.bf16.msra.mxu0 %v4075
  %4234 = vmatpush.bf16.msra.mxu0 %v4073
  %4235 = vmatpush.bf16.msra.mxu0 %v4071
  %4236 = vmatpush.bf16.msra.mxu0 %v4069
  %4237 = vmatmul.bf16.gmra.mxu0 %v2183
  %v4238 = vpop.f32.mrf.mxu0
  %v4239 = vadd.f32 %v3825, %v4238
  %v4240 = vpop.f32.mrf.mxu0
  %v4241 = vadd.f32 %v3825, %v4240
  %4242 = vmatmul.bf16.gmra.mxu0 %v2184
  %v4243 = vpop.f32.mrf.mxu0
  %v4244 = vadd.f32 %v3825, %v4243
  %v4245 = vpop.f32.mrf.mxu0
  %v4246 = vadd.f32 %v3825, %v4245
  %4247 = vmatmul.bf16.gmra.mxu0 %v2185
  %v4248 = vpop.f32.mrf.mxu0
  %v4249 = vadd.f32 %v3825, %v4248
  %v4250 = vpop.f32.mrf.mxu0
  %v4251 = vadd.f32 %v3825, %v4250
  %4252 = vmatmul.bf16.gmra.mxu0 %v2186
  %v4253 = vpop.f32.mrf.mxu0
  %v4254 = vadd.f32 %v3825, %v4253
  %v4255 = vpop.f32.mrf.mxu0
  %v4256 = vadd.f32 %v3825, %v4255
  %4257 = vmatmul.bf16.gmra.mxu0 %v2187
  %v4258 = vpop.f32.mrf.mxu0
  %v4259 = vadd.f32 %v3825, %v4258
  %v4260 = vpop.f32.mrf.mxu0
  %v4261 = vadd.f32 %v3825, %v4260
  %4262 = vmatmul.bf16.gmra.mxu0 %v2188
  %v4263 = vpop.f32.mrf.mxu0
  %v4264 = vadd.f32 %v3825, %v4263
  %v4265 = vpop.f32.mrf.mxu0
  %v4266 = vadd.f32 %v3825, %v4265
  %4267 = vmatmul.bf16.gmra.mxu0 %v2189
  %v4268 = vpop.f32.mrf.mxu0
  %v4269 = vadd.f32 %v3825, %v4268
  %v4270 = vpop.f32.mrf.mxu0
  %v4271 = vadd.f32 %v3825, %v4270
  %4272 = vmatmul.bf16.gmra.mxu0 %v2190
  %v4273 = vpop.f32.mrf.mxu0
  %v4274 = vadd.f32 %v3825, %v4273
  %v4275 = vpop.f32.mrf.mxu0
  %v4276 = vadd.f32 %v3825, %v4275
  %4277 = vmatmul.bf16.gmra.mxu0 %v2191
  %v4278 = vpop.f32.mrf.mxu0
  %v4279 = vadd.f32 %v3825, %v4278
  %v4280 = vpop.f32.mrf.mxu0
  %v4281 = vadd.f32 %v3825, %v4280
  %4282 = vmatmul.bf16.gmra.mxu0 %v2192
  %v4283 = vpop.f32.mrf.mxu0
  %v4284 = vadd.f32 %v3825, %v4283
  %v4285 = vpop.f32.mrf.mxu0
  %v4286 = vadd.f32 %v3825, %v4285
  %4287 = vmatmul.bf16.gmra.mxu0 %v2193
  %v4288 = vpop.f32.mrf.mxu0
  %v4289 = vadd.f32 %v3825, %v4288
  %v4290 = vpop.f32.mrf.mxu0
  %v4291 = vadd.f32 %v3825, %v4290
  %4292 = vmatmul.bf16.gmra.mxu0 %v2194
  %v4293 = vpop.f32.mrf.mxu0
  %v4294 = vadd.f32 %v3825, %v4293
  %v4295 = vpop.f32.mrf.mxu0
  %v4296 = vadd.f32 %v3825, %v4295
  %4297 = vmatmul.bf16.gmra.mxu0 %v2195
  %v4298 = vpop.f32.mrf.mxu0
  %v4299 = vadd.f32 %v3825, %v4298
  %v4300 = vpop.f32.mrf.mxu0
  %v4301 = vadd.f32 %v3825, %v4300
  %4302 = vmatmul.bf16.gmra.mxu0 %v2196
  %v4303 = vpop.f32.mrf.mxu0
  %v4304 = vadd.f32 %v3825, %v4303
  %v4305 = vpop.f32.mrf.mxu0
  %v4306 = vadd.f32 %v3825, %v4305
  %4307 = vmatmul.bf16.gmra.mxu0 %v2197
  %v4308 = vpop.f32.mrf.mxu0
  %v4309 = vadd.f32 %v3825, %v4308
  %v4310 = vpop.f32.mrf.mxu0
  %v4311 = vadd.f32 %v3825, %v4310
  %4312 = vmatmul.bf16.gmra.mxu0 %v2198
  %v4313 = vpop.f32.mrf.mxu0
  %v4314 = vadd.f32 %v3825, %v4313
  %v4315 = vpop.f32.mrf.mxu0
  %v4316 = vadd.f32 %v3825, %v4315
  %4317 = vmatmul.bf16.gmra.mxu0 %v2199
  %v4318 = vpop.f32.mrf.mxu0
  %v4319 = vadd.f32 %v3825, %v4318
  %v4320 = vpop.f32.mrf.mxu0
  %v4321 = vadd.f32 %v3825, %v4320
  %4322 = vmatmul.bf16.gmra.mxu0 %v2200
  %v4323 = vpop.f32.mrf.mxu0
  %v4324 = vadd.f32 %v3825, %v4323
  %v4325 = vpop.f32.mrf.mxu0
  %v4326 = vadd.f32 %v3825, %v4325
  %4327 = vmatmul.bf16.gmra.mxu0 %v2201
  %v4328 = vpop.f32.mrf.mxu0
  %v4329 = vadd.f32 %v3825, %v4328
  %v4330 = vpop.f32.mrf.mxu0
  %v4331 = vadd.f32 %v3825, %v4330
  %4332 = vmatmul.bf16.gmra.mxu0 %v2202
  %v4333 = vpop.f32.mrf.mxu0
  %v4334 = vadd.f32 %v3825, %v4333
  %v4335 = vpop.f32.mrf.mxu0
  %v4336 = vadd.f32 %v3825, %v4335
  %4337 = vmatmul.bf16.gmra.mxu0 %v2203
  %v4338 = vpop.f32.mrf.mxu0
  %v4339 = vadd.f32 %v3825, %v4338
  %v4340 = vpop.f32.mrf.mxu0
  %v4341 = vadd.f32 %v3825, %v4340
  %4342 = vmatmul.bf16.gmra.mxu0 %v2204
  %v4343 = vpop.f32.mrf.mxu0
  %v4344 = vadd.f32 %v3825, %v4343
  %v4345 = vpop.f32.mrf.mxu0
  %v4346 = vadd.f32 %v3825, %v4345
  %4347 = vmatmul.bf16.gmra.mxu0 %v2205
  %v4348 = vpop.f32.mrf.mxu0
  %v4349 = vadd.f32 %v3825, %v4348
  %v4350 = vpop.f32.mrf.mxu0
  %v4351 = vadd.f32 %v3825, %v4350
  %4352 = vmatmul.bf16.gmra.mxu0 %v2206
  %v4353 = vpop.f32.mrf.mxu0
  %v4354 = vadd.f32 %v3825, %v4353
  %v4355 = vpop.f32.mrf.mxu0
  %v4356 = vadd.f32 %v3825, %v4355
  %4357 = vmatmul.bf16.gmra.mxu0 %v2207
  %v4358 = vpop.f32.mrf.mxu0
  %v4359 = vadd.f32 %v3825, %v4358
  %v4360 = vpop.f32.mrf.mxu0
  %v4361 = vadd.f32 %v3825, %v4360
  %4362 = vmatmul.bf16.gmra.mxu0 %v2208
  %v4363 = vpop.f32.mrf.mxu0
  %v4364 = vadd.f32 %v3825, %v4363
  %v4365 = vpop.f32.mrf.mxu0
  %v4366 = vadd.f32 %v3825, %v4365
  %4367 = vmatmul.bf16.gmra.mxu0 %v2209
  %v4368 = vpop.f32.mrf.mxu0
  %v4369 = vadd.f32 %v3825, %v4368
  %v4370 = vpop.f32.mrf.mxu0
  %v4371 = vadd.f32 %v3825, %v4370
  %4372 = vmatmul.bf16.gmra.mxu0 %v2210
  %v4373 = vpop.f32.mrf.mxu0
  %v4374 = vadd.f32 %v3825, %v4373
  %v4375 = vpop.f32.mrf.mxu0
  %v4376 = vadd.f32 %v3825, %v4375
  %4377 = vmatmul.bf16.gmra.mxu0 %v2211
  %v4378 = vpop.f32.mrf.mxu0
  %v4379 = vadd.f32 %v3825, %v4378
  %v4380 = vpop.f32.mrf.mxu0
  %v4381 = vadd.f32 %v3825, %v4380
  %4382 = vmatmul.bf16.gmra.mxu0 %v2212
  %v4383 = vpop.f32.mrf.mxu0
  %v4384 = vadd.f32 %v3825, %v4383
  %v4385 = vpop.f32.mrf.mxu0
  %v4386 = vadd.f32 %v3825, %v4385
  %4387 = vmatmul.bf16.gmra.mxu0 %v2213
  %v4388 = vpop.f32.mrf.mxu0
  %v4389 = vadd.f32 %v3825, %v4388
  %v4390 = vpop.f32.mrf.mxu0
  %v4391 = vadd.f32 %v3825, %v4390
  %4392 = vmatmul.bf16.gmra.mxu0 %v2214
  %v4393 = vpop.f32.mrf.mxu0
  %v4394 = vadd.f32 %v3825, %v4393
  %v4395 = vpop.f32.mrf.mxu0
  %v4396 = vadd.f32 %v3825, %v4395
  %4397 = vmatmul.bf16.gmra.mxu0 %v2215
  %v4398 = vpop.f32.mrf.mxu0
  %v4399 = vadd.f32 %v3825, %v4398
  %v4400 = vpop.f32.mrf.mxu0
  %v4401 = vadd.f32 %v3825, %v4400
  %4402 = vmatmul.bf16.gmra.mxu0 %v2216
  %v4403 = vpop.f32.mrf.mxu0
  %v4404 = vadd.f32 %v3825, %v4403
  %v4405 = vpop.f32.mrf.mxu0
  %v4406 = vadd.f32 %v3825, %v4405
  %4407 = vmatmul.bf16.gmra.mxu0 %v2217
  %v4408 = vpop.f32.mrf.mxu0
  %v4409 = vadd.f32 %v3825, %v4408
  %v4410 = vpop.f32.mrf.mxu0
  %v4411 = vadd.f32 %v3825, %v4410
  %4412 = vmatmul.bf16.gmra.mxu0 %v2218
  %v4413 = vpop.f32.mrf.mxu0
  %v4414 = vadd.f32 %v3825, %v4413
  %v4415 = vpop.f32.mrf.mxu0
  %v4416 = vadd.f32 %v3825, %v4415
  %4417 = vmatmul.bf16.gmra.mxu0 %v2219
  %v4418 = vpop.f32.mrf.mxu0
  %v4419 = vadd.f32 %v3825, %v4418
  %v4420 = vpop.f32.mrf.mxu0
  %v4421 = vadd.f32 %v3825, %v4420
  %4422 = vmatmul.bf16.gmra.mxu0 %v2220
  %v4423 = vpop.f32.mrf.mxu0
  %v4424 = vadd.f32 %v3825, %v4423
  %v4425 = vpop.f32.mrf.mxu0
  %v4426 = vadd.f32 %v3825, %v4425
  %4427 = vmatmul.bf16.gmra.mxu0 %v2221
  %v4428 = vpop.f32.mrf.mxu0
  %v4429 = vadd.f32 %v3825, %v4428
  %v4430 = vpop.f32.mrf.mxu0
  %v4431 = vadd.f32 %v3825, %v4430
  %4432 = vmatmul.bf16.gmra.mxu0 %v2222
  %v4433 = vpop.f32.mrf.mxu0
  %v4434 = vadd.f32 %v3825, %v4433
  %v4435 = vpop.f32.mrf.mxu0
  %v4436 = vadd.f32 %v3825, %v4435
  %4437 = vmatmul.bf16.gmra.mxu0 %v2223
  %v4438 = vpop.f32.mrf.mxu0
  %v4439 = vadd.f32 %v3825, %v4438
  %v4440 = vpop.f32.mrf.mxu0
  %v4441 = vadd.f32 %v3825, %v4440
  %4442 = vmatmul.bf16.gmra.mxu0 %v2224
  %v4443 = vpop.f32.mrf.mxu0
  %v4444 = vadd.f32 %v3825, %v4443
  %v4445 = vpop.f32.mrf.mxu0
  %v4446 = vadd.f32 %v3825, %v4445
  %4447 = vmatmul.bf16.gmra.mxu0 %v2225
  %v4448 = vpop.f32.mrf.mxu0
  %v4449 = vadd.f32 %v3825, %v4448
  %v4450 = vpop.f32.mrf.mxu0
  %v4451 = vadd.f32 %v3825, %v4450
  %4452 = vmatmul.bf16.gmra.mxu0 %v2226
  %v4453 = vpop.f32.mrf.mxu0
  %v4454 = vadd.f32 %v3825, %v4453
  %v4455 = vpop.f32.mrf.mxu0
  %v4456 = vadd.f32 %v3825, %v4455
  %4457 = vmatmul.bf16.gmra.mxu0 %v2227
  %v4458 = vpop.f32.mrf.mxu0
  %v4459 = vadd.f32 %v3825, %v4458
  %v4460 = vpop.f32.mrf.mxu0
  %v4461 = vadd.f32 %v3825, %v4460
  %4462 = vmatmul.bf16.gmra.mxu0 %v2228
  %v4463 = vpop.f32.mrf.mxu0
  %v4464 = vadd.f32 %v3825, %v4463
  %v4465 = vpop.f32.mrf.mxu0
  %v4466 = vadd.f32 %v3825, %v4465
  %4467 = vmatmul.bf16.gmra.mxu0 %v2229
  %v4468 = vpop.f32.mrf.mxu0
  %v4469 = vadd.f32 %v3825, %v4468
  %v4470 = vpop.f32.mrf.mxu0
  %v4471 = vadd.f32 %v3825, %v4470
  %4472 = vmatmul.bf16.gmra.mxu0 %v2230
  %v4473 = vpop.f32.mrf.mxu0
  %v4474 = vadd.f32 %v3825, %v4473
  %v4475 = vpop.f32.mrf.mxu0
  %v4476 = vadd.f32 %v3825, %v4475
  %4477 = vmatmul.bf16.gmra.mxu0 %v2231
  %v4478 = vpop.f32.mrf.mxu0
  %v4479 = vadd.f32 %v3825, %v4478
  %v4480 = vpop.f32.mrf.mxu0
  %v4481 = vadd.f32 %v3825, %v4480
  %4482 = vmatmul.bf16.gmra.mxu0 %v2232
  %v4483 = vpop.f32.mrf.mxu0
  %v4484 = vadd.f32 %v3825, %v4483
  %v4485 = vpop.f32.mrf.mxu0
  %v4486 = vadd.f32 %v3825, %v4485
  %4487 = vmatmul.bf16.gmra.mxu0 %v2233
  %v4488 = vpop.f32.mrf.mxu0
  %v4489 = vadd.f32 %v3825, %v4488
  %v4490 = vpop.f32.mrf.mxu0
  %v4491 = vadd.f32 %v3825, %v4490
  %4492 = vmatmul.bf16.gmra.mxu0 %v2234
  %v4493 = vpop.f32.mrf.mxu0
  %v4494 = vadd.f32 %v3825, %v4493
  %v4495 = vpop.f32.mrf.mxu0
  %v4496 = vadd.f32 %v3825, %v4495
  %4497 = vmatmul.bf16.gmra.mxu0 %v2235
  %v4498 = vpop.f32.mrf.mxu0
  %v4499 = vadd.f32 %v3825, %v4498
  %v4500 = vpop.f32.mrf.mxu0
  %v4501 = vadd.f32 %v3825, %v4500
  %4502 = vmatmul.bf16.gmra.mxu0 %v2236
  %v4503 = vpop.f32.mrf.mxu0
  %v4504 = vadd.f32 %v3825, %v4503
  %v4505 = vpop.f32.mrf.mxu0
  %v4506 = vadd.f32 %v3825, %v4505
  %4507 = vmatmul.bf16.gmra.mxu0 %v2237
  %v4508 = vpop.f32.mrf.mxu0
  %v4509 = vadd.f32 %v3825, %v4508
  %v4510 = vpop.f32.mrf.mxu0
  %v4511 = vadd.f32 %v3825, %v4510
  %4512 = vmatmul.bf16.gmra.mxu0 %v2238
  %v4513 = vpop.f32.mrf.mxu0
  %v4514 = vadd.f32 %v3825, %v4513
  %v4515 = vpop.f32.mrf.mxu0
  %v4516 = vadd.f32 %v3825, %v4515
  %4517 = vmatmul.bf16.gmra.mxu0 %v2239
  %v4518 = vpop.f32.mrf.mxu0
  %v4519 = vadd.f32 %v3825, %v4518
  %v4520 = vpop.f32.mrf.mxu0
  %v4521 = vadd.f32 %v3825, %v4520
  %4522 = vmatmul.bf16.gmra.mxu0 %v2240
  %v4523 = vpop.f32.mrf.mxu0
  %v4524 = vadd.f32 %v3825, %v4523
  %v4525 = vpop.f32.mrf.mxu0
  %v4526 = vadd.f32 %v3825, %v4525
  %4527 = vmatmul.bf16.gmra.mxu0 %v2241
  %v4528 = vpop.f32.mrf.mxu0
  %v4529 = vadd.f32 %v3825, %v4528
  %v4530 = vpop.f32.mrf.mxu0
  %v4531 = vadd.f32 %v3825, %v4530
  %4532 = vmatmul.bf16.gmra.mxu0 %v2242
  %v4533 = vpop.f32.mrf.mxu0
  %v4534 = vadd.f32 %v3825, %v4533
  %v4535 = vpop.f32.mrf.mxu0
  %v4536 = vadd.f32 %v3825, %v4535
  %4537 = vdwg.mxu0
  %4538 = vmatpush.bf16.msra.mxu0 %v4099
  %4539 = vmatpush.bf16.msra.mxu0 %v4097
  %4540 = vmatpush.bf16.msra.mxu0 %v4095
  %4541 = vmatpush.bf16.msra.mxu0 %v4093
  %4542 = vmatpush.bf16.msra.mxu0 %v4091
  %4543 = vmatpush.bf16.msra.mxu0 %v4089
  %4544 = vmatpush.bf16.msra.mxu0 %v4087
  %4545 = vmatpush.bf16.msra.mxu0 %v4085
  %4546 = vmatmul.bf16.gmra.mxu0 %v2543
  %v4547 = vpop.f32.mrf.mxu0
  %v4548 = vadd.f32 %v4239, %v4547
  %v4549 = vpop.f32.mrf.mxu0
  %v4550 = vadd.f32 %v4241, %v4549
  %4551 = vmatmul.bf16.gmra.mxu0 %v2544
  %v4552 = vpop.f32.mrf.mxu0
  %v4553 = vadd.f32 %v4244, %v4552
  %v4554 = vpop.f32.mrf.mxu0
  %v4555 = vadd.f32 %v4246, %v4554
  %4556 = vmatmul.bf16.gmra.mxu0 %v2545
  %v4557 = vpop.f32.mrf.mxu0
  %v4558 = vadd.f32 %v4249, %v4557
  %v4559 = vpop.f32.mrf.mxu0
  %v4560 = vadd.f32 %v4251, %v4559
  %4561 = vmatmul.bf16.gmra.mxu0 %v2546
  %v4562 = vpop.f32.mrf.mxu0
  %v4563 = vadd.f32 %v4254, %v4562
  %v4564 = vpop.f32.mrf.mxu0
  %v4565 = vadd.f32 %v4256, %v4564
  %4566 = vmatmul.bf16.gmra.mxu0 %v2547
  %v4567 = vpop.f32.mrf.mxu0
  %v4568 = vadd.f32 %v4259, %v4567
  %v4569 = vpop.f32.mrf.mxu0
  %v4570 = vadd.f32 %v4261, %v4569
  %4571 = vmatmul.bf16.gmra.mxu0 %v2548
  %v4572 = vpop.f32.mrf.mxu0
  %v4573 = vadd.f32 %v4264, %v4572
  %v4574 = vpop.f32.mrf.mxu0
  %v4575 = vadd.f32 %v4266, %v4574
  %4576 = vmatmul.bf16.gmra.mxu0 %v2549
  %v4577 = vpop.f32.mrf.mxu0
  %v4578 = vadd.f32 %v4269, %v4577
  %v4579 = vpop.f32.mrf.mxu0
  %v4580 = vadd.f32 %v4271, %v4579
  %4581 = vmatmul.bf16.gmra.mxu0 %v2550
  %v4582 = vpop.f32.mrf.mxu0
  %v4583 = vadd.f32 %v4274, %v4582
  %v4584 = vpop.f32.mrf.mxu0
  %v4585 = vadd.f32 %v4276, %v4584
  %4586 = vmatmul.bf16.gmra.mxu0 %v2551
  %v4587 = vpop.f32.mrf.mxu0
  %v4588 = vadd.f32 %v4279, %v4587
  %v4589 = vpop.f32.mrf.mxu0
  %v4590 = vadd.f32 %v4281, %v4589
  %4591 = vmatmul.bf16.gmra.mxu0 %v2552
  %v4592 = vpop.f32.mrf.mxu0
  %v4593 = vadd.f32 %v4284, %v4592
  %v4594 = vpop.f32.mrf.mxu0
  %v4595 = vadd.f32 %v4286, %v4594
  %4596 = vmatmul.bf16.gmra.mxu0 %v2553
  %v4597 = vpop.f32.mrf.mxu0
  %v4598 = vadd.f32 %v4289, %v4597
  %v4599 = vpop.f32.mrf.mxu0
  %v4600 = vadd.f32 %v4291, %v4599
  %4601 = vmatmul.bf16.gmra.mxu0 %v2554
  %v4602 = vpop.f32.mrf.mxu0
  %v4603 = vadd.f32 %v4294, %v4602
  %v4604 = vpop.f32.mrf.mxu0
  %v4605 = vadd.f32 %v4296, %v4604
  %4606 = vmatmul.bf16.gmra.mxu0 %v2555
  %v4607 = vpop.f32.mrf.mxu0
  %v4608 = vadd.f32 %v4299, %v4607
  %v4609 = vpop.f32.mrf.mxu0
  %v4610 = vadd.f32 %v4301, %v4609
  %4611 = vmatmul.bf16.gmra.mxu0 %v2556
  %v4612 = vpop.f32.mrf.mxu0
  %v4613 = vadd.f32 %v4304, %v4612
  %v4614 = vpop.f32.mrf.mxu0
  %v4615 = vadd.f32 %v4306, %v4614
  %4616 = vmatmul.bf16.gmra.mxu0 %v2557
  %v4617 = vpop.f32.mrf.mxu0
  %v4618 = vadd.f32 %v4309, %v4617
  %v4619 = vpop.f32.mrf.mxu0
  %v4620 = vadd.f32 %v4311, %v4619
  %4621 = vmatmul.bf16.gmra.mxu0 %v2558
  %v4622 = vpop.f32.mrf.mxu0
  %v4623 = vadd.f32 %v4314, %v4622
  %v4624 = vpop.f32.mrf.mxu0
  %v4625 = vadd.f32 %v4316, %v4624
  %4626 = vmatmul.bf16.gmra.mxu0 %v2559
  %v4627 = vpop.f32.mrf.mxu0
  %v4628 = vadd.f32 %v4319, %v4627
  %v4629 = vpop.f32.mrf.mxu0
  %v4630 = vadd.f32 %v4321, %v4629
  %4631 = vmatmul.bf16.gmra.mxu0 %v2560
  %v4632 = vpop.f32.mrf.mxu0
  %v4633 = vadd.f32 %v4324, %v4632
  %v4634 = vpop.f32.mrf.mxu0
  %v4635 = vadd.f32 %v4326, %v4634
  %4636 = vmatmul.bf16.gmra.mxu0 %v2561
  %v4637 = vpop.f32.mrf.mxu0
  %v4638 = vadd.f32 %v4329, %v4637
  %v4639 = vpop.f32.mrf.mxu0
  %v4640 = vadd.f32 %v4331, %v4639
  %4641 = vmatmul.bf16.gmra.mxu0 %v2562
  %v4642 = vpop.f32.mrf.mxu0
  %v4643 = vadd.f32 %v4334, %v4642
  %v4644 = vpop.f32.mrf.mxu0
  %v4645 = vadd.f32 %v4336, %v4644
  %4646 = vmatmul.bf16.gmra.mxu0 %v2563
  %v4647 = vpop.f32.mrf.mxu0
  %v4648 = vadd.f32 %v4339, %v4647
  %v4649 = vpop.f32.mrf.mxu0
  %v4650 = vadd.f32 %v4341, %v4649
  %4651 = vmatmul.bf16.gmra.mxu0 %v2564
  %v4652 = vpop.f32.mrf.mxu0
  %v4653 = vadd.f32 %v4344, %v4652
  %v4654 = vpop.f32.mrf.mxu0
  %v4655 = vadd.f32 %v4346, %v4654
  %4656 = vmatmul.bf16.gmra.mxu0 %v2565
  %v4657 = vpop.f32.mrf.mxu0
  %v4658 = vadd.f32 %v4349, %v4657
  %v4659 = vpop.f32.mrf.mxu0
  %v4660 = vadd.f32 %v4351, %v4659
  %4661 = vmatmul.bf16.gmra.mxu0 %v2566
  %v4662 = vpop.f32.mrf.mxu0
  %v4663 = vadd.f32 %v4354, %v4662
  %v4664 = vpop.f32.mrf.mxu0
  %v4665 = vadd.f32 %v4356, %v4664
  %4666 = vmatmul.bf16.gmra.mxu0 %v2567
  %v4667 = vpop.f32.mrf.mxu0
  %v4668 = vadd.f32 %v4359, %v4667
  %v4669 = vpop.f32.mrf.mxu0
  %v4670 = vadd.f32 %v4361, %v4669
  %4671 = vmatmul.bf16.gmra.mxu0 %v2568
  %v4672 = vpop.f32.mrf.mxu0
  %v4673 = vadd.f32 %v4364, %v4672
  %v4674 = vpop.f32.mrf.mxu0
  %v4675 = vadd.f32 %v4366, %v4674
  %4676 = vmatmul.bf16.gmra.mxu0 %v2569
  %v4677 = vpop.f32.mrf.mxu0
  %v4678 = vadd.f32 %v4369, %v4677
  %v4679 = vpop.f32.mrf.mxu0
  %v4680 = vadd.f32 %v4371, %v4679
  %4681 = vmatmul.bf16.gmra.mxu0 %v2570
  %v4682 = vpop.f32.mrf.mxu0
  %v4683 = vadd.f32 %v4374, %v4682
  %v4684 = vpop.f32.mrf.mxu0
  %v4685 = vadd.f32 %v4376, %v4684
  %4686 = vmatmul.bf16.gmra.mxu0 %v2571
  %v4687 = vpop.f32.mrf.mxu0
  %v4688 = vadd.f32 %v4379, %v4687
  %v4689 = vpop.f32.mrf.mxu0
  %v4690 = vadd.f32 %v4381, %v4689
  %4691 = vmatmul.bf16.gmra.mxu0 %v2572
  %v4692 = vpop.f32.mrf.mxu0
  %v4693 = vadd.f32 %v4384, %v4692
  %v4694 = vpop.f32.mrf.mxu0
  %v4695 = vadd.f32 %v4386, %v4694
  %4696 = vmatmul.bf16.gmra.mxu0 %v2573
  %v4697 = vpop.f32.mrf.mxu0
  %v4698 = vadd.f32 %v4389, %v4697
  %v4699 = vpop.f32.mrf.mxu0
  %v4700 = vadd.f32 %v4391, %v4699
  %4701 = vmatmul.bf16.gmra.mxu0 %v2574
  %v4702 = vpop.f32.mrf.mxu0
  %v4703 = vadd.f32 %v4394, %v4702
  %v4704 = vpop.f32.mrf.mxu0
  %v4705 = vadd.f32 %v4396, %v4704
  %4706 = vmatmul.bf16.gmra.mxu0 %v2575
  %v4707 = vpop.f32.mrf.mxu0
  %v4708 = vadd.f32 %v4399, %v4707
  %v4709 = vpop.f32.mrf.mxu0
  %v4710 = vadd.f32 %v4401, %v4709
  %4711 = vmatmul.bf16.gmra.mxu0 %v2576
  %v4712 = vpop.f32.mrf.mxu0
  %v4713 = vadd.f32 %v4404, %v4712
  %v4714 = vpop.f32.mrf.mxu0
  %v4715 = vadd.f32 %v4406, %v4714
  %4716 = vmatmul.bf16.gmra.mxu0 %v2577
  %v4717 = vpop.f32.mrf.mxu0
  %v4718 = vadd.f32 %v4409, %v4717
  %v4719 = vpop.f32.mrf.mxu0
  %v4720 = vadd.f32 %v4411, %v4719
  %4721 = vmatmul.bf16.gmra.mxu0 %v2578
  %v4722 = vpop.f32.mrf.mxu0
  %v4723 = vadd.f32 %v4414, %v4722
  %v4724 = vpop.f32.mrf.mxu0
  %v4725 = vadd.f32 %v4416, %v4724
  %4726 = vmatmul.bf16.gmra.mxu0 %v2579
  %v4727 = vpop.f32.mrf.mxu0
  %v4728 = vadd.f32 %v4419, %v4727
  %v4729 = vpop.f32.mrf.mxu0
  %v4730 = vadd.f32 %v4421, %v4729
  %4731 = vmatmul.bf16.gmra.mxu0 %v2580
  %v4732 = vpop.f32.mrf.mxu0
  %v4733 = vadd.f32 %v4424, %v4732
  %v4734 = vpop.f32.mrf.mxu0
  %v4735 = vadd.f32 %v4426, %v4734
  %4736 = vmatmul.bf16.gmra.mxu0 %v2581
  %v4737 = vpop.f32.mrf.mxu0
  %v4738 = vadd.f32 %v4429, %v4737
  %v4739 = vpop.f32.mrf.mxu0
  %v4740 = vadd.f32 %v4431, %v4739
  %4741 = vmatmul.bf16.gmra.mxu0 %v2582
  %v4742 = vpop.f32.mrf.mxu0
  %v4743 = vadd.f32 %v4434, %v4742
  %v4744 = vpop.f32.mrf.mxu0
  %v4745 = vadd.f32 %v4436, %v4744
  %4746 = vmatmul.bf16.gmra.mxu0 %v2583
  %v4747 = vpop.f32.mrf.mxu0
  %v4748 = vadd.f32 %v4439, %v4747
  %v4749 = vpop.f32.mrf.mxu0
  %v4750 = vadd.f32 %v4441, %v4749
  %4751 = vmatmul.bf16.gmra.mxu0 %v2584
  %v4752 = vpop.f32.mrf.mxu0
  %v4753 = vadd.f32 %v4444, %v4752
  %v4754 = vpop.f32.mrf.mxu0
  %v4755 = vadd.f32 %v4446, %v4754
  %4756 = vmatmul.bf16.gmra.mxu0 %v2585
  %v4757 = vpop.f32.mrf.mxu0
  %v4758 = vadd.f32 %v4449, %v4757
  %v4759 = vpop.f32.mrf.mxu0
  %v4760 = vadd.f32 %v4451, %v4759
  %4761 = vmatmul.bf16.gmra.mxu0 %v2586
  %v4762 = vpop.f32.mrf.mxu0
  %v4763 = vadd.f32 %v4454, %v4762
  %v4764 = vpop.f32.mrf.mxu0
  %v4765 = vadd.f32 %v4456, %v4764
  %4766 = vmatmul.bf16.gmra.mxu0 %v2587
  %v4767 = vpop.f32.mrf.mxu0
  %v4768 = vadd.f32 %v4459, %v4767
  %v4769 = vpop.f32.mrf.mxu0
  %v4770 = vadd.f32 %v4461, %v4769
  %4771 = vmatmul.bf16.gmra.mxu0 %v2588
  %v4772 = vpop.f32.mrf.mxu0
  %v4773 = vadd.f32 %v4464, %v4772
  %v4774 = vpop.f32.mrf.mxu0
  %v4775 = vadd.f32 %v4466, %v4774
  %4776 = vmatmul.bf16.gmra.mxu0 %v2589
  %v4777 = vpop.f32.mrf.mxu0
  %v4778 = vadd.f32 %v4469, %v4777
  %v4779 = vpop.f32.mrf.mxu0
  %v4780 = vadd.f32 %v4471, %v4779
  %4781 = vmatmul.bf16.gmra.mxu0 %v2590
  %v4782 = vpop.f32.mrf.mxu0
  %v4783 = vadd.f32 %v4474, %v4782
  %v4784 = vpop.f32.mrf.mxu0
  %v4785 = vadd.f32 %v4476, %v4784
  %4786 = vmatmul.bf16.gmra.mxu0 %v2591
  %v4787 = vpop.f32.mrf.mxu0
  %v4788 = vadd.f32 %v4479, %v4787
  %v4789 = vpop.f32.mrf.mxu0
  %v4790 = vadd.f32 %v4481, %v4789
  %4791 = vmatmul.bf16.gmra.mxu0 %v2592
  %v4792 = vpop.f32.mrf.mxu0
  %v4793 = vadd.f32 %v4484, %v4792
  %v4794 = vpop.f32.mrf.mxu0
  %v4795 = vadd.f32 %v4486, %v4794
  %4796 = vmatmul.bf16.gmra.mxu0 %v2593
  %v4797 = vpop.f32.mrf.mxu0
  %v4798 = vadd.f32 %v4489, %v4797
  %v4799 = vpop.f32.mrf.mxu0
  %v4800 = vadd.f32 %v4491, %v4799
  %4801 = vmatmul.bf16.gmra.mxu0 %v2594
  %v4802 = vpop.f32.mrf.mxu0
  %v4803 = vadd.f32 %v4494, %v4802
  %v4804 = vpop.f32.mrf.mxu0
  %v4805 = vadd.f32 %v4496, %v4804
  %4806 = vmatmul.bf16.gmra.mxu0 %v2595
  %v4807 = vpop.f32.mrf.mxu0
  %v4808 = vadd.f32 %v4499, %v4807
  %v4809 = vpop.f32.mrf.mxu0
  %v4810 = vadd.f32 %v4501, %v4809
  %4811 = vmatmul.bf16.gmra.mxu0 %v2596
  %v4812 = vpop.f32.mrf.mxu0
  %v4813 = vadd.f32 %v4504, %v4812
  %v4814 = vpop.f32.mrf.mxu0
  %v4815 = vadd.f32 %v4506, %v4814
  %4816 = vmatmul.bf16.gmra.mxu0 %v2597
  %v4817 = vpop.f32.mrf.mxu0
  %v4818 = vadd.f32 %v4509, %v4817
  %v4819 = vpop.f32.mrf.mxu0
  %v4820 = vadd.f32 %v4511, %v4819
  %4821 = vmatmul.bf16.gmra.mxu0 %v2598
  %v4822 = vpop.f32.mrf.mxu0
  %v4823 = vadd.f32 %v4514, %v4822
  %v4824 = vpop.f32.mrf.mxu0
  %v4825 = vadd.f32 %v4516, %v4824
  %4826 = vmatmul.bf16.gmra.mxu0 %v2599
  %v4827 = vpop.f32.mrf.mxu0
  %v4828 = vadd.f32 %v4519, %v4827
  %v4829 = vpop.f32.mrf.mxu0
  %v4830 = vadd.f32 %v4521, %v4829
  %4831 = vmatmul.bf16.gmra.mxu0 %v2600
  %v4832 = vpop.f32.mrf.mxu0
  %v4833 = vadd.f32 %v4524, %v4832
  %v4834 = vpop.f32.mrf.mxu0
  %v4835 = vadd.f32 %v4526, %v4834
  %4836 = vmatmul.bf16.gmra.mxu0 %v2601
  %v4837 = vpop.f32.mrf.mxu0
  %v4838 = vadd.f32 %v4529, %v4837
  %v4839 = vpop.f32.mrf.mxu0
  %v4840 = vadd.f32 %v4531, %v4839
  %4841 = vmatmul.bf16.gmra.mxu0 %v2602
  %v4842 = vpop.f32.mrf.mxu0
  %v4843 = vadd.f32 %v4534, %v4842
  %v4844 = vpop.f32.mrf.mxu0
  %v4845 = vadd.f32 %v4536, %v4844
  %4846 = vdwg.mxu0
  %4847 = vmatpush.bf16.msra.mxu0 %v4115
  %4848 = vmatpush.bf16.msra.mxu0 %v4113
  %4849 = vmatpush.bf16.msra.mxu0 %v4111
  %4850 = vmatpush.bf16.msra.mxu0 %v4109
  %4851 = vmatpush.bf16.msra.mxu0 %v4107
  %4852 = vmatpush.bf16.msra.mxu0 %v4105
  %4853 = vmatpush.bf16.msra.mxu0 %v4103
  %4854 = vmatpush.bf16.msra.mxu0 %v4101
  %4855 = vmatmul.bf16.gmra.mxu0 %v2903
  %v4856 = vpop.f32.mrf.mxu0
  %v4857 = vadd.f32 %v4548, %v4856
  %v4858 = vpop.f32.mrf.mxu0
  %v4859 = vadd.f32 %v4550, %v4858
  %4860 = vmatmul.bf16.gmra.mxu0 %v2904
  %v4861 = vpop.f32.mrf.mxu0
  %v4862 = vadd.f32 %v4553, %v4861
  %v4863 = vpop.f32.mrf.mxu0
  %v4864 = vadd.f32 %v4555, %v4863
  %4865 = vmatmul.bf16.gmra.mxu0 %v2905
  %v4866 = vpop.f32.mrf.mxu0
  %v4867 = vadd.f32 %v4558, %v4866
  %v4868 = vpop.f32.mrf.mxu0
  %v4869 = vadd.f32 %v4560, %v4868
  %4870 = vmatmul.bf16.gmra.mxu0 %v2906
  %v4871 = vpop.f32.mrf.mxu0
  %v4872 = vadd.f32 %v4563, %v4871
  %v4873 = vpop.f32.mrf.mxu0
  %v4874 = vadd.f32 %v4565, %v4873
  %4875 = vmatmul.bf16.gmra.mxu0 %v2907
  %v4876 = vpop.f32.mrf.mxu0
  %v4877 = vadd.f32 %v4568, %v4876
  %v4878 = vpop.f32.mrf.mxu0
  %v4879 = vadd.f32 %v4570, %v4878
  %4880 = vmatmul.bf16.gmra.mxu0 %v2908
  %v4881 = vpop.f32.mrf.mxu0
  %v4882 = vadd.f32 %v4573, %v4881
  %v4883 = vpop.f32.mrf.mxu0
  %v4884 = vadd.f32 %v4575, %v4883
  %4885 = vmatmul.bf16.gmra.mxu0 %v2909
  %v4886 = vpop.f32.mrf.mxu0
  %v4887 = vadd.f32 %v4578, %v4886
  %v4888 = vpop.f32.mrf.mxu0
  %v4889 = vadd.f32 %v4580, %v4888
  %4890 = vmatmul.bf16.gmra.mxu0 %v2910
  %v4891 = vpop.f32.mrf.mxu0
  %v4892 = vadd.f32 %v4583, %v4891
  %v4893 = vpop.f32.mrf.mxu0
  %v4894 = vadd.f32 %v4585, %v4893
  %4895 = vmatmul.bf16.gmra.mxu0 %v2911
  %v4896 = vpop.f32.mrf.mxu0
  %v4897 = vadd.f32 %v4588, %v4896
  %v4898 = vpop.f32.mrf.mxu0
  %v4899 = vadd.f32 %v4590, %v4898
  %4900 = vmatmul.bf16.gmra.mxu0 %v2912
  %v4901 = vpop.f32.mrf.mxu0
  %v4902 = vadd.f32 %v4593, %v4901
  %v4903 = vpop.f32.mrf.mxu0
  %v4904 = vadd.f32 %v4595, %v4903
  %4905 = vmatmul.bf16.gmra.mxu0 %v2913
  %v4906 = vpop.f32.mrf.mxu0
  %v4907 = vadd.f32 %v4598, %v4906
  %v4908 = vpop.f32.mrf.mxu0
  %v4909 = vadd.f32 %v4600, %v4908
  %4910 = vmatmul.bf16.gmra.mxu0 %v2914
  %v4911 = vpop.f32.mrf.mxu0
  %v4912 = vadd.f32 %v4603, %v4911
  %v4913 = vpop.f32.mrf.mxu0
  %v4914 = vadd.f32 %v4605, %v4913
  %4915 = vmatmul.bf16.gmra.mxu0 %v2915
  %v4916 = vpop.f32.mrf.mxu0
  %v4917 = vadd.f32 %v4608, %v4916
  %v4918 = vpop.f32.mrf.mxu0
  %v4919 = vadd.f32 %v4610, %v4918
  %4920 = vmatmul.bf16.gmra.mxu0 %v2916
  %v4921 = vpop.f32.mrf.mxu0
  %v4922 = vadd.f32 %v4613, %v4921
  %v4923 = vpop.f32.mrf.mxu0
  %v4924 = vadd.f32 %v4615, %v4923
  %4925 = vmatmul.bf16.gmra.mxu0 %v2917
  %v4926 = vpop.f32.mrf.mxu0
  %v4927 = vadd.f32 %v4618, %v4926
  %v4928 = vpop.f32.mrf.mxu0
  %v4929 = vadd.f32 %v4620, %v4928
  %4930 = vmatmul.bf16.gmra.mxu0 %v2918
  %v4931 = vpop.f32.mrf.mxu0
  %v4932 = vadd.f32 %v4623, %v4931
  %v4933 = vpop.f32.mrf.mxu0
  %v4934 = vadd.f32 %v4625, %v4933
  %4935 = vmatmul.bf16.gmra.mxu0 %v2919
  %v4936 = vpop.f32.mrf.mxu0
  %v4937 = vadd.f32 %v4628, %v4936
  %v4938 = vpop.f32.mrf.mxu0
  %v4939 = vadd.f32 %v4630, %v4938
  %4940 = vmatmul.bf16.gmra.mxu0 %v2920
  %v4941 = vpop.f32.mrf.mxu0
  %v4942 = vadd.f32 %v4633, %v4941
  %v4943 = vpop.f32.mrf.mxu0
  %v4944 = vadd.f32 %v4635, %v4943
  %4945 = vmatmul.bf16.gmra.mxu0 %v2921
  %v4946 = vpop.f32.mrf.mxu0
  %v4947 = vadd.f32 %v4638, %v4946
  %v4948 = vpop.f32.mrf.mxu0
  %v4949 = vadd.f32 %v4640, %v4948
  %4950 = vmatmul.bf16.gmra.mxu0 %v2922
  %v4951 = vpop.f32.mrf.mxu0
  %v4952 = vadd.f32 %v4643, %v4951
  %v4953 = vpop.f32.mrf.mxu0
  %v4954 = vadd.f32 %v4645, %v4953
  %4955 = vmatmul.bf16.gmra.mxu0 %v2923
  %v4956 = vpop.f32.mrf.mxu0
  %v4957 = vadd.f32 %v4648, %v4956
  %v4958 = vpop.f32.mrf.mxu0
  %v4959 = vadd.f32 %v4650, %v4958
  %4960 = vmatmul.bf16.gmra.mxu0 %v2924
  %v4961 = vpop.f32.mrf.mxu0
  %v4962 = vadd.f32 %v4653, %v4961
  %v4963 = vpop.f32.mrf.mxu0
  %v4964 = vadd.f32 %v4655, %v4963
  %4965 = vmatmul.bf16.gmra.mxu0 %v2925
  %v4966 = vpop.f32.mrf.mxu0
  %v4967 = vadd.f32 %v4658, %v4966
  %v4968 = vpop.f32.mrf.mxu0
  %v4969 = vadd.f32 %v4660, %v4968
  %4970 = vmatmul.bf16.gmra.mxu0 %v2926
  %v4971 = vpop.f32.mrf.mxu0
  %v4972 = vadd.f32 %v4663, %v4971
  %v4973 = vpop.f32.mrf.mxu0
  %v4974 = vadd.f32 %v4665, %v4973
  %4975 = vmatmul.bf16.gmra.mxu0 %v2927
  %v4976 = vpop.f32.mrf.mxu0
  %v4977 = vadd.f32 %v4668, %v4976
  %v4978 = vpop.f32.mrf.mxu0
  %v4979 = vadd.f32 %v4670, %v4978
  %4980 = vmatmul.bf16.gmra.mxu0 %v2928
  %v4981 = vpop.f32.mrf.mxu0
  %v4982 = vadd.f32 %v4673, %v4981
  %v4983 = vpop.f32.mrf.mxu0
  %v4984 = vadd.f32 %v4675, %v4983
  %4985 = vmatmul.bf16.gmra.mxu0 %v2929
  %v4986 = vpop.f32.mrf.mxu0
  %v4987 = vadd.f32 %v4678, %v4986
  %v4988 = vpop.f32.mrf.mxu0
  %v4989 = vadd.f32 %v4680, %v4988
  %4990 = vmatmul.bf16.gmra.mxu0 %v2930
  %v4991 = vpop.f32.mrf.mxu0
  %v4992 = vadd.f32 %v4683, %v4991
  %v4993 = vpop.f32.mrf.mxu0
  %v4994 = vadd.f32 %v4685, %v4993
  %4995 = vmatmul.bf16.gmra.mxu0 %v2931
  %v4996 = vpop.f32.mrf.mxu0
  %v4997 = vadd.f32 %v4688, %v4996
  %v4998 = vpop.f32.mrf.mxu0
  %v4999 = vadd.f32 %v4690, %v4998
  %5000 = vmatmul.bf16.gmra.mxu0 %v2932
  %v5001 = vpop.f32.mrf.mxu0
  %v5002 = vadd.f32 %v4693, %v5001
  %v5003 = vpop.f32.mrf.mxu0
  %v5004 = vadd.f32 %v4695, %v5003
  %5005 = vmatmul.bf16.gmra.mxu0 %v2933
  %v5006 = vpop.f32.mrf.mxu0
  %v5007 = vadd.f32 %v4698, %v5006
  %v5008 = vpop.f32.mrf.mxu0
  %v5009 = vadd.f32 %v4700, %v5008
  %5010 = vmatmul.bf16.gmra.mxu0 %v2934
  %v5011 = vpop.f32.mrf.mxu0
  %v5012 = vadd.f32 %v4703, %v5011
  %v5013 = vpop.f32.mrf.mxu0
  %v5014 = vadd.f32 %v4705, %v5013
  %5015 = vmatmul.bf16.gmra.mxu0 %v2935
  %v5016 = vpop.f32.mrf.mxu0
  %v5017 = vadd.f32 %v4708, %v5016
  %v5018 = vpop.f32.mrf.mxu0
  %v5019 = vadd.f32 %v4710, %v5018
  %5020 = vmatmul.bf16.gmra.mxu0 %v2936
  %v5021 = vpop.f32.mrf.mxu0
  %v5022 = vadd.f32 %v4713, %v5021
  %v5023 = vpop.f32.mrf.mxu0
  %v5024 = vadd.f32 %v4715, %v5023
  %5025 = vmatmul.bf16.gmra.mxu0 %v2937
  %v5026 = vpop.f32.mrf.mxu0
  %v5027 = vadd.f32 %v4718, %v5026
  %v5028 = vpop.f32.mrf.mxu0
  %v5029 = vadd.f32 %v4720, %v5028
  %5030 = vmatmul.bf16.gmra.mxu0 %v2938
  %v5031 = vpop.f32.mrf.mxu0
  %v5032 = vadd.f32 %v4723, %v5031
  %v5033 = vpop.f32.mrf.mxu0
  %v5034 = vadd.f32 %v4725, %v5033
  %5035 = vmatmul.bf16.gmra.mxu0 %v2939
  %v5036 = vpop.f32.mrf.mxu0
  %v5037 = vadd.f32 %v4728, %v5036
  %v5038 = vpop.f32.mrf.mxu0
  %v5039 = vadd.f32 %v4730, %v5038
  %5040 = vmatmul.bf16.gmra.mxu0 %v2940
  %v5041 = vpop.f32.mrf.mxu0
  %v5042 = vadd.f32 %v4733, %v5041
  %v5043 = vpop.f32.mrf.mxu0
  %v5044 = vadd.f32 %v4735, %v5043
  %5045 = vmatmul.bf16.gmra.mxu0 %v2941
  %v5046 = vpop.f32.mrf.mxu0
  %v5047 = vadd.f32 %v4738, %v5046
  %v5048 = vpop.f32.mrf.mxu0
  %v5049 = vadd.f32 %v4740, %v5048
  %5050 = vmatmul.bf16.gmra.mxu0 %v2942
  %v5051 = vpop.f32.mrf.mxu0
  %v5052 = vadd.f32 %v4743, %v5051
  %v5053 = vpop.f32.mrf.mxu0
  %v5054 = vadd.f32 %v4745, %v5053
  %5055 = vmatmul.bf16.gmra.mxu0 %v2943
  %v5056 = vpop.f32.mrf.mxu0
  %v5057 = vadd.f32 %v4748, %v5056
  %v5058 = vpop.f32.mrf.mxu0
  %v5059 = vadd.f32 %v4750, %v5058
  %5060 = vmatmul.bf16.gmra.mxu0 %v2944
  %v5061 = vpop.f32.mrf.mxu0
  %v5062 = vadd.f32 %v4753, %v5061
  %v5063 = vpop.f32.mrf.mxu0
  %v5064 = vadd.f32 %v4755, %v5063
  %5065 = vmatmul.bf16.gmra.mxu0 %v2945
  %v5066 = vpop.f32.mrf.mxu0
  %v5067 = vadd.f32 %v4758, %v5066
  %v5068 = vpop.f32.mrf.mxu0
  %v5069 = vadd.f32 %v4760, %v5068
  %5070 = vmatmul.bf16.gmra.mxu0 %v2946
  %v5071 = vpop.f32.mrf.mxu0
  %v5072 = vadd.f32 %v4763, %v5071
  %v5073 = vpop.f32.mrf.mxu0
  %v5074 = vadd.f32 %v4765, %v5073
  %5075 = vmatmul.bf16.gmra.mxu0 %v2947
  %v5076 = vpop.f32.mrf.mxu0
  %v5077 = vadd.f32 %v4768, %v5076
  %v5078 = vpop.f32.mrf.mxu0
  %v5079 = vadd.f32 %v4770, %v5078
  %5080 = vmatmul.bf16.gmra.mxu0 %v2948
  %v5081 = vpop.f32.mrf.mxu0
  %v5082 = vadd.f32 %v4773, %v5081
  %v5083 = vpop.f32.mrf.mxu0
  %v5084 = vadd.f32 %v4775, %v5083
  %5085 = vmatmul.bf16.gmra.mxu0 %v2949
  %v5086 = vpop.f32.mrf.mxu0
  %v5087 = vadd.f32 %v4778, %v5086
  %v5088 = vpop.f32.mrf.mxu0
  %v5089 = vadd.f32 %v4780, %v5088
  %5090 = vmatmul.bf16.gmra.mxu0 %v2950
  %v5091 = vpop.f32.mrf.mxu0
  %v5092 = vadd.f32 %v4783, %v5091
  %v5093 = vpop.f32.mrf.mxu0
  %v5094 = vadd.f32 %v4785, %v5093
  %5095 = vmatmul.bf16.gmra.mxu0 %v2951
  %v5096 = vpop.f32.mrf.mxu0
  %v5097 = vadd.f32 %v4788, %v5096
  %v5098 = vpop.f32.mrf.mxu0
  %v5099 = vadd.f32 %v4790, %v5098
  %5100 = vmatmul.bf16.gmra.mxu0 %v2952
  %v5101 = vpop.f32.mrf.mxu0
  %v5102 = vadd.f32 %v4793, %v5101
  %v5103 = vpop.f32.mrf.mxu0
  %v5104 = vadd.f32 %v4795, %v5103
  %5105 = vmatmul.bf16.gmra.mxu0 %v2953
  %v5106 = vpop.f32.mrf.mxu0
  %v5107 = vadd.f32 %v4798, %v5106
  %v5108 = vpop.f32.mrf.mxu0
  %v5109 = vadd.f32 %v4800, %v5108
  %5110 = vmatmul.bf16.gmra.mxu0 %v2954
  %v5111 = vpop.f32.mrf.mxu0
  %v5112 = vadd.f32 %v4803, %v5111
  %v5113 = vpop.f32.mrf.mxu0
  %v5114 = vadd.f32 %v4805, %v5113
  %5115 = vmatmul.bf16.gmra.mxu0 %v2955
  %v5116 = vpop.f32.mrf.mxu0
  %v5117 = vadd.f32 %v4808, %v5116
  %v5118 = vpop.f32.mrf.mxu0
  %v5119 = vadd.f32 %v4810, %v5118
  %5120 = vmatmul.bf16.gmra.mxu0 %v2956
  %v5121 = vpop.f32.mrf.mxu0
  %v5122 = vadd.f32 %v4813, %v5121
  %v5123 = vpop.f32.mrf.mxu0
  %v5124 = vadd.f32 %v4815, %v5123
  %5125 = vmatmul.bf16.gmra.mxu0 %v2957
  %v5126 = vpop.f32.mrf.mxu0
  %v5127 = vadd.f32 %v4818, %v5126
  %v5128 = vpop.f32.mrf.mxu0
  %v5129 = vadd.f32 %v4820, %v5128
  %5130 = vmatmul.bf16.gmra.mxu0 %v2958
  %v5131 = vpop.f32.mrf.mxu0
  %v5132 = vadd.f32 %v4823, %v5131
  %v5133 = vpop.f32.mrf.mxu0
  %v5134 = vadd.f32 %v4825, %v5133
  %5135 = vmatmul.bf16.gmra.mxu0 %v2959
  %v5136 = vpop.f32.mrf.mxu0
  %v5137 = vadd.f32 %v4828, %v5136
  %v5138 = vpop.f32.mrf.mxu0
  %v5139 = vadd.f32 %v4830, %v5138
  %5140 = vmatmul.bf16.gmra.mxu0 %v2960
  %v5141 = vpop.f32.mrf.mxu0
  %v5142 = vadd.f32 %v4833, %v5141
  %v5143 = vpop.f32.mrf.mxu0
  %v5144 = vadd.f32 %v4835, %v5143
  %5145 = vmatmul.bf16.gmra.mxu0 %v2961
  %v5146 = vpop.f32.mrf.mxu0
  %v5147 = vadd.f32 %v4838, %v5146
  %v5148 = vpop.f32.mrf.mxu0
  %v5149 = vadd.f32 %v4840, %v5148
  %5150 = vmatmul.bf16.gmra.mxu0 %v2962
  %v5151 = vpop.f32.mrf.mxu0
  %v5152 = vadd.f32 %v4843, %v5151
  %v5153 = vpop.f32.mrf.mxu0
  %v5154 = vadd.f32 %v4845, %v5153
  %5155 = vdwg.mxu0
  %5156 = vmatpush.bf16.msra.mxu0 %v4131
  %5157 = vmatpush.bf16.msra.mxu0 %v4129
  %5158 = vmatpush.bf16.msra.mxu0 %v4127
  %5159 = vmatpush.bf16.msra.mxu0 %v4125
  %5160 = vmatpush.bf16.msra.mxu0 %v4123
  %5161 = vmatpush.bf16.msra.mxu0 %v4121
  %5162 = vmatpush.bf16.msra.mxu0 %v4119
  %5163 = vmatpush.bf16.msra.mxu0 %v4117
  %5164 = vmatmul.bf16.gmra.mxu0 %v3263
  %v5165 = vpop.f32.mrf.mxu0
  %v5166 = vadd.f32 %v4857, %v5165
  %v5167 = vpop.f32.mrf.mxu0
  %v5168 = vadd.f32 %v4859, %v5167
  %5169 = vmatmul.bf16.gmra.mxu0 %v3264
  %v5170 = vpop.f32.mrf.mxu0
  %v5171 = vadd.f32 %v4862, %v5170
  %v5172 = vpop.f32.mrf.mxu0
  %v5173 = vadd.f32 %v4864, %v5172
  %5174 = vmatmul.bf16.gmra.mxu0 %v3265
  %v5175 = vpop.f32.mrf.mxu0
  %v5176 = vadd.f32 %v4867, %v5175
  %v5177 = vpop.f32.mrf.mxu0
  %v5178 = vadd.f32 %v4869, %v5177
  %5179 = vmatmul.bf16.gmra.mxu0 %v3266
  %v5180 = vpop.f32.mrf.mxu0
  %v5181 = vadd.f32 %v4872, %v5180
  %v5182 = vpop.f32.mrf.mxu0
  %v5183 = vadd.f32 %v4874, %v5182
  %5184 = vmatmul.bf16.gmra.mxu0 %v3267
  %v5185 = vpop.f32.mrf.mxu0
  %v5186 = vadd.f32 %v4877, %v5185
  %v5187 = vpop.f32.mrf.mxu0
  %v5188 = vadd.f32 %v4879, %v5187
  %5189 = vmatmul.bf16.gmra.mxu0 %v3268
  %v5190 = vpop.f32.mrf.mxu0
  %v5191 = vadd.f32 %v4882, %v5190
  %v5192 = vpop.f32.mrf.mxu0
  %v5193 = vadd.f32 %v4884, %v5192
  %5194 = vmatmul.bf16.gmra.mxu0 %v3269
  %v5195 = vpop.f32.mrf.mxu0
  %v5196 = vadd.f32 %v4887, %v5195
  %v5197 = vpop.f32.mrf.mxu0
  %v5198 = vadd.f32 %v4889, %v5197
  %5199 = vmatmul.bf16.gmra.mxu0 %v3270
  %v5200 = vpop.f32.mrf.mxu0
  %v5201 = vadd.f32 %v4892, %v5200
  %v5202 = vpop.f32.mrf.mxu0
  %v5203 = vadd.f32 %v4894, %v5202
  %5204 = vmatmul.bf16.gmra.mxu0 %v3271
  %v5205 = vpop.f32.mrf.mxu0
  %v5206 = vadd.f32 %v4897, %v5205
  %v5207 = vpop.f32.mrf.mxu0
  %v5208 = vadd.f32 %v4899, %v5207
  %5209 = vmatmul.bf16.gmra.mxu0 %v3272
  %v5210 = vpop.f32.mrf.mxu0
  %v5211 = vadd.f32 %v4902, %v5210
  %v5212 = vpop.f32.mrf.mxu0
  %v5213 = vadd.f32 %v4904, %v5212
  %5214 = vmatmul.bf16.gmra.mxu0 %v3273
  %v5215 = vpop.f32.mrf.mxu0
  %v5216 = vadd.f32 %v4907, %v5215
  %v5217 = vpop.f32.mrf.mxu0
  %v5218 = vadd.f32 %v4909, %v5217
  %5219 = vmatmul.bf16.gmra.mxu0 %v3274
  %v5220 = vpop.f32.mrf.mxu0
  %v5221 = vadd.f32 %v4912, %v5220
  %v5222 = vpop.f32.mrf.mxu0
  %v5223 = vadd.f32 %v4914, %v5222
  %5224 = vmatmul.bf16.gmra.mxu0 %v3275
  %v5225 = vpop.f32.mrf.mxu0
  %v5226 = vadd.f32 %v4917, %v5225
  %v5227 = vpop.f32.mrf.mxu0
  %v5228 = vadd.f32 %v4919, %v5227
  %5229 = vmatmul.bf16.gmra.mxu0 %v3276
  %v5230 = vpop.f32.mrf.mxu0
  %v5231 = vadd.f32 %v4922, %v5230
  %v5232 = vpop.f32.mrf.mxu0
  %v5233 = vadd.f32 %v4924, %v5232
  %5234 = vmatmul.bf16.gmra.mxu0 %v3277
  %v5235 = vpop.f32.mrf.mxu0
  %v5236 = vadd.f32 %v4927, %v5235
  %v5237 = vpop.f32.mrf.mxu0
  %v5238 = vadd.f32 %v4929, %v5237
  %5239 = vmatmul.bf16.gmra.mxu0 %v3278
  %v5240 = vpop.f32.mrf.mxu0
  %v5241 = vadd.f32 %v4932, %v5240
  %v5242 = vpop.f32.mrf.mxu0
  %v5243 = vadd.f32 %v4934, %v5242
  %5244 = vmatmul.bf16.gmra.mxu0 %v3279
  %v5245 = vpop.f32.mrf.mxu0
  %v5246 = vadd.f32 %v4937, %v5245
  %v5247 = vpop.f32.mrf.mxu0
  %v5248 = vadd.f32 %v4939, %v5247
  %5249 = vmatmul.bf16.gmra.mxu0 %v3280
  %v5250 = vpop.f32.mrf.mxu0
  %v5251 = vadd.f32 %v4942, %v5250
  %v5252 = vpop.f32.mrf.mxu0
  %v5253 = vadd.f32 %v4944, %v5252
  %5254 = vmatmul.bf16.gmra.mxu0 %v3281
  %v5255 = vpop.f32.mrf.mxu0
  %v5256 = vadd.f32 %v4947, %v5255
  %v5257 = vpop.f32.mrf.mxu0
  %v5258 = vadd.f32 %v4949, %v5257
  %5259 = vmatmul.bf16.gmra.mxu0 %v3282
  %v5260 = vpop.f32.mrf.mxu0
  %v5261 = vadd.f32 %v4952, %v5260
  %v5262 = vpop.f32.mrf.mxu0
  %v5263 = vadd.f32 %v4954, %v5262
  %5264 = vmatmul.bf16.gmra.mxu0 %v3283
  %v5265 = vpop.f32.mrf.mxu0
  %v5266 = vadd.f32 %v4957, %v5265
  %v5267 = vpop.f32.mrf.mxu0
  %v5268 = vadd.f32 %v4959, %v5267
  %5269 = vmatmul.bf16.gmra.mxu0 %v3284
  %v5270 = vpop.f32.mrf.mxu0
  %v5271 = vadd.f32 %v4962, %v5270
  %v5272 = vpop.f32.mrf.mxu0
  %v5273 = vadd.f32 %v4964, %v5272
  %5274 = vmatmul.bf16.gmra.mxu0 %v3285
  %v5275 = vpop.f32.mrf.mxu0
  %v5276 = vadd.f32 %v4967, %v5275
  %v5277 = vpop.f32.mrf.mxu0
  %v5278 = vadd.f32 %v4969, %v5277
  %5279 = vmatmul.bf16.gmra.mxu0 %v3286
  %v5280 = vpop.f32.mrf.mxu0
  %v5281 = vadd.f32 %v4972, %v5280
  %v5282 = vpop.f32.mrf.mxu0
  %v5283 = vadd.f32 %v4974, %v5282
  %5284 = vmatmul.bf16.gmra.mxu0 %v3287
  %v5285 = vpop.f32.mrf.mxu0
  %v5286 = vadd.f32 %v4977, %v5285
  %v5287 = vpop.f32.mrf.mxu0
  %v5288 = vadd.f32 %v4979, %v5287
  %5289 = vmatmul.bf16.gmra.mxu0 %v3288
  %v5290 = vpop.f32.mrf.mxu0
  %v5291 = vadd.f32 %v4982, %v5290
  %v5292 = vpop.f32.mrf.mxu0
  %v5293 = vadd.f32 %v4984, %v5292
  %5294 = vmatmul.bf16.gmra.mxu0 %v3289
  %v5295 = vpop.f32.mrf.mxu0
  %v5296 = vadd.f32 %v4987, %v5295
  %v5297 = vpop.f32.mrf.mxu0
  %v5298 = vadd.f32 %v4989, %v5297
  %5299 = vmatmul.bf16.gmra.mxu0 %v3290
  %v5300 = vpop.f32.mrf.mxu0
  %v5301 = vadd.f32 %v4992, %v5300
  %v5302 = vpop.f32.mrf.mxu0
  %v5303 = vadd.f32 %v4994, %v5302
  %5304 = vmatmul.bf16.gmra.mxu0 %v3291
  %v5305 = vpop.f32.mrf.mxu0
  %v5306 = vadd.f32 %v4997, %v5305
  %v5307 = vpop.f32.mrf.mxu0
  %v5308 = vadd.f32 %v4999, %v5307
  %5309 = vmatmul.bf16.gmra.mxu0 %v3292
  %v5310 = vpop.f32.mrf.mxu0
  %v5311 = vadd.f32 %v5002, %v5310
  %v5312 = vpop.f32.mrf.mxu0
  %v5313 = vadd.f32 %v5004, %v5312
  %5314 = vmatmul.bf16.gmra.mxu0 %v3293
  %v5315 = vpop.f32.mrf.mxu0
  %v5316 = vadd.f32 %v5007, %v5315
  %v5317 = vpop.f32.mrf.mxu0
  %v5318 = vadd.f32 %v5009, %v5317
  %5319 = vmatmul.bf16.gmra.mxu0 %v3294
  %v5320 = vpop.f32.mrf.mxu0
  %v5321 = vadd.f32 %v5012, %v5320
  %v5322 = vpop.f32.mrf.mxu0
  %v5323 = vadd.f32 %v5014, %v5322
  %5324 = vmatmul.bf16.gmra.mxu0 %v3295
  %v5325 = vpop.f32.mrf.mxu0
  %v5326 = vadd.f32 %v5017, %v5325
  %v5327 = vpop.f32.mrf.mxu0
  %v5328 = vadd.f32 %v5019, %v5327
  %5329 = vmatmul.bf16.gmra.mxu0 %v3296
  %v5330 = vpop.f32.mrf.mxu0
  %v5331 = vadd.f32 %v5022, %v5330
  %v5332 = vpop.f32.mrf.mxu0
  %v5333 = vadd.f32 %v5024, %v5332
  %5334 = vmatmul.bf16.gmra.mxu0 %v3297
  %v5335 = vpop.f32.mrf.mxu0
  %v5336 = vadd.f32 %v5027, %v5335
  %v5337 = vpop.f32.mrf.mxu0
  %v5338 = vadd.f32 %v5029, %v5337
  %5339 = vmatmul.bf16.gmra.mxu0 %v3298
  %v5340 = vpop.f32.mrf.mxu0
  %v5341 = vadd.f32 %v5032, %v5340
  %v5342 = vpop.f32.mrf.mxu0
  %v5343 = vadd.f32 %v5034, %v5342
  %5344 = vmatmul.bf16.gmra.mxu0 %v3299
  %v5345 = vpop.f32.mrf.mxu0
  %v5346 = vadd.f32 %v5037, %v5345
  %v5347 = vpop.f32.mrf.mxu0
  %v5348 = vadd.f32 %v5039, %v5347
  %5349 = vmatmul.bf16.gmra.mxu0 %v3300
  %v5350 = vpop.f32.mrf.mxu0
  %v5351 = vadd.f32 %v5042, %v5350
  %v5352 = vpop.f32.mrf.mxu0
  %v5353 = vadd.f32 %v5044, %v5352
  %5354 = vmatmul.bf16.gmra.mxu0 %v3301
  %v5355 = vpop.f32.mrf.mxu0
  %v5356 = vadd.f32 %v5047, %v5355
  %v5357 = vpop.f32.mrf.mxu0
  %v5358 = vadd.f32 %v5049, %v5357
  %5359 = vmatmul.bf16.gmra.mxu0 %v3302
  %v5360 = vpop.f32.mrf.mxu0
  %v5361 = vadd.f32 %v5052, %v5360
  %v5362 = vpop.f32.mrf.mxu0
  %v5363 = vadd.f32 %v5054, %v5362
  %5364 = vmatmul.bf16.gmra.mxu0 %v3303
  %v5365 = vpop.f32.mrf.mxu0
  %v5366 = vadd.f32 %v5057, %v5365
  %v5367 = vpop.f32.mrf.mxu0
  %v5368 = vadd.f32 %v5059, %v5367
  %5369 = vmatmul.bf16.gmra.mxu0 %v3304
  %v5370 = vpop.f32.mrf.mxu0
  %v5371 = vadd.f32 %v5062, %v5370
  %v5372 = vpop.f32.mrf.mxu0
  %v5373 = vadd.f32 %v5064, %v5372
  %5374 = vmatmul.bf16.gmra.mxu0 %v3305
  %v5375 = vpop.f32.mrf.mxu0
  %v5376 = vadd.f32 %v5067, %v5375
  %v5377 = vpop.f32.mrf.mxu0
  %v5378 = vadd.f32 %v5069, %v5377
  %5379 = vmatmul.bf16.gmra.mxu0 %v3306
  %v5380 = vpop.f32.mrf.mxu0
  %v5381 = vadd.f32 %v5072, %v5380
  %v5382 = vpop.f32.mrf.mxu0
  %v5383 = vadd.f32 %v5074, %v5382
  %5384 = vmatmul.bf16.gmra.mxu0 %v3307
  %v5385 = vpop.f32.mrf.mxu0
  %v5386 = vadd.f32 %v5077, %v5385
  %v5387 = vpop.f32.mrf.mxu0
  %v5388 = vadd.f32 %v5079, %v5387
  %5389 = vmatmul.bf16.gmra.mxu0 %v3308
  %v5390 = vpop.f32.mrf.mxu0
  %v5391 = vadd.f32 %v5082, %v5390
  %v5392 = vpop.f32.mrf.mxu0
  %v5393 = vadd.f32 %v5084, %v5392
  %5394 = vmatmul.bf16.gmra.mxu0 %v3309
  %v5395 = vpop.f32.mrf.mxu0
  %v5396 = vadd.f32 %v5087, %v5395
  %v5397 = vpop.f32.mrf.mxu0
  %v5398 = vadd.f32 %v5089, %v5397
  %5399 = vmatmul.bf16.gmra.mxu0 %v3310
  %v5400 = vpop.f32.mrf.mxu0
  %v5401 = vadd.f32 %v5092, %v5400
  %v5402 = vpop.f32.mrf.mxu0
  %v5403 = vadd.f32 %v5094, %v5402
  %5404 = vmatmul.bf16.gmra.mxu0 %v3311
  %v5405 = vpop.f32.mrf.mxu0
  %v5406 = vadd.f32 %v5097, %v5405
  %v5407 = vpop.f32.mrf.mxu0
  %v5408 = vadd.f32 %v5099, %v5407
  %5409 = vmatmul.bf16.gmra.mxu0 %v3312
  %v5410 = vpop.f32.mrf.mxu0
  %v5411 = vadd.f32 %v5102, %v5410
  %v5412 = vpop.f32.mrf.mxu0
  %v5413 = vadd.f32 %v5104, %v5412
  %5414 = vmatmul.bf16.gmra.mxu0 %v3313
  %v5415 = vpop.f32.mrf.mxu0
  %v5416 = vadd.f32 %v5107, %v5415
  %v5417 = vpop.f32.mrf.mxu0
  %v5418 = vadd.f32 %v5109, %v5417
  %5419 = vmatmul.bf16.gmra.mxu0 %v3314
  %v5420 = vpop.f32.mrf.mxu0
  %v5421 = vadd.f32 %v5112, %v5420
  %v5422 = vpop.f32.mrf.mxu0
  %v5423 = vadd.f32 %v5114, %v5422
  %5424 = vmatmul.bf16.gmra.mxu0 %v3315
  %v5425 = vpop.f32.mrf.mxu0
  %v5426 = vadd.f32 %v5117, %v5425
  %v5427 = vpop.f32.mrf.mxu0
  %v5428 = vadd.f32 %v5119, %v5427
  %5429 = vmatmul.bf16.gmra.mxu0 %v3316
  %v5430 = vpop.f32.mrf.mxu0
  %v5431 = vadd.f32 %v5122, %v5430
  %v5432 = vpop.f32.mrf.mxu0
  %v5433 = vadd.f32 %v5124, %v5432
  %5434 = vmatmul.bf16.gmra.mxu0 %v3317
  %v5435 = vpop.f32.mrf.mxu0
  %v5436 = vadd.f32 %v5127, %v5435
  %v5437 = vpop.f32.mrf.mxu0
  %v5438 = vadd.f32 %v5129, %v5437
  %5439 = vmatmul.bf16.gmra.mxu0 %v3318
  %v5440 = vpop.f32.mrf.mxu0
  %v5441 = vadd.f32 %v5132, %v5440
  %v5442 = vpop.f32.mrf.mxu0
  %v5443 = vadd.f32 %v5134, %v5442
  %5444 = vmatmul.bf16.gmra.mxu0 %v3319
  %v5445 = vpop.f32.mrf.mxu0
  %v5446 = vadd.f32 %v5137, %v5445
  %v5447 = vpop.f32.mrf.mxu0
  %v5448 = vadd.f32 %v5139, %v5447
  %5449 = vmatmul.bf16.gmra.mxu0 %v3320
  %v5450 = vpop.f32.mrf.mxu0
  %v5451 = vadd.f32 %v5142, %v5450
  %v5452 = vpop.f32.mrf.mxu0
  %v5453 = vadd.f32 %v5144, %v5452
  %5454 = vmatmul.bf16.gmra.mxu0 %v3321
  %v5455 = vpop.f32.mrf.mxu0
  %v5456 = vadd.f32 %v5147, %v5455
  %v5457 = vpop.f32.mrf.mxu0
  %v5458 = vadd.f32 %v5149, %v5457
  %5459 = vmatmul.bf16.gmra.mxu0 %v3322
  %v5460 = vpop.f32.mrf.mxu0
  %v5461 = vadd.f32 %v5152, %v5460
  %v5462 = vpop.f32.mrf.mxu0
  %v5463 = vadd.f32 %v5154, %v5462
  %5464 = vdwg.mxu0
  %5465 = vmatpush.bf16.msra.mxu0 %v4147
  %5466 = vmatpush.bf16.msra.mxu0 %v4145
  %5467 = vmatpush.bf16.msra.mxu0 %v4143
  %5468 = vmatpush.bf16.msra.mxu0 %v4141
  %5469 = vmatpush.bf16.msra.mxu0 %v4139
  %5470 = vmatpush.bf16.msra.mxu0 %v4137
  %5471 = vmatpush.bf16.msra.mxu0 %v4135
  %5472 = vmatpush.bf16.msra.mxu0 %v4133
  %5473 = vmatmul.bf16.gmra.mxu0 %v3623
  %v5474 = vpop.f32.mrf.mxu0
  %v5475 = vadd.f32 %v5166, %v5474
  %v5476 = vpop.f32.mrf.mxu0
  %v5477 = vadd.f32 %v5168, %v5476
  %5478 = vmatmul.bf16.gmra.mxu0 %v3624
  %v5479 = vpop.f32.mrf.mxu0
  %v5480 = vadd.f32 %v5171, %v5479
  %v5481 = vpop.f32.mrf.mxu0
  %v5482 = vadd.f32 %v5173, %v5481
  %5483 = vmatmul.bf16.gmra.mxu0 %v3625
  %v5484 = vpop.f32.mrf.mxu0
  %v5485 = vadd.f32 %v5176, %v5484
  %v5486 = vpop.f32.mrf.mxu0
  %v5487 = vadd.f32 %v5178, %v5486
  %5488 = vmatmul.bf16.gmra.mxu0 %v3626
  %v5489 = vpop.f32.mrf.mxu0
  %v5490 = vadd.f32 %v5181, %v5489
  %v5491 = vpop.f32.mrf.mxu0
  %v5492 = vadd.f32 %v5183, %v5491
  %5493 = vmatmul.bf16.gmra.mxu0 %v3627
  %v5494 = vpop.f32.mrf.mxu0
  %v5495 = vadd.f32 %v5186, %v5494
  %v5496 = vpop.f32.mrf.mxu0
  %v5497 = vadd.f32 %v5188, %v5496
  %5498 = vmatmul.bf16.gmra.mxu0 %v3628
  %v5499 = vpop.f32.mrf.mxu0
  %v5500 = vadd.f32 %v5191, %v5499
  %v5501 = vpop.f32.mrf.mxu0
  %v5502 = vadd.f32 %v5193, %v5501
  %5503 = vmatmul.bf16.gmra.mxu0 %v3629
  %v5504 = vpop.f32.mrf.mxu0
  %v5505 = vadd.f32 %v5196, %v5504
  %v5506 = vpop.f32.mrf.mxu0
  %v5507 = vadd.f32 %v5198, %v5506
  %5508 = vmatmul.bf16.gmra.mxu0 %v3630
  %v5509 = vpop.f32.mrf.mxu0
  %v5510 = vadd.f32 %v5201, %v5509
  %v5511 = vpop.f32.mrf.mxu0
  %v5512 = vadd.f32 %v5203, %v5511
  %5513 = vmatmul.bf16.gmra.mxu0 %v3631
  %v5514 = vpop.f32.mrf.mxu0
  %v5515 = vadd.f32 %v5206, %v5514
  %v5516 = vpop.f32.mrf.mxu0
  %v5517 = vadd.f32 %v5208, %v5516
  %5518 = vmatmul.bf16.gmra.mxu0 %v3632
  %v5519 = vpop.f32.mrf.mxu0
  %v5520 = vadd.f32 %v5211, %v5519
  %v5521 = vpop.f32.mrf.mxu0
  %v5522 = vadd.f32 %v5213, %v5521
  %5523 = vmatmul.bf16.gmra.mxu0 %v3633
  %v5524 = vpop.f32.mrf.mxu0
  %v5525 = vadd.f32 %v5216, %v5524
  %v5526 = vpop.f32.mrf.mxu0
  %v5527 = vadd.f32 %v5218, %v5526
  %5528 = vmatmul.bf16.gmra.mxu0 %v3634
  %v5529 = vpop.f32.mrf.mxu0
  %v5530 = vadd.f32 %v5221, %v5529
  %v5531 = vpop.f32.mrf.mxu0
  %v5532 = vadd.f32 %v5223, %v5531
  %5533 = vmatmul.bf16.gmra.mxu0 %v3635
  %v5534 = vpop.f32.mrf.mxu0
  %v5535 = vadd.f32 %v5226, %v5534
  %v5536 = vpop.f32.mrf.mxu0
  %v5537 = vadd.f32 %v5228, %v5536
  %5538 = vmatmul.bf16.gmra.mxu0 %v3636
  %v5539 = vpop.f32.mrf.mxu0
  %v5540 = vadd.f32 %v5231, %v5539
  %v5541 = vpop.f32.mrf.mxu0
  %v5542 = vadd.f32 %v5233, %v5541
  %5543 = vmatmul.bf16.gmra.mxu0 %v3637
  %v5544 = vpop.f32.mrf.mxu0
  %v5545 = vadd.f32 %v5236, %v5544
  %v5546 = vpop.f32.mrf.mxu0
  %v5547 = vadd.f32 %v5238, %v5546
  %5548 = vmatmul.bf16.gmra.mxu0 %v3638
  %v5549 = vpop.f32.mrf.mxu0
  %v5550 = vadd.f32 %v5241, %v5549
  %v5551 = vpop.f32.mrf.mxu0
  %v5552 = vadd.f32 %v5243, %v5551
  %5553 = vmatmul.bf16.gmra.mxu0 %v3639
  %v5554 = vpop.f32.mrf.mxu0
  %v5555 = vadd.f32 %v5246, %v5554
  %v5556 = vpop.f32.mrf.mxu0
  %v5557 = vadd.f32 %v5248, %v5556
  %5558 = vmatmul.bf16.gmra.mxu0 %v3640
  %v5559 = vpop.f32.mrf.mxu0
  %v5560 = vadd.f32 %v5251, %v5559
  %v5561 = vpop.f32.mrf.mxu0
  %v5562 = vadd.f32 %v5253, %v5561
  %5563 = vmatmul.bf16.gmra.mxu0 %v3641
  %v5564 = vpop.f32.mrf.mxu0
  %v5565 = vadd.f32 %v5256, %v5564
  %v5566 = vpop.f32.mrf.mxu0
  %v5567 = vadd.f32 %v5258, %v5566
  %5568 = vmatmul.bf16.gmra.mxu0 %v3642
  %v5569 = vpop.f32.mrf.mxu0
  %v5570 = vadd.f32 %v5261, %v5569
  %v5571 = vpop.f32.mrf.mxu0
  %v5572 = vadd.f32 %v5263, %v5571
  %5573 = vmatmul.bf16.gmra.mxu0 %v3643
  %v5574 = vpop.f32.mrf.mxu0
  %v5575 = vadd.f32 %v5266, %v5574
  %v5576 = vpop.f32.mrf.mxu0
  %v5577 = vadd.f32 %v5268, %v5576
  %5578 = vmatmul.bf16.gmra.mxu0 %v3644
  %v5579 = vpop.f32.mrf.mxu0
  %v5580 = vadd.f32 %v5271, %v5579
  %v5581 = vpop.f32.mrf.mxu0
  %v5582 = vadd.f32 %v5273, %v5581
  %5583 = vmatmul.bf16.gmra.mxu0 %v3645
  %v5584 = vpop.f32.mrf.mxu0
  %v5585 = vadd.f32 %v5276, %v5584
  %v5586 = vpop.f32.mrf.mxu0
  %v5587 = vadd.f32 %v5278, %v5586
  %5588 = vmatmul.bf16.gmra.mxu0 %v3646
  %v5589 = vpop.f32.mrf.mxu0
  %v5590 = vadd.f32 %v5281, %v5589
  %v5591 = vpop.f32.mrf.mxu0
  %v5592 = vadd.f32 %v5283, %v5591
  %5593 = vmatmul.bf16.gmra.mxu0 %v3647
  %v5594 = vpop.f32.mrf.mxu0
  %v5595 = vadd.f32 %v5286, %v5594
  %v5596 = vpop.f32.mrf.mxu0
  %v5597 = vadd.f32 %v5288, %v5596
  %5598 = vmatmul.bf16.gmra.mxu0 %v3648
  %v5599 = vpop.f32.mrf.mxu0
  %v5600 = vadd.f32 %v5291, %v5599
  %v5601 = vpop.f32.mrf.mxu0
  %v5602 = vadd.f32 %v5293, %v5601
  %5603 = vmatmul.bf16.gmra.mxu0 %v3649
  %v5604 = vpop.f32.mrf.mxu0
  %v5605 = vadd.f32 %v5296, %v5604
  %v5606 = vpop.f32.mrf.mxu0
  %v5607 = vadd.f32 %v5298, %v5606
  %5608 = vmatmul.bf16.gmra.mxu0 %v3650
  %v5609 = vpop.f32.mrf.mxu0
  %v5610 = vadd.f32 %v5301, %v5609
  %v5611 = vpop.f32.mrf.mxu0
  %v5612 = vadd.f32 %v5303, %v5611
  %5613 = vmatmul.bf16.gmra.mxu0 %v3651
  %v5614 = vpop.f32.mrf.mxu0
  %v5615 = vadd.f32 %v5306, %v5614
  %v5616 = vpop.f32.mrf.mxu0
  %v5617 = vadd.f32 %v5308, %v5616
  %5618 = vmatmul.bf16.gmra.mxu0 %v3652
  %v5619 = vpop.f32.mrf.mxu0
  %v5620 = vadd.f32 %v5311, %v5619
  %v5621 = vpop.f32.mrf.mxu0
  %v5622 = vadd.f32 %v5313, %v5621
  %5623 = vmatmul.bf16.gmra.mxu0 %v3653
  %v5624 = vpop.f32.mrf.mxu0
  %v5625 = vadd.f32 %v5316, %v5624
  %v5626 = vpop.f32.mrf.mxu0
  %v5627 = vadd.f32 %v5318, %v5626
  %5628 = vmatmul.bf16.gmra.mxu0 %v3654
  %v5629 = vpop.f32.mrf.mxu0
  %v5630 = vadd.f32 %v5321, %v5629
  %v5631 = vpop.f32.mrf.mxu0
  %v5632 = vadd.f32 %v5323, %v5631
  %5633 = vmatmul.bf16.gmra.mxu0 %v3655
  %v5634 = vpop.f32.mrf.mxu0
  %v5635 = vadd.f32 %v5326, %v5634
  %v5636 = vpop.f32.mrf.mxu0
  %v5637 = vadd.f32 %v5328, %v5636
  %5638 = vmatmul.bf16.gmra.mxu0 %v3656
  %v5639 = vpop.f32.mrf.mxu0
  %v5640 = vadd.f32 %v5331, %v5639
  %v5641 = vpop.f32.mrf.mxu0
  %v5642 = vadd.f32 %v5333, %v5641
  %5643 = vmatmul.bf16.gmra.mxu0 %v3657
  %v5644 = vpop.f32.mrf.mxu0
  %v5645 = vadd.f32 %v5336, %v5644
  %v5646 = vpop.f32.mrf.mxu0
  %v5647 = vadd.f32 %v5338, %v5646
  %5648 = vmatmul.bf16.gmra.mxu0 %v3658
  %v5649 = vpop.f32.mrf.mxu0
  %v5650 = vadd.f32 %v5341, %v5649
  %v5651 = vpop.f32.mrf.mxu0
  %v5652 = vadd.f32 %v5343, %v5651
  %5653 = vmatmul.bf16.gmra.mxu0 %v3659
  %v5654 = vpop.f32.mrf.mxu0
  %v5655 = vadd.f32 %v5346, %v5654
  %v5656 = vpop.f32.mrf.mxu0
  %v5657 = vadd.f32 %v5348, %v5656
  %5658 = vmatmul.bf16.gmra.mxu0 %v3660
  %v5659 = vpop.f32.mrf.mxu0
  %v5660 = vadd.f32 %v5351, %v5659
  %v5661 = vpop.f32.mrf.mxu0
  %v5662 = vadd.f32 %v5353, %v5661
  %5663 = vmatmul.bf16.gmra.mxu0 %v3661
  %v5664 = vpop.f32.mrf.mxu0
  %v5665 = vadd.f32 %v5356, %v5664
  %v5666 = vpop.f32.mrf.mxu0
  %v5667 = vadd.f32 %v5358, %v5666
  %5668 = vmatmul.bf16.gmra.mxu0 %v3662
  %v5669 = vpop.f32.mrf.mxu0
  %v5670 = vadd.f32 %v5361, %v5669
  %v5671 = vpop.f32.mrf.mxu0
  %v5672 = vadd.f32 %v5363, %v5671
  %5673 = vmatmul.bf16.gmra.mxu0 %v3663
  %v5674 = vpop.f32.mrf.mxu0
  %v5675 = vadd.f32 %v5366, %v5674
  %v5676 = vpop.f32.mrf.mxu0
  %v5677 = vadd.f32 %v5368, %v5676
  %5678 = vmatmul.bf16.gmra.mxu0 %v3664
  %v5679 = vpop.f32.mrf.mxu0
  %v5680 = vadd.f32 %v5371, %v5679
  %v5681 = vpop.f32.mrf.mxu0
  %v5682 = vadd.f32 %v5373, %v5681
  %5683 = vmatmul.bf16.gmra.mxu0 %v3665
  %v5684 = vpop.f32.mrf.mxu0
  %v5685 = vadd.f32 %v5376, %v5684
  %v5686 = vpop.f32.mrf.mxu0
  %v5687 = vadd.f32 %v5378, %v5686
  %5688 = vmatmul.bf16.gmra.mxu0 %v3666
  %v5689 = vpop.f32.mrf.mxu0
  %v5690 = vadd.f32 %v5381, %v5689
  %v5691 = vpop.f32.mrf.mxu0
  %v5692 = vadd.f32 %v5383, %v5691
  %5693 = vmatmul.bf16.gmra.mxu0 %v3667
  %v5694 = vpop.f32.mrf.mxu0
  %v5695 = vadd.f32 %v5386, %v5694
  %v5696 = vpop.f32.mrf.mxu0
  %v5697 = vadd.f32 %v5388, %v5696
  %5698 = vmatmul.bf16.gmra.mxu0 %v3668
  %v5699 = vpop.f32.mrf.mxu0
  %v5700 = vadd.f32 %v5391, %v5699
  %v5701 = vpop.f32.mrf.mxu0
  %v5702 = vadd.f32 %v5393, %v5701
  %5703 = vmatmul.bf16.gmra.mxu0 %v3669
  %v5704 = vpop.f32.mrf.mxu0
  %v5705 = vadd.f32 %v5396, %v5704
  %v5706 = vpop.f32.mrf.mxu0
  %v5707 = vadd.f32 %v5398, %v5706
  %5708 = vmatmul.bf16.gmra.mxu0 %v3670
  %v5709 = vpop.f32.mrf.mxu0
  %v5710 = vadd.f32 %v5401, %v5709
  %v5711 = vpop.f32.mrf.mxu0
  %v5712 = vadd.f32 %v5403, %v5711
  %5713 = vmatmul.bf16.gmra.mxu0 %v3671
  %v5714 = vpop.f32.mrf.mxu0
  %v5715 = vadd.f32 %v5406, %v5714
  %v5716 = vpop.f32.mrf.mxu0
  %v5717 = vadd.f32 %v5408, %v5716
  %5718 = vmatmul.bf16.gmra.mxu0 %v3672
  %v5719 = vpop.f32.mrf.mxu0
  %v5720 = vadd.f32 %v5411, %v5719
  %v5721 = vpop.f32.mrf.mxu0
  %v5722 = vadd.f32 %v5413, %v5721
  %5723 = vmatmul.bf16.gmra.mxu0 %v3673
  %v5724 = vpop.f32.mrf.mxu0
  %v5725 = vadd.f32 %v5416, %v5724
  %v5726 = vpop.f32.mrf.mxu0
  %v5727 = vadd.f32 %v5418, %v5726
  %5728 = vmatmul.bf16.gmra.mxu0 %v3674
  %v5729 = vpop.f32.mrf.mxu0
  %v5730 = vadd.f32 %v5421, %v5729
  %v5731 = vpop.f32.mrf.mxu0
  %v5732 = vadd.f32 %v5423, %v5731
  %5733 = vmatmul.bf16.gmra.mxu0 %v3675
  %v5734 = vpop.f32.mrf.mxu0
  %v5735 = vadd.f32 %v5426, %v5734
  %v5736 = vpop.f32.mrf.mxu0
  %v5737 = vadd.f32 %v5428, %v5736
  %5738 = vmatmul.bf16.gmra.mxu0 %v3676
  %v5739 = vpop.f32.mrf.mxu0
  %v5740 = vadd.f32 %v5431, %v5739
  %v5741 = vpop.f32.mrf.mxu0
  %v5742 = vadd.f32 %v5433, %v5741
  %5743 = vmatmul.bf16.gmra.mxu0 %v3677
  %v5744 = vpop.f32.mrf.mxu0
  %v5745 = vadd.f32 %v5436, %v5744
  %v5746 = vpop.f32.mrf.mxu0
  %v5747 = vadd.f32 %v5438, %v5746
  %5748 = vmatmul.bf16.gmra.mxu0 %v3678
  %v5749 = vpop.f32.mrf.mxu0
  %v5750 = vadd.f32 %v5441, %v5749
  %v5751 = vpop.f32.mrf.mxu0
  %v5752 = vadd.f32 %v5443, %v5751
  %5753 = vmatmul.bf16.gmra.mxu0 %v3679
  %v5754 = vpop.f32.mrf.mxu0
  %v5755 = vadd.f32 %v5446, %v5754
  %v5756 = vpop.f32.mrf.mxu0
  %v5757 = vadd.f32 %v5448, %v5756
  %5758 = vmatmul.bf16.gmra.mxu0 %v3680
  %v5759 = vpop.f32.mrf.mxu0
  %v5760 = vadd.f32 %v5451, %v5759
  %v5761 = vpop.f32.mrf.mxu0
  %v5762 = vadd.f32 %v5453, %v5761
  %5763 = vmatmul.bf16.gmra.mxu0 %v3681
  %v5764 = vpop.f32.mrf.mxu0
  %v5765 = vadd.f32 %v5456, %v5764
  %v5766 = vpop.f32.mrf.mxu0
  %v5767 = vadd.f32 %v5458, %v5766
  %5768 = vmatmul.bf16.gmra.mxu0 %v3682
  %v5769 = vpop.f32.mrf.mxu0
  %v5770 = vadd.f32 %v5461, %v5769
  %v5771 = vpop.f32.mrf.mxu0
  %v5772 = vadd.f32 %v5463, %v5771
  %5773 = vdwg.mxu0
  %5774 = vmatpush.bf16.msra.mxu0 %v4084
  %5775 = vmatpush.bf16.msra.mxu0 %v4082
  %5776 = vmatpush.bf16.msra.mxu0 %v4080
  %5777 = vmatpush.bf16.msra.mxu0 %v4078
  %5778 = vmatpush.bf16.msra.mxu0 %v4076
  %5779 = vmatpush.bf16.msra.mxu0 %v4074
  %5780 = vmatpush.bf16.msra.mxu0 %v4072
  %5781 = vmatpush.bf16.msra.mxu0 %v4070
  %5782 = vmatmul.bf16.gmra.mxu0 %v2183
  %v5783 = vpop.f32.mrf.mxu0
  %v5784 = vadd.f32 %v3826, %v5783
  %v5785 = vpop.f32.mrf.mxu0
  %v5786 = vadd.f32 %v3826, %v5785
  %5787 = vmatmul.bf16.gmra.mxu0 %v2184
  %v5788 = vpop.f32.mrf.mxu0
  %v5789 = vadd.f32 %v3826, %v5788
  %v5790 = vpop.f32.mrf.mxu0
  %v5791 = vadd.f32 %v3826, %v5790
  %5792 = vmatmul.bf16.gmra.mxu0 %v2185
  %v5793 = vpop.f32.mrf.mxu0
  %v5794 = vadd.f32 %v3826, %v5793
  %v5795 = vpop.f32.mrf.mxu0
  %v5796 = vadd.f32 %v3826, %v5795
  %5797 = vmatmul.bf16.gmra.mxu0 %v2186
  %v5798 = vpop.f32.mrf.mxu0
  %v5799 = vadd.f32 %v3826, %v5798
  %v5800 = vpop.f32.mrf.mxu0
  %v5801 = vadd.f32 %v3826, %v5800
  %5802 = vmatmul.bf16.gmra.mxu0 %v2187
  %v5803 = vpop.f32.mrf.mxu0
  %v5804 = vadd.f32 %v3826, %v5803
  %v5805 = vpop.f32.mrf.mxu0
  %v5806 = vadd.f32 %v3826, %v5805
  %5807 = vmatmul.bf16.gmra.mxu0 %v2188
  %v5808 = vpop.f32.mrf.mxu0
  %v5809 = vadd.f32 %v3826, %v5808
  %v5810 = vpop.f32.mrf.mxu0
  %v5811 = vadd.f32 %v3826, %v5810
  %5812 = vmatmul.bf16.gmra.mxu0 %v2189
  %v5813 = vpop.f32.mrf.mxu0
  %v5814 = vadd.f32 %v3826, %v5813
  %v5815 = vpop.f32.mrf.mxu0
  %v5816 = vadd.f32 %v3826, %v5815
  %5817 = vmatmul.bf16.gmra.mxu0 %v2190
  %v5818 = vpop.f32.mrf.mxu0
  %v5819 = vadd.f32 %v3826, %v5818
  %v5820 = vpop.f32.mrf.mxu0
  %v5821 = vadd.f32 %v3826, %v5820
  %5822 = vmatmul.bf16.gmra.mxu0 %v2191
  %v5823 = vpop.f32.mrf.mxu0
  %v5824 = vadd.f32 %v3826, %v5823
  %v5825 = vpop.f32.mrf.mxu0
  %v5826 = vadd.f32 %v3826, %v5825
  %5827 = vmatmul.bf16.gmra.mxu0 %v2192
  %v5828 = vpop.f32.mrf.mxu0
  %v5829 = vadd.f32 %v3826, %v5828
  %v5830 = vpop.f32.mrf.mxu0
  %v5831 = vadd.f32 %v3826, %v5830
  %5832 = vmatmul.bf16.gmra.mxu0 %v2193
  %v5833 = vpop.f32.mrf.mxu0
  %v5834 = vadd.f32 %v3826, %v5833
  %v5835 = vpop.f32.mrf.mxu0
  %v5836 = vadd.f32 %v3826, %v5835
  %5837 = vmatmul.bf16.gmra.mxu0 %v2194
  %v5838 = vpop.f32.mrf.mxu0
  %v5839 = vadd.f32 %v3826, %v5838
  %v5840 = vpop.f32.mrf.mxu0
  %v5841 = vadd.f32 %v3826, %v5840
  %5842 = vmatmul.bf16.gmra.mxu0 %v2195
  %v5843 = vpop.f32.mrf.mxu0
  %v5844 = vadd.f32 %v3826, %v5843
  %v5845 = vpop.f32.mrf.mxu0
  %v5846 = vadd.f32 %v3826, %v5845
  %5847 = vmatmul.bf16.gmra.mxu0 %v2196
  %v5848 = vpop.f32.mrf.mxu0
  %v5849 = vadd.f32 %v3826, %v5848
  %v5850 = vpop.f32.mrf.mxu0
  %v5851 = vadd.f32 %v3826, %v5850
  %5852 = vmatmul.bf16.gmra.mxu0 %v2197
  %v5853 = vpop.f32.mrf.mxu0
  %v5854 = vadd.f32 %v3826, %v5853
  %v5855 = vpop.f32.mrf.mxu0
  %v5856 = vadd.f32 %v3826, %v5855
  %5857 = vmatmul.bf16.gmra.mxu0 %v2198
  %v5858 = vpop.f32.mrf.mxu0
  %v5859 = vadd.f32 %v3826, %v5858
  %v5860 = vpop.f32.mrf.mxu0
  %v5861 = vadd.f32 %v3826, %v5860
  %5862 = vmatmul.bf16.gmra.mxu0 %v2199
  %v5863 = vpop.f32.mrf.mxu0
  %v5864 = vadd.f32 %v3826, %v5863
  %v5865 = vpop.f32.mrf.mxu0
  %v5866 = vadd.f32 %v3826, %v5865
  %5867 = vmatmul.bf16.gmra.mxu0 %v2200
  %v5868 = vpop.f32.mrf.mxu0
  %v5869 = vadd.f32 %v3826, %v5868
  %v5870 = vpop.f32.mrf.mxu0
  %v5871 = vadd.f32 %v3826, %v5870
  %5872 = vmatmul.bf16.gmra.mxu0 %v2201
  %v5873 = vpop.f32.mrf.mxu0
  %v5874 = vadd.f32 %v3826, %v5873
  %v5875 = vpop.f32.mrf.mxu0
  %v5876 = vadd.f32 %v3826, %v5875
  %5877 = vmatmul.bf16.gmra.mxu0 %v2202
  %v5878 = vpop.f32.mrf.mxu0
  %v5879 = vadd.f32 %v3826, %v5878
  %v5880 = vpop.f32.mrf.mxu0
  %v5881 = vadd.f32 %v3826, %v5880
  %5882 = vmatmul.bf16.gmra.mxu0 %v2203
  %v5883 = vpop.f32.mrf.mxu0
  %v5884 = vadd.f32 %v3826, %v5883
  %v5885 = vpop.f32.mrf.mxu0
  %v5886 = vadd.f32 %v3826, %v5885
  %5887 = vmatmul.bf16.gmra.mxu0 %v2204
  %v5888 = vpop.f32.mrf.mxu0
  %v5889 = vadd.f32 %v3826, %v5888
  %v5890 = vpop.f32.mrf.mxu0
  %v5891 = vadd.f32 %v3826, %v5890
  %5892 = vmatmul.bf16.gmra.mxu0 %v2205
  %v5893 = vpop.f32.mrf.mxu0
  %v5894 = vadd.f32 %v3826, %v5893
  %v5895 = vpop.f32.mrf.mxu0
  %v5896 = vadd.f32 %v3826, %v5895
  %5897 = vmatmul.bf16.gmra.mxu0 %v2206
  %v5898 = vpop.f32.mrf.mxu0
  %v5899 = vadd.f32 %v3826, %v5898
  %v5900 = vpop.f32.mrf.mxu0
  %v5901 = vadd.f32 %v3826, %v5900
  %5902 = vmatmul.bf16.gmra.mxu0 %v2207
  %v5903 = vpop.f32.mrf.mxu0
  %v5904 = vadd.f32 %v3826, %v5903
  %v5905 = vpop.f32.mrf.mxu0
  %v5906 = vadd.f32 %v3826, %v5905
  %5907 = vmatmul.bf16.gmra.mxu0 %v2208
  %v5908 = vpop.f32.mrf.mxu0
  %v5909 = vadd.f32 %v3826, %v5908
  %v5910 = vpop.f32.mrf.mxu0
  %v5911 = vadd.f32 %v3826, %v5910
  %5912 = vmatmul.bf16.gmra.mxu0 %v2209
  %v5913 = vpop.f32.mrf.mxu0
  %v5914 = vadd.f32 %v3826, %v5913
  %v5915 = vpop.f32.mrf.mxu0
  %v5916 = vadd.f32 %v3826, %v5915
  %5917 = vmatmul.bf16.gmra.mxu0 %v2210
  %v5918 = vpop.f32.mrf.mxu0
  %v5919 = vadd.f32 %v3826, %v5918
  %v5920 = vpop.f32.mrf.mxu0
  %v5921 = vadd.f32 %v3826, %v5920
  %5922 = vmatmul.bf16.gmra.mxu0 %v2211
  %v5923 = vpop.f32.mrf.mxu0
  %v5924 = vadd.f32 %v3826, %v5923
  %v5925 = vpop.f32.mrf.mxu0
  %v5926 = vadd.f32 %v3826, %v5925
  %5927 = vmatmul.bf16.gmra.mxu0 %v2212
  %v5928 = vpop.f32.mrf.mxu0
  %v5929 = vadd.f32 %v3826, %v5928
  %v5930 = vpop.f32.mrf.mxu0
  %v5931 = vadd.f32 %v3826, %v5930
  %5932 = vmatmul.bf16.gmra.mxu0 %v2213
  %v5933 = vpop.f32.mrf.mxu0
  %v5934 = vadd.f32 %v3826, %v5933
  %v5935 = vpop.f32.mrf.mxu0
  %v5936 = vadd.f32 %v3826, %v5935
  %5937 = vmatmul.bf16.gmra.mxu0 %v2214
  %v5938 = vpop.f32.mrf.mxu0
  %v5939 = vadd.f32 %v3826, %v5938
  %v5940 = vpop.f32.mrf.mxu0
  %v5941 = vadd.f32 %v3826, %v5940
  %5942 = vmatmul.bf16.gmra.mxu0 %v2215
  %v5943 = vpop.f32.mrf.mxu0
  %v5944 = vadd.f32 %v3826, %v5943
  %v5945 = vpop.f32.mrf.mxu0
  %v5946 = vadd.f32 %v3826, %v5945
  %5947 = vmatmul.bf16.gmra.mxu0 %v2216
  %v5948 = vpop.f32.mrf.mxu0
  %v5949 = vadd.f32 %v3826, %v5948
  %v5950 = vpop.f32.mrf.mxu0
  %v5951 = vadd.f32 %v3826, %v5950
  %5952 = vmatmul.bf16.gmra.mxu0 %v2217
  %v5953 = vpop.f32.mrf.mxu0
  %v5954 = vadd.f32 %v3826, %v5953
  %v5955 = vpop.f32.mrf.mxu0
  %v5956 = vadd.f32 %v3826, %v5955
  %5957 = vmatmul.bf16.gmra.mxu0 %v2218
  %v5958 = vpop.f32.mrf.mxu0
  %v5959 = vadd.f32 %v3826, %v5958
  %v5960 = vpop.f32.mrf.mxu0
  %v5961 = vadd.f32 %v3826, %v5960
  %5962 = vmatmul.bf16.gmra.mxu0 %v2219
  %v5963 = vpop.f32.mrf.mxu0
  %v5964 = vadd.f32 %v3826, %v5963
  %v5965 = vpop.f32.mrf.mxu0
  %v5966 = vadd.f32 %v3826, %v5965
  %5967 = vmatmul.bf16.gmra.mxu0 %v2220
  %v5968 = vpop.f32.mrf.mxu0
  %v5969 = vadd.f32 %v3826, %v5968
  %v5970 = vpop.f32.mrf.mxu0
  %v5971 = vadd.f32 %v3826, %v5970
  %5972 = vmatmul.bf16.gmra.mxu0 %v2221
  %v5973 = vpop.f32.mrf.mxu0
  %v5974 = vadd.f32 %v3826, %v5973
  %v5975 = vpop.f32.mrf.mxu0
  %v5976 = vadd.f32 %v3826, %v5975
  %5977 = vmatmul.bf16.gmra.mxu0 %v2222
  %v5978 = vpop.f32.mrf.mxu0
  %v5979 = vadd.f32 %v3826, %v5978
  %v5980 = vpop.f32.mrf.mxu0
  %v5981 = vadd.f32 %v3826, %v5980
  %5982 = vmatmul.bf16.gmra.mxu0 %v2223
  %v5983 = vpop.f32.mrf.mxu0
  %v5984 = vadd.f32 %v3826, %v5983
  %v5985 = vpop.f32.mrf.mxu0
  %v5986 = vadd.f32 %v3826, %v5985
  %5987 = vmatmul.bf16.gmra.mxu0 %v2224
  %v5988 = vpop.f32.mrf.mxu0
  %v5989 = vadd.f32 %v3826, %v5988
  %v5990 = vpop.f32.mrf.mxu0
  %v5991 = vadd.f32 %v3826, %v5990
  %5992 = vmatmul.bf16.gmra.mxu0 %v2225
  %v5993 = vpop.f32.mrf.mxu0
  %v5994 = vadd.f32 %v3826, %v5993
  %v5995 = vpop.f32.mrf.mxu0
  %v5996 = vadd.f32 %v3826, %v5995
  %5997 = vmatmul.bf16.gmra.mxu0 %v2226
  %v5998 = vpop.f32.mrf.mxu0
  %v5999 = vadd.f32 %v3826, %v5998
  %v6000 = vpop.f32.mrf.mxu0
  %v6001 = vadd.f32 %v3826, %v6000
  %6002 = vmatmul.bf16.gmra.mxu0 %v2227
  %v6003 = vpop.f32.mrf.mxu0
  %v6004 = vadd.f32 %v3826, %v6003
  %v6005 = vpop.f32.mrf.mxu0
  %v6006 = vadd.f32 %v3826, %v6005
  %6007 = vmatmul.bf16.gmra.mxu0 %v2228
  %v6008 = vpop.f32.mrf.mxu0
  %v6009 = vadd.f32 %v3826, %v6008
  %v6010 = vpop.f32.mrf.mxu0
  %v6011 = vadd.f32 %v3826, %v6010
  %6012 = vmatmul.bf16.gmra.mxu0 %v2229
  %v6013 = vpop.f32.mrf.mxu0
  %v6014 = vadd.f32 %v3826, %v6013
  %v6015 = vpop.f32.mrf.mxu0
  %v6016 = vadd.f32 %v3826, %v6015
  %6017 = vmatmul.bf16.gmra.mxu0 %v2230
  %v6018 = vpop.f32.mrf.mxu0
  %v6019 = vadd.f32 %v3826, %v6018
  %v6020 = vpop.f32.mrf.mxu0
  %v6021 = vadd.f32 %v3826, %v6020
  %6022 = vmatmul.bf16.gmra.mxu0 %v2231
  %v6023 = vpop.f32.mrf.mxu0
  %v6024 = vadd.f32 %v3826, %v6023
  %v6025 = vpop.f32.mrf.mxu0
  %v6026 = vadd.f32 %v3826, %v6025
  %6027 = vmatmul.bf16.gmra.mxu0 %v2232
  %v6028 = vpop.f32.mrf.mxu0
  %v6029 = vadd.f32 %v3826, %v6028
  %v6030 = vpop.f32.mrf.mxu0
  %v6031 = vadd.f32 %v3826, %v6030
  %6032 = vmatmul.bf16.gmra.mxu0 %v2233
  %v6033 = vpop.f32.mrf.mxu0
  %v6034 = vadd.f32 %v3826, %v6033
  %v6035 = vpop.f32.mrf.mxu0
  %v6036 = vadd.f32 %v3826, %v6035
  %6037 = vmatmul.bf16.gmra.mxu0 %v2234
  %v6038 = vpop.f32.mrf.mxu0
  %v6039 = vadd.f32 %v3826, %v6038
  %v6040 = vpop.f32.mrf.mxu0
  %v6041 = vadd.f32 %v3826, %v6040
  %6042 = vmatmul.bf16.gmra.mxu0 %v2235
  %v6043 = vpop.f32.mrf.mxu0
  %v6044 = vadd.f32 %v3826, %v6043
  %v6045 = vpop.f32.mrf.mxu0
  %v6046 = vadd.f32 %v3826, %v6045
  %6047 = vmatmul.bf16.gmra.mxu0 %v2236
  %v6048 = vpop.f32.mrf.mxu0
  %v6049 = vadd.f32 %v3826, %v6048
  %v6050 = vpop.f32.mrf.mxu0
  %v6051 = vadd.f32 %v3826, %v6050
  %6052 = vmatmul.bf16.gmra.mxu0 %v2237
  %v6053 = vpop.f32.mrf.mxu0
  %v6054 = vadd.f32 %v3826, %v6053
  %v6055 = vpop.f32.mrf.mxu0
  %v6056 = vadd.f32 %v3826, %v6055
  %6057 = vmatmul.bf16.gmra.mxu0 %v2238
  %v6058 = vpop.f32.mrf.mxu0
  %v6059 = vadd.f32 %v3826, %v6058
  %v6060 = vpop.f32.mrf.mxu0
  %v6061 = vadd.f32 %v3826, %v6060
  %6062 = vmatmul.bf16.gmra.mxu0 %v2239
  %v6063 = vpop.f32.mrf.mxu0
  %v6064 = vadd.f32 %v3826, %v6063
  %v6065 = vpop.f32.mrf.mxu0
  %v6066 = vadd.f32 %v3826, %v6065
  %6067 = vmatmul.bf16.gmra.mxu0 %v2240
  %v6068 = vpop.f32.mrf.mxu0
  %v6069 = vadd.f32 %v3826, %v6068
  %v6070 = vpop.f32.mrf.mxu0
  %v6071 = vadd.f32 %v3826, %v6070
  %6072 = vmatmul.bf16.gmra.mxu0 %v2241
  %v6073 = vpop.f32.mrf.mxu0
  %v6074 = vadd.f32 %v3826, %v6073
  %v6075 = vpop.f32.mrf.mxu0
  %v6076 = vadd.f32 %v3826, %v6075
  %6077 = vmatmul.bf16.gmra.mxu0 %v2242
  %v6078 = vpop.f32.mrf.mxu0
  %v6079 = vadd.f32 %v3826, %v6078
  %v6080 = vpop.f32.mrf.mxu0
  %v6081 = vadd.f32 %v3826, %v6080
  %6082 = vdwg.mxu0
  %6083 = vmatpush.bf16.msra.mxu0 %v4100
  %6084 = vmatpush.bf16.msra.mxu0 %v4098
  %6085 = vmatpush.bf16.msra.mxu0 %v4096
  %6086 = vmatpush.bf16.msra.mxu0 %v4094
  %6087 = vmatpush.bf16.msra.mxu0 %v4092
  %6088 = vmatpush.bf16.msra.mxu0 %v4090
  %6089 = vmatpush.bf16.msra.mxu0 %v4088
  %6090 = vmatpush.bf16.msra.mxu0 %v4086
  %6091 = vmatmul.bf16.gmra.mxu0 %v2543
  %v6092 = vpop.f32.mrf.mxu0
  %v6093 = vadd.f32 %v5784, %v6092
  %v6094 = vpop.f32.mrf.mxu0
  %v6095 = vadd.f32 %v5786, %v6094
  %6096 = vmatmul.bf16.gmra.mxu0 %v2544
  %v6097 = vpop.f32.mrf.mxu0
  %v6098 = vadd.f32 %v5789, %v6097
  %v6099 = vpop.f32.mrf.mxu0
  %v6100 = vadd.f32 %v5791, %v6099
  %6101 = vmatmul.bf16.gmra.mxu0 %v2545
  %v6102 = vpop.f32.mrf.mxu0
  %v6103 = vadd.f32 %v5794, %v6102
  %v6104 = vpop.f32.mrf.mxu0
  %v6105 = vadd.f32 %v5796, %v6104
  %6106 = vmatmul.bf16.gmra.mxu0 %v2546
  %v6107 = vpop.f32.mrf.mxu0
  %v6108 = vadd.f32 %v5799, %v6107
  %v6109 = vpop.f32.mrf.mxu0
  %v6110 = vadd.f32 %v5801, %v6109
  %6111 = vmatmul.bf16.gmra.mxu0 %v2547
  %v6112 = vpop.f32.mrf.mxu0
  %v6113 = vadd.f32 %v5804, %v6112
  %v6114 = vpop.f32.mrf.mxu0
  %v6115 = vadd.f32 %v5806, %v6114
  %6116 = vmatmul.bf16.gmra.mxu0 %v2548
  %v6117 = vpop.f32.mrf.mxu0
  %v6118 = vadd.f32 %v5809, %v6117
  %v6119 = vpop.f32.mrf.mxu0
  %v6120 = vadd.f32 %v5811, %v6119
  %6121 = vmatmul.bf16.gmra.mxu0 %v2549
  %v6122 = vpop.f32.mrf.mxu0
  %v6123 = vadd.f32 %v5814, %v6122
  %v6124 = vpop.f32.mrf.mxu0
  %v6125 = vadd.f32 %v5816, %v6124
  %6126 = vmatmul.bf16.gmra.mxu0 %v2550
  %v6127 = vpop.f32.mrf.mxu0
  %v6128 = vadd.f32 %v5819, %v6127
  %v6129 = vpop.f32.mrf.mxu0
  %v6130 = vadd.f32 %v5821, %v6129
  %6131 = vmatmul.bf16.gmra.mxu0 %v2551
  %v6132 = vpop.f32.mrf.mxu0
  %v6133 = vadd.f32 %v5824, %v6132
  %v6134 = vpop.f32.mrf.mxu0
  %v6135 = vadd.f32 %v5826, %v6134
  %6136 = vmatmul.bf16.gmra.mxu0 %v2552
  %v6137 = vpop.f32.mrf.mxu0
  %v6138 = vadd.f32 %v5829, %v6137
  %v6139 = vpop.f32.mrf.mxu0
  %v6140 = vadd.f32 %v5831, %v6139
  %6141 = vmatmul.bf16.gmra.mxu0 %v2553
  %v6142 = vpop.f32.mrf.mxu0
  %v6143 = vadd.f32 %v5834, %v6142
  %v6144 = vpop.f32.mrf.mxu0
  %v6145 = vadd.f32 %v5836, %v6144
  %6146 = vmatmul.bf16.gmra.mxu0 %v2554
  %v6147 = vpop.f32.mrf.mxu0
  %v6148 = vadd.f32 %v5839, %v6147
  %v6149 = vpop.f32.mrf.mxu0
  %v6150 = vadd.f32 %v5841, %v6149
  %6151 = vmatmul.bf16.gmra.mxu0 %v2555
  %v6152 = vpop.f32.mrf.mxu0
  %v6153 = vadd.f32 %v5844, %v6152
  %v6154 = vpop.f32.mrf.mxu0
  %v6155 = vadd.f32 %v5846, %v6154
  %6156 = vmatmul.bf16.gmra.mxu0 %v2556
  %v6157 = vpop.f32.mrf.mxu0
  %v6158 = vadd.f32 %v5849, %v6157
  %v6159 = vpop.f32.mrf.mxu0
  %v6160 = vadd.f32 %v5851, %v6159
  %6161 = vmatmul.bf16.gmra.mxu0 %v2557
  %v6162 = vpop.f32.mrf.mxu0
  %v6163 = vadd.f32 %v5854, %v6162
  %v6164 = vpop.f32.mrf.mxu0
  %v6165 = vadd.f32 %v5856, %v6164
  %6166 = vmatmul.bf16.gmra.mxu0 %v2558
  %v6167 = vpop.f32.mrf.mxu0
  %v6168 = vadd.f32 %v5859, %v6167
  %v6169 = vpop.f32.mrf.mxu0
  %v6170 = vadd.f32 %v5861, %v6169
  %6171 = vmatmul.bf16.gmra.mxu0 %v2559
  %v6172 = vpop.f32.mrf.mxu0
  %v6173 = vadd.f32 %v5864, %v6172
  %v6174 = vpop.f32.mrf.mxu0
  %v6175 = vadd.f32 %v5866, %v6174
  %6176 = vmatmul.bf16.gmra.mxu0 %v2560
  %v6177 = vpop.f32.mrf.mxu0
  %v6178 = vadd.f32 %v5869, %v6177
  %v6179 = vpop.f32.mrf.mxu0
  %v6180 = vadd.f32 %v5871, %v6179
  %6181 = vmatmul.bf16.gmra.mxu0 %v2561
  %v6182 = vpop.f32.mrf.mxu0
  %v6183 = vadd.f32 %v5874, %v6182
  %v6184 = vpop.f32.mrf.mxu0
  %v6185 = vadd.f32 %v5876, %v6184
  %6186 = vmatmul.bf16.gmra.mxu0 %v2562
  %v6187 = vpop.f32.mrf.mxu0
  %v6188 = vadd.f32 %v5879, %v6187
  %v6189 = vpop.f32.mrf.mxu0
  %v6190 = vadd.f32 %v5881, %v6189
  %6191 = vmatmul.bf16.gmra.mxu0 %v2563
  %v6192 = vpop.f32.mrf.mxu0
  %v6193 = vadd.f32 %v5884, %v6192
  %v6194 = vpop.f32.mrf.mxu0
  %v6195 = vadd.f32 %v5886, %v6194
  %6196 = vmatmul.bf16.gmra.mxu0 %v2564
  %v6197 = vpop.f32.mrf.mxu0
  %v6198 = vadd.f32 %v5889, %v6197
  %v6199 = vpop.f32.mrf.mxu0
  %v6200 = vadd.f32 %v5891, %v6199
  %6201 = vmatmul.bf16.gmra.mxu0 %v2565
  %v6202 = vpop.f32.mrf.mxu0
  %v6203 = vadd.f32 %v5894, %v6202
  %v6204 = vpop.f32.mrf.mxu0
  %v6205 = vadd.f32 %v5896, %v6204
  %6206 = vmatmul.bf16.gmra.mxu0 %v2566
  %v6207 = vpop.f32.mrf.mxu0
  %v6208 = vadd.f32 %v5899, %v6207
  %v6209 = vpop.f32.mrf.mxu0
  %v6210 = vadd.f32 %v5901, %v6209
  %6211 = vmatmul.bf16.gmra.mxu0 %v2567
  %v6212 = vpop.f32.mrf.mxu0
  %v6213 = vadd.f32 %v5904, %v6212
  %v6214 = vpop.f32.mrf.mxu0
  %v6215 = vadd.f32 %v5906, %v6214
  %6216 = vmatmul.bf16.gmra.mxu0 %v2568
  %v6217 = vpop.f32.mrf.mxu0
  %v6218 = vadd.f32 %v5909, %v6217
  %v6219 = vpop.f32.mrf.mxu0
  %v6220 = vadd.f32 %v5911, %v6219
  %6221 = vmatmul.bf16.gmra.mxu0 %v2569
  %v6222 = vpop.f32.mrf.mxu0
  %v6223 = vadd.f32 %v5914, %v6222
  %v6224 = vpop.f32.mrf.mxu0
  %v6225 = vadd.f32 %v5916, %v6224
  %6226 = vmatmul.bf16.gmra.mxu0 %v2570
  %v6227 = vpop.f32.mrf.mxu0
  %v6228 = vadd.f32 %v5919, %v6227
  %v6229 = vpop.f32.mrf.mxu0
  %v6230 = vadd.f32 %v5921, %v6229
  %6231 = vmatmul.bf16.gmra.mxu0 %v2571
  %v6232 = vpop.f32.mrf.mxu0
  %v6233 = vadd.f32 %v5924, %v6232
  %v6234 = vpop.f32.mrf.mxu0
  %v6235 = vadd.f32 %v5926, %v6234
  %6236 = vmatmul.bf16.gmra.mxu0 %v2572
  %v6237 = vpop.f32.mrf.mxu0
  %v6238 = vadd.f32 %v5929, %v6237
  %v6239 = vpop.f32.mrf.mxu0
  %v6240 = vadd.f32 %v5931, %v6239
  %6241 = vmatmul.bf16.gmra.mxu0 %v2573
  %v6242 = vpop.f32.mrf.mxu0
  %v6243 = vadd.f32 %v5934, %v6242
  %v6244 = vpop.f32.mrf.mxu0
  %v6245 = vadd.f32 %v5936, %v6244
  %6246 = vmatmul.bf16.gmra.mxu0 %v2574
  %v6247 = vpop.f32.mrf.mxu0
  %v6248 = vadd.f32 %v5939, %v6247
  %v6249 = vpop.f32.mrf.mxu0
  %v6250 = vadd.f32 %v5941, %v6249
  %6251 = vmatmul.bf16.gmra.mxu0 %v2575
  %v6252 = vpop.f32.mrf.mxu0
  %v6253 = vadd.f32 %v5944, %v6252
  %v6254 = vpop.f32.mrf.mxu0
  %v6255 = vadd.f32 %v5946, %v6254
  %6256 = vmatmul.bf16.gmra.mxu0 %v2576
  %v6257 = vpop.f32.mrf.mxu0
  %v6258 = vadd.f32 %v5949, %v6257
  %v6259 = vpop.f32.mrf.mxu0
  %v6260 = vadd.f32 %v5951, %v6259
  %6261 = vmatmul.bf16.gmra.mxu0 %v2577
  %v6262 = vpop.f32.mrf.mxu0
  %v6263 = vadd.f32 %v5954, %v6262
  %v6264 = vpop.f32.mrf.mxu0
  %v6265 = vadd.f32 %v5956, %v6264
  %6266 = vmatmul.bf16.gmra.mxu0 %v2578
  %v6267 = vpop.f32.mrf.mxu0
  %v6268 = vadd.f32 %v5959, %v6267
  %v6269 = vpop.f32.mrf.mxu0
  %v6270 = vadd.f32 %v5961, %v6269
  %6271 = vmatmul.bf16.gmra.mxu0 %v2579
  %v6272 = vpop.f32.mrf.mxu0
  %v6273 = vadd.f32 %v5964, %v6272
  %v6274 = vpop.f32.mrf.mxu0
  %v6275 = vadd.f32 %v5966, %v6274
  %6276 = vmatmul.bf16.gmra.mxu0 %v2580
  %v6277 = vpop.f32.mrf.mxu0
  %v6278 = vadd.f32 %v5969, %v6277
  %v6279 = vpop.f32.mrf.mxu0
  %v6280 = vadd.f32 %v5971, %v6279
  %6281 = vmatmul.bf16.gmra.mxu0 %v2581
  %v6282 = vpop.f32.mrf.mxu0
  %v6283 = vadd.f32 %v5974, %v6282
  %v6284 = vpop.f32.mrf.mxu0
  %v6285 = vadd.f32 %v5976, %v6284
  %6286 = vmatmul.bf16.gmra.mxu0 %v2582
  %v6287 = vpop.f32.mrf.mxu0
  %v6288 = vadd.f32 %v5979, %v6287
  %v6289 = vpop.f32.mrf.mxu0
  %v6290 = vadd.f32 %v5981, %v6289
  %6291 = vmatmul.bf16.gmra.mxu0 %v2583
  %v6292 = vpop.f32.mrf.mxu0
  %v6293 = vadd.f32 %v5984, %v6292
  %v6294 = vpop.f32.mrf.mxu0
  %v6295 = vadd.f32 %v5986, %v6294
  %6296 = vmatmul.bf16.gmra.mxu0 %v2584
  %v6297 = vpop.f32.mrf.mxu0
  %v6298 = vadd.f32 %v5989, %v6297
  %v6299 = vpop.f32.mrf.mxu0
  %v6300 = vadd.f32 %v5991, %v6299
  %6301 = vmatmul.bf16.gmra.mxu0 %v2585
  %v6302 = vpop.f32.mrf.mxu0
  %v6303 = vadd.f32 %v5994, %v6302
  %v6304 = vpop.f32.mrf.mxu0
  %v6305 = vadd.f32 %v5996, %v6304
  %6306 = vmatmul.bf16.gmra.mxu0 %v2586
  %v6307 = vpop.f32.mrf.mxu0
  %v6308 = vadd.f32 %v5999, %v6307
  %v6309 = vpop.f32.mrf.mxu0
  %v6310 = vadd.f32 %v6001, %v6309
  %6311 = vmatmul.bf16.gmra.mxu0 %v2587
  %v6312 = vpop.f32.mrf.mxu0
  %v6313 = vadd.f32 %v6004, %v6312
  %v6314 = vpop.f32.mrf.mxu0
  %v6315 = vadd.f32 %v6006, %v6314
  %6316 = vmatmul.bf16.gmra.mxu0 %v2588
  %v6317 = vpop.f32.mrf.mxu0
  %v6318 = vadd.f32 %v6009, %v6317
  %v6319 = vpop.f32.mrf.mxu0
  %v6320 = vadd.f32 %v6011, %v6319
  %6321 = vmatmul.bf16.gmra.mxu0 %v2589
  %v6322 = vpop.f32.mrf.mxu0
  %v6323 = vadd.f32 %v6014, %v6322
  %v6324 = vpop.f32.mrf.mxu0
  %v6325 = vadd.f32 %v6016, %v6324
  %6326 = vmatmul.bf16.gmra.mxu0 %v2590
  %v6327 = vpop.f32.mrf.mxu0
  %v6328 = vadd.f32 %v6019, %v6327
  %v6329 = vpop.f32.mrf.mxu0
  %v6330 = vadd.f32 %v6021, %v6329
  %6331 = vmatmul.bf16.gmra.mxu0 %v2591
  %v6332 = vpop.f32.mrf.mxu0
  %v6333 = vadd.f32 %v6024, %v6332
  %v6334 = vpop.f32.mrf.mxu0
  %v6335 = vadd.f32 %v6026, %v6334
  %6336 = vmatmul.bf16.gmra.mxu0 %v2592
  %v6337 = vpop.f32.mrf.mxu0
  %v6338 = vadd.f32 %v6029, %v6337
  %v6339 = vpop.f32.mrf.mxu0
  %v6340 = vadd.f32 %v6031, %v6339
  %6341 = vmatmul.bf16.gmra.mxu0 %v2593
  %v6342 = vpop.f32.mrf.mxu0
  %v6343 = vadd.f32 %v6034, %v6342
  %v6344 = vpop.f32.mrf.mxu0
  %v6345 = vadd.f32 %v6036, %v6344
  %6346 = vmatmul.bf16.gmra.mxu0 %v2594
  %v6347 = vpop.f32.mrf.mxu0
  %v6348 = vadd.f32 %v6039, %v6347
  %v6349 = vpop.f32.mrf.mxu0
  %v6350 = vadd.f32 %v6041, %v6349
  %6351 = vmatmul.bf16.gmra.mxu0 %v2595
  %v6352 = vpop.f32.mrf.mxu0
  %v6353 = vadd.f32 %v6044, %v6352
  %v6354 = vpop.f32.mrf.mxu0
  %v6355 = vadd.f32 %v6046, %v6354
  %6356 = vmatmul.bf16.gmra.mxu0 %v2596
  %v6357 = vpop.f32.mrf.mxu0
  %v6358 = vadd.f32 %v6049, %v6357
  %v6359 = vpop.f32.mrf.mxu0
  %v6360 = vadd.f32 %v6051, %v6359
  %6361 = vmatmul.bf16.gmra.mxu0 %v2597
  %v6362 = vpop.f32.mrf.mxu0
  %v6363 = vadd.f32 %v6054, %v6362
  %v6364 = vpop.f32.mrf.mxu0
  %v6365 = vadd.f32 %v6056, %v6364
  %6366 = vmatmul.bf16.gmra.mxu0 %v2598
  %v6367 = vpop.f32.mrf.mxu0
  %v6368 = vadd.f32 %v6059, %v6367
  %v6369 = vpop.f32.mrf.mxu0
  %v6370 = vadd.f32 %v6061, %v6369
  %6371 = vmatmul.bf16.gmra.mxu0 %v2599
  %v6372 = vpop.f32.mrf.mxu0
  %v6373 = vadd.f32 %v6064, %v6372
  %v6374 = vpop.f32.mrf.mxu0
  %v6375 = vadd.f32 %v6066, %v6374
  %6376 = vmatmul.bf16.gmra.mxu0 %v2600
  %v6377 = vpop.f32.mrf.mxu0
  %v6378 = vadd.f32 %v6069, %v6377
  %v6379 = vpop.f32.mrf.mxu0
  %v6380 = vadd.f32 %v6071, %v6379
  %6381 = vmatmul.bf16.gmra.mxu0 %v2601
  %v6382 = vpop.f32.mrf.mxu0
  %v6383 = vadd.f32 %v6074, %v6382
  %v6384 = vpop.f32.mrf.mxu0
  %v6385 = vadd.f32 %v6076, %v6384
  %6386 = vmatmul.bf16.gmra.mxu0 %v2602
  %v6387 = vpop.f32.mrf.mxu0
  %v6388 = vadd.f32 %v6079, %v6387
  %v6389 = vpop.f32.mrf.mxu0
  %v6390 = vadd.f32 %v6081, %v6389
  %6391 = vdwg.mxu0
  %6392 = vmatpush.bf16.msra.mxu0 %v4116
  %6393 = vmatpush.bf16.msra.mxu0 %v4114
  %6394 = vmatpush.bf16.msra.mxu0 %v4112
  %6395 = vmatpush.bf16.msra.mxu0 %v4110
  %6396 = vmatpush.bf16.msra.mxu0 %v4108
  %6397 = vmatpush.bf16.msra.mxu0 %v4106
  %6398 = vmatpush.bf16.msra.mxu0 %v4104
  %6399 = vmatpush.bf16.msra.mxu0 %v4102
  %6400 = vmatmul.bf16.gmra.mxu0 %v2903
  %v6401 = vpop.f32.mrf.mxu0
  %v6402 = vadd.f32 %v6093, %v6401
  %v6403 = vpop.f32.mrf.mxu0
  %v6404 = vadd.f32 %v6095, %v6403
  %6405 = vmatmul.bf16.gmra.mxu0 %v2904
  %v6406 = vpop.f32.mrf.mxu0
  %v6407 = vadd.f32 %v6098, %v6406
  %v6408 = vpop.f32.mrf.mxu0
  %v6409 = vadd.f32 %v6100, %v6408
  %6410 = vmatmul.bf16.gmra.mxu0 %v2905
  %v6411 = vpop.f32.mrf.mxu0
  %v6412 = vadd.f32 %v6103, %v6411
  %v6413 = vpop.f32.mrf.mxu0
  %v6414 = vadd.f32 %v6105, %v6413
  %6415 = vmatmul.bf16.gmra.mxu0 %v2906
  %v6416 = vpop.f32.mrf.mxu0
  %v6417 = vadd.f32 %v6108, %v6416
  %v6418 = vpop.f32.mrf.mxu0
  %v6419 = vadd.f32 %v6110, %v6418
  %6420 = vmatmul.bf16.gmra.mxu0 %v2907
  %v6421 = vpop.f32.mrf.mxu0
  %v6422 = vadd.f32 %v6113, %v6421
  %v6423 = vpop.f32.mrf.mxu0
  %v6424 = vadd.f32 %v6115, %v6423
  %6425 = vmatmul.bf16.gmra.mxu0 %v2908
  %v6426 = vpop.f32.mrf.mxu0
  %v6427 = vadd.f32 %v6118, %v6426
  %v6428 = vpop.f32.mrf.mxu0
  %v6429 = vadd.f32 %v6120, %v6428
  %6430 = vmatmul.bf16.gmra.mxu0 %v2909
  %v6431 = vpop.f32.mrf.mxu0
  %v6432 = vadd.f32 %v6123, %v6431
  %v6433 = vpop.f32.mrf.mxu0
  %v6434 = vadd.f32 %v6125, %v6433
  %6435 = vmatmul.bf16.gmra.mxu0 %v2910
  %v6436 = vpop.f32.mrf.mxu0
  %v6437 = vadd.f32 %v6128, %v6436
  %v6438 = vpop.f32.mrf.mxu0
  %v6439 = vadd.f32 %v6130, %v6438
  %6440 = vmatmul.bf16.gmra.mxu0 %v2911
  %v6441 = vpop.f32.mrf.mxu0
  %v6442 = vadd.f32 %v6133, %v6441
  %v6443 = vpop.f32.mrf.mxu0
  %v6444 = vadd.f32 %v6135, %v6443
  %6445 = vmatmul.bf16.gmra.mxu0 %v2912
  %v6446 = vpop.f32.mrf.mxu0
  %v6447 = vadd.f32 %v6138, %v6446
  %v6448 = vpop.f32.mrf.mxu0
  %v6449 = vadd.f32 %v6140, %v6448
  %6450 = vmatmul.bf16.gmra.mxu0 %v2913
  %v6451 = vpop.f32.mrf.mxu0
  %v6452 = vadd.f32 %v6143, %v6451
  %v6453 = vpop.f32.mrf.mxu0
  %v6454 = vadd.f32 %v6145, %v6453
  %6455 = vmatmul.bf16.gmra.mxu0 %v2914
  %v6456 = vpop.f32.mrf.mxu0
  %v6457 = vadd.f32 %v6148, %v6456
  %v6458 = vpop.f32.mrf.mxu0
  %v6459 = vadd.f32 %v6150, %v6458
  %6460 = vmatmul.bf16.gmra.mxu0 %v2915
  %v6461 = vpop.f32.mrf.mxu0
  %v6462 = vadd.f32 %v6153, %v6461
  %v6463 = vpop.f32.mrf.mxu0
  %v6464 = vadd.f32 %v6155, %v6463
  %6465 = vmatmul.bf16.gmra.mxu0 %v2916
  %v6466 = vpop.f32.mrf.mxu0
  %v6467 = vadd.f32 %v6158, %v6466
  %v6468 = vpop.f32.mrf.mxu0
  %v6469 = vadd.f32 %v6160, %v6468
  %6470 = vmatmul.bf16.gmra.mxu0 %v2917
  %v6471 = vpop.f32.mrf.mxu0
  %v6472 = vadd.f32 %v6163, %v6471
  %v6473 = vpop.f32.mrf.mxu0
  %v6474 = vadd.f32 %v6165, %v6473
  %6475 = vmatmul.bf16.gmra.mxu0 %v2918
  %v6476 = vpop.f32.mrf.mxu0
  %v6477 = vadd.f32 %v6168, %v6476
  %v6478 = vpop.f32.mrf.mxu0
  %v6479 = vadd.f32 %v6170, %v6478
  %6480 = vmatmul.bf16.gmra.mxu0 %v2919
  %v6481 = vpop.f32.mrf.mxu0
  %v6482 = vadd.f32 %v6173, %v6481
  %v6483 = vpop.f32.mrf.mxu0
  %v6484 = vadd.f32 %v6175, %v6483
  %6485 = vmatmul.bf16.gmra.mxu0 %v2920
  %v6486 = vpop.f32.mrf.mxu0
  %v6487 = vadd.f32 %v6178, %v6486
  %v6488 = vpop.f32.mrf.mxu0
  %v6489 = vadd.f32 %v6180, %v6488
  %6490 = vmatmul.bf16.gmra.mxu0 %v2921
  %v6491 = vpop.f32.mrf.mxu0
  %v6492 = vadd.f32 %v6183, %v6491
  %v6493 = vpop.f32.mrf.mxu0
  %v6494 = vadd.f32 %v6185, %v6493
  %6495 = vmatmul.bf16.gmra.mxu0 %v2922
  %v6496 = vpop.f32.mrf.mxu0
  %v6497 = vadd.f32 %v6188, %v6496
  %v6498 = vpop.f32.mrf.mxu0
  %v6499 = vadd.f32 %v6190, %v6498
  %6500 = vmatmul.bf16.gmra.mxu0 %v2923
  %v6501 = vpop.f32.mrf.mxu0
  %v6502 = vadd.f32 %v6193, %v6501
  %v6503 = vpop.f32.mrf.mxu0
  %v6504 = vadd.f32 %v6195, %v6503
  %6505 = vmatmul.bf16.gmra.mxu0 %v2924
  %v6506 = vpop.f32.mrf.mxu0
  %v6507 = vadd.f32 %v6198, %v6506
  %v6508 = vpop.f32.mrf.mxu0
  %v6509 = vadd.f32 %v6200, %v6508
  %6510 = vmatmul.bf16.gmra.mxu0 %v2925
  %v6511 = vpop.f32.mrf.mxu0
  %v6512 = vadd.f32 %v6203, %v6511
  %v6513 = vpop.f32.mrf.mxu0
  %v6514 = vadd.f32 %v6205, %v6513
  %6515 = vmatmul.bf16.gmra.mxu0 %v2926
  %v6516 = vpop.f32.mrf.mxu0
  %v6517 = vadd.f32 %v6208, %v6516
  %v6518 = vpop.f32.mrf.mxu0
  %v6519 = vadd.f32 %v6210, %v6518
  %6520 = vmatmul.bf16.gmra.mxu0 %v2927
  %v6521 = vpop.f32.mrf.mxu0
  %v6522 = vadd.f32 %v6213, %v6521
  %v6523 = vpop.f32.mrf.mxu0
  %v6524 = vadd.f32 %v6215, %v6523
  %6525 = vmatmul.bf16.gmra.mxu0 %v2928
  %v6526 = vpop.f32.mrf.mxu0
  %v6527 = vadd.f32 %v6218, %v6526
  %v6528 = vpop.f32.mrf.mxu0
  %v6529 = vadd.f32 %v6220, %v6528
  %6530 = vmatmul.bf16.gmra.mxu0 %v2929
  %v6531 = vpop.f32.mrf.mxu0
  %v6532 = vadd.f32 %v6223, %v6531
  %v6533 = vpop.f32.mrf.mxu0
  %v6534 = vadd.f32 %v6225, %v6533
  %6535 = vmatmul.bf16.gmra.mxu0 %v2930
  %v6536 = vpop.f32.mrf.mxu0
  %v6537 = vadd.f32 %v6228, %v6536
  %v6538 = vpop.f32.mrf.mxu0
  %v6539 = vadd.f32 %v6230, %v6538
  %6540 = vmatmul.bf16.gmra.mxu0 %v2931
  %v6541 = vpop.f32.mrf.mxu0
  %v6542 = vadd.f32 %v6233, %v6541
  %v6543 = vpop.f32.mrf.mxu0
  %v6544 = vadd.f32 %v6235, %v6543
  %6545 = vmatmul.bf16.gmra.mxu0 %v2932
  %v6546 = vpop.f32.mrf.mxu0
  %v6547 = vadd.f32 %v6238, %v6546
  %v6548 = vpop.f32.mrf.mxu0
  %v6549 = vadd.f32 %v6240, %v6548
  %6550 = vmatmul.bf16.gmra.mxu0 %v2933
  %v6551 = vpop.f32.mrf.mxu0
  %v6552 = vadd.f32 %v6243, %v6551
  %v6553 = vpop.f32.mrf.mxu0
  %v6554 = vadd.f32 %v6245, %v6553
  %6555 = vmatmul.bf16.gmra.mxu0 %v2934
  %v6556 = vpop.f32.mrf.mxu0
  %v6557 = vadd.f32 %v6248, %v6556
  %v6558 = vpop.f32.mrf.mxu0
  %v6559 = vadd.f32 %v6250, %v6558
  %6560 = vmatmul.bf16.gmra.mxu0 %v2935
  %v6561 = vpop.f32.mrf.mxu0
  %v6562 = vadd.f32 %v6253, %v6561
  %v6563 = vpop.f32.mrf.mxu0
  %v6564 = vadd.f32 %v6255, %v6563
  %6565 = vmatmul.bf16.gmra.mxu0 %v2936
  %v6566 = vpop.f32.mrf.mxu0
  %v6567 = vadd.f32 %v6258, %v6566
  %v6568 = vpop.f32.mrf.mxu0
  %v6569 = vadd.f32 %v6260, %v6568
  %6570 = vmatmul.bf16.gmra.mxu0 %v2937
  %v6571 = vpop.f32.mrf.mxu0
  %v6572 = vadd.f32 %v6263, %v6571
  %v6573 = vpop.f32.mrf.mxu0
  %v6574 = vadd.f32 %v6265, %v6573
  %6575 = vmatmul.bf16.gmra.mxu0 %v2938
  %v6576 = vpop.f32.mrf.mxu0
  %v6577 = vadd.f32 %v6268, %v6576
  %v6578 = vpop.f32.mrf.mxu0
  %v6579 = vadd.f32 %v6270, %v6578
  %6580 = vmatmul.bf16.gmra.mxu0 %v2939
  %v6581 = vpop.f32.mrf.mxu0
  %v6582 = vadd.f32 %v6273, %v6581
  %v6583 = vpop.f32.mrf.mxu0
  %v6584 = vadd.f32 %v6275, %v6583
  %6585 = vmatmul.bf16.gmra.mxu0 %v2940
  %v6586 = vpop.f32.mrf.mxu0
  %v6587 = vadd.f32 %v6278, %v6586
  %v6588 = vpop.f32.mrf.mxu0
  %v6589 = vadd.f32 %v6280, %v6588
  %6590 = vmatmul.bf16.gmra.mxu0 %v2941
  %v6591 = vpop.f32.mrf.mxu0
  %v6592 = vadd.f32 %v6283, %v6591
  %v6593 = vpop.f32.mrf.mxu0
  %v6594 = vadd.f32 %v6285, %v6593
  %6595 = vmatmul.bf16.gmra.mxu0 %v2942
  %v6596 = vpop.f32.mrf.mxu0
  %v6597 = vadd.f32 %v6288, %v6596
  %v6598 = vpop.f32.mrf.mxu0
  %v6599 = vadd.f32 %v6290, %v6598
  %6600 = vmatmul.bf16.gmra.mxu0 %v2943
  %v6601 = vpop.f32.mrf.mxu0
  %v6602 = vadd.f32 %v6293, %v6601
  %v6603 = vpop.f32.mrf.mxu0
  %v6604 = vadd.f32 %v6295, %v6603
  %6605 = vmatmul.bf16.gmra.mxu0 %v2944
  %v6606 = vpop.f32.mrf.mxu0
  %v6607 = vadd.f32 %v6298, %v6606
  %v6608 = vpop.f32.mrf.mxu0
  %v6609 = vadd.f32 %v6300, %v6608
  %6610 = vmatmul.bf16.gmra.mxu0 %v2945
  %v6611 = vpop.f32.mrf.mxu0
  %v6612 = vadd.f32 %v6303, %v6611
  %v6613 = vpop.f32.mrf.mxu0
  %v6614 = vadd.f32 %v6305, %v6613
  %6615 = vmatmul.bf16.gmra.mxu0 %v2946
  %v6616 = vpop.f32.mrf.mxu0
  %v6617 = vadd.f32 %v6308, %v6616
  %v6618 = vpop.f32.mrf.mxu0
  %v6619 = vadd.f32 %v6310, %v6618
  %6620 = vmatmul.bf16.gmra.mxu0 %v2947
  %v6621 = vpop.f32.mrf.mxu0
  %v6622 = vadd.f32 %v6313, %v6621
  %v6623 = vpop.f32.mrf.mxu0
  %v6624 = vadd.f32 %v6315, %v6623
  %6625 = vmatmul.bf16.gmra.mxu0 %v2948
  %v6626 = vpop.f32.mrf.mxu0
  %v6627 = vadd.f32 %v6318, %v6626
  %v6628 = vpop.f32.mrf.mxu0
  %v6629 = vadd.f32 %v6320, %v6628
  %6630 = vmatmul.bf16.gmra.mxu0 %v2949
  %v6631 = vpop.f32.mrf.mxu0
  %v6632 = vadd.f32 %v6323, %v6631
  %v6633 = vpop.f32.mrf.mxu0
  %v6634 = vadd.f32 %v6325, %v6633
  %6635 = vmatmul.bf16.gmra.mxu0 %v2950
  %v6636 = vpop.f32.mrf.mxu0
  %v6637 = vadd.f32 %v6328, %v6636
  %v6638 = vpop.f32.mrf.mxu0
  %v6639 = vadd.f32 %v6330, %v6638
  %6640 = vmatmul.bf16.gmra.mxu0 %v2951
  %v6641 = vpop.f32.mrf.mxu0
  %v6642 = vadd.f32 %v6333, %v6641
  %v6643 = vpop.f32.mrf.mxu0
  %v6644 = vadd.f32 %v6335, %v6643
  %6645 = vmatmul.bf16.gmra.mxu0 %v2952
  %v6646 = vpop.f32.mrf.mxu0
  %v6647 = vadd.f32 %v6338, %v6646
  %v6648 = vpop.f32.mrf.mxu0
  %v6649 = vadd.f32 %v6340, %v6648
  %6650 = vmatmul.bf16.gmra.mxu0 %v2953
  %v6651 = vpop.f32.mrf.mxu0
  %v6652 = vadd.f32 %v6343, %v6651
  %v6653 = vpop.f32.mrf.mxu0
  %v6654 = vadd.f32 %v6345, %v6653
  %6655 = vmatmul.bf16.gmra.mxu0 %v2954
  %v6656 = vpop.f32.mrf.mxu0
  %v6657 = vadd.f32 %v6348, %v6656
  %v6658 = vpop.f32.mrf.mxu0
  %v6659 = vadd.f32 %v6350, %v6658
  %6660 = vmatmul.bf16.gmra.mxu0 %v2955
  %v6661 = vpop.f32.mrf.mxu0
  %v6662 = vadd.f32 %v6353, %v6661
  %v6663 = vpop.f32.mrf.mxu0
  %v6664 = vadd.f32 %v6355, %v6663
  %6665 = vmatmul.bf16.gmra.mxu0 %v2956
  %v6666 = vpop.f32.mrf.mxu0
  %v6667 = vadd.f32 %v6358, %v6666
  %v6668 = vpop.f32.mrf.mxu0
  %v6669 = vadd.f32 %v6360, %v6668
  %6670 = vmatmul.bf16.gmra.mxu0 %v2957
  %v6671 = vpop.f32.mrf.mxu0
  %v6672 = vadd.f32 %v6363, %v6671
  %v6673 = vpop.f32.mrf.mxu0
  %v6674 = vadd.f32 %v6365, %v6673
  %6675 = vmatmul.bf16.gmra.mxu0 %v2958
  %v6676 = vpop.f32.mrf.mxu0
  %v6677 = vadd.f32 %v6368, %v6676
  %v6678 = vpop.f32.mrf.mxu0
  %v6679 = vadd.f32 %v6370, %v6678
  %6680 = vmatmul.bf16.gmra.mxu0 %v2959
  %v6681 = vpop.f32.mrf.mxu0
  %v6682 = vadd.f32 %v6373, %v6681
  %v6683 = vpop.f32.mrf.mxu0
  %v6684 = vadd.f32 %v6375, %v6683
  %6685 = vmatmul.bf16.gmra.mxu0 %v2960
  %v6686 = vpop.f32.mrf.mxu0
  %v6687 = vadd.f32 %v6378, %v6686
  %v6688 = vpop.f32.mrf.mxu0
  %v6689 = vadd.f32 %v6380, %v6688
  %6690 = vmatmul.bf16.gmra.mxu0 %v2961
  %v6691 = vpop.f32.mrf.mxu0
  %v6692 = vadd.f32 %v6383, %v6691
  %v6693 = vpop.f32.mrf.mxu0
  %v6694 = vadd.f32 %v6385, %v6693
  %6695 = vmatmul.bf16.gmra.mxu0 %v2962
  %v6696 = vpop.f32.mrf.mxu0
  %v6697 = vadd.f32 %v6388, %v6696
  %v6698 = vpop.f32.mrf.mxu0
  %v6699 = vadd.f32 %v6390, %v6698
  %6700 = vdwg.mxu0
  %6701 = vmatpush.bf16.msra.mxu0 %v4132
  %6702 = vmatpush.bf16.msra.mxu0 %v4130
  %6703 = vmatpush.bf16.msra.mxu0 %v4128
  %6704 = vmatpush.bf16.msra.mxu0 %v4126
  %6705 = vmatpush.bf16.msra.mxu0 %v4124
  %6706 = vmatpush.bf16.msra.mxu0 %v4122
  %6707 = vmatpush.bf16.msra.mxu0 %v4120
  %6708 = vmatpush.bf16.msra.mxu0 %v4118
  %6709 = vmatmul.bf16.gmra.mxu0 %v3263
  %v6710 = vpop.f32.mrf.mxu0
  %v6711 = vadd.f32 %v6402, %v6710
  %v6712 = vpop.f32.mrf.mxu0
  %v6713 = vadd.f32 %v6404, %v6712
  %6714 = vmatmul.bf16.gmra.mxu0 %v3264
  %v6715 = vpop.f32.mrf.mxu0
  %v6716 = vadd.f32 %v6407, %v6715
  %v6717 = vpop.f32.mrf.mxu0
  %v6718 = vadd.f32 %v6409, %v6717
  %6719 = vmatmul.bf16.gmra.mxu0 %v3265
  %v6720 = vpop.f32.mrf.mxu0
  %v6721 = vadd.f32 %v6412, %v6720
  %v6722 = vpop.f32.mrf.mxu0
  %v6723 = vadd.f32 %v6414, %v6722
  %6724 = vmatmul.bf16.gmra.mxu0 %v3266
  %v6725 = vpop.f32.mrf.mxu0
  %v6726 = vadd.f32 %v6417, %v6725
  %v6727 = vpop.f32.mrf.mxu0
  %v6728 = vadd.f32 %v6419, %v6727
  %6729 = vmatmul.bf16.gmra.mxu0 %v3267
  %v6730 = vpop.f32.mrf.mxu0
  %v6731 = vadd.f32 %v6422, %v6730
  %v6732 = vpop.f32.mrf.mxu0
  %v6733 = vadd.f32 %v6424, %v6732
  %6734 = vmatmul.bf16.gmra.mxu0 %v3268
  %v6735 = vpop.f32.mrf.mxu0
  %v6736 = vadd.f32 %v6427, %v6735
  %v6737 = vpop.f32.mrf.mxu0
  %v6738 = vadd.f32 %v6429, %v6737
  %6739 = vmatmul.bf16.gmra.mxu0 %v3269
  %v6740 = vpop.f32.mrf.mxu0
  %v6741 = vadd.f32 %v6432, %v6740
  %v6742 = vpop.f32.mrf.mxu0
  %v6743 = vadd.f32 %v6434, %v6742
  %6744 = vmatmul.bf16.gmra.mxu0 %v3270
  %v6745 = vpop.f32.mrf.mxu0
  %v6746 = vadd.f32 %v6437, %v6745
  %v6747 = vpop.f32.mrf.mxu0
  %v6748 = vadd.f32 %v6439, %v6747
  %6749 = vmatmul.bf16.gmra.mxu0 %v3271
  %v6750 = vpop.f32.mrf.mxu0
  %v6751 = vadd.f32 %v6442, %v6750
  %v6752 = vpop.f32.mrf.mxu0
  %v6753 = vadd.f32 %v6444, %v6752
  %6754 = vmatmul.bf16.gmra.mxu0 %v3272
  %v6755 = vpop.f32.mrf.mxu0
  %v6756 = vadd.f32 %v6447, %v6755
  %v6757 = vpop.f32.mrf.mxu0
  %v6758 = vadd.f32 %v6449, %v6757
  %6759 = vmatmul.bf16.gmra.mxu0 %v3273
  %v6760 = vpop.f32.mrf.mxu0
  %v6761 = vadd.f32 %v6452, %v6760
  %v6762 = vpop.f32.mrf.mxu0
  %v6763 = vadd.f32 %v6454, %v6762
  %6764 = vmatmul.bf16.gmra.mxu0 %v3274
  %v6765 = vpop.f32.mrf.mxu0
  %v6766 = vadd.f32 %v6457, %v6765
  %v6767 = vpop.f32.mrf.mxu0
  %v6768 = vadd.f32 %v6459, %v6767
  %6769 = vmatmul.bf16.gmra.mxu0 %v3275
  %v6770 = vpop.f32.mrf.mxu0
  %v6771 = vadd.f32 %v6462, %v6770
  %v6772 = vpop.f32.mrf.mxu0
  %v6773 = vadd.f32 %v6464, %v6772
  %6774 = vmatmul.bf16.gmra.mxu0 %v3276
  %v6775 = vpop.f32.mrf.mxu0
  %v6776 = vadd.f32 %v6467, %v6775
  %v6777 = vpop.f32.mrf.mxu0
  %v6778 = vadd.f32 %v6469, %v6777
  %6779 = vmatmul.bf16.gmra.mxu0 %v3277
  %v6780 = vpop.f32.mrf.mxu0
  %v6781 = vadd.f32 %v6472, %v6780
  %v6782 = vpop.f32.mrf.mxu0
  %v6783 = vadd.f32 %v6474, %v6782
  %6784 = vmatmul.bf16.gmra.mxu0 %v3278
  %v6785 = vpop.f32.mrf.mxu0
  %v6786 = vadd.f32 %v6477, %v6785
  %v6787 = vpop.f32.mrf.mxu0
  %v6788 = vadd.f32 %v6479, %v6787
  %6789 = vmatmul.bf16.gmra.mxu0 %v3279
  %v6790 = vpop.f32.mrf.mxu0
  %v6791 = vadd.f32 %v6482, %v6790
  %v6792 = vpop.f32.mrf.mxu0
  %v6793 = vadd.f32 %v6484, %v6792
  %6794 = vmatmul.bf16.gmra.mxu0 %v3280
  %v6795 = vpop.f32.mrf.mxu0
  %v6796 = vadd.f32 %v6487, %v6795
  %v6797 = vpop.f32.mrf.mxu0
  %v6798 = vadd.f32 %v6489, %v6797
  %6799 = vmatmul.bf16.gmra.mxu0 %v3281
  %v6800 = vpop.f32.mrf.mxu0
  %v6801 = vadd.f32 %v6492, %v6800
  %v6802 = vpop.f32.mrf.mxu0
  %v6803 = vadd.f32 %v6494, %v6802
  %6804 = vmatmul.bf16.gmra.mxu0 %v3282
  %v6805 = vpop.f32.mrf.mxu0
  %v6806 = vadd.f32 %v6497, %v6805
  %v6807 = vpop.f32.mrf.mxu0
  %v6808 = vadd.f32 %v6499, %v6807
  %6809 = vmatmul.bf16.gmra.mxu0 %v3283
  %v6810 = vpop.f32.mrf.mxu0
  %v6811 = vadd.f32 %v6502, %v6810
  %v6812 = vpop.f32.mrf.mxu0
  %v6813 = vadd.f32 %v6504, %v6812
  %6814 = vmatmul.bf16.gmra.mxu0 %v3284
  %v6815 = vpop.f32.mrf.mxu0
  %v6816 = vadd.f32 %v6507, %v6815
  %v6817 = vpop.f32.mrf.mxu0
  %v6818 = vadd.f32 %v6509, %v6817
  %6819 = vmatmul.bf16.gmra.mxu0 %v3285
  %v6820 = vpop.f32.mrf.mxu0
  %v6821 = vadd.f32 %v6512, %v6820
  %v6822 = vpop.f32.mrf.mxu0
  %v6823 = vadd.f32 %v6514, %v6822
  %6824 = vmatmul.bf16.gmra.mxu0 %v3286
  %v6825 = vpop.f32.mrf.mxu0
  %v6826 = vadd.f32 %v6517, %v6825
  %v6827 = vpop.f32.mrf.mxu0
  %v6828 = vadd.f32 %v6519, %v6827
  %6829 = vmatmul.bf16.gmra.mxu0 %v3287
  %v6830 = vpop.f32.mrf.mxu0
  %v6831 = vadd.f32 %v6522, %v6830
  %v6832 = vpop.f32.mrf.mxu0
  %v6833 = vadd.f32 %v6524, %v6832
  %6834 = vmatmul.bf16.gmra.mxu0 %v3288
  %v6835 = vpop.f32.mrf.mxu0
  %v6836 = vadd.f32 %v6527, %v6835
  %v6837 = vpop.f32.mrf.mxu0
  %v6838 = vadd.f32 %v6529, %v6837
  %6839 = vmatmul.bf16.gmra.mxu0 %v3289
  %v6840 = vpop.f32.mrf.mxu0
  %v6841 = vadd.f32 %v6532, %v6840
  %v6842 = vpop.f32.mrf.mxu0
  %v6843 = vadd.f32 %v6534, %v6842
  %6844 = vmatmul.bf16.gmra.mxu0 %v3290
  %v6845 = vpop.f32.mrf.mxu0
  %v6846 = vadd.f32 %v6537, %v6845
  %v6847 = vpop.f32.mrf.mxu0
  %v6848 = vadd.f32 %v6539, %v6847
  %6849 = vmatmul.bf16.gmra.mxu0 %v3291
  %v6850 = vpop.f32.mrf.mxu0
  %v6851 = vadd.f32 %v6542, %v6850
  %v6852 = vpop.f32.mrf.mxu0
  %v6853 = vadd.f32 %v6544, %v6852
  %6854 = vmatmul.bf16.gmra.mxu0 %v3292
  %v6855 = vpop.f32.mrf.mxu0
  %v6856 = vadd.f32 %v6547, %v6855
  %v6857 = vpop.f32.mrf.mxu0
  %v6858 = vadd.f32 %v6549, %v6857
  %6859 = vmatmul.bf16.gmra.mxu0 %v3293
  %v6860 = vpop.f32.mrf.mxu0
  %v6861 = vadd.f32 %v6552, %v6860
  %v6862 = vpop.f32.mrf.mxu0
  %v6863 = vadd.f32 %v6554, %v6862
  %6864 = vmatmul.bf16.gmra.mxu0 %v3294
  %v6865 = vpop.f32.mrf.mxu0
  %v6866 = vadd.f32 %v6557, %v6865
  %v6867 = vpop.f32.mrf.mxu0
  %v6868 = vadd.f32 %v6559, %v6867
  %6869 = vmatmul.bf16.gmra.mxu0 %v3295
  %v6870 = vpop.f32.mrf.mxu0
  %v6871 = vadd.f32 %v6562, %v6870
  %v6872 = vpop.f32.mrf.mxu0
  %v6873 = vadd.f32 %v6564, %v6872
  %6874 = vmatmul.bf16.gmra.mxu0 %v3296
  %v6875 = vpop.f32.mrf.mxu0
  %v6876 = vadd.f32 %v6567, %v6875
  %v6877 = vpop.f32.mrf.mxu0
  %v6878 = vadd.f32 %v6569, %v6877
  %6879 = vmatmul.bf16.gmra.mxu0 %v3297
  %v6880 = vpop.f32.mrf.mxu0
  %v6881 = vadd.f32 %v6572, %v6880
  %v6882 = vpop.f32.mrf.mxu0
  %v6883 = vadd.f32 %v6574, %v6882
  %6884 = vmatmul.bf16.gmra.mxu0 %v3298
  %v6885 = vpop.f32.mrf.mxu0
  %v6886 = vadd.f32 %v6577, %v6885
  %v6887 = vpop.f32.mrf.mxu0
  %v6888 = vadd.f32 %v6579, %v6887
  %6889 = vmatmul.bf16.gmra.mxu0 %v3299
  %v6890 = vpop.f32.mrf.mxu0
  %v6891 = vadd.f32 %v6582, %v6890
  %v6892 = vpop.f32.mrf.mxu0
  %v6893 = vadd.f32 %v6584, %v6892
  %6894 = vmatmul.bf16.gmra.mxu0 %v3300
  %v6895 = vpop.f32.mrf.mxu0
  %v6896 = vadd.f32 %v6587, %v6895
  %v6897 = vpop.f32.mrf.mxu0
  %v6898 = vadd.f32 %v6589, %v6897
  %6899 = vmatmul.bf16.gmra.mxu0 %v3301
  %v6900 = vpop.f32.mrf.mxu0
  %v6901 = vadd.f32 %v6592, %v6900
  %v6902 = vpop.f32.mrf.mxu0
  %v6903 = vadd.f32 %v6594, %v6902
  %6904 = vmatmul.bf16.gmra.mxu0 %v3302
  %v6905 = vpop.f32.mrf.mxu0
  %v6906 = vadd.f32 %v6597, %v6905
  %v6907 = vpop.f32.mrf.mxu0
  %v6908 = vadd.f32 %v6599, %v6907
  %6909 = vmatmul.bf16.gmra.mxu0 %v3303
  %v6910 = vpop.f32.mrf.mxu0
  %v6911 = vadd.f32 %v6602, %v6910
  %v6912 = vpop.f32.mrf.mxu0
  %v6913 = vadd.f32 %v6604, %v6912
  %6914 = vmatmul.bf16.gmra.mxu0 %v3304
  %v6915 = vpop.f32.mrf.mxu0
  %v6916 = vadd.f32 %v6607, %v6915
  %v6917 = vpop.f32.mrf.mxu0
  %v6918 = vadd.f32 %v6609, %v6917
  %6919 = vmatmul.bf16.gmra.mxu0 %v3305
  %v6920 = vpop.f32.mrf.mxu0
  %v6921 = vadd.f32 %v6612, %v6920
  %v6922 = vpop.f32.mrf.mxu0
  %v6923 = vadd.f32 %v6614, %v6922
  %6924 = vmatmul.bf16.gmra.mxu0 %v3306
  %v6925 = vpop.f32.mrf.mxu0
  %v6926 = vadd.f32 %v6617, %v6925
  %v6927 = vpop.f32.mrf.mxu0
  %v6928 = vadd.f32 %v6619, %v6927
  %6929 = vmatmul.bf16.gmra.mxu0 %v3307
  %v6930 = vpop.f32.mrf.mxu0
  %v6931 = vadd.f32 %v6622, %v6930
  %v6932 = vpop.f32.mrf.mxu0
  %v6933 = vadd.f32 %v6624, %v6932
  %6934 = vmatmul.bf16.gmra.mxu0 %v3308
  %v6935 = vpop.f32.mrf.mxu0
  %v6936 = vadd.f32 %v6627, %v6935
  %v6937 = vpop.f32.mrf.mxu0
  %v6938 = vadd.f32 %v6629, %v6937
  %6939 = vmatmul.bf16.gmra.mxu0 %v3309
  %v6940 = vpop.f32.mrf.mxu0
  %v6941 = vadd.f32 %v6632, %v6940
  %v6942 = vpop.f32.mrf.mxu0
  %v6943 = vadd.f32 %v6634, %v6942
  %6944 = vmatmul.bf16.gmra.mxu0 %v3310
  %v6945 = vpop.f32.mrf.mxu0
  %v6946 = vadd.f32 %v6637, %v6945
  %v6947 = vpop.f32.mrf.mxu0
  %v6948 = vadd.f32 %v6639, %v6947
  %6949 = vmatmul.bf16.gmra.mxu0 %v3311
  %v6950 = vpop.f32.mrf.mxu0
  %v6951 = vadd.f32 %v6642, %v6950
  %v6952 = vpop.f32.mrf.mxu0
  %v6953 = vadd.f32 %v6644, %v6952
  %6954 = vmatmul.bf16.gmra.mxu0 %v3312
  %v6955 = vpop.f32.mrf.mxu0
  %v6956 = vadd.f32 %v6647, %v6955
  %v6957 = vpop.f32.mrf.mxu0
  %v6958 = vadd.f32 %v6649, %v6957
  %6959 = vmatmul.bf16.gmra.mxu0 %v3313
  %v6960 = vpop.f32.mrf.mxu0
  %v6961 = vadd.f32 %v6652, %v6960
  %v6962 = vpop.f32.mrf.mxu0
  %v6963 = vadd.f32 %v6654, %v6962
  %6964 = vmatmul.bf16.gmra.mxu0 %v3314
  %v6965 = vpop.f32.mrf.mxu0
  %v6966 = vadd.f32 %v6657, %v6965
  %v6967 = vpop.f32.mrf.mxu0
  %v6968 = vadd.f32 %v6659, %v6967
  %6969 = vmatmul.bf16.gmra.mxu0 %v3315
  %v6970 = vpop.f32.mrf.mxu0
  %v6971 = vadd.f32 %v6662, %v6970
  %v6972 = vpop.f32.mrf.mxu0
  %v6973 = vadd.f32 %v6664, %v6972
  %6974 = vmatmul.bf16.gmra.mxu0 %v3316
  %v6975 = vpop.f32.mrf.mxu0
  %v6976 = vadd.f32 %v6667, %v6975
  %v6977 = vpop.f32.mrf.mxu0
  %v6978 = vadd.f32 %v6669, %v6977
  %6979 = vmatmul.bf16.gmra.mxu0 %v3317
  %v6980 = vpop.f32.mrf.mxu0
  %v6981 = vadd.f32 %v6672, %v6980
  %v6982 = vpop.f32.mrf.mxu0
  %v6983 = vadd.f32 %v6674, %v6982
  %6984 = vmatmul.bf16.gmra.mxu0 %v3318
  %v6985 = vpop.f32.mrf.mxu0
  %v6986 = vadd.f32 %v6677, %v6985
  %v6987 = vpop.f32.mrf.mxu0
  %v6988 = vadd.f32 %v6679, %v6987
  %6989 = vmatmul.bf16.gmra.mxu0 %v3319
  %v6990 = vpop.f32.mrf.mxu0
  %v6991 = vadd.f32 %v6682, %v6990
  %v6992 = vpop.f32.mrf.mxu0
  %v6993 = vadd.f32 %v6684, %v6992
  %6994 = vmatmul.bf16.gmra.mxu0 %v3320
  %v6995 = vpop.f32.mrf.mxu0
  %v6996 = vadd.f32 %v6687, %v6995
  %v6997 = vpop.f32.mrf.mxu0
  %v6998 = vadd.f32 %v6689, %v6997
  %6999 = vmatmul.bf16.gmra.mxu0 %v3321
  %v7000 = vpop.f32.mrf.mxu0
  %v7001 = vadd.f32 %v6692, %v7000
  %v7002 = vpop.f32.mrf.mxu0
  %v7003 = vadd.f32 %v6694, %v7002
  %7004 = vmatmul.bf16.gmra.mxu0 %v3322
  %v7005 = vpop.f32.mrf.mxu0
  %v7006 = vadd.f32 %v6697, %v7005
  %v7007 = vpop.f32.mrf.mxu0
  %v7008 = vadd.f32 %v6699, %v7007
  %7009 = vdwg.mxu0
  %7010 = vmatpush.bf16.msra.mxu0 %v4148
  %7011 = vmatpush.bf16.msra.mxu0 %v4146
  %7012 = vmatpush.bf16.msra.mxu0 %v4144
  %7013 = vmatpush.bf16.msra.mxu0 %v4142
  %7014 = vmatpush.bf16.msra.mxu0 %v4140
  %7015 = vmatpush.bf16.msra.mxu0 %v4138
  %7016 = vmatpush.bf16.msra.mxu0 %v4136
  %7017 = vmatpush.bf16.msra.mxu0 %v4134
  %7018 = vmatmul.bf16.gmra.mxu0 %v3623
  %v7019 = vpop.f32.mrf.mxu0
  %v7020 = vadd.f32 %v6711, %v7019
  %v7021 = vpop.f32.mrf.mxu0
  %v7022 = vadd.f32 %v6713, %v7021
  %7023 = vmatmul.bf16.gmra.mxu0 %v3624
  %v7024 = vpop.f32.mrf.mxu0
  %v7025 = vadd.f32 %v6716, %v7024
  %v7026 = vpop.f32.mrf.mxu0
  %v7027 = vadd.f32 %v6718, %v7026
  %7028 = vmatmul.bf16.gmra.mxu0 %v3625
  %v7029 = vpop.f32.mrf.mxu0
  %v7030 = vadd.f32 %v6721, %v7029
  %v7031 = vpop.f32.mrf.mxu0
  %v7032 = vadd.f32 %v6723, %v7031
  %7033 = vmatmul.bf16.gmra.mxu0 %v3626
  %v7034 = vpop.f32.mrf.mxu0
  %v7035 = vadd.f32 %v6726, %v7034
  %v7036 = vpop.f32.mrf.mxu0
  %v7037 = vadd.f32 %v6728, %v7036
  %7038 = vmatmul.bf16.gmra.mxu0 %v3627
  %v7039 = vpop.f32.mrf.mxu0
  %v7040 = vadd.f32 %v6731, %v7039
  %v7041 = vpop.f32.mrf.mxu0
  %v7042 = vadd.f32 %v6733, %v7041
  %7043 = vmatmul.bf16.gmra.mxu0 %v3628
  %v7044 = vpop.f32.mrf.mxu0
  %v7045 = vadd.f32 %v6736, %v7044
  %v7046 = vpop.f32.mrf.mxu0
  %v7047 = vadd.f32 %v6738, %v7046
  %7048 = vmatmul.bf16.gmra.mxu0 %v3629
  %v7049 = vpop.f32.mrf.mxu0
  %v7050 = vadd.f32 %v6741, %v7049
  %v7051 = vpop.f32.mrf.mxu0
  %v7052 = vadd.f32 %v6743, %v7051
  %7053 = vmatmul.bf16.gmra.mxu0 %v3630
  %v7054 = vpop.f32.mrf.mxu0
  %v7055 = vadd.f32 %v6746, %v7054
  %v7056 = vpop.f32.mrf.mxu0
  %v7057 = vadd.f32 %v6748, %v7056
  %7058 = vmatmul.bf16.gmra.mxu0 %v3631
  %v7059 = vpop.f32.mrf.mxu0
  %v7060 = vadd.f32 %v6751, %v7059
  %v7061 = vpop.f32.mrf.mxu0
  %v7062 = vadd.f32 %v6753, %v7061
  %7063 = vmatmul.bf16.gmra.mxu0 %v3632
  %v7064 = vpop.f32.mrf.mxu0
  %v7065 = vadd.f32 %v6756, %v7064
  %v7066 = vpop.f32.mrf.mxu0
  %v7067 = vadd.f32 %v6758, %v7066
  %7068 = vmatmul.bf16.gmra.mxu0 %v3633
  %v7069 = vpop.f32.mrf.mxu0
  %v7070 = vadd.f32 %v6761, %v7069
  %v7071 = vpop.f32.mrf.mxu0
  %v7072 = vadd.f32 %v6763, %v7071
  %7073 = vmatmul.bf16.gmra.mxu0 %v3634
  %v7074 = vpop.f32.mrf.mxu0
  %v7075 = vadd.f32 %v6766, %v7074
  %v7076 = vpop.f32.mrf.mxu0
  %v7077 = vadd.f32 %v6768, %v7076
  %7078 = vmatmul.bf16.gmra.mxu0 %v3635
  %v7079 = vpop.f32.mrf.mxu0
  %v7080 = vadd.f32 %v6771, %v7079
  %v7081 = vpop.f32.mrf.mxu0
  %v7082 = vadd.f32 %v6773, %v7081
  %7083 = vmatmul.bf16.gmra.mxu0 %v3636
  %v7084 = vpop.f32.mrf.mxu0
  %v7085 = vadd.f32 %v6776, %v7084
  %v7086 = vpop.f32.mrf.mxu0
  %v7087 = vadd.f32 %v6778, %v7086
  %7088 = vmatmul.bf16.gmra.mxu0 %v3637
  %v7089 = vpop.f32.mrf.mxu0
  %v7090 = vadd.f32 %v6781, %v7089
  %v7091 = vpop.f32.mrf.mxu0
  %v7092 = vadd.f32 %v6783, %v7091
  %7093 = vmatmul.bf16.gmra.mxu0 %v3638
  %v7094 = vpop.f32.mrf.mxu0
  %v7095 = vadd.f32 %v6786, %v7094
  %v7096 = vpop.f32.mrf.mxu0
  %v7097 = vadd.f32 %v6788, %v7096
  %7098 = vmatmul.bf16.gmra.mxu0 %v3639
  %v7099 = vpop.f32.mrf.mxu0
  %v7100 = vadd.f32 %v6791, %v7099
  %v7101 = vpop.f32.mrf.mxu0
  %v7102 = vadd.f32 %v6793, %v7101
  %7103 = vmatmul.bf16.gmra.mxu0 %v3640
  %v7104 = vpop.f32.mrf.mxu0
  %v7105 = vadd.f32 %v6796, %v7104
  %v7106 = vpop.f32.mrf.mxu0
  %v7107 = vadd.f32 %v6798, %v7106
  %7108 = vmatmul.bf16.gmra.mxu0 %v3641
  %v7109 = vpop.f32.mrf.mxu0
  %v7110 = vadd.f32 %v6801, %v7109
  %v7111 = vpop.f32.mrf.mxu0
  %v7112 = vadd.f32 %v6803, %v7111
  %7113 = vmatmul.bf16.gmra.mxu0 %v3642
  %v7114 = vpop.f32.mrf.mxu0
  %v7115 = vadd.f32 %v6806, %v7114
  %v7116 = vpop.f32.mrf.mxu0
  %v7117 = vadd.f32 %v6808, %v7116
  %7118 = vmatmul.bf16.gmra.mxu0 %v3643
  %v7119 = vpop.f32.mrf.mxu0
  %v7120 = vadd.f32 %v6811, %v7119
  %v7121 = vpop.f32.mrf.mxu0
  %v7122 = vadd.f32 %v6813, %v7121
  %7123 = vmatmul.bf16.gmra.mxu0 %v3644
  %v7124 = vpop.f32.mrf.mxu0
  %v7125 = vadd.f32 %v6816, %v7124
  %v7126 = vpop.f32.mrf.mxu0
  %v7127 = vadd.f32 %v6818, %v7126
  %7128 = vmatmul.bf16.gmra.mxu0 %v3645
  %v7129 = vpop.f32.mrf.mxu0
  %v7130 = vadd.f32 %v6821, %v7129
  %v7131 = vpop.f32.mrf.mxu0
  %v7132 = vadd.f32 %v6823, %v7131
  %7133 = vmatmul.bf16.gmra.mxu0 %v3646
  %v7134 = vpop.f32.mrf.mxu0
  %v7135 = vadd.f32 %v6826, %v7134
  %v7136 = vpop.f32.mrf.mxu0
  %v7137 = vadd.f32 %v6828, %v7136
  %7138 = vmatmul.bf16.gmra.mxu0 %v3647
  %v7139 = vpop.f32.mrf.mxu0
  %v7140 = vadd.f32 %v6831, %v7139
  %v7141 = vpop.f32.mrf.mxu0
  %v7142 = vadd.f32 %v6833, %v7141
  %7143 = vmatmul.bf16.gmra.mxu0 %v3648
  %v7144 = vpop.f32.mrf.mxu0
  %v7145 = vadd.f32 %v6836, %v7144
  %v7146 = vpop.f32.mrf.mxu0
  %v7147 = vadd.f32 %v6838, %v7146
  %7148 = vmatmul.bf16.gmra.mxu0 %v3649
  %v7149 = vpop.f32.mrf.mxu0
  %v7150 = vadd.f32 %v6841, %v7149
  %v7151 = vpop.f32.mrf.mxu0
  %v7152 = vadd.f32 %v6843, %v7151
  %7153 = vmatmul.bf16.gmra.mxu0 %v3650
  %v7154 = vpop.f32.mrf.mxu0
  %v7155 = vadd.f32 %v6846, %v7154
  %v7156 = vpop.f32.mrf.mxu0
  %v7157 = vadd.f32 %v6848, %v7156
  %7158 = vmatmul.bf16.gmra.mxu0 %v3651
  %v7159 = vpop.f32.mrf.mxu0
  %v7160 = vadd.f32 %v6851, %v7159
  %v7161 = vpop.f32.mrf.mxu0
  %v7162 = vadd.f32 %v6853, %v7161
  %7163 = vmatmul.bf16.gmra.mxu0 %v3652
  %v7164 = vpop.f32.mrf.mxu0
  %v7165 = vadd.f32 %v6856, %v7164
  %v7166 = vpop.f32.mrf.mxu0
  %v7167 = vadd.f32 %v6858, %v7166
  %7168 = vmatmul.bf16.gmra.mxu0 %v3653
  %v7169 = vpop.f32.mrf.mxu0
  %v7170 = vadd.f32 %v6861, %v7169
  %v7171 = vpop.f32.mrf.mxu0
  %v7172 = vadd.f32 %v6863, %v7171
  %7173 = vmatmul.bf16.gmra.mxu0 %v3654
  %v7174 = vpop.f32.mrf.mxu0
  %v7175 = vadd.f32 %v6866, %v7174
  %v7176 = vpop.f32.mrf.mxu0
  %v7177 = vadd.f32 %v6868, %v7176
  %7178 = vmatmul.bf16.gmra.mxu0 %v3655
  %v7179 = vpop.f32.mrf.mxu0
  %v7180 = vadd.f32 %v6871, %v7179
  %v7181 = vpop.f32.mrf.mxu0
  %v7182 = vadd.f32 %v6873, %v7181
  %7183 = vmatmul.bf16.gmra.mxu0 %v3656
  %v7184 = vpop.f32.mrf.mxu0
  %v7185 = vadd.f32 %v6876, %v7184
  %v7186 = vpop.f32.mrf.mxu0
  %v7187 = vadd.f32 %v6878, %v7186
  %7188 = vmatmul.bf16.gmra.mxu0 %v3657
  %v7189 = vpop.f32.mrf.mxu0
  %v7190 = vadd.f32 %v6881, %v7189
  %v7191 = vpop.f32.mrf.mxu0
  %v7192 = vadd.f32 %v6883, %v7191
  %7193 = vmatmul.bf16.gmra.mxu0 %v3658
  %v7194 = vpop.f32.mrf.mxu0
  %v7195 = vadd.f32 %v6886, %v7194
  %v7196 = vpop.f32.mrf.mxu0
  %v7197 = vadd.f32 %v6888, %v7196
  %7198 = vmatmul.bf16.gmra.mxu0 %v3659
  %v7199 = vpop.f32.mrf.mxu0
  %v7200 = vadd.f32 %v6891, %v7199
  %v7201 = vpop.f32.mrf.mxu0
  %v7202 = vadd.f32 %v6893, %v7201
  %7203 = vmatmul.bf16.gmra.mxu0 %v3660
  %v7204 = vpop.f32.mrf.mxu0
  %v7205 = vadd.f32 %v6896, %v7204
  %v7206 = vpop.f32.mrf.mxu0
  %v7207 = vadd.f32 %v6898, %v7206
  %7208 = vmatmul.bf16.gmra.mxu0 %v3661
  %v7209 = vpop.f32.mrf.mxu0
  %v7210 = vadd.f32 %v6901, %v7209
  %v7211 = vpop.f32.mrf.mxu0
  %v7212 = vadd.f32 %v6903, %v7211
  %7213 = vmatmul.bf16.gmra.mxu0 %v3662
  %v7214 = vpop.f32.mrf.mxu0
  %v7215 = vadd.f32 %v6906, %v7214
  %v7216 = vpop.f32.mrf.mxu0
  %v7217 = vadd.f32 %v6908, %v7216
  %7218 = vmatmul.bf16.gmra.mxu0 %v3663
  %v7219 = vpop.f32.mrf.mxu0
  %v7220 = vadd.f32 %v6911, %v7219
  %v7221 = vpop.f32.mrf.mxu0
  %v7222 = vadd.f32 %v6913, %v7221
  %7223 = vmatmul.bf16.gmra.mxu0 %v3664
  %v7224 = vpop.f32.mrf.mxu0
  %v7225 = vadd.f32 %v6916, %v7224
  %v7226 = vpop.f32.mrf.mxu0
  %v7227 = vadd.f32 %v6918, %v7226
  %7228 = vmatmul.bf16.gmra.mxu0 %v3665
  %v7229 = vpop.f32.mrf.mxu0
  %v7230 = vadd.f32 %v6921, %v7229
  %v7231 = vpop.f32.mrf.mxu0
  %v7232 = vadd.f32 %v6923, %v7231
  %7233 = vmatmul.bf16.gmra.mxu0 %v3666
  %v7234 = vpop.f32.mrf.mxu0
  %v7235 = vadd.f32 %v6926, %v7234
  %v7236 = vpop.f32.mrf.mxu0
  %v7237 = vadd.f32 %v6928, %v7236
  %7238 = vmatmul.bf16.gmra.mxu0 %v3667
  %v7239 = vpop.f32.mrf.mxu0
  %v7240 = vadd.f32 %v6931, %v7239
  %v7241 = vpop.f32.mrf.mxu0
  %v7242 = vadd.f32 %v6933, %v7241
  %7243 = vmatmul.bf16.gmra.mxu0 %v3668
  %v7244 = vpop.f32.mrf.mxu0
  %v7245 = vadd.f32 %v6936, %v7244
  %v7246 = vpop.f32.mrf.mxu0
  %v7247 = vadd.f32 %v6938, %v7246
  %7248 = vmatmul.bf16.gmra.mxu0 %v3669
  %v7249 = vpop.f32.mrf.mxu0
  %v7250 = vadd.f32 %v6941, %v7249
  %v7251 = vpop.f32.mrf.mxu0
  %v7252 = vadd.f32 %v6943, %v7251
  %7253 = vmatmul.bf16.gmra.mxu0 %v3670
  %v7254 = vpop.f32.mrf.mxu0
  %v7255 = vadd.f32 %v6946, %v7254
  %v7256 = vpop.f32.mrf.mxu0
  %v7257 = vadd.f32 %v6948, %v7256
  %7258 = vmatmul.bf16.gmra.mxu0 %v3671
  %v7259 = vpop.f32.mrf.mxu0
  %v7260 = vadd.f32 %v6951, %v7259
  %v7261 = vpop.f32.mrf.mxu0
  %v7262 = vadd.f32 %v6953, %v7261
  %7263 = vmatmul.bf16.gmra.mxu0 %v3672
  %v7264 = vpop.f32.mrf.mxu0
  %v7265 = vadd.f32 %v6956, %v7264
  %v7266 = vpop.f32.mrf.mxu0
  %v7267 = vadd.f32 %v6958, %v7266
  %7268 = vmatmul.bf16.gmra.mxu0 %v3673
  %v7269 = vpop.f32.mrf.mxu0
  %v7270 = vadd.f32 %v6961, %v7269
  %v7271 = vpop.f32.mrf.mxu0
  %v7272 = vadd.f32 %v6963, %v7271
  %7273 = vmatmul.bf16.gmra.mxu0 %v3674
  %v7274 = vpop.f32.mrf.mxu0
  %v7275 = vadd.f32 %v6966, %v7274
  %v7276 = vpop.f32.mrf.mxu0
  %v7277 = vadd.f32 %v6968, %v7276
  %7278 = vmatmul.bf16.gmra.mxu0 %v3675
  %v7279 = vpop.f32.mrf.mxu0
  %v7280 = vadd.f32 %v6971, %v7279
  %v7281 = vpop.f32.mrf.mxu0
  %v7282 = vadd.f32 %v6973, %v7281
  %7283 = vmatmul.bf16.gmra.mxu0 %v3676
  %v7284 = vpop.f32.mrf.mxu0
  %v7285 = vadd.f32 %v6976, %v7284
  %v7286 = vpop.f32.mrf.mxu0
  %v7287 = vadd.f32 %v6978, %v7286
  %7288 = vmatmul.bf16.gmra.mxu0 %v3677
  %v7289 = vpop.f32.mrf.mxu0
  %v7290 = vadd.f32 %v6981, %v7289
  %v7291 = vpop.f32.mrf.mxu0
  %v7292 = vadd.f32 %v6983, %v7291
  %7293 = vmatmul.bf16.gmra.mxu0 %v3678
  %v7294 = vpop.f32.mrf.mxu0
  %v7295 = vadd.f32 %v6986, %v7294
  %v7296 = vpop.f32.mrf.mxu0
  %v7297 = vadd.f32 %v6988, %v7296
  %7298 = vmatmul.bf16.gmra.mxu0 %v3679
  %v7299 = vpop.f32.mrf.mxu0
  %v7300 = vadd.f32 %v6991, %v7299
  %v7301 = vpop.f32.mrf.mxu0
  %v7302 = vadd.f32 %v6993, %v7301
  %7303 = vmatmul.bf16.gmra.mxu0 %v3680
  %v7304 = vpop.f32.mrf.mxu0
  %v7305 = vadd.f32 %v6996, %v7304
  %v7306 = vpop.f32.mrf.mxu0
  %v7307 = vadd.f32 %v6998, %v7306
  %7308 = vmatmul.bf16.gmra.mxu0 %v3681
  %v7309 = vpop.f32.mrf.mxu0
  %v7310 = vadd.f32 %v7001, %v7309
  %v7311 = vpop.f32.mrf.mxu0
  %v7312 = vadd.f32 %v7003, %v7311
  %7313 = vmatmul.bf16.gmra.mxu0 %v3682
  %v7314 = vpop.f32.mrf.mxu0
  %v7315 = vadd.f32 %v7006, %v7314
  %v7316 = vpop.f32.mrf.mxu0
  %v7317 = vadd.f32 %v7008, %v7316
  %7318 = vdwg.mxu0
  %v7319 = vmax.f32 %v5475, 0.0
  %v7320 = vmax.f32 %v7020, 0.0
  %v7321 = vmax.f32 %v5477, 0.0
  %v7322 = vmax.f32 %v7022, 0.0
  %v7323 = vmax.f32 %v5480, 0.0
  %v7324 = vmax.f32 %v7025, 0.0
  %v7325 = vmax.f32 %v5482, 0.0
  %v7326 = vmax.f32 %v7027, 0.0
  %v7327 = vmax.f32 %v5485, 0.0
  %v7328 = vmax.f32 %v7030, 0.0
  %v7329 = vmax.f32 %v5487, 0.0
  %v7330 = vmax.f32 %v7032, 0.0
  %v7331 = vmax.f32 %v5490, 0.0
  %v7332 = vmax.f32 %v7035, 0.0
  %v7333 = vmax.f32 %v5492, 0.0
  %v7334 = vmax.f32 %v7037, 0.0
  %v7335 = vmax.f32 %v5495, 0.0
  %v7336 = vmax.f32 %v7040, 0.0
  %v7337 = vmax.f32 %v5497, 0.0
  %v7338 = vmax.f32 %v7042, 0.0
  %v7339 = vmax.f32 %v5500, 0.0
  %v7340 = vmax.f32 %v7045, 0.0
  %v7341 = vmax.f32 %v5502, 0.0
  %v7342 = vmax.f32 %v7047, 0.0
  %v7343 = vmax.f32 %v5505, 0.0
  %v7344 = vmax.f32 %v7050, 0.0
  %v7345 = vmax.f32 %v5507, 0.0
  %v7346 = vmax.f32 %v7052, 0.0
  %v7347 = vmax.f32 %v5510, 0.0
  %v7348 = vmax.f32 %v7055, 0.0
  %v7349 = vmax.f32 %v5512, 0.0
  %v7350 = vmax.f32 %v7057, 0.0
  %v7351 = vmax.f32 %v5515, 0.0
  %v7352 = vmax.f32 %v7060, 0.0
  %v7353 = vmax.f32 %v5517, 0.0
  %v7354 = vmax.f32 %v7062, 0.0
  %v7355 = vmax.f32 %v5520, 0.0
  %v7356 = vmax.f32 %v7065, 0.0
  %v7357 = vmax.f32 %v5522, 0.0
  %v7358 = vmax.f32 %v7067, 0.0
  %v7359 = vmax.f32 %v5525, 0.0
  %v7360 = vmax.f32 %v7070, 0.0
  %v7361 = vmax.f32 %v5527, 0.0
  %v7362 = vmax.f32 %v7072, 0.0
  %v7363 = vmax.f32 %v5530, 0.0
  %v7364 = vmax.f32 %v7075, 0.0
  %v7365 = vmax.f32 %v5532, 0.0
  %v7366 = vmax.f32 %v7077, 0.0
  %v7367 = vmax.f32 %v5535, 0.0
  %v7368 = vmax.f32 %v7080, 0.0
  %v7369 = vmax.f32 %v5537, 0.0
  %v7370 = vmax.f32 %v7082, 0.0
  %v7371 = vmax.f32 %v5540, 0.0
  %v7372 = vmax.f32 %v7085, 0.0
  %v7373 = vmax.f32 %v5542, 0.0
  %v7374 = vmax.f32 %v7087, 0.0
  %v7375 = vmax.f32 %v5545, 0.0
  %v7376 = vmax.f32 %v7090, 0.0
  %v7377 = vmax.f32 %v5547, 0.0
  %v7378 = vmax.f32 %v7092, 0.0
  %v7379 = vmax.f32 %v5550, 0.0
  %v7380 = vmax.f32 %v7095, 0.0
  %v7381 = vmax.f32 %v5552, 0.0
  %v7382 = vmax.f32 %v7097, 0.0
  %v7383 = vmax.f32 %v5555, 0.0
  %v7384 = vmax.f32 %v7100, 0.0
  %v7385 = vmax.f32 %v5557, 0.0
  %v7386 = vmax.f32 %v7102, 0.0
  %v7387 = vmax.f32 %v5560, 0.0
  %v7388 = vmax.f32 %v7105, 0.0
  %v7389 = vmax.f32 %v5562, 0.0
  %v7390 = vmax.f32 %v7107, 0.0
  %v7391 = vmax.f32 %v5565, 0.0
  %v7392 = vmax.f32 %v7110, 0.0
  %v7393 = vmax.f32 %v5567, 0.0
  %v7394 = vmax.f32 %v7112, 0.0
  %v7395 = vmax.f32 %v5570, 0.0
  %v7396 = vmax.f32 %v7115, 0.0
  %v7397 = vmax.f32 %v5572, 0.0
  %v7398 = vmax.f32 %v7117, 0.0
  %v7399 = vmax.f32 %v5575, 0.0
  %v7400 = vmax.f32 %v7120, 0.0
  %v7401 = vmax.f32 %v5577, 0.0
  %v7402 = vmax.f32 %v7122, 0.0
  %v7403 = vmax.f32 %v5580, 0.0
  %v7404 = vmax.f32 %v7125, 0.0
  %v7405 = vmax.f32 %v5582, 0.0
  %v7406 = vmax.f32 %v7127, 0.0
  %v7407 = vmax.f32 %v5585, 0.0
  %v7408 = vmax.f32 %v7130, 0.0
  %v7409 = vmax.f32 %v5587, 0.0
  %v7410 = vmax.f32 %v7132, 0.0
  %v7411 = vmax.f32 %v5590, 0.0
  %v7412 = vmax.f32 %v7135, 0.0
  %v7413 = vmax.f32 %v5592, 0.0
  %v7414 = vmax.f32 %v7137, 0.0
  %v7415 = vmax.f32 %v5595, 0.0
  %v7416 = vmax.f32 %v7140, 0.0
  %v7417 = vmax.f32 %v5597, 0.0
  %v7418 = vmax.f32 %v7142, 0.0
  %v7419 = vmax.f32 %v5600, 0.0
  %v7420 = vmax.f32 %v7145, 0.0
  %v7421 = vmax.f32 %v5602, 0.0
  %v7422 = vmax.f32 %v7147, 0.0
  %v7423 = vmax.f32 %v5605, 0.0
  %v7424 = vmax.f32 %v7150, 0.0
  %v7425 = vmax.f32 %v5607, 0.0
  %v7426 = vmax.f32 %v7152, 0.0
  %v7427 = vmax.f32 %v5610, 0.0
  %v7428 = vmax.f32 %v7155, 0.0
  %v7429 = vmax.f32 %v5612, 0.0
  %v7430 = vmax.f32 %v7157, 0.0
  %v7431 = vmax.f32 %v5615, 0.0
  %v7432 = vmax.f32 %v7160, 0.0
  %v7433 = vmax.f32 %v5617, 0.0
  %v7434 = vmax.f32 %v7162, 0.0
  %v7435 = vmax.f32 %v5620, 0.0
  %v7436 = vmax.f32 %v7165, 0.0
  %v7437 = vmax.f32 %v5622, 0.0
  %v7438 = vmax.f32 %v7167, 0.0
  %v7439 = vmax.f32 %v5625, 0.0
  %v7440 = vmax.f32 %v7170, 0.0
  %v7441 = vmax.f32 %v5627, 0.0
  %v7442 = vmax.f32 %v7172, 0.0
  %v7443 = vmax.f32 %v5630, 0.0
  %v7444 = vmax.f32 %v7175, 0.0
  %v7445 = vmax.f32 %v5632, 0.0
  %v7446 = vmax.f32 %v7177, 0.0
  %v7447 = vmax.f32 %v5635, 0.0
  %v7448 = vmax.f32 %v7180, 0.0
  %v7449 = vmax.f32 %v5637, 0.0
  %v7450 = vmax.f32 %v7182, 0.0
  %v7451 = vmax.f32 %v5640, 0.0
  %v7452 = vmax.f32 %v7185, 0.0
  %v7453 = vmax.f32 %v5642, 0.0
  %v7454 = vmax.f32 %v7187, 0.0
  %v7455 = vmax.f32 %v5645, 0.0
  %v7456 = vmax.f32 %v7190, 0.0
  %v7457 = vmax.f32 %v5647, 0.0
  %v7458 = vmax.f32 %v7192, 0.0
  %v7459 = vmax.f32 %v5650, 0.0
  %v7460 = vmax.f32 %v7195, 0.0
  %v7461 = vmax.f32 %v5652, 0.0
  %v7462 = vmax.f32 %v7197, 0.0
  %v7463 = vmax.f32 %v5655, 0.0
  %v7464 = vmax.f32 %v7200, 0.0
  %v7465 = vmax.f32 %v5657, 0.0
  %v7466 = vmax.f32 %v7202, 0.0
  %v7467 = vmax.f32 %v5660, 0.0
  %v7468 = vmax.f32 %v7205, 0.0
  %v7469 = vmax.f32 %v5662, 0.0
  %v7470 = vmax.f32 %v7207, 0.0
  %v7471 = vmax.f32 %v5665, 0.0
  %v7472 = vmax.f32 %v7210, 0.0
  %v7473 = vmax.f32 %v5667, 0.0
  %v7474 = vmax.f32 %v7212, 0.0
  %v7475 = vmax.f32 %v5670, 0.0
  %v7476 = vmax.f32 %v7215, 0.0
  %v7477 = vmax.f32 %v5672, 0.0
  %v7478 = vmax.f32 %v7217, 0.0
  %v7479 = vmax.f32 %v5675, 0.0
  %v7480 = vmax.f32 %v7220, 0.0
  %v7481 = vmax.f32 %v5677, 0.0
  %v7482 = vmax.f32 %v7222, 0.0
  %v7483 = vmax.f32 %v5680, 0.0
  %v7484 = vmax.f32 %v7225, 0.0
  %v7485 = vmax.f32 %v5682, 0.0
  %v7486 = vmax.f32 %v7227, 0.0
  %v7487 = vmax.f32 %v5685, 0.0
  %v7488 = vmax.f32 %v7230, 0.0
  %v7489 = vmax.f32 %v5687, 0.0
  %v7490 = vmax.f32 %v7232, 0.0
  %v7491 = vmax.f32 %v5690, 0.0
  %v7492 = vmax.f32 %v7235, 0.0
  %v7493 = vmax.f32 %v5692, 0.0
  %v7494 = vmax.f32 %v7237, 0.0
  %v7495 = vmax.f32 %v5695, 0.0
  %v7496 = vmax.f32 %v7240, 0.0
  %v7497 = vmax.f32 %v5697, 0.0
  %v7498 = vmax.f32 %v7242, 0.0
  %v7499 = vmax.f32 %v5700, 0.0
  %v7500 = vmax.f32 %v7245, 0.0
  %v7501 = vmax.f32 %v5702, 0.0
  %v7502 = vmax.f32 %v7247, 0.0
  %v7503 = vmax.f32 %v5705, 0.0
  %v7504 = vmax.f32 %v7250, 0.0
  %v7505 = vmax.f32 %v5707, 0.0
  %v7506 = vmax.f32 %v7252, 0.0
  %v7507 = vmax.f32 %v5710, 0.0
  %v7508 = vmax.f32 %v7255, 0.0
  %v7509 = vmax.f32 %v5712, 0.0
  %v7510 = vmax.f32 %v7257, 0.0
  %v7511 = vmax.f32 %v5715, 0.0
  %v7512 = vmax.f32 %v7260, 0.0
  %v7513 = vmax.f32 %v5717, 0.0
  %v7514 = vmax.f32 %v7262, 0.0
  %v7515 = vmax.f32 %v5720, 0.0
  %v7516 = vmax.f32 %v7265, 0.0
  %v7517 = vmax.f32 %v5722, 0.0
  %v7518 = vmax.f32 %v7267, 0.0
  %v7519 = vmax.f32 %v5725, 0.0
  %v7520 = vmax.f32 %v7270, 0.0
  %v7521 = vmax.f32 %v5727, 0.0
  %v7522 = vmax.f32 %v7272, 0.0
  %v7523 = vmax.f32 %v5730, 0.0
  %v7524 = vmax.f32 %v7275, 0.0
  %v7525 = vmax.f32 %v5732, 0.0
  %v7526 = vmax.f32 %v7277, 0.0
  %v7527 = vmax.f32 %v5735, 0.0
  %v7528 = vmax.f32 %v7280, 0.0
  %v7529 = vmax.f32 %v5737, 0.0
  %v7530 = vmax.f32 %v7282, 0.0
  %v7531 = vmax.f32 %v5740, 0.0
  %v7532 = vmax.f32 %v7285, 0.0
  %v7533 = vmax.f32 %v5742, 0.0
  %v7534 = vmax.f32 %v7287, 0.0
  %v7535 = vmax.f32 %v5745, 0.0
  %v7536 = vmax.f32 %v7290, 0.0
  %v7537 = vmax.f32 %v5747, 0.0
  %v7538 = vmax.f32 %v7292, 0.0
  %v7539 = vmax.f32 %v5750, 0.0
  %v7540 = vmax.f32 %v7295, 0.0
  %v7541 = vmax.f32 %v5752, 0.0
  %v7542 = vmax.f32 %v7297, 0.0
  %v7543 = vmax.f32 %v5755, 0.0
  %v7544 = vmax.f32 %v7300, 0.0
  %v7545 = vmax.f32 %v5757, 0.0
  %v7546 = vmax.f32 %v7302, 0.0
  %v7547 = vmax.f32 %v5760, 0.0
  %v7548 = vmax.f32 %v7305, 0.0
  %v7549 = vmax.f32 %v5762, 0.0
  %v7550 = vmax.f32 %v7307, 0.0
  %v7551 = vmax.f32 %v5765, 0.0
  %v7552 = vmax.f32 %v7310, 0.0
  %v7553 = vmax.f32 %v5767, 0.0
  %v7554 = vmax.f32 %v7312, 0.0
  %v7555 = vmax.f32 %v5770, 0.0
  %v7556 = vmax.f32 %v7315, 0.0
  %v7557 = vmax.f32 %v5772, 0.0
  %v7558 = vmax.f32 %v7317, 0.0
  %7559 = vst [vmem:[#allocation3] sm:$0xff] 0
  %7560 = vst [vmem:[#allocation3 + $0x8] sm:$0xff] 0
  %7561 = vst [vmem:[#allocation3 + $0x10] sm:$0xff] 0
  %7562 = vst [vmem:[#allocation3 + $0x18] sm:$0xff] 0
  %7563 = vst [vmem:[#allocation3 + $0x20] sm:$0xff] 0
  %7564 = vst [vmem:[#allocation3 + $0x28] sm:$0xff] 0
  %7565 = vst [vmem:[#allocation3 + $0x30] sm:$0xff] 0
  %7566 = vst [vmem:[#allocation3 + $0x38] sm:$0xff] 0
  %s7567 = scalar_lea.vmem [#allocation3], 1024
  %7568 = vst [vmem:[%s7567] sm:$0xff] 0
  %7569 = vst [vmem:[%s7567 + $0x8] sm:$0xff] 0
  %7570 = vst [vmem:[%s7567 + $0x10] sm:$0xff] 0
  %7571 = vst [vmem:[%s7567 + $0x18] sm:$0xff] 0
  %7572 = vst [vmem:[%s7567 + $0x20] sm:$0xff] 0
  %7573 = vst [vmem:[%s7567 + $0x28] sm:$0xff] 0
  %7574 = vst [vmem:[%s7567 + $0x30] sm:$0xff] 0
  %7575 = vst [vmem:[%s7567 + $0x38] sm:$0xff] 0
  %v7576 = vpack.c.bf16 %v7320, %v7319
  %v7577 = vpack.c.bf16 %v7322, %v7321
  %v7578 = vpack.c.bf16 %v7324, %v7323
  %v7579 = vpack.c.bf16 %v7326, %v7325
  %v7580 = vpack.c.bf16 %v7328, %v7327
  %v7581 = vpack.c.bf16 %v7330, %v7329
  %v7582 = vpack.c.bf16 %v7332, %v7331
  %v7583 = vpack.c.bf16 %v7334, %v7333
  %v7584 = vpack.c.bf16 %v7336, %v7335
  %v7585 = vpack.c.bf16 %v7338, %v7337
  %v7586 = vpack.c.bf16 %v7340, %v7339
  %v7587 = vpack.c.bf16 %v7342, %v7341
  %v7588 = vpack.c.bf16 %v7344, %v7343
  %v7589 = vpack.c.bf16 %v7346, %v7345
  %v7590 = vpack.c.bf16 %v7348, %v7347
  %v7591 = vpack.c.bf16 %v7350, %v7349
  %v7592 = vpack.c.bf16 %v7352, %v7351
  %v7593 = vpack.c.bf16 %v7354, %v7353
  %v7594 = vpack.c.bf16 %v7356, %v7355
  %v7595 = vpack.c.bf16 %v7358, %v7357
  %v7596 = vpack.c.bf16 %v7360, %v7359
  %v7597 = vpack.c.bf16 %v7362, %v7361
  %v7598 = vpack.c.bf16 %v7364, %v7363
  %v7599 = vpack.c.bf16 %v7366, %v7365
  %v7600 = vpack.c.bf16 %v7368, %v7367
  %v7601 = vpack.c.bf16 %v7370, %v7369
  %v7602 = vpack.c.bf16 %v7372, %v7371
  %v7603 = vpack.c.bf16 %v7374, %v7373
  %v7604 = vpack.c.bf16 %v7376, %v7375
  %v7605 = vpack.c.bf16 %v7378, %v7377
  %v7606 = vpack.c.bf16 %v7380, %v7379
  %v7607 = vpack.c.bf16 %v7382, %v7381
  %v7608 = vpack.c.bf16 %v7384, %v7383
  %v7609 = vpack.c.bf16 %v7386, %v7385
  %v7610 = vpack.c.bf16 %v7388, %v7387
  %v7611 = vpack.c.bf16 %v7390, %v7389
  %v7612 = vpack.c.bf16 %v7392, %v7391
  %v7613 = vpack.c.bf16 %v7394, %v7393
  %v7614 = vpack.c.bf16 %v7396, %v7395
  %v7615 = vpack.c.bf16 %v7398, %v7397
  %v7616 = vpack.c.bf16 %v7400, %v7399
  %v7617 = vpack.c.bf16 %v7402, %v7401
  %v7618 = vpack.c.bf16 %v7404, %v7403
  %v7619 = vpack.c.bf16 %v7406, %v7405
  %v7620 = vpack.c.bf16 %v7408, %v7407
  %v7621 = vpack.c.bf16 %v7410, %v7409
  %v7622 = vpack.c.bf16 %v7412, %v7411
  %v7623 = vpack.c.bf16 %v7414, %v7413
  %v7624 = vpack.c.bf16 %v7416, %v7415
  %v7625 = vpack.c.bf16 %v7418, %v7417
  %v7626 = vpack.c.bf16 %v7420, %v7419
  %v7627 = vpack.c.bf16 %v7422, %v7421
  %v7628 = vpack.c.bf16 %v7424, %v7423
  %v7629 = vpack.c.bf16 %v7426, %v7425
  %v7630 = vpack.c.bf16 %v7428, %v7427
  %v7631 = vpack.c.bf16 %v7430, %v7429
  %v7632 = vpack.c.bf16 %v7432, %v7431
  %v7633 = vpack.c.bf16 %v7434, %v7433
  %v7634 = vpack.c.bf16 %v7436, %v7435
  %v7635 = vpack.c.bf16 %v7438, %v7437
  %v7636 = vpack.c.bf16 %v7440, %v7439
  %v7637 = vpack.c.bf16 %v7442, %v7441
  %v7638 = vpack.c.bf16 %v7444, %v7443
  %v7639 = vpack.c.bf16 %v7446, %v7445
  %v7640 = vpack.c.bf16 %v7448, %v7447
  %v7641 = vpack.c.bf16 %v7450, %v7449
  %v7642 = vpack.c.bf16 %v7452, %v7451
  %v7643 = vpack.c.bf16 %v7454, %v7453
  %v7644 = vpack.c.bf16 %v7456, %v7455
  %v7645 = vpack.c.bf16 %v7458, %v7457
  %v7646 = vpack.c.bf16 %v7460, %v7459
  %v7647 = vpack.c.bf16 %v7462, %v7461
  %v7648 = vpack.c.bf16 %v7464, %v7463
  %v7649 = vpack.c.bf16 %v7466, %v7465
  %v7650 = vpack.c.bf16 %v7468, %v7467
  %v7651 = vpack.c.bf16 %v7470, %v7469
  %v7652 = vpack.c.bf16 %v7472, %v7471
  %v7653 = vpack.c.bf16 %v7474, %v7473
  %v7654 = vpack.c.bf16 %v7476, %v7475
  %v7655 = vpack.c.bf16 %v7478, %v7477
  %v7656 = vpack.c.bf16 %v7480, %v7479
  %v7657 = vpack.c.bf16 %v7482, %v7481
  %v7658 = vpack.c.bf16 %v7484, %v7483
  %v7659 = vpack.c.bf16 %v7486, %v7485
  %v7660 = vpack.c.bf16 %v7488, %v7487
  %v7661 = vpack.c.bf16 %v7490, %v7489
  %v7662 = vpack.c.bf16 %v7492, %v7491
  %v7663 = vpack.c.bf16 %v7494, %v7493
  %v7664 = vpack.c.bf16 %v7496, %v7495
  %v7665 = vpack.c.bf16 %v7498, %v7497
  %v7666 = vpack.c.bf16 %v7500, %v7499
  %v7667 = vpack.c.bf16 %v7502, %v7501
  %v7668 = vpack.c.bf16 %v7504, %v7503
  %v7669 = vpack.c.bf16 %v7506, %v7505
  %v7670 = vpack.c.bf16 %v7508, %v7507
  %v7671 = vpack.c.bf16 %v7510, %v7509
  %v7672 = vpack.c.bf16 %v7512, %v7511
  %v7673 = vpack.c.bf16 %v7514, %v7513
  %v7674 = vpack.c.bf16 %v7516, %v7515
  %v7675 = vpack.c.bf16 %v7518, %v7517
  %v7676 = vpack.c.bf16 %v7520, %v7519
  %v7677 = vpack.c.bf16 %v7522, %v7521
  %v7678 = vpack.c.bf16 %v7524, %v7523
  %v7679 = vpack.c.bf16 %v7526, %v7525
  %v7680 = vpack.c.bf16 %v7528, %v7527
  %v7681 = vpack.c.bf16 %v7530, %v7529
  %v7682 = vpack.c.bf16 %v7532, %v7531
  %v7683 = vpack.c.bf16 %v7534, %v7533
  %v7684 = vpack.c.bf16 %v7536, %v7535
  %v7685 = vpack.c.bf16 %v7538, %v7537
  %v7686 = vpack.c.bf16 %v7540, %v7539
  %v7687 = vpack.c.bf16 %v7542, %v7541
  %v7688 = vpack.c.bf16 %v7544, %v7543
  %v7689 = vpack.c.bf16 %v7546, %v7545
  %v7690 = vpack.c.bf16 %v7548, %v7547
  %v7691 = vpack.c.bf16 %v7550, %v7549
  %v7692 = vpack.c.bf16 %v7552, %v7551
  %v7693 = vpack.c.bf16 %v7554, %v7553
  %v7694 = vpack.c.bf16 %v7556, %v7555
  %v7695 = vpack.c.bf16 %v7558, %v7557
  %s7696 = scalar_lea.vmem [#allocation3], 64
  %7697 = vst [vmem:[%s7696] sm:$0xff] %v7576
  %7698 = vst [vmem:[%s7696 + $0x8] sm:$0xff] %v7577
  %7699 = vst [vmem:[%s7696 + $0x10] sm:$0xff] %v7578
  %7700 = vst [vmem:[%s7696 + $0x18] sm:$0xff] %v7579
  %7701 = vst [vmem:[%s7696 + $0x20] sm:$0xff] %v7580
  %7702 = vst [vmem:[%s7696 + $0x28] sm:$0xff] %v7581
  %7703 = vst [vmem:[%s7696 + $0x30] sm:$0xff] %v7582
  %7704 = vst [vmem:[%s7696 + $0x38] sm:$0xff] %v7583
  %7705 = vst [vmem:[%s7696 + $0x40] sm:$0xff] %v7584
  %7706 = vst [vmem:[%s7696 + $0x48] sm:$0xff] %v7585
  %7707 = vst [vmem:[%s7696 + $0x50] sm:$0xff] %v7586
  %7708 = vst [vmem:[%s7696 + $0x58] sm:$0xff] %v7587
  %7709 = vst [vmem:[%s7696 + $0x60] sm:$0xff] %v7588
  %7710 = vst [vmem:[%s7696 + $0x68] sm:$0xff] %v7589
  %7711 = vst [vmem:[%s7696 + $0x70] sm:$0xff] %v7590
  %7712 = vst [vmem:[%s7696 + $0x78] sm:$0xff] %v7591
  %7713 = vst [vmem:[%s7696 + $0x80] sm:$0xff] %v7592
  %7714 = vst [vmem:[%s7696 + $0x88] sm:$0xff] %v7593
  %7715 = vst [vmem:[%s7696 + $0x90] sm:$0xff] %v7594
  %7716 = vst [vmem:[%s7696 + $0x98] sm:$0xff] %v7595
  %7717 = vst [vmem:[%s7696 + $0xa0] sm:$0xff] %v7596
  %7718 = vst [vmem:[%s7696 + $0xa8] sm:$0xff] %v7597
  %7719 = vst [vmem:[%s7696 + $0xb0] sm:$0xff] %v7598
  %7720 = vst [vmem:[%s7696 + $0xb8] sm:$0xff] %v7599
  %7721 = vst [vmem:[%s7696 + $0xc0] sm:$0xff] %v7600
  %7722 = vst [vmem:[%s7696 + $0xc8] sm:$0xff] %v7601
  %7723 = vst [vmem:[%s7696 + $0xd0] sm:$0xff] %v7602
  %7724 = vst [vmem:[%s7696 + $0xd8] sm:$0xff] %v7603
  %7725 = vst [vmem:[%s7696 + $0xe0] sm:$0xff] %v7604
  %7726 = vst [vmem:[%s7696 + $0xe8] sm:$0xff] %v7605
  %7727 = vst [vmem:[%s7696 + $0xf0] sm:$0xff] %v7606
  %7728 = vst [vmem:[%s7696 + $0xf8] sm:$0xff] %v7607
  %7729 = vst [vmem:[%s7696 + $0x100] sm:$0xff] %v7608
  %7730 = vst [vmem:[%s7696 + $0x108] sm:$0xff] %v7609
  %7731 = vst [vmem:[%s7696 + $0x110] sm:$0xff] %v7610
  %7732 = vst [vmem:[%s7696 + $0x118] sm:$0xff] %v7611
  %7733 = vst [vmem:[%s7696 + $0x120] sm:$0xff] %v7612
  %7734 = vst [vmem:[%s7696 + $0x128] sm:$0xff] %v7613
  %7735 = vst [vmem:[%s7696 + $0x130] sm:$0xff] %v7614
  %7736 = vst [vmem:[%s7696 + $0x138] sm:$0xff] %v7615
  %7737 = vst [vmem:[%s7696 + $0x140] sm:$0xff] %v7616
  %7738 = vst [vmem:[%s7696 + $0x148] sm:$0xff] %v7617
  %7739 = vst [vmem:[%s7696 + $0x150] sm:$0xff] %v7618
  %7740 = vst [vmem:[%s7696 + $0x158] sm:$0xff] %v7619
  %7741 = vst [vmem:[%s7696 + $0x160] sm:$0xff] %v7620
  %7742 = vst [vmem:[%s7696 + $0x168] sm:$0xff] %v7621
  %7743 = vst [vmem:[%s7696 + $0x170] sm:$0xff] %v7622
  %7744 = vst [vmem:[%s7696 + $0x178] sm:$0xff] %v7623
  %7745 = vst [vmem:[%s7696 + $0x180] sm:$0xff] %v7624
  %7746 = vst [vmem:[%s7696 + $0x188] sm:$0xff] %v7625
  %7747 = vst [vmem:[%s7696 + $0x190] sm:$0xff] %v7626
  %7748 = vst [vmem:[%s7696 + $0x198] sm:$0xff] %v7627
  %7749 = vst [vmem:[%s7696 + $0x1a0] sm:$0xff] %v7628
  %7750 = vst [vmem:[%s7696 + $0x1a8] sm:$0xff] %v7629
  %7751 = vst [vmem:[%s7696 + $0x1b0] sm:$0xff] %v7630
  %7752 = vst [vmem:[%s7696 + $0x1b8] sm:$0xff] %v7631
  %7753 = vst [vmem:[%s7696 + $0x1c0] sm:$0xff] %v7632
  %7754 = vst [vmem:[%s7696 + $0x1c8] sm:$0xff] %v7633
  %7755 = vst [vmem:[%s7696 + $0x1d0] sm:$0xff] %v7634
  %7756 = vst [vmem:[%s7696 + $0x1d8] sm:$0xff] %v7635
  %7757 = vst [vmem:[%s7696 + $0x1e0] sm:$0xff] %v7636
  %7758 = vst [vmem:[%s7696 + $0x1e8] sm:$0xff] %v7637
  %7759 = vst [vmem:[%s7696 + $0x1f0] sm:$0xff] %v7638
  %7760 = vst [vmem:[%s7696 + $0x1f8] sm:$0xff] %v7639
  %7761 = vst [vmem:[%s7696 + $0x200] sm:$0xff] %v7640
  %7762 = vst [vmem:[%s7696 + $0x208] sm:$0xff] %v7641
  %7763 = vst [vmem:[%s7696 + $0x210] sm:$0xff] %v7642
  %7764 = vst [vmem:[%s7696 + $0x218] sm:$0xff] %v7643
  %7765 = vst [vmem:[%s7696 + $0x220] sm:$0xff] %v7644
  %7766 = vst [vmem:[%s7696 + $0x228] sm:$0xff] %v7645
  %7767 = vst [vmem:[%s7696 + $0x230] sm:$0xff] %v7646
  %7768 = vst [vmem:[%s7696 + $0x238] sm:$0xff] %v7647
  %7769 = vst [vmem:[%s7696 + $0x240] sm:$0xff] %v7648
  %7770 = vst [vmem:[%s7696 + $0x248] sm:$0xff] %v7649
  %7771 = vst [vmem:[%s7696 + $0x250] sm:$0xff] %v7650
  %7772 = vst [vmem:[%s7696 + $0x258] sm:$0xff] %v7651
  %7773 = vst [vmem:[%s7696 + $0x260] sm:$0xff] %v7652
  %7774 = vst [vmem:[%s7696 + $0x268] sm:$0xff] %v7653
  %7775 = vst [vmem:[%s7696 + $0x270] sm:$0xff] %v7654
  %7776 = vst [vmem:[%s7696 + $0x278] sm:$0xff] %v7655
  %7777 = vst [vmem:[%s7696 + $0x280] sm:$0xff] %v7656
  %7778 = vst [vmem:[%s7696 + $0x288] sm:$0xff] %v7657
  %7779 = vst [vmem:[%s7696 + $0x290] sm:$0xff] %v7658
  %7780 = vst [vmem:[%s7696 + $0x298] sm:$0xff] %v7659
  %7781 = vst [vmem:[%s7696 + $0x2a0] sm:$0xff] %v7660
  %7782 = vst [vmem:[%s7696 + $0x2a8] sm:$0xff] %v7661
  %7783 = vst [vmem:[%s7696 + $0x2b0] sm:$0xff] %v7662
  %7784 = vst [vmem:[%s7696 + $0x2b8] sm:$0xff] %v7663
  %7785 = vst [vmem:[%s7696 + $0x2c0] sm:$0xff] %v7664
  %7786 = vst [vmem:[%s7696 + $0x2c8] sm:$0xff] %v7665
  %7787 = vst [vmem:[%s7696 + $0x2d0] sm:$0xff] %v7666
  %7788 = vst [vmem:[%s7696 + $0x2d8] sm:$0xff] %v7667
  %7789 = vst [vmem:[%s7696 + $0x2e0] sm:$0xff] %v7668
  %7790 = vst [vmem:[%s7696 + $0x2e8] sm:$0xff] %v7669
  %7791 = vst [vmem:[%s7696 + $0x2f0] sm:$0xff] %v7670
  %7792 = vst [vmem:[%s7696 + $0x2f8] sm:$0xff] %v7671
  %7793 = vst [vmem:[%s7696 + $0x300] sm:$0xff] %v7672
  %7794 = vst [vmem:[%s7696 + $0x308] sm:$0xff] %v7673
  %7795 = vst [vmem:[%s7696 + $0x310] sm:$0xff] %v7674
  %7796 = vst [vmem:[%s7696 + $0x318] sm:$0xff] %v7675
  %7797 = vst [vmem:[%s7696 + $0x320] sm:$0xff] %v7676
  %7798 = vst [vmem:[%s7696 + $0x328] sm:$0xff] %v7677
  %7799 = vst [vmem:[%s7696 + $0x330] sm:$0xff] %v7678
  %7800 = vst [vmem:[%s7696 + $0x338] sm:$0xff] %v7679
  %7801 = vst [vmem:[%s7696 + $0x340] sm:$0xff] %v7680
  %7802 = vst [vmem:[%s7696 + $0x348] sm:$0xff] %v7681
  %7803 = vst [vmem:[%s7696 + $0x350] sm:$0xff] %v7682
  %7804 = vst [vmem:[%s7696 + $0x358] sm:$0xff] %v7683
  %7805 = vst [vmem:[%s7696 + $0x360] sm:$0xff] %v7684
  %7806 = vst [vmem:[%s7696 + $0x368] sm:$0xff] %v7685
  %7807 = vst [vmem:[%s7696 + $0x370] sm:$0xff] %v7686
  %7808 = vst [vmem:[%s7696 + $0x378] sm:$0xff] %v7687
  %7809 = vst [vmem:[%s7696 + $0x380] sm:$0xff] %v7688
  %7810 = vst [vmem:[%s7696 + $0x388] sm:$0xff] %v7689
  %7811 = vst [vmem:[%s7696 + $0x390] sm:$0xff] %v7690
  %7812 = vst [vmem:[%s7696 + $0x398] sm:$0xff] %v7691
  %7813 = vst [vmem:[%s7696 + $0x3a0] sm:$0xff] %v7692
  %7814 = vst [vmem:[%s7696 + $0x3a8] sm:$0xff] %v7693
  %7815 = vst [vmem:[%s7696 + $0x3b0] sm:$0xff] %v7694
  %7816 = vst [vmem:[%s7696 + $0x3b8] sm:$0xff] %v7695
  %v7817 = vld [vmem:[#allocation3] sm:$0xff]
  %v7818 = vld [vmem:[#allocation3 + $0x8] sm:$0xff]
  %v7819 = vld [vmem:[#allocation3 + $0x10] sm:$0xff]
  %v7820 = vld [vmem:[#allocation3 + $0x18] sm:$0xff]
  %v7821 = vld [vmem:[#allocation3 + $0x20] sm:$0xff]
  %v7822 = vld [vmem:[#allocation3 + $0x28] sm:$0xff]
  %v7823 = vld [vmem:[#allocation3 + $0x30] sm:$0xff]
  %v7824 = vld [vmem:[#allocation3 + $0x38] sm:$0xff]
  %v7825 = vld [vmem:[#allocation3 + $0x40] sm:$0xff]
  %v7826 = vld [vmem:[#allocation3 + $0x48] sm:$0xff]
  %v7827 = vld [vmem:[#allocation3 + $0x50] sm:$0xff]
  %v7828 = vld [vmem:[#allocation3 + $0x58] sm:$0xff]
  %v7829 = vld [vmem:[#allocation3 + $0x60] sm:$0xff]
  %v7830 = vld [vmem:[#allocation3 + $0x68] sm:$0xff]
  %v7831 = vld [vmem:[#allocation3 + $0x70] sm:$0xff]
  %v7832 = vld [vmem:[#allocation3 + $0x78] sm:$0xff]
  %v7833 = vld [vmem:[#allocation3 + $0x80] sm:$0xff]
  %v7834 = vld [vmem:[#allocation3 + $0x88] sm:$0xff]
  %v7835 = vld [vmem:[#allocation3 + $0x90] sm:$0xff]
  %v7836 = vld [vmem:[#allocation3 + $0x98] sm:$0xff]
  %v7837 = vld [vmem:[#allocation3 + $0xa0] sm:$0xff]
  %v7838 = vld [vmem:[#allocation3 + $0xa8] sm:$0xff]
  %v7839 = vld [vmem:[#allocation3 + $0xb0] sm:$0xff]
  %v7840 = vld [vmem:[#allocation3 + $0xb8] sm:$0xff]
  %v7841 = vld [vmem:[#allocation3 + $0xc0] sm:$0xff]
  %v7842 = vld [vmem:[#allocation3 + $0xc8] sm:$0xff]
  %v7843 = vld [vmem:[#allocation3 + $0xd0] sm:$0xff]
  %v7844 = vld [vmem:[#allocation3 + $0xd8] sm:$0xff]
  %v7845 = vld [vmem:[#allocation3 + $0xe0] sm:$0xff]
  %v7846 = vld [vmem:[#allocation3 + $0xe8] sm:$0xff]
  %v7847 = vld [vmem:[#allocation3 + $0xf0] sm:$0xff]
  %v7848 = vld [vmem:[#allocation3 + $0xf8] sm:$0xff]
  %v7849 = vld [vmem:[#allocation3 + $0x100] sm:$0xff]
  %v7850 = vld [vmem:[#allocation3 + $0x108] sm:$0xff]
  %v7851 = vld [vmem:[#allocation3 + $0x110] sm:$0xff]
  %v7852 = vld [vmem:[#allocation3 + $0x118] sm:$0xff]
  %v7853 = vld [vmem:[#allocation3 + $0x120] sm:$0xff]
  %v7854 = vld [vmem:[#allocation3 + $0x128] sm:$0xff]
  %v7855 = vld [vmem:[#allocation3 + $0x130] sm:$0xff]
  %v7856 = vld [vmem:[#allocation3 + $0x138] sm:$0xff]
  %v7857 = vld [vmem:[#allocation3 + $0x140] sm:$0xff]
  %v7858 = vld [vmem:[#allocation3 + $0x148] sm:$0xff]
  %v7859 = vld [vmem:[#allocation3 + $0x150] sm:$0xff]
  %v7860 = vld [vmem:[#allocation3 + $0x158] sm:$0xff]
  %v7861 = vld [vmem:[#allocation3 + $0x160] sm:$0xff]
  %v7862 = vld [vmem:[#allocation3 + $0x168] sm:$0xff]
  %v7863 = vld [vmem:[#allocation3 + $0x170] sm:$0xff]
  %v7864 = vld [vmem:[#allocation3 + $0x178] sm:$0xff]
  %v7865 = vld [vmem:[#allocation3 + $0x180] sm:$0xff]
  %v7866 = vld [vmem:[#allocation3 + $0x188] sm:$0xff]
  %v7867 = vld [vmem:[#allocation3 + $0x190] sm:$0xff]
  %v7868 = vld [vmem:[#allocation3 + $0x198] sm:$0xff]
  %v7869 = vld [vmem:[#allocation3 + $0x1a0] sm:$0xff]
  %v7870 = vld [vmem:[#allocation3 + $0x1a8] sm:$0xff]
  %v7871 = vld [vmem:[#allocation3 + $0x1b0] sm:$0xff]
  %v7872 = vld [vmem:[#allocation3 + $0x1b8] sm:$0xff]
  %v7873 = vld [vmem:[#allocation3 + $0x1c0] sm:$0xff]
  %v7874 = vld [vmem:[#allocation3 + $0x1c8] sm:$0xff]
  %v7875 = vld [vmem:[#allocation3 + $0x1d0] sm:$0xff]
  %v7876 = vld [vmem:[#allocation3 + $0x1d8] sm:$0xff]
  %v7877 = vld [vmem:[#allocation3 + $0x1e0] sm:$0xff]
  %v7878 = vld [vmem:[#allocation3 + $0x1e8] sm:$0xff]
  %v7879 = vld [vmem:[#allocation3 + $0x1f0] sm:$0xff]
  %v7880 = vld [vmem:[#allocation3 + $0x1f8] sm:$0xff]
  %v7881 = vld [vmem:[#allocation3 + $0x200] sm:$0xff]
  %v7882 = vld [vmem:[#allocation3 + $0x208] sm:$0xff]
  %v7883 = vld [vmem:[#allocation3 + $0x210] sm:$0xff]
  %v7884 = vld [vmem:[#allocation3 + $0x218] sm:$0xff]
  %v7885 = vld [vmem:[#allocation3 + $0x220] sm:$0xff]
  %v7886 = vld [vmem:[#allocation3 + $0x228] sm:$0xff]
  %v7887 = vld [vmem:[#allocation3 + $0x230] sm:$0xff]
  %v7888 = vld [vmem:[#allocation3 + $0x238] sm:$0xff]
  %v7889 = vld [vmem:[#allocation3 + $0x240] sm:$0xff]
  %v7890 = vld [vmem:[#allocation3 + $0x248] sm:$0xff]
  %v7891 = vld [vmem:[#allocation3 + $0x250] sm:$0xff]
  %v7892 = vld [vmem:[#allocation3 + $0x258] sm:$0xff]
  %v7893 = vld [vmem:[#allocation3 + $0x260] sm:$0xff]
  %v7894 = vld [vmem:[#allocation3 + $0x268] sm:$0xff]
  %v7895 = vld [vmem:[#allocation3 + $0x270] sm:$0xff]
  %v7896 = vld [vmem:[#allocation3 + $0x278] sm:$0xff]
  %v7897 = vld [vmem:[#allocation3 + $0x280] sm:$0xff]
  %v7898 = vld [vmem:[#allocation3 + $0x288] sm:$0xff]
  %v7899 = vld [vmem:[#allocation3 + $0x290] sm:$0xff]
  %v7900 = vld [vmem:[#allocation3 + $0x298] sm:$0xff]
  %v7901 = vld [vmem:[#allocation3 + $0x2a0] sm:$0xff]
  %v7902 = vld [vmem:[#allocation3 + $0x2a8] sm:$0xff]
  %v7903 = vld [vmem:[#allocation3 + $0x2b0] sm:$0xff]
  %v7904 = vld [vmem:[#allocation3 + $0x2b8] sm:$0xff]
  %v7905 = vld [vmem:[#allocation3 + $0x2c0] sm:$0xff]
  %v7906 = vld [vmem:[#allocation3 + $0x2c8] sm:$0xff]
  %v7907 = vld [vmem:[#allocation3 + $0x2d0] sm:$0xff]
  %v7908 = vld [vmem:[#allocation3 + $0x2d8] sm:$0xff]
  %v7909 = vld [vmem:[#allocation3 + $0x2e0] sm:$0xff]
  %v7910 = vld [vmem:[#allocation3 + $0x2e8] sm:$0xff]
  %v7911 = vld [vmem:[#allocation3 + $0x2f0] sm:$0xff]
  %v7912 = vld [vmem:[#allocation3 + $0x2f8] sm:$0xff]
  %v7913 = vld [vmem:[#allocation3 + $0x300] sm:$0xff]
  %v7914 = vld [vmem:[#allocation3 + $0x308] sm:$0xff]
  %v7915 = vld [vmem:[#allocation3 + $0x310] sm:$0xff]
  %v7916 = vld [vmem:[#allocation3 + $0x318] sm:$0xff]
  %v7917 = vld [vmem:[#allocation3 + $0x320] sm:$0xff]
  %v7918 = vld [vmem:[#allocation3 + $0x328] sm:$0xff]
  %v7919 = vld [vmem:[#allocation3 + $0x330] sm:$0xff]
  %v7920 = vld [vmem:[#allocation3 + $0x338] sm:$0xff]
  %v7921 = vld [vmem:[#allocation3 + $0x340] sm:$0xff]
  %v7922 = vld [vmem:[#allocation3 + $0x348] sm:$0xff]
  %v7923 = vld [vmem:[#allocation3 + $0x350] sm:$0xff]
  %v7924 = vld [vmem:[#allocation3 + $0x358] sm:$0xff]
  %v7925 = vld [vmem:[#allocation3 + $0x360] sm:$0xff]
  %v7926 = vld [vmem:[#allocation3 + $0x368] sm:$0xff]
  %v7927 = vld [vmem:[#allocation3 + $0x370] sm:$0xff]
  %v7928 = vld [vmem:[#allocation3 + $0x378] sm:$0xff]
  %v7929 = vld [vmem:[#allocation3 + $0x380] sm:$0xff]
  %v7930 = vld [vmem:[#allocation3 + $0x388] sm:$0xff]
  %v7931 = vld [vmem:[#allocation3 + $0x390] sm:$0xff]
  %v7932 = vld [vmem:[#allocation3 + $0x398] sm:$0xff]
  %v7933 = vld [vmem:[#allocation3 + $0x3a0] sm:$0xff]
  %v7934 = vld [vmem:[#allocation3 + $0x3a8] sm:$0xff]
  %v7935 = vld [vmem:[#allocation3 + $0x3b0] sm:$0xff]
  %v7936 = vld [vmem:[#allocation3 + $0x3b8] sm:$0xff]
  %v7937 = vld [vmem:[%s7696] sm:$0xff]
  %v7938 = vld [vmem:[%s7696 + $0x8] sm:$0xff]
  %v7939 = vld [vmem:[%s7696 + $0x10] sm:$0xff]
  %v7940 = vld [vmem:[%s7696 + $0x18] sm:$0xff]
  %v7941 = vld [vmem:[%s7696 + $0x20] sm:$0xff]
  %v7942 = vld [vmem:[%s7696 + $0x28] sm:$0xff]
  %v7943 = vld [vmem:[%s7696 + $0x30] sm:$0xff]
  %v7944 = vld [vmem:[%s7696 + $0x38] sm:$0xff]
  %v7945 = vld [vmem:[%s7696 + $0x40] sm:$0xff]
  %v7946 = vld [vmem:[%s7696 + $0x48] sm:$0xff]
  %v7947 = vld [vmem:[%s7696 + $0x50] sm:$0xff]
  %v7948 = vld [vmem:[%s7696 + $0x58] sm:$0xff]
  %v7949 = vld [vmem:[%s7696 + $0x60] sm:$0xff]
  %v7950 = vld [vmem:[%s7696 + $0x68] sm:$0xff]
  %v7951 = vld [vmem:[%s7696 + $0x70] sm:$0xff]
  %v7952 = vld [vmem:[%s7696 + $0x78] sm:$0xff]
  %v7953 = vld [vmem:[%s7696 + $0x80] sm:$0xff]
  %v7954 = vld [vmem:[%s7696 + $0x88] sm:$0xff]
  %v7955 = vld [vmem:[%s7696 + $0x90] sm:$0xff]
  %v7956 = vld [vmem:[%s7696 + $0x98] sm:$0xff]
  %v7957 = vld [vmem:[%s7696 + $0xa0] sm:$0xff]
  %v7958 = vld [vmem:[%s7696 + $0xa8] sm:$0xff]
  %v7959 = vld [vmem:[%s7696 + $0xb0] sm:$0xff]
  %v7960 = vld [vmem:[%s7696 + $0xb8] sm:$0xff]
  %v7961 = vld [vmem:[%s7696 + $0xc0] sm:$0xff]
  %v7962 = vld [vmem:[%s7696 + $0xc8] sm:$0xff]
  %v7963 = vld [vmem:[%s7696 + $0xd0] sm:$0xff]
  %v7964 = vld [vmem:[%s7696 + $0xd8] sm:$0xff]
  %v7965 = vld [vmem:[%s7696 + $0xe0] sm:$0xff]
  %v7966 = vld [vmem:[%s7696 + $0xe8] sm:$0xff]
  %v7967 = vld [vmem:[%s7696 + $0xf0] sm:$0xff]
  %v7968 = vld [vmem:[%s7696 + $0xf8] sm:$0xff]
  %v7969 = vld [vmem:[%s7696 + $0x100] sm:$0xff]
  %v7970 = vld [vmem:[%s7696 + $0x108] sm:$0xff]
  %v7971 = vld [vmem:[%s7696 + $0x110] sm:$0xff]
  %v7972 = vld [vmem:[%s7696 + $0x118] sm:$0xff]
  %v7973 = vld [vmem:[%s7696 + $0x120] sm:$0xff]
  %v7974 = vld [vmem:[%s7696 + $0x128] sm:$0xff]
  %v7975 = vld [vmem:[%s7696 + $0x130] sm:$0xff]
  %v7976 = vld [vmem:[%s7696 + $0x138] sm:$0xff]
  %v7977 = vld [vmem:[%s7696 + $0x140] sm:$0xff]
  %v7978 = vld [vmem:[%s7696 + $0x148] sm:$0xff]
  %v7979 = vld [vmem:[%s7696 + $0x150] sm:$0xff]
  %v7980 = vld [vmem:[%s7696 + $0x158] sm:$0xff]
  %v7981 = vld [vmem:[%s7696 + $0x160] sm:$0xff]
  %v7982 = vld [vmem:[%s7696 + $0x168] sm:$0xff]
  %v7983 = vld [vmem:[%s7696 + $0x170] sm:$0xff]
  %v7984 = vld [vmem:[%s7696 + $0x178] sm:$0xff]
  %v7985 = vld [vmem:[%s7696 + $0x180] sm:$0xff]
  %v7986 = vld [vmem:[%s7696 + $0x188] sm:$0xff]
  %v7987 = vld [vmem:[%s7696 + $0x190] sm:$0xff]
  %v7988 = vld [vmem:[%s7696 + $0x198] sm:$0xff]
  %v7989 = vld [vmem:[%s7696 + $0x1a0] sm:$0xff]
  %v7990 = vld [vmem:[%s7696 + $0x1a8] sm:$0xff]
  %v7991 = vld [vmem:[%s7696 + $0x1b0] sm:$0xff]
  %v7992 = vld [vmem:[%s7696 + $0x1b8] sm:$0xff]
  %v7993 = vld [vmem:[%s7696 + $0x1c0] sm:$0xff]
  %v7994 = vld [vmem:[%s7696 + $0x1c8] sm:$0xff]
  %v7995 = vld [vmem:[%s7696 + $0x1d0] sm:$0xff]
  %v7996 = vld [vmem:[%s7696 + $0x1d8] sm:$0xff]
  %v7997 = vld [vmem:[%s7696 + $0x1e0] sm:$0xff]
  %v7998 = vld [vmem:[%s7696 + $0x1e8] sm:$0xff]
  %v7999 = vld [vmem:[%s7696 + $0x1f0] sm:$0xff]
  %v8000 = vld [vmem:[%s7696 + $0x1f8] sm:$0xff]
  %v8001 = vld [vmem:[%s7696 + $0x200] sm:$0xff]
  %v8002 = vld [vmem:[%s7696 + $0x208] sm:$0xff]
  %v8003 = vld [vmem:[%s7696 + $0x210] sm:$0xff]
  %v8004 = vld [vmem:[%s7696 + $0x218] sm:$0xff]
  %v8005 = vld [vmem:[%s7696 + $0x220] sm:$0xff]
  %v8006 = vld [vmem:[%s7696 + $0x228] sm:$0xff]
  %v8007 = vld [vmem:[%s7696 + $0x230] sm:$0xff]
  %v8008 = vld [vmem:[%s7696 + $0x238] sm:$0xff]
  %v8009 = vld [vmem:[%s7696 + $0x240] sm:$0xff]
  %v8010 = vld [vmem:[%s7696 + $0x248] sm:$0xff]
  %v8011 = vld [vmem:[%s7696 + $0x250] sm:$0xff]
  %v8012 = vld [vmem:[%s7696 + $0x258] sm:$0xff]
  %v8013 = vld [vmem:[%s7696 + $0x260] sm:$0xff]
  %v8014 = vld [vmem:[%s7696 + $0x268] sm:$0xff]
  %v8015 = vld [vmem:[%s7696 + $0x270] sm:$0xff]
  %v8016 = vld [vmem:[%s7696 + $0x278] sm:$0xff]
  %v8017 = vld [vmem:[%s7696 + $0x280] sm:$0xff]
  %v8018 = vld [vmem:[%s7696 + $0x288] sm:$0xff]
  %v8019 = vld [vmem:[%s7696 + $0x290] sm:$0xff]
  %v8020 = vld [vmem:[%s7696 + $0x298] sm:$0xff]
  %v8021 = vld [vmem:[%s7696 + $0x2a0] sm:$0xff]
  %v8022 = vld [vmem:[%s7696 + $0x2a8] sm:$0xff]
  %v8023 = vld [vmem:[%s7696 + $0x2b0] sm:$0xff]
  %v8024 = vld [vmem:[%s7696 + $0x2b8] sm:$0xff]
  %v8025 = vld [vmem:[%s7696 + $0x2c0] sm:$0xff]
  %v8026 = vld [vmem:[%s7696 + $0x2c8] sm:$0xff]
  %v8027 = vld [vmem:[%s7696 + $0x2d0] sm:$0xff]
  %v8028 = vld [vmem:[%s7696 + $0x2d8] sm:$0xff]
  %v8029 = vld [vmem:[%s7696 + $0x2e0] sm:$0xff]
  %v8030 = vld [vmem:[%s7696 + $0x2e8] sm:$0xff]
  %v8031 = vld [vmem:[%s7696 + $0x2f0] sm:$0xff]
  %v8032 = vld [vmem:[%s7696 + $0x2f8] sm:$0xff]
  %v8033 = vld [vmem:[%s7696 + $0x300] sm:$0xff]
  %v8034 = vld [vmem:[%s7696 + $0x308] sm:$0xff]
  %v8035 = vld [vmem:[%s7696 + $0x310] sm:$0xff]
  %v8036 = vld [vmem:[%s7696 + $0x318] sm:$0xff]
  %v8037 = vld [vmem:[%s7696 + $0x320] sm:$0xff]
  %v8038 = vld [vmem:[%s7696 + $0x328] sm:$0xff]
  %v8039 = vld [vmem:[%s7696 + $0x330] sm:$0xff]
  %v8040 = vld [vmem:[%s7696 + $0x338] sm:$0xff]
  %v8041 = vld [vmem:[%s7696 + $0x340] sm:$0xff]
  %v8042 = vld [vmem:[%s7696 + $0x348] sm:$0xff]
  %v8043 = vld [vmem:[%s7696 + $0x350] sm:$0xff]
  %v8044 = vld [vmem:[%s7696 + $0x358] sm:$0xff]
  %v8045 = vld [vmem:[%s7696 + $0x360] sm:$0xff]
  %v8046 = vld [vmem:[%s7696 + $0x368] sm:$0xff]
  %v8047 = vld [vmem:[%s7696 + $0x370] sm:$0xff]
  %v8048 = vld [vmem:[%s7696 + $0x378] sm:$0xff]
  %v8049 = vld [vmem:[%s7696 + $0x380] sm:$0xff]
  %v8050 = vld [vmem:[%s7696 + $0x388] sm:$0xff]
  %v8051 = vld [vmem:[%s7696 + $0x390] sm:$0xff]
  %v8052 = vld [vmem:[%s7696 + $0x398] sm:$0xff]
  %v8053 = vld [vmem:[%s7696 + $0x3a0] sm:$0xff]
  %v8054 = vld [vmem:[%s7696 + $0x3a8] sm:$0xff]
  %v8055 = vld [vmem:[%s7696 + $0x3b0] sm:$0xff]
  %v8056 = vld [vmem:[%s7696 + $0x3b8] sm:$0xff]
  %s8057 = scalar_lea.vmem [#allocation3], 128
  %v8058 = vld [vmem:[%s8057] sm:$0xff]
  %v8059 = vld [vmem:[%s8057 + $0x8] sm:$0xff]
  %v8060 = vld [vmem:[%s8057 + $0x10] sm:$0xff]
  %v8061 = vld [vmem:[%s8057 + $0x18] sm:$0xff]
  %v8062 = vld [vmem:[%s8057 + $0x20] sm:$0xff]
  %v8063 = vld [vmem:[%s8057 + $0x28] sm:$0xff]
  %v8064 = vld [vmem:[%s8057 + $0x30] sm:$0xff]
  %v8065 = vld [vmem:[%s8057 + $0x38] sm:$0xff]
  %v8066 = vld [vmem:[%s8057 + $0x40] sm:$0xff]
  %v8067 = vld [vmem:[%s8057 + $0x48] sm:$0xff]
  %v8068 = vld [vmem:[%s8057 + $0x50] sm:$0xff]
  %v8069 = vld [vmem:[%s8057 + $0x58] sm:$0xff]
  %v8070 = vld [vmem:[%s8057 + $0x60] sm:$0xff]
  %v8071 = vld [vmem:[%s8057 + $0x68] sm:$0xff]
  %v8072 = vld [vmem:[%s8057 + $0x70] sm:$0xff]
  %v8073 = vld [vmem:[%s8057 + $0x78] sm:$0xff]
  %v8074 = vld [vmem:[%s8057 + $0x80] sm:$0xff]
  %v8075 = vld [vmem:[%s8057 + $0x88] sm:$0xff]
  %v8076 = vld [vmem:[%s8057 + $0x90] sm:$0xff]
  %v8077 = vld [vmem:[%s8057 + $0x98] sm:$0xff]
  %v8078 = vld [vmem:[%s8057 + $0xa0] sm:$0xff]
  %v8079 = vld [vmem:[%s8057 + $0xa8] sm:$0xff]
  %v8080 = vld [vmem:[%s8057 + $0xb0] sm:$0xff]
  %v8081 = vld [vmem:[%s8057 + $0xb8] sm:$0xff]
  %v8082 = vld [vmem:[%s8057 + $0xc0] sm:$0xff]
  %v8083 = vld [vmem:[%s8057 + $0xc8] sm:$0xff]
  %v8084 = vld [vmem:[%s8057 + $0xd0] sm:$0xff]
  %v8085 = vld [vmem:[%s8057 + $0xd8] sm:$0xff]
  %v8086 = vld [vmem:[%s8057 + $0xe0] sm:$0xff]
  %v8087 = vld [vmem:[%s8057 + $0xe8] sm:$0xff]
  %v8088 = vld [vmem:[%s8057 + $0xf0] sm:$0xff]
  %v8089 = vld [vmem:[%s8057 + $0xf8] sm:$0xff]
  %v8090 = vld [vmem:[%s8057 + $0x100] sm:$0xff]
  %v8091 = vld [vmem:[%s8057 + $0x108] sm:$0xff]
  %v8092 = vld [vmem:[%s8057 + $0x110] sm:$0xff]
  %v8093 = vld [vmem:[%s8057 + $0x118] sm:$0xff]
  %v8094 = vld [vmem:[%s8057 + $0x120] sm:$0xff]
  %v8095 = vld [vmem:[%s8057 + $0x128] sm:$0xff]
  %v8096 = vld [vmem:[%s8057 + $0x130] sm:$0xff]
  %v8097 = vld [vmem:[%s8057 + $0x138] sm:$0xff]
  %v8098 = vld [vmem:[%s8057 + $0x140] sm:$0xff]
  %v8099 = vld [vmem:[%s8057 + $0x148] sm:$0xff]
  %v8100 = vld [vmem:[%s8057 + $0x150] sm:$0xff]
  %v8101 = vld [vmem:[%s8057 + $0x158] sm:$0xff]
  %v8102 = vld [vmem:[%s8057 + $0x160] sm:$0xff]
  %v8103 = vld [vmem:[%s8057 + $0x168] sm:$0xff]
  %v8104 = vld [vmem:[%s8057 + $0x170] sm:$0xff]
  %v8105 = vld [vmem:[%s8057 + $0x178] sm:$0xff]
  %v8106 = vld [vmem:[%s8057 + $0x180] sm:$0xff]
  %v8107 = vld [vmem:[%s8057 + $0x188] sm:$0xff]
  %v8108 = vld [vmem:[%s8057 + $0x190] sm:$0xff]
  %v8109 = vld [vmem:[%s8057 + $0x198] sm:$0xff]
  %v8110 = vld [vmem:[%s8057 + $0x1a0] sm:$0xff]
  %v8111 = vld [vmem:[%s8057 + $0x1a8] sm:$0xff]
  %v8112 = vld [vmem:[%s8057 + $0x1b0] sm:$0xff]
  %v8113 = vld [vmem:[%s8057 + $0x1b8] sm:$0xff]
  %v8114 = vld [vmem:[%s8057 + $0x1c0] sm:$0xff]
  %v8115 = vld [vmem:[%s8057 + $0x1c8] sm:$0xff]
  %v8116 = vld [vmem:[%s8057 + $0x1d0] sm:$0xff]
  %v8117 = vld [vmem:[%s8057 + $0x1d8] sm:$0xff]
  %v8118 = vld [vmem:[%s8057 + $0x1e0] sm:$0xff]
  %v8119 = vld [vmem:[%s8057 + $0x1e8] sm:$0xff]
  %v8120 = vld [vmem:[%s8057 + $0x1f0] sm:$0xff]
  %v8121 = vld [vmem:[%s8057 + $0x1f8] sm:$0xff]
  %v8122 = vld [vmem:[%s8057 + $0x200] sm:$0xff]
  %v8123 = vld [vmem:[%s8057 + $0x208] sm:$0xff]
  %v8124 = vld [vmem:[%s8057 + $0x210] sm:$0xff]
  %v8125 = vld [vmem:[%s8057 + $0x218] sm:$0xff]
  %v8126 = vld [vmem:[%s8057 + $0x220] sm:$0xff]
  %v8127 = vld [vmem:[%s8057 + $0x228] sm:$0xff]
  %v8128 = vld [vmem:[%s8057 + $0x230] sm:$0xff]
  %v8129 = vld [vmem:[%s8057 + $0x238] sm:$0xff]
  %v8130 = vld [vmem:[%s8057 + $0x240] sm:$0xff]
  %v8131 = vld [vmem:[%s8057 + $0x248] sm:$0xff]
  %v8132 = vld [vmem:[%s8057 + $0x250] sm:$0xff]
  %v8133 = vld [vmem:[%s8057 + $0x258] sm:$0xff]
  %v8134 = vld [vmem:[%s8057 + $0x260] sm:$0xff]
  %v8135 = vld [vmem:[%s8057 + $0x268] sm:$0xff]
  %v8136 = vld [vmem:[%s8057 + $0x270] sm:$0xff]
  %v8137 = vld [vmem:[%s8057 + $0x278] sm:$0xff]
  %v8138 = vld [vmem:[%s8057 + $0x280] sm:$0xff]
  %v8139 = vld [vmem:[%s8057 + $0x288] sm:$0xff]
  %v8140 = vld [vmem:[%s8057 + $0x290] sm:$0xff]
  %v8141 = vld [vmem:[%s8057 + $0x298] sm:$0xff]
  %v8142 = vld [vmem:[%s8057 + $0x2a0] sm:$0xff]
  %v8143 = vld [vmem:[%s8057 + $0x2a8] sm:$0xff]
  %v8144 = vld [vmem:[%s8057 + $0x2b0] sm:$0xff]
  %v8145 = vld [vmem:[%s8057 + $0x2b8] sm:$0xff]
  %v8146 = vld [vmem:[%s8057 + $0x2c0] sm:$0xff]
  %v8147 = vld [vmem:[%s8057 + $0x2c8] sm:$0xff]
  %v8148 = vld [vmem:[%s8057 + $0x2d0] sm:$0xff]
  %v8149 = vld [vmem:[%s8057 + $0x2d8] sm:$0xff]
  %v8150 = vld [vmem:[%s8057 + $0x2e0] sm:$0xff]
  %v8151 = vld [vmem:[%s8057 + $0x2e8] sm:$0xff]
  %v8152 = vld [vmem:[%s8057 + $0x2f0] sm:$0xff]
  %v8153 = vld [vmem:[%s8057 + $0x2f8] sm:$0xff]
  %v8154 = vld [vmem:[%s8057 + $0x300] sm:$0xff]
  %v8155 = vld [vmem:[%s8057 + $0x308] sm:$0xff]
  %v8156 = vld [vmem:[%s8057 + $0x310] sm:$0xff]
  %v8157 = vld [vmem:[%s8057 + $0x318] sm:$0xff]
  %v8158 = vld [vmem:[%s8057 + $0x320] sm:$0xff]
  %v8159 = vld [vmem:[%s8057 + $0x328] sm:$0xff]
  %v8160 = vld [vmem:[%s8057 + $0x330] sm:$0xff]
  %v8161 = vld [vmem:[%s8057 + $0x338] sm:$0xff]
  %v8162 = vld [vmem:[%s8057 + $0x340] sm:$0xff]
  %v8163 = vld [vmem:[%s8057 + $0x348] sm:$0xff]
  %v8164 = vld [vmem:[%s8057 + $0x350] sm:$0xff]
  %v8165 = vld [vmem:[%s8057 + $0x358] sm:$0xff]
  %v8166 = vld [vmem:[%s8057 + $0x360] sm:$0xff]
  %v8167 = vld [vmem:[%s8057 + $0x368] sm:$0xff]
  %v8168 = vld [vmem:[%s8057 + $0x370] sm:$0xff]
  %v8169 = vld [vmem:[%s8057 + $0x378] sm:$0xff]
  %v8170 = vld [vmem:[%s8057 + $0x380] sm:$0xff]
  %v8171 = vld [vmem:[%s8057 + $0x388] sm:$0xff]
  %v8172 = vld [vmem:[%s8057 + $0x390] sm:$0xff]
  %v8173 = vld [vmem:[%s8057 + $0x398] sm:$0xff]
  %v8174 = vld [vmem:[%s8057 + $0x3a0] sm:$0xff]
  %v8175 = vld [vmem:[%s8057 + $0x3a8] sm:$0xff]
  %v8176 = vld [vmem:[%s8057 + $0x3b0] sm:$0xff]
  %v8177 = vld [vmem:[%s8057 + $0x3b8] sm:$0xff]
  %v8298 = vunpack.c.l.b16 %v7817
  %v8299 = vunpack.c.h.b16 %v7817
  %v8300 = vunpack.c.l.b16 %v7818
  %v8301 = vunpack.c.h.b16 %v7818
  %v8302 = vunpack.c.l.b16 %v7819
  %v8303 = vunpack.c.h.b16 %v7819
  %v8304 = vunpack.c.l.b16 %v7820
  %v8305 = vunpack.c.h.b16 %v7820
  %v8306 = vunpack.c.l.b16 %v7821
  %v8307 = vunpack.c.h.b16 %v7821
  %v8308 = vunpack.c.l.b16 %v7822
  %v8309 = vunpack.c.h.b16 %v7822
  %v8310 = vunpack.c.l.b16 %v7823
  %v8311 = vunpack.c.h.b16 %v7823
  %v8312 = vunpack.c.l.b16 %v7824
  %v8313 = vunpack.c.h.b16 %v7824
  %v8314 = vunpack.c.l.b16 %v7825
  %v8315 = vunpack.c.h.b16 %v7825
  %v8316 = vunpack.c.l.b16 %v7826
  %v8317 = vunpack.c.h.b16 %v7826
  %v8318 = vunpack.c.l.b16 %v7827
  %v8319 = vunpack.c.h.b16 %v7827
  %v8320 = vunpack.c.l.b16 %v7828
  %v8321 = vunpack.c.h.b16 %v7828
  %v8322 = vunpack.c.l.b16 %v7829
  %v8323 = vunpack.c.h.b16 %v7829
  %v8324 = vunpack.c.l.b16 %v7830
  %v8325 = vunpack.c.h.b16 %v7830
  %v8326 = vunpack.c.l.b16 %v7831
  %v8327 = vunpack.c.h.b16 %v7831
  %v8328 = vunpack.c.l.b16 %v7832
  %v8329 = vunpack.c.h.b16 %v7832
  %v8330 = vunpack.c.l.b16 %v7833
  %v8331 = vunpack.c.h.b16 %v7833
  %v8332 = vunpack.c.l.b16 %v7834
  %v8333 = vunpack.c.h.b16 %v7834
  %v8334 = vunpack.c.l.b16 %v7835
  %v8335 = vunpack.c.h.b16 %v7835
  %v8336 = vunpack.c.l.b16 %v7836
  %v8337 = vunpack.c.h.b16 %v7836
  %v8338 = vunpack.c.l.b16 %v7837
  %v8339 = vunpack.c.h.b16 %v7837
  %v8340 = vunpack.c.l.b16 %v7838
  %v8341 = vunpack.c.h.b16 %v7838
  %v8342 = vunpack.c.l.b16 %v7839
  %v8343 = vunpack.c.h.b16 %v7839
  %v8344 = vunpack.c.l.b16 %v7840
  %v8345 = vunpack.c.h.b16 %v7840
  %v8346 = vunpack.c.l.b16 %v7841
  %v8347 = vunpack.c.h.b16 %v7841
  %v8348 = vunpack.c.l.b16 %v7842
  %v8349 = vunpack.c.h.b16 %v7842
  %v8350 = vunpack.c.l.b16 %v7843
  %v8351 = vunpack.c.h.b16 %v7843
  %v8352 = vunpack.c.l.b16 %v7844
  %v8353 = vunpack.c.h.b16 %v7844
  %v8354 = vunpack.c.l.b16 %v7845
  %v8355 = vunpack.c.h.b16 %v7845
  %v8356 = vunpack.c.l.b16 %v7846
  %v8357 = vunpack.c.h.b16 %v7846
  %v8358 = vunpack.c.l.b16 %v7847
  %v8359 = vunpack.c.h.b16 %v7847
  %v8360 = vunpack.c.l.b16 %v7848
  %v8361 = vunpack.c.h.b16 %v7848
  %v8362 = vunpack.c.l.b16 %v7849
  %v8363 = vunpack.c.h.b16 %v7849
  %v8364 = vunpack.c.l.b16 %v7850
  %v8365 = vunpack.c.h.b16 %v7850
  %v8366 = vunpack.c.l.b16 %v7851
  %v8367 = vunpack.c.h.b16 %v7851
  %v8368 = vunpack.c.l.b16 %v7852
  %v8369 = vunpack.c.h.b16 %v7852
  %v8370 = vunpack.c.l.b16 %v7853
  %v8371 = vunpack.c.h.b16 %v7853
  %v8372 = vunpack.c.l.b16 %v7854
  %v8373 = vunpack.c.h.b16 %v7854
  %v8374 = vunpack.c.l.b16 %v7855
  %v8375 = vunpack.c.h.b16 %v7855
  %v8376 = vunpack.c.l.b16 %v7856
  %v8377 = vunpack.c.h.b16 %v7856
  %v8378 = vunpack.c.l.b16 %v7857
  %v8379 = vunpack.c.h.b16 %v7857
  %v8380 = vunpack.c.l.b16 %v7858
  %v8381 = vunpack.c.h.b16 %v7858
  %v8382 = vunpack.c.l.b16 %v7859
  %v8383 = vunpack.c.h.b16 %v7859
  %v8384 = vunpack.c.l.b16 %v7860
  %v8385 = vunpack.c.h.b16 %v7860
  %v8386 = vunpack.c.l.b16 %v7861
  %v8387 = vunpack.c.h.b16 %v7861
  %v8388 = vunpack.c.l.b16 %v7862
  %v8389 = vunpack.c.h.b16 %v7862
  %v8390 = vunpack.c.l.b16 %v7863
  %v8391 = vunpack.c.h.b16 %v7863
  %v8392 = vunpack.c.l.b16 %v7864
  %v8393 = vunpack.c.h.b16 %v7864
  %v8394 = vunpack.c.l.b16 %v7865
  %v8395 = vunpack.c.h.b16 %v7865
  %v8396 = vunpack.c.l.b16 %v7866
  %v8397 = vunpack.c.h.b16 %v7866
  %v8398 = vunpack.c.l.b16 %v7867
  %v8399 = vunpack.c.h.b16 %v7867
  %v8400 = vunpack.c.l.b16 %v7868
  %v8401 = vunpack.c.h.b16 %v7868
  %v8402 = vunpack.c.l.b16 %v7869
  %v8403 = vunpack.c.h.b16 %v7869
  %v8404 = vunpack.c.l.b16 %v7870
  %v8405 = vunpack.c.h.b16 %v7870
  %v8406 = vunpack.c.l.b16 %v7871
  %v8407 = vunpack.c.h.b16 %v7871
  %v8408 = vunpack.c.l.b16 %v7872
  %v8409 = vunpack.c.h.b16 %v7872
  %v8410 = vunpack.c.l.b16 %v7873
  %v8411 = vunpack.c.h.b16 %v7873
  %v8412 = vunpack.c.l.b16 %v7874
  %v8413 = vunpack.c.h.b16 %v7874
  %v8414 = vunpack.c.l.b16 %v7875
  %v8415 = vunpack.c.h.b16 %v7875
  %v8416 = vunpack.c.l.b16 %v7876
  %v8417 = vunpack.c.h.b16 %v7876
  %v8418 = vunpack.c.l.b16 %v7877
  %v8419 = vunpack.c.h.b16 %v7877
  %v8420 = vunpack.c.l.b16 %v7878
  %v8421 = vunpack.c.h.b16 %v7878
  %v8422 = vunpack.c.l.b16 %v7879
  %v8423 = vunpack.c.h.b16 %v7879
  %v8424 = vunpack.c.l.b16 %v7880
  %v8425 = vunpack.c.h.b16 %v7880
  %v8426 = vunpack.c.l.b16 %v7881
  %v8427 = vunpack.c.h.b16 %v7881
  %v8428 = vunpack.c.l.b16 %v7882
  %v8429 = vunpack.c.h.b16 %v7882
  %v8430 = vunpack.c.l.b16 %v7883
  %v8431 = vunpack.c.h.b16 %v7883
  %v8432 = vunpack.c.l.b16 %v7884
  %v8433 = vunpack.c.h.b16 %v7884
  %v8434 = vunpack.c.l.b16 %v7885
  %v8435 = vunpack.c.h.b16 %v7885
  %v8436 = vunpack.c.l.b16 %v7886
  %v8437 = vunpack.c.h.b16 %v7886
  %v8438 = vunpack.c.l.b16 %v7887
  %v8439 = vunpack.c.h.b16 %v7887
  %v8440 = vunpack.c.l.b16 %v7888
  %v8441 = vunpack.c.h.b16 %v7888
  %v8442 = vunpack.c.l.b16 %v7889
  %v8443 = vunpack.c.h.b16 %v7889
  %v8444 = vunpack.c.l.b16 %v7890
  %v8445 = vunpack.c.h.b16 %v7890
  %v8446 = vunpack.c.l.b16 %v7891
  %v8447 = vunpack.c.h.b16 %v7891
  %v8448 = vunpack.c.l.b16 %v7892
  %v8449 = vunpack.c.h.b16 %v7892
  %v8450 = vunpack.c.l.b16 %v7893
  %v8451 = vunpack.c.h.b16 %v7893
  %v8452 = vunpack.c.l.b16 %v7894
  %v8453 = vunpack.c.h.b16 %v7894
  %v8454 = vunpack.c.l.b16 %v7895
  %v8455 = vunpack.c.h.b16 %v7895
  %v8456 = vunpack.c.l.b16 %v7896
  %v8457 = vunpack.c.h.b16 %v7896
  %v8458 = vunpack.c.l.b16 %v7897
  %v8459 = vunpack.c.h.b16 %v7897
  %v8460 = vunpack.c.l.b16 %v7898
  %v8461 = vunpack.c.h.b16 %v7898
  %v8462 = vunpack.c.l.b16 %v7899
  %v8463 = vunpack.c.h.b16 %v7899
  %v8464 = vunpack.c.l.b16 %v7900
  %v8465 = vunpack.c.h.b16 %v7900
  %v8466 = vunpack.c.l.b16 %v7901
  %v8467 = vunpack.c.h.b16 %v7901
  %v8468 = vunpack.c.l.b16 %v7902
  %v8469 = vunpack.c.h.b16 %v7902
  %v8470 = vunpack.c.l.b16 %v7903
  %v8471 = vunpack.c.h.b16 %v7903
  %v8472 = vunpack.c.l.b16 %v7904
  %v8473 = vunpack.c.h.b16 %v7904
  %v8474 = vunpack.c.l.b16 %v7905
  %v8475 = vunpack.c.h.b16 %v7905
  %v8476 = vunpack.c.l.b16 %v7906
  %v8477 = vunpack.c.h.b16 %v7906
  %v8478 = vunpack.c.l.b16 %v7907
  %v8479 = vunpack.c.h.b16 %v7907
  %v8480 = vunpack.c.l.b16 %v7908
  %v8481 = vunpack.c.h.b16 %v7908
  %v8482 = vunpack.c.l.b16 %v7909
  %v8483 = vunpack.c.h.b16 %v7909
  %v8484 = vunpack.c.l.b16 %v7910
  %v8485 = vunpack.c.h.b16 %v7910
  %v8486 = vunpack.c.l.b16 %v7911
  %v8487 = vunpack.c.h.b16 %v7911
  %v8488 = vunpack.c.l.b16 %v7912
  %v8489 = vunpack.c.h.b16 %v7912
  %v8490 = vunpack.c.l.b16 %v7913
  %v8491 = vunpack.c.h.b16 %v7913
  %v8492 = vunpack.c.l.b16 %v7914
  %v8493 = vunpack.c.h.b16 %v7914
  %v8494 = vunpack.c.l.b16 %v7915
  %v8495 = vunpack.c.h.b16 %v7915
  %v8496 = vunpack.c.l.b16 %v7916
  %v8497 = vunpack.c.h.b16 %v7916
  %v8498 = vunpack.c.l.b16 %v7917
  %v8499 = vunpack.c.h.b16 %v7917
  %v8500 = vunpack.c.l.b16 %v7918
  %v8501 = vunpack.c.h.b16 %v7918
  %v8502 = vunpack.c.l.b16 %v7919
  %v8503 = vunpack.c.h.b16 %v7919
  %v8504 = vunpack.c.l.b16 %v7920
  %v8505 = vunpack.c.h.b16 %v7920
  %v8506 = vunpack.c.l.b16 %v7921
  %v8507 = vunpack.c.h.b16 %v7921
  %v8508 = vunpack.c.l.b16 %v7922
  %v8509 = vunpack.c.h.b16 %v7922
  %v8510 = vunpack.c.l.b16 %v7923
  %v8511 = vunpack.c.h.b16 %v7923
  %v8512 = vunpack.c.l.b16 %v7924
  %v8513 = vunpack.c.h.b16 %v7924
  %v8514 = vunpack.c.l.b16 %v7925
  %v8515 = vunpack.c.h.b16 %v7925
  %v8516 = vunpack.c.l.b16 %v7926
  %v8517 = vunpack.c.h.b16 %v7926
  %v8518 = vunpack.c.l.b16 %v7927
  %v8519 = vunpack.c.h.b16 %v7927
  %v8520 = vunpack.c.l.b16 %v7928
  %v8521 = vunpack.c.h.b16 %v7928
  %v8522 = vunpack.c.l.b16 %v7929
  %v8523 = vunpack.c.h.b16 %v7929
  %v8524 = vunpack.c.l.b16 %v7930
  %v8525 = vunpack.c.h.b16 %v7930
  %v8526 = vunpack.c.l.b16 %v7931
  %v8527 = vunpack.c.h.b16 %v7931
  %v8528 = vunpack.c.l.b16 %v7932
  %v8529 = vunpack.c.h.b16 %v7932
  %v8530 = vunpack.c.l.b16 %v7933
  %v8531 = vunpack.c.h.b16 %v7933
  %v8532 = vunpack.c.l.b16 %v7934
  %v8533 = vunpack.c.h.b16 %v7934
  %v8534 = vunpack.c.l.b16 %v7935
  %v8535 = vunpack.c.h.b16 %v7935
  %v8536 = vunpack.c.l.b16 %v7936
  %v8537 = vunpack.c.h.b16 %v7936
  %v8538 = vpack.c.b16 %v8300, %v8298
  %v8539 = vpack.c.b16 %v8301, %v8299
  %v8540 = vpack.c.b16 %v8304, %v8302
  %v8541 = vpack.c.b16 %v8305, %v8303
  %v8542 = vpack.c.b16 %v8308, %v8306
  %v8543 = vpack.c.b16 %v8309, %v8307
  %v8544 = vpack.c.b16 %v8312, %v8310
  %v8545 = vpack.c.b16 %v8313, %v8311
  %v8546 = vpack.c.b16 %v8316, %v8314
  %v8547 = vpack.c.b16 %v8317, %v8315
  %v8548 = vpack.c.b16 %v8320, %v8318
  %v8549 = vpack.c.b16 %v8321, %v8319
  %v8550 = vpack.c.b16 %v8324, %v8322
  %v8551 = vpack.c.b16 %v8325, %v8323
  %v8552 = vpack.c.b16 %v8328, %v8326
  %v8553 = vpack.c.b16 %v8329, %v8327
  %v8554 = vpack.c.b16 %v8332, %v8330
  %v8555 = vpack.c.b16 %v8333, %v8331
  %v8556 = vpack.c.b16 %v8336, %v8334
  %v8557 = vpack.c.b16 %v8337, %v8335
  %v8558 = vpack.c.b16 %v8340, %v8338
  %v8559 = vpack.c.b16 %v8341, %v8339
  %v8560 = vpack.c.b16 %v8344, %v8342
  %v8561 = vpack.c.b16 %v8345, %v8343
  %v8562 = vpack.c.b16 %v8348, %v8346
  %v8563 = vpack.c.b16 %v8349, %v8347
  %v8564 = vpack.c.b16 %v8352, %v8350
  %v8565 = vpack.c.b16 %v8353, %v8351
  %v8566 = vpack.c.b16 %v8356, %v8354
  %v8567 = vpack.c.b16 %v8357, %v8355
  %v8568 = vpack.c.b16 %v8360, %v8358
  %v8569 = vpack.c.b16 %v8361, %v8359
  %v8570 = vpack.c.b16 %v8364, %v8362
  %v8571 = vpack.c.b16 %v8365, %v8363
  %v8572 = vpack.c.b16 %v8368, %v8366
  %v8573 = vpack.c.b16 %v8369, %v8367
  %v8574 = vpack.c.b16 %v8372, %v8370
  %v8575 = vpack.c.b16 %v8373, %v8371
  %v8576 = vpack.c.b16 %v8376, %v8374
  %v8577 = vpack.c.b16 %v8377, %v8375
  %v8578 = vpack.c.b16 %v8380, %v8378
  %v8579 = vpack.c.b16 %v8381, %v8379
  %v8580 = vpack.c.b16 %v8384, %v8382
  %v8581 = vpack.c.b16 %v8385, %v8383
  %v8582 = vpack.c.b16 %v8388, %v8386
  %v8583 = vpack.c.b16 %v8389, %v8387
  %v8584 = vpack.c.b16 %v8392, %v8390
  %v8585 = vpack.c.b16 %v8393, %v8391
  %v8586 = vpack.c.b16 %v8396, %v8394
  %v8587 = vpack.c.b16 %v8397, %v8395
  %v8588 = vpack.c.b16 %v8400, %v8398
  %v8589 = vpack.c.b16 %v8401, %v8399
  %v8590 = vpack.c.b16 %v8404, %v8402
  %v8591 = vpack.c.b16 %v8405, %v8403
  %v8592 = vpack.c.b16 %v8408, %v8406
  %v8593 = vpack.c.b16 %v8409, %v8407
  %v8594 = vpack.c.b16 %v8412, %v8410
  %v8595 = vpack.c.b16 %v8413, %v8411
  %v8596 = vpack.c.b16 %v8416, %v8414
  %v8597 = vpack.c.b16 %v8417, %v8415
  %v8598 = vpack.c.b16 %v8420, %v8418
  %v8599 = vpack.c.b16 %v8421, %v8419
  %v8600 = vpack.c.b16 %v8424, %v8422
  %v8601 = vpack.c.b16 %v8425, %v8423
  %v8602 = vpack.c.b16 %v8428, %v8426
  %v8603 = vpack.c.b16 %v8429, %v8427
  %v8604 = vpack.c.b16 %v8432, %v8430
  %v8605 = vpack.c.b16 %v8433, %v8431
  %v8606 = vpack.c.b16 %v8436, %v8434
  %v8607 = vpack.c.b16 %v8437, %v8435
  %v8608 = vpack.c.b16 %v8440, %v8438
  %v8609 = vpack.c.b16 %v8441, %v8439
  %v8610 = vpack.c.b16 %v8444, %v8442
  %v8611 = vpack.c.b16 %v8445, %v8443
  %v8612 = vpack.c.b16 %v8448, %v8446
  %v8613 = vpack.c.b16 %v8449, %v8447
  %v8614 = vpack.c.b16 %v8452, %v8450
  %v8615 = vpack.c.b16 %v8453, %v8451
  %v8616 = vpack.c.b16 %v8456, %v8454
  %v8617 = vpack.c.b16 %v8457, %v8455
  %v8618 = vpack.c.b16 %v8460, %v8458
  %v8619 = vpack.c.b16 %v8461, %v8459
  %v8620 = vpack.c.b16 %v8464, %v8462
  %v8621 = vpack.c.b16 %v8465, %v8463
  %v8622 = vpack.c.b16 %v8468, %v8466
  %v8623 = vpack.c.b16 %v8469, %v8467
  %v8624 = vpack.c.b16 %v8472, %v8470
  %v8625 = vpack.c.b16 %v8473, %v8471
  %v8626 = vpack.c.b16 %v8476, %v8474
  %v8627 = vpack.c.b16 %v8477, %v8475
  %v8628 = vpack.c.b16 %v8480, %v8478
  %v8629 = vpack.c.b16 %v8481, %v8479
  %v8630 = vpack.c.b16 %v8484, %v8482
  %v8631 = vpack.c.b16 %v8485, %v8483
  %v8632 = vpack.c.b16 %v8488, %v8486
  %v8633 = vpack.c.b16 %v8489, %v8487
  %v8634 = vpack.c.b16 %v8492, %v8490
  %v8635 = vpack.c.b16 %v8493, %v8491
  %v8636 = vpack.c.b16 %v8496, %v8494
  %v8637 = vpack.c.b16 %v8497, %v8495
  %v8638 = vpack.c.b16 %v8500, %v8498
  %v8639 = vpack.c.b16 %v8501, %v8499
  %v8640 = vpack.c.b16 %v8504, %v8502
  %v8641 = vpack.c.b16 %v8505, %v8503
  %v8642 = vpack.c.b16 %v8508, %v8506
  %v8643 = vpack.c.b16 %v8509, %v8507
  %v8644 = vpack.c.b16 %v8512, %v8510
  %v8645 = vpack.c.b16 %v8513, %v8511
  %v8646 = vpack.c.b16 %v8516, %v8514
  %v8647 = vpack.c.b16 %v8517, %v8515
  %v8648 = vpack.c.b16 %v8520, %v8518
  %v8649 = vpack.c.b16 %v8521, %v8519
  %v8650 = vpack.c.b16 %v8524, %v8522
  %v8651 = vpack.c.b16 %v8525, %v8523
  %v8652 = vpack.c.b16 %v8528, %v8526
  %v8653 = vpack.c.b16 %v8529, %v8527
  %v8654 = vpack.c.b16 %v8532, %v8530
  %v8655 = vpack.c.b16 %v8533, %v8531
  %v8656 = vpack.c.b16 %v8536, %v8534
  %v8657 = vpack.c.b16 %v8537, %v8535
  %v8898 = vunpack.c.l.b16 %v7937
  %v8899 = vunpack.c.h.b16 %v7937
  %v8900 = vunpack.c.l.b16 %v7938
  %v8901 = vunpack.c.h.b16 %v7938
  %v8902 = vunpack.c.l.b16 %v7939
  %v8903 = vunpack.c.h.b16 %v7939
  %v8904 = vunpack.c.l.b16 %v7940
  %v8905 = vunpack.c.h.b16 %v7940
  %v8906 = vunpack.c.l.b16 %v7941
  %v8907 = vunpack.c.h.b16 %v7941
  %v8908 = vunpack.c.l.b16 %v7942
  %v8909 = vunpack.c.h.b16 %v7942
  %v8910 = vunpack.c.l.b16 %v7943
  %v8911 = vunpack.c.h.b16 %v7943
  %v8912 = vunpack.c.l.b16 %v7944
  %v8913 = vunpack.c.h.b16 %v7944
  %v8914 = vunpack.c.l.b16 %v7945
  %v8915 = vunpack.c.h.b16 %v7945
  %v8916 = vunpack.c.l.b16 %v7946
  %v8917 = vunpack.c.h.b16 %v7946
  %v8918 = vunpack.c.l.b16 %v7947
  %v8919 = vunpack.c.h.b16 %v7947
  %v8920 = vunpack.c.l.b16 %v7948
  %v8921 = vunpack.c.h.b16 %v7948
  %v8922 = vunpack.c.l.b16 %v7949
  %v8923 = vunpack.c.h.b16 %v7949
  %v8924 = vunpack.c.l.b16 %v7950
  %v8925 = vunpack.c.h.b16 %v7950
  %v8926 = vunpack.c.l.b16 %v7951
  %v8927 = vunpack.c.h.b16 %v7951
  %v8928 = vunpack.c.l.b16 %v7952
  %v8929 = vunpack.c.h.b16 %v7952
  %v8930 = vunpack.c.l.b16 %v7953
  %v8931 = vunpack.c.h.b16 %v7953
  %v8932 = vunpack.c.l.b16 %v7954
  %v8933 = vunpack.c.h.b16 %v7954
  %v8934 = vunpack.c.l.b16 %v7955
  %v8935 = vunpack.c.h.b16 %v7955
  %v8936 = vunpack.c.l.b16 %v7956
  %v8937 = vunpack.c.h.b16 %v7956
  %v8938 = vunpack.c.l.b16 %v7957
  %v8939 = vunpack.c.h.b16 %v7957
  %v8940 = vunpack.c.l.b16 %v7958
  %v8941 = vunpack.c.h.b16 %v7958
  %v8942 = vunpack.c.l.b16 %v7959
  %v8943 = vunpack.c.h.b16 %v7959
  %v8944 = vunpack.c.l.b16 %v7960
  %v8945 = vunpack.c.h.b16 %v7960
  %v8946 = vunpack.c.l.b16 %v7961
  %v8947 = vunpack.c.h.b16 %v7961
  %v8948 = vunpack.c.l.b16 %v7962
  %v8949 = vunpack.c.h.b16 %v7962
  %v8950 = vunpack.c.l.b16 %v7963
  %v8951 = vunpack.c.h.b16 %v7963
  %v8952 = vunpack.c.l.b16 %v7964
  %v8953 = vunpack.c.h.b16 %v7964
  %v8954 = vunpack.c.l.b16 %v7965
  %v8955 = vunpack.c.h.b16 %v7965
  %v8956 = vunpack.c.l.b16 %v7966
  %v8957 = vunpack.c.h.b16 %v7966
  %v8958 = vunpack.c.l.b16 %v7967
  %v8959 = vunpack.c.h.b16 %v7967
  %v8960 = vunpack.c.l.b16 %v7968
  %v8961 = vunpack.c.h.b16 %v7968
  %v8962 = vunpack.c.l.b16 %v7969
  %v8963 = vunpack.c.h.b16 %v7969
  %v8964 = vunpack.c.l.b16 %v7970
  %v8965 = vunpack.c.h.b16 %v7970
  %v8966 = vunpack.c.l.b16 %v7971
  %v8967 = vunpack.c.h.b16 %v7971
  %v8968 = vunpack.c.l.b16 %v7972
  %v8969 = vunpack.c.h.b16 %v7972
  %v8970 = vunpack.c.l.b16 %v7973
  %v8971 = vunpack.c.h.b16 %v7973
  %v8972 = vunpack.c.l.b16 %v7974
  %v8973 = vunpack.c.h.b16 %v7974
  %v8974 = vunpack.c.l.b16 %v7975
  %v8975 = vunpack.c.h.b16 %v7975
  %v8976 = vunpack.c.l.b16 %v7976
  %v8977 = vunpack.c.h.b16 %v7976
  %v8978 = vunpack.c.l.b16 %v7977
  %v8979 = vunpack.c.h.b16 %v7977
  %v8980 = vunpack.c.l.b16 %v7978
  %v8981 = vunpack.c.h.b16 %v7978
  %v8982 = vunpack.c.l.b16 %v7979
  %v8983 = vunpack.c.h.b16 %v7979
  %v8984 = vunpack.c.l.b16 %v7980
  %v8985 = vunpack.c.h.b16 %v7980
  %v8986 = vunpack.c.l.b16 %v7981
  %v8987 = vunpack.c.h.b16 %v7981
  %v8988 = vunpack.c.l.b16 %v7982
  %v8989 = vunpack.c.h.b16 %v7982
  %v8990 = vunpack.c.l.b16 %v7983
  %v8991 = vunpack.c.h.b16 %v7983
  %v8992 = vunpack.c.l.b16 %v7984
  %v8993 = vunpack.c.h.b16 %v7984
  %v8994 = vunpack.c.l.b16 %v7985
  %v8995 = vunpack.c.h.b16 %v7985
  %v8996 = vunpack.c.l.b16 %v7986
  %v8997 = vunpack.c.h.b16 %v7986
  %v8998 = vunpack.c.l.b16 %v7987
  %v8999 = vunpack.c.h.b16 %v7987
  %v9000 = vunpack.c.l.b16 %v7988
  %v9001 = vunpack.c.h.b16 %v7988
  %v9002 = vunpack.c.l.b16 %v7989
  %v9003 = vunpack.c.h.b16 %v7989
  %v9004 = vunpack.c.l.b16 %v7990
  %v9005 = vunpack.c.h.b16 %v7990
  %v9006 = vunpack.c.l.b16 %v7991
  %v9007 = vunpack.c.h.b16 %v7991
  %v9008 = vunpack.c.l.b16 %v7992
  %v9009 = vunpack.c.h.b16 %v7992
  %v9010 = vunpack.c.l.b16 %v7993
  %v9011 = vunpack.c.h.b16 %v7993
  %v9012 = vunpack.c.l.b16 %v7994
  %v9013 = vunpack.c.h.b16 %v7994
  %v9014 = vunpack.c.l.b16 %v7995
  %v9015 = vunpack.c.h.b16 %v7995
  %v9016 = vunpack.c.l.b16 %v7996
  %v9017 = vunpack.c.h.b16 %v7996
  %v9018 = vunpack.c.l.b16 %v7997
  %v9019 = vunpack.c.h.b16 %v7997
  %v9020 = vunpack.c.l.b16 %v7998
  %v9021 = vunpack.c.h.b16 %v7998
  %v9022 = vunpack.c.l.b16 %v7999
  %v9023 = vunpack.c.h.b16 %v7999
  %v9024 = vunpack.c.l.b16 %v8000
  %v9025 = vunpack.c.h.b16 %v8000
  %v9026 = vunpack.c.l.b16 %v8001
  %v9027 = vunpack.c.h.b16 %v8001
  %v9028 = vunpack.c.l.b16 %v8002
  %v9029 = vunpack.c.h.b16 %v8002
  %v9030 = vunpack.c.l.b16 %v8003
  %v9031 = vunpack.c.h.b16 %v8003
  %v9032 = vunpack.c.l.b16 %v8004
  %v9033 = vunpack.c.h.b16 %v8004
  %v9034 = vunpack.c.l.b16 %v8005
  %v9035 = vunpack.c.h.b16 %v8005
  %v9036 = vunpack.c.l.b16 %v8006
  %v9037 = vunpack.c.h.b16 %v8006
  %v9038 = vunpack.c.l.b16 %v8007
  %v9039 = vunpack.c.h.b16 %v8007
  %v9040 = vunpack.c.l.b16 %v8008
  %v9041 = vunpack.c.h.b16 %v8008
  %v9042 = vunpack.c.l.b16 %v8009
  %v9043 = vunpack.c.h.b16 %v8009
  %v9044 = vunpack.c.l.b16 %v8010
  %v9045 = vunpack.c.h.b16 %v8010
  %v9046 = vunpack.c.l.b16 %v8011
  %v9047 = vunpack.c.h.b16 %v8011
  %v9048 = vunpack.c.l.b16 %v8012
  %v9049 = vunpack.c.h.b16 %v8012
  %v9050 = vunpack.c.l.b16 %v8013
  %v9051 = vunpack.c.h.b16 %v8013
  %v9052 = vunpack.c.l.b16 %v8014
  %v9053 = vunpack.c.h.b16 %v8014
  %v9054 = vunpack.c.l.b16 %v8015
  %v9055 = vunpack.c.h.b16 %v8015
  %v9056 = vunpack.c.l.b16 %v8016
  %v9057 = vunpack.c.h.b16 %v8016
  %v9058 = vunpack.c.l.b16 %v8017
  %v9059 = vunpack.c.h.b16 %v8017
  %v9060 = vunpack.c.l.b16 %v8018
  %v9061 = vunpack.c.h.b16 %v8018
  %v9062 = vunpack.c.l.b16 %v8019
  %v9063 = vunpack.c.h.b16 %v8019
  %v9064 = vunpack.c.l.b16 %v8020
  %v9065 = vunpack.c.h.b16 %v8020
  %v9066 = vunpack.c.l.b16 %v8021
  %v9067 = vunpack.c.h.b16 %v8021
  %v9068 = vunpack.c.l.b16 %v8022
  %v9069 = vunpack.c.h.b16 %v8022
  %v9070 = vunpack.c.l.b16 %v8023
  %v9071 = vunpack.c.h.b16 %v8023
  %v9072 = vunpack.c.l.b16 %v8024
  %v9073 = vunpack.c.h.b16 %v8024
  %v9074 = vunpack.c.l.b16 %v8025
  %v9075 = vunpack.c.h.b16 %v8025
  %v9076 = vunpack.c.l.b16 %v8026
  %v9077 = vunpack.c.h.b16 %v8026
  %v9078 = vunpack.c.l.b16 %v8027
  %v9079 = vunpack.c.h.b16 %v8027
  %v9080 = vunpack.c.l.b16 %v8028
  %v9081 = vunpack.c.h.b16 %v8028
  %v9082 = vunpack.c.l.b16 %v8029
  %v9083 = vunpack.c.h.b16 %v8029
  %v9084 = vunpack.c.l.b16 %v8030
  %v9085 = vunpack.c.h.b16 %v8030
  %v9086 = vunpack.c.l.b16 %v8031
  %v9087 = vunpack.c.h.b16 %v8031
  %v9088 = vunpack.c.l.b16 %v8032
  %v9089 = vunpack.c.h.b16 %v8032
  %v9090 = vunpack.c.l.b16 %v8033
  %v9091 = vunpack.c.h.b16 %v8033
  %v9092 = vunpack.c.l.b16 %v8034
  %v9093 = vunpack.c.h.b16 %v8034
  %v9094 = vunpack.c.l.b16 %v8035
  %v9095 = vunpack.c.h.b16 %v8035
  %v9096 = vunpack.c.l.b16 %v8036
  %v9097 = vunpack.c.h.b16 %v8036
  %v9098 = vunpack.c.l.b16 %v8037
  %v9099 = vunpack.c.h.b16 %v8037
  %v9100 = vunpack.c.l.b16 %v8038
  %v9101 = vunpack.c.h.b16 %v8038
  %v9102 = vunpack.c.l.b16 %v8039
  %v9103 = vunpack.c.h.b16 %v8039
  %v9104 = vunpack.c.l.b16 %v8040
  %v9105 = vunpack.c.h.b16 %v8040
  %v9106 = vunpack.c.l.b16 %v8041
  %v9107 = vunpack.c.h.b16 %v8041
  %v9108 = vunpack.c.l.b16 %v8042
  %v9109 = vunpack.c.h.b16 %v8042
  %v9110 = vunpack.c.l.b16 %v8043
  %v9111 = vunpack.c.h.b16 %v8043
  %v9112 = vunpack.c.l.b16 %v8044
  %v9113 = vunpack.c.h.b16 %v8044
  %v9114 = vunpack.c.l.b16 %v8045
  %v9115 = vunpack.c.h.b16 %v8045
  %v9116 = vunpack.c.l.b16 %v8046
  %v9117 = vunpack.c.h.b16 %v8046
  %v9118 = vunpack.c.l.b16 %v8047
  %v9119 = vunpack.c.h.b16 %v8047
  %v9120 = vunpack.c.l.b16 %v8048
  %v9121 = vunpack.c.h.b16 %v8048
  %v9122 = vunpack.c.l.b16 %v8049
  %v9123 = vunpack.c.h.b16 %v8049
  %v9124 = vunpack.c.l.b16 %v8050
  %v9125 = vunpack.c.h.b16 %v8050
  %v9126 = vunpack.c.l.b16 %v8051
  %v9127 = vunpack.c.h.b16 %v8051
  %v9128 = vunpack.c.l.b16 %v8052
  %v9129 = vunpack.c.h.b16 %v8052
  %v9130 = vunpack.c.l.b16 %v8053
  %v9131 = vunpack.c.h.b16 %v8053
  %v9132 = vunpack.c.l.b16 %v8054
  %v9133 = vunpack.c.h.b16 %v8054
  %v9134 = vunpack.c.l.b16 %v8055
  %v9135 = vunpack.c.h.b16 %v8055
  %v9136 = vunpack.c.l.b16 %v8056
  %v9137 = vunpack.c.h.b16 %v8056
  %v9138 = vpack.c.b16 %v8900, %v8898
  %v9139 = vpack.c.b16 %v8901, %v8899
  %v9140 = vpack.c.b16 %v8904, %v8902
  %v9141 = vpack.c.b16 %v8905, %v8903
  %v9142 = vpack.c.b16 %v8908, %v8906
  %v9143 = vpack.c.b16 %v8909, %v8907
  %v9144 = vpack.c.b16 %v8912, %v8910
  %v9145 = vpack.c.b16 %v8913, %v8911
  %v9146 = vpack.c.b16 %v8916, %v8914
  %v9147 = vpack.c.b16 %v8917, %v8915
  %v9148 = vpack.c.b16 %v8920, %v8918
  %v9149 = vpack.c.b16 %v8921, %v8919
  %v9150 = vpack.c.b16 %v8924, %v8922
  %v9151 = vpack.c.b16 %v8925, %v8923
  %v9152 = vpack.c.b16 %v8928, %v8926
  %v9153 = vpack.c.b16 %v8929, %v8927
  %v9154 = vpack.c.b16 %v8932, %v8930
  %v9155 = vpack.c.b16 %v8933, %v8931
  %v9156 = vpack.c.b16 %v8936, %v8934
  %v9157 = vpack.c.b16 %v8937, %v8935
  %v9158 = vpack.c.b16 %v8940, %v8938
  %v9159 = vpack.c.b16 %v8941, %v8939
  %v9160 = vpack.c.b16 %v8944, %v8942
  %v9161 = vpack.c.b16 %v8945, %v8943
  %v9162 = vpack.c.b16 %v8948, %v8946
  %v9163 = vpack.c.b16 %v8949, %v8947
  %v9164 = vpack.c.b16 %v8952, %v8950
  %v9165 = vpack.c.b16 %v8953, %v8951
  %v9166 = vpack.c.b16 %v8956, %v8954
  %v9167 = vpack.c.b16 %v8957, %v8955
  %v9168 = vpack.c.b16 %v8960, %v8958
  %v9169 = vpack.c.b16 %v8961, %v8959
  %v9170 = vpack.c.b16 %v8964, %v8962
  %v9171 = vpack.c.b16 %v8965, %v8963
  %v9172 = vpack.c.b16 %v8968, %v8966
  %v9173 = vpack.c.b16 %v8969, %v8967
  %v9174 = vpack.c.b16 %v8972, %v8970
  %v9175 = vpack.c.b16 %v8973, %v8971
  %v9176 = vpack.c.b16 %v8976, %v8974
  %v9177 = vpack.c.b16 %v8977, %v8975
  %v9178 = vpack.c.b16 %v8980, %v8978
  %v9179 = vpack.c.b16 %v8981, %v8979
  %v9180 = vpack.c.b16 %v8984, %v8982
  %v9181 = vpack.c.b16 %v8985, %v8983
  %v9182 = vpack.c.b16 %v8988, %v8986
  %v9183 = vpack.c.b16 %v8989, %v8987
  %v9184 = vpack.c.b16 %v8992, %v8990
  %v9185 = vpack.c.b16 %v8993, %v8991
  %v9186 = vpack.c.b16 %v8996, %v8994
  %v9187 = vpack.c.b16 %v8997, %v8995
  %v9188 = vpack.c.b16 %v9000, %v8998
  %v9189 = vpack.c.b16 %v9001, %v8999
  %v9190 = vpack.c.b16 %v9004, %v9002
  %v9191 = vpack.c.b16 %v9005, %v9003
  %v9192 = vpack.c.b16 %v9008, %v9006
  %v9193 = vpack.c.b16 %v9009, %v9007
  %v9194 = vpack.c.b16 %v9012, %v9010
  %v9195 = vpack.c.b16 %v9013, %v9011
  %v9196 = vpack.c.b16 %v9016, %v9014
  %v9197 = vpack.c.b16 %v9017, %v9015
  %v9198 = vpack.c.b16 %v9020, %v9018
  %v9199 = vpack.c.b16 %v9021, %v9019
  %v9200 = vpack.c.b16 %v9024, %v9022
  %v9201 = vpack.c.b16 %v9025, %v9023
  %v9202 = vpack.c.b16 %v9028, %v9026
  %v9203 = vpack.c.b16 %v9029, %v9027
  %v9204 = vpack.c.b16 %v9032, %v9030
  %v9205 = vpack.c.b16 %v9033, %v9031
  %v9206 = vpack.c.b16 %v9036, %v9034
  %v9207 = vpack.c.b16 %v9037, %v9035
  %v9208 = vpack.c.b16 %v9040, %v9038
  %v9209 = vpack.c.b16 %v9041, %v9039
  %v9210 = vpack.c.b16 %v9044, %v9042
  %v9211 = vpack.c.b16 %v9045, %v9043
  %v9212 = vpack.c.b16 %v9048, %v9046
  %v9213 = vpack.c.b16 %v9049, %v9047
  %v9214 = vpack.c.b16 %v9052, %v9050
  %v9215 = vpack.c.b16 %v9053, %v9051
  %v9216 = vpack.c.b16 %v9056, %v9054
  %v9217 = vpack.c.b16 %v9057, %v9055
  %v9218 = vpack.c.b16 %v9060, %v9058
  %v9219 = vpack.c.b16 %v9061, %v9059
  %v9220 = vpack.c.b16 %v9064, %v9062
  %v9221 = vpack.c.b16 %v9065, %v9063
  %v9222 = vpack.c.b16 %v9068, %v9066
  %v9223 = vpack.c.b16 %v9069, %v9067
  %v9224 = vpack.c.b16 %v9072, %v9070
  %v9225 = vpack.c.b16 %v9073, %v9071
  %v9226 = vpack.c.b16 %v9076, %v9074
  %v9227 = vpack.c.b16 %v9077, %v9075
  %v9228 = vpack.c.b16 %v9080, %v9078
  %v9229 = vpack.c.b16 %v9081, %v9079
  %v9230 = vpack.c.b16 %v9084, %v9082
  %v9231 = vpack.c.b16 %v9085, %v9083
  %v9232 = vpack.c.b16 %v9088, %v9086
  %v9233 = vpack.c.b16 %v9089, %v9087
  %v9234 = vpack.c.b16 %v9092, %v9090
  %v9235 = vpack.c.b16 %v9093, %v9091
  %v9236 = vpack.c.b16 %v9096, %v9094
  %v9237 = vpack.c.b16 %v9097, %v9095
  %v9238 = vpack.c.b16 %v9100, %v9098
  %v9239 = vpack.c.b16 %v9101, %v9099
  %v9240 = vpack.c.b16 %v9104, %v9102
  %v9241 = vpack.c.b16 %v9105, %v9103
  %v9242 = vpack.c.b16 %v9108, %v9106
  %v9243 = vpack.c.b16 %v9109, %v9107
  %v9244 = vpack.c.b16 %v9112, %v9110
  %v9245 = vpack.c.b16 %v9113, %v9111
  %v9246 = vpack.c.b16 %v9116, %v9114
  %v9247 = vpack.c.b16 %v9117, %v9115
  %v9248 = vpack.c.b16 %v9120, %v9118
  %v9249 = vpack.c.b16 %v9121, %v9119
  %v9250 = vpack.c.b16 %v9124, %v9122
  %v9251 = vpack.c.b16 %v9125, %v9123
  %v9252 = vpack.c.b16 %v9128, %v9126
  %v9253 = vpack.c.b16 %v9129, %v9127
  %v9254 = vpack.c.b16 %v9132, %v9130
  %v9255 = vpack.c.b16 %v9133, %v9131
  %v9256 = vpack.c.b16 %v9136, %v9134
  %v9257 = vpack.c.b16 %v9137, %v9135
  %v9498 = vunpack.c.l.b16 %v8058
  %v9499 = vunpack.c.h.b16 %v8058
  %v9500 = vunpack.c.l.b16 %v8059
  %v9501 = vunpack.c.h.b16 %v8059
  %v9502 = vunpack.c.l.b16 %v8060
  %v9503 = vunpack.c.h.b16 %v8060
  %v9504 = vunpack.c.l.b16 %v8061
  %v9505 = vunpack.c.h.b16 %v8061
  %v9506 = vunpack.c.l.b16 %v8062
  %v9507 = vunpack.c.h.b16 %v8062
  %v9508 = vunpack.c.l.b16 %v8063
  %v9509 = vunpack.c.h.b16 %v8063
  %v9510 = vunpack.c.l.b16 %v8064
  %v9511 = vunpack.c.h.b16 %v8064
  %v9512 = vunpack.c.l.b16 %v8065
  %v9513 = vunpack.c.h.b16 %v8065
  %v9514 = vunpack.c.l.b16 %v8066
  %v9515 = vunpack.c.h.b16 %v8066
  %v9516 = vunpack.c.l.b16 %v8067
  %v9517 = vunpack.c.h.b16 %v8067
  %v9518 = vunpack.c.l.b16 %v8068
  %v9519 = vunpack.c.h.b16 %v8068
  %v9520 = vunpack.c.l.b16 %v8069
  %v9521 = vunpack.c.h.b16 %v8069
  %v9522 = vunpack.c.l.b16 %v8070
  %v9523 = vunpack.c.h.b16 %v8070
  %v9524 = vunpack.c.l.b16 %v8071
  %v9525 = vunpack.c.h.b16 %v8071
  %v9526 = vunpack.c.l.b16 %v8072
  %v9527 = vunpack.c.h.b16 %v8072
  %v9528 = vunpack.c.l.b16 %v8073
  %v9529 = vunpack.c.h.b16 %v8073
  %v9530 = vunpack.c.l.b16 %v8074
  %v9531 = vunpack.c.h.b16 %v8074
  %v9532 = vunpack.c.l.b16 %v8075
  %v9533 = vunpack.c.h.b16 %v8075
  %v9534 = vunpack.c.l.b16 %v8076
  %v9535 = vunpack.c.h.b16 %v8076
  %v9536 = vunpack.c.l.b16 %v8077
  %v9537 = vunpack.c.h.b16 %v8077
  %v9538 = vunpack.c.l.b16 %v8078
  %v9539 = vunpack.c.h.b16 %v8078
  %v9540 = vunpack.c.l.b16 %v8079
  %v9541 = vunpack.c.h.b16 %v8079
  %v9542 = vunpack.c.l.b16 %v8080
  %v9543 = vunpack.c.h.b16 %v8080
  %v9544 = vunpack.c.l.b16 %v8081
  %v9545 = vunpack.c.h.b16 %v8081
  %v9546 = vunpack.c.l.b16 %v8082
  %v9547 = vunpack.c.h.b16 %v8082
  %v9548 = vunpack.c.l.b16 %v8083
  %v9549 = vunpack.c.h.b16 %v8083
  %v9550 = vunpack.c.l.b16 %v8084
  %v9551 = vunpack.c.h.b16 %v8084
  %v9552 = vunpack.c.l.b16 %v8085
  %v9553 = vunpack.c.h.b16 %v8085
  %v9554 = vunpack.c.l.b16 %v8086
  %v9555 = vunpack.c.h.b16 %v8086
  %v9556 = vunpack.c.l.b16 %v8087
  %v9557 = vunpack.c.h.b16 %v8087
  %v9558 = vunpack.c.l.b16 %v8088
  %v9559 = vunpack.c.h.b16 %v8088
  %v9560 = vunpack.c.l.b16 %v8089
  %v9561 = vunpack.c.h.b16 %v8089
  %v9562 = vunpack.c.l.b16 %v8090
  %v9563 = vunpack.c.h.b16 %v8090
  %v9564 = vunpack.c.l.b16 %v8091
  %v9565 = vunpack.c.h.b16 %v8091
  %v9566 = vunpack.c.l.b16 %v8092
  %v9567 = vunpack.c.h.b16 %v8092
  %v9568 = vunpack.c.l.b16 %v8093
  %v9569 = vunpack.c.h.b16 %v8093
  %v9570 = vunpack.c.l.b16 %v8094
  %v9571 = vunpack.c.h.b16 %v8094
  %v9572 = vunpack.c.l.b16 %v8095
  %v9573 = vunpack.c.h.b16 %v8095
  %v9574 = vunpack.c.l.b16 %v8096
  %v9575 = vunpack.c.h.b16 %v8096
  %v9576 = vunpack.c.l.b16 %v8097
  %v9577 = vunpack.c.h.b16 %v8097
  %v9578 = vunpack.c.l.b16 %v8098
  %v9579 = vunpack.c.h.b16 %v8098
  %v9580 = vunpack.c.l.b16 %v8099
  %v9581 = vunpack.c.h.b16 %v8099
  %v9582 = vunpack.c.l.b16 %v8100
  %v9583 = vunpack.c.h.b16 %v8100
  %v9584 = vunpack.c.l.b16 %v8101
  %v9585 = vunpack.c.h.b16 %v8101
  %v9586 = vunpack.c.l.b16 %v8102
  %v9587 = vunpack.c.h.b16 %v8102
  %v9588 = vunpack.c.l.b16 %v8103
  %v9589 = vunpack.c.h.b16 %v8103
  %v9590 = vunpack.c.l.b16 %v8104
  %v9591 = vunpack.c.h.b16 %v8104
  %v9592 = vunpack.c.l.b16 %v8105
  %v9593 = vunpack.c.h.b16 %v8105
  %v9594 = vunpack.c.l.b16 %v8106
  %v9595 = vunpack.c.h.b16 %v8106
  %v9596 = vunpack.c.l.b16 %v8107
  %v9597 = vunpack.c.h.b16 %v8107
  %v9598 = vunpack.c.l.b16 %v8108
  %v9599 = vunpack.c.h.b16 %v8108
  %v9600 = vunpack.c.l.b16 %v8109
  %v9601 = vunpack.c.h.b16 %v8109
  %v9602 = vunpack.c.l.b16 %v8110
  %v9603 = vunpack.c.h.b16 %v8110
  %v9604 = vunpack.c.l.b16 %v8111
  %v9605 = vunpack.c.h.b16 %v8111
  %v9606 = vunpack.c.l.b16 %v8112
  %v9607 = vunpack.c.h.b16 %v8112
  %v9608 = vunpack.c.l.b16 %v8113
  %v9609 = vunpack.c.h.b16 %v8113
  %v9610 = vunpack.c.l.b16 %v8114
  %v9611 = vunpack.c.h.b16 %v8114
  %v9612 = vunpack.c.l.b16 %v8115
  %v9613 = vunpack.c.h.b16 %v8115
  %v9614 = vunpack.c.l.b16 %v8116
  %v9615 = vunpack.c.h.b16 %v8116
  %v9616 = vunpack.c.l.b16 %v8117
  %v9617 = vunpack.c.h.b16 %v8117
  %v9618 = vunpack.c.l.b16 %v8118
  %v9619 = vunpack.c.h.b16 %v8118
  %v9620 = vunpack.c.l.b16 %v8119
  %v9621 = vunpack.c.h.b16 %v8119
  %v9622 = vunpack.c.l.b16 %v8120
  %v9623 = vunpack.c.h.b16 %v8120
  %v9624 = vunpack.c.l.b16 %v8121
  %v9625 = vunpack.c.h.b16 %v8121
  %v9626 = vunpack.c.l.b16 %v8122
  %v9627 = vunpack.c.h.b16 %v8122
  %v9628 = vunpack.c.l.b16 %v8123
  %v9629 = vunpack.c.h.b16 %v8123
  %v9630 = vunpack.c.l.b16 %v8124
  %v9631 = vunpack.c.h.b16 %v8124
  %v9632 = vunpack.c.l.b16 %v8125
  %v9633 = vunpack.c.h.b16 %v8125
  %v9634 = vunpack.c.l.b16 %v8126
  %v9635 = vunpack.c.h.b16 %v8126
  %v9636 = vunpack.c.l.b16 %v8127
  %v9637 = vunpack.c.h.b16 %v8127
  %v9638 = vunpack.c.l.b16 %v8128
  %v9639 = vunpack.c.h.b16 %v8128
  %v9640 = vunpack.c.l.b16 %v8129
  %v9641 = vunpack.c.h.b16 %v8129
  %v9642 = vunpack.c.l.b16 %v8130
  %v9643 = vunpack.c.h.b16 %v8130
  %v9644 = vunpack.c.l.b16 %v8131
  %v9645 = vunpack.c.h.b16 %v8131
  %v9646 = vunpack.c.l.b16 %v8132
  %v9647 = vunpack.c.h.b16 %v8132
  %v9648 = vunpack.c.l.b16 %v8133
  %v9649 = vunpack.c.h.b16 %v8133
  %v9650 = vunpack.c.l.b16 %v8134
  %v9651 = vunpack.c.h.b16 %v8134
  %v9652 = vunpack.c.l.b16 %v8135
  %v9653 = vunpack.c.h.b16 %v8135
  %v9654 = vunpack.c.l.b16 %v8136
  %v9655 = vunpack.c.h.b16 %v8136
  %v9656 = vunpack.c.l.b16 %v8137
  %v9657 = vunpack.c.h.b16 %v8137
  %v9658 = vunpack.c.l.b16 %v8138
  %v9659 = vunpack.c.h.b16 %v8138
  %v9660 = vunpack.c.l.b16 %v8139
  %v9661 = vunpack.c.h.b16 %v8139
  %v9662 = vunpack.c.l.b16 %v8140
  %v9663 = vunpack.c.h.b16 %v8140
  %v9664 = vunpack.c.l.b16 %v8141
  %v9665 = vunpack.c.h.b16 %v8141
  %v9666 = vunpack.c.l.b16 %v8142
  %v9667 = vunpack.c.h.b16 %v8142
  %v9668 = vunpack.c.l.b16 %v8143
  %v9669 = vunpack.c.h.b16 %v8143
  %v9670 = vunpack.c.l.b16 %v8144
  %v9671 = vunpack.c.h.b16 %v8144
  %v9672 = vunpack.c.l.b16 %v8145
  %v9673 = vunpack.c.h.b16 %v8145
  %v9674 = vunpack.c.l.b16 %v8146
  %v9675 = vunpack.c.h.b16 %v8146
  %v9676 = vunpack.c.l.b16 %v8147
  %v9677 = vunpack.c.h.b16 %v8147
  %v9678 = vunpack.c.l.b16 %v8148
  %v9679 = vunpack.c.h.b16 %v8148
  %v9680 = vunpack.c.l.b16 %v8149
  %v9681 = vunpack.c.h.b16 %v8149
  %v9682 = vunpack.c.l.b16 %v8150
  %v9683 = vunpack.c.h.b16 %v8150
  %v9684 = vunpack.c.l.b16 %v8151
  %v9685 = vunpack.c.h.b16 %v8151
  %v9686 = vunpack.c.l.b16 %v8152
  %v9687 = vunpack.c.h.b16 %v8152
  %v9688 = vunpack.c.l.b16 %v8153
  %v9689 = vunpack.c.h.b16 %v8153
  %v9690 = vunpack.c.l.b16 %v8154
  %v9691 = vunpack.c.h.b16 %v8154
  %v9692 = vunpack.c.l.b16 %v8155
  %v9693 = vunpack.c.h.b16 %v8155
  %v9694 = vunpack.c.l.b16 %v8156
  %v9695 = vunpack.c.h.b16 %v8156
  %v9696 = vunpack.c.l.b16 %v8157
  %v9697 = vunpack.c.h.b16 %v8157
  %v9698 = vunpack.c.l.b16 %v8158
  %v9699 = vunpack.c.h.b16 %v8158
  %v9700 = vunpack.c.l.b16 %v8159
  %v9701 = vunpack.c.h.b16 %v8159
  %v9702 = vunpack.c.l.b16 %v8160
  %v9703 = vunpack.c.h.b16 %v8160
  %v9704 = vunpack.c.l.b16 %v8161
  %v9705 = vunpack.c.h.b16 %v8161
  %v9706 = vunpack.c.l.b16 %v8162
  %v9707 = vunpack.c.h.b16 %v8162
  %v9708 = vunpack.c.l.b16 %v8163
  %v9709 = vunpack.c.h.b16 %v8163
  %v9710 = vunpack.c.l.b16 %v8164
  %v9711 = vunpack.c.h.b16 %v8164
  %v9712 = vunpack.c.l.b16 %v8165
  %v9713 = vunpack.c.h.b16 %v8165
  %v9714 = vunpack.c.l.b16 %v8166
  %v9715 = vunpack.c.h.b16 %v8166
  %v9716 = vunpack.c.l.b16 %v8167
  %v9717 = vunpack.c.h.b16 %v8167
  %v9718 = vunpack.c.l.b16 %v8168
  %v9719 = vunpack.c.h.b16 %v8168
  %v9720 = vunpack.c.l.b16 %v8169
  %v9721 = vunpack.c.h.b16 %v8169
  %v9722 = vunpack.c.l.b16 %v8170
  %v9723 = vunpack.c.h.b16 %v8170
  %v9724 = vunpack.c.l.b16 %v8171
  %v9725 = vunpack.c.h.b16 %v8171
  %v9726 = vunpack.c.l.b16 %v8172
  %v9727 = vunpack.c.h.b16 %v8172
  %v9728 = vunpack.c.l.b16 %v8173
  %v9729 = vunpack.c.h.b16 %v8173
  %v9730 = vunpack.c.l.b16 %v8174
  %v9731 = vunpack.c.h.b16 %v8174
  %v9732 = vunpack.c.l.b16 %v8175
  %v9733 = vunpack.c.h.b16 %v8175
  %v9734 = vunpack.c.l.b16 %v8176
  %v9735 = vunpack.c.h.b16 %v8176
  %v9736 = vunpack.c.l.b16 %v8177
  %v9737 = vunpack.c.h.b16 %v8177
  %v9738 = vpack.c.b16 %v9500, %v9498
  %v9739 = vpack.c.b16 %v9501, %v9499
  %v9740 = vpack.c.b16 %v9504, %v9502
  %v9741 = vpack.c.b16 %v9505, %v9503
  %v9742 = vpack.c.b16 %v9508, %v9506
  %v9743 = vpack.c.b16 %v9509, %v9507
  %v9744 = vpack.c.b16 %v9512, %v9510
  %v9745 = vpack.c.b16 %v9513, %v9511
  %v9746 = vpack.c.b16 %v9516, %v9514
  %v9747 = vpack.c.b16 %v9517, %v9515
  %v9748 = vpack.c.b16 %v9520, %v9518
  %v9749 = vpack.c.b16 %v9521, %v9519
  %v9750 = vpack.c.b16 %v9524, %v9522
  %v9751 = vpack.c.b16 %v9525, %v9523
  %v9752 = vpack.c.b16 %v9528, %v9526
  %v9753 = vpack.c.b16 %v9529, %v9527
  %v9754 = vpack.c.b16 %v9532, %v9530
  %v9755 = vpack.c.b16 %v9533, %v9531
  %v9756 = vpack.c.b16 %v9536, %v9534
  %v9757 = vpack.c.b16 %v9537, %v9535
  %v9758 = vpack.c.b16 %v9540, %v9538
  %v9759 = vpack.c.b16 %v9541, %v9539
  %v9760 = vpack.c.b16 %v9544, %v9542
  %v9761 = vpack.c.b16 %v9545, %v9543
  %v9762 = vpack.c.b16 %v9548, %v9546
  %v9763 = vpack.c.b16 %v9549, %v9547
  %v9764 = vpack.c.b16 %v9552, %v9550
  %v9765 = vpack.c.b16 %v9553, %v9551
  %v9766 = vpack.c.b16 %v9556, %v9554
  %v9767 = vpack.c.b16 %v9557, %v9555
  %v9768 = vpack.c.b16 %v9560, %v9558
  %v9769 = vpack.c.b16 %v9561, %v9559
  %v9770 = vpack.c.b16 %v9564, %v9562
  %v9771 = vpack.c.b16 %v9565, %v9563
  %v9772 = vpack.c.b16 %v9568, %v9566
  %v9773 = vpack.c.b16 %v9569, %v9567
  %v9774 = vpack.c.b16 %v9572, %v9570
  %v9775 = vpack.c.b16 %v9573, %v9571
  %v9776 = vpack.c.b16 %v9576, %v9574
  %v9777 = vpack.c.b16 %v9577, %v9575
  %v9778 = vpack.c.b16 %v9580, %v9578
  %v9779 = vpack.c.b16 %v9581, %v9579
  %v9780 = vpack.c.b16 %v9584, %v9582
  %v9781 = vpack.c.b16 %v9585, %v9583
  %v9782 = vpack.c.b16 %v9588, %v9586
  %v9783 = vpack.c.b16 %v9589, %v9587
  %v9784 = vpack.c.b16 %v9592, %v9590
  %v9785 = vpack.c.b16 %v9593, %v9591
  %v9786 = vpack.c.b16 %v9596, %v9594
  %v9787 = vpack.c.b16 %v9597, %v9595
  %v9788 = vpack.c.b16 %v9600, %v9598
  %v9789 = vpack.c.b16 %v9601, %v9599
  %v9790 = vpack.c.b16 %v9604, %v9602
  %v9791 = vpack.c.b16 %v9605, %v9603
  %v9792 = vpack.c.b16 %v9608, %v9606
  %v9793 = vpack.c.b16 %v9609, %v9607
  %v9794 = vpack.c.b16 %v9612, %v9610
  %v9795 = vpack.c.b16 %v9613, %v9611
  %v9796 = vpack.c.b16 %v9616, %v9614
  %v9797 = vpack.c.b16 %v9617, %v9615
  %v9798 = vpack.c.b16 %v9620, %v9618
  %v9799 = vpack.c.b16 %v9621, %v9619
  %v9800 = vpack.c.b16 %v9624, %v9622
  %v9801 = vpack.c.b16 %v9625, %v9623
  %v9802 = vpack.c.b16 %v9628, %v9626
  %v9803 = vpack.c.b16 %v9629, %v9627
  %v9804 = vpack.c.b16 %v9632, %v9630
  %v9805 = vpack.c.b16 %v9633, %v9631
  %v9806 = vpack.c.b16 %v9636, %v9634
  %v9807 = vpack.c.b16 %v9637, %v9635
  %v9808 = vpack.c.b16 %v9640, %v9638
  %v9809 = vpack.c.b16 %v9641, %v9639
  %v9810 = vpack.c.b16 %v9644, %v9642
  %v9811 = vpack.c.b16 %v9645, %v9643
  %v9812 = vpack.c.b16 %v9648, %v9646
  %v9813 = vpack.c.b16 %v9649, %v9647
  %v9814 = vpack.c.b16 %v9652, %v9650
  %v9815 = vpack.c.b16 %v9653, %v9651
  %v9816 = vpack.c.b16 %v9656, %v9654
  %v9817 = vpack.c.b16 %v9657, %v9655
  %v9818 = vpack.c.b16 %v9660, %v9658
  %v9819 = vpack.c.b16 %v9661, %v9659
  %v9820 = vpack.c.b16 %v9664, %v9662
  %v9821 = vpack.c.b16 %v9665, %v9663
  %v9822 = vpack.c.b16 %v9668, %v9666
  %v9823 = vpack.c.b16 %v9669, %v9667
  %v9824 = vpack.c.b16 %v9672, %v9670
  %v9825 = vpack.c.b16 %v9673, %v9671
  %v9826 = vpack.c.b16 %v9676, %v9674
  %v9827 = vpack.c.b16 %v9677, %v9675
  %v9828 = vpack.c.b16 %v9680, %v9678
  %v9829 = vpack.c.b16 %v9681, %v9679
  %v9830 = vpack.c.b16 %v9684, %v9682
  %v9831 = vpack.c.b16 %v9685, %v9683
  %v9832 = vpack.c.b16 %v9688, %v9686
  %v9833 = vpack.c.b16 %v9689, %v9687
  %v9834 = vpack.c.b16 %v9692, %v9690
  %v9835 = vpack.c.b16 %v9693, %v9691
  %v9836 = vpack.c.b16 %v9696, %v9694
  %v9837 = vpack.c.b16 %v9697, %v9695
  %v9838 = vpack.c.b16 %v9700, %v9698
  %v9839 = vpack.c.b16 %v9701, %v9699
  %v9840 = vpack.c.b16 %v9704, %v9702
  %v9841 = vpack.c.b16 %v9705, %v9703
  %v9842 = vpack.c.b16 %v9708, %v9706
  %v9843 = vpack.c.b16 %v9709, %v9707
  %v9844 = vpack.c.b16 %v9712, %v9710
  %v9845 = vpack.c.b16 %v9713, %v9711
  %v9846 = vpack.c.b16 %v9716, %v9714
  %v9847 = vpack.c.b16 %v9717, %v9715
  %v9848 = vpack.c.b16 %v9720, %v9718
  %v9849 = vpack.c.b16 %v9721, %v9719
  %v9850 = vpack.c.b16 %v9724, %v9722
  %v9851 = vpack.c.b16 %v9725, %v9723
  %v9852 = vpack.c.b16 %v9728, %v9726
  %v9853 = vpack.c.b16 %v9729, %v9727
  %v9854 = vpack.c.b16 %v9732, %v9730
  %v9855 = vpack.c.b16 %v9733, %v9731
  %v9856 = vpack.c.b16 %v9736, %v9734
  %v9857 = vpack.c.b16 %v9737, %v9735
  %v9978 = vld [vmem:[%s5] sm:$0xf]
  %v9979 = vld [vmem:[%s5 + $0x4] sm:$0xf]
  %v9980 = vld [vmem:[%s5 + $0x8] sm:$0xf]
  %v9981 = vld [vmem:[%s5 + $0xc] sm:$0xf]
  %v9982 = vld [vmem:[%s5 + $0x10] sm:$0xf]
  %v9983 = vld [vmem:[%s5 + $0x14] sm:$0xf]
  %v9984 = vld [vmem:[%s5 + $0x18] sm:$0xf]
  %v9985 = vld [vmem:[%s5 + $0x1c] sm:$0xf]
  %v9986 = vld [vmem:[%s5 + $0x20] sm:$0xf]
  %v9987 = vld [vmem:[%s5 + $0x24] sm:$0xf]
  %v9988 = vld [vmem:[%s5 + $0x28] sm:$0xf]
  %v9989 = vld [vmem:[%s5 + $0x2c] sm:$0xf]
  %v9990 = vld [vmem:[%s5 + $0x30] sm:$0xf]
  %v9991 = vld [vmem:[%s5 + $0x34] sm:$0xf]
  %v9992 = vld [vmem:[%s5 + $0x38] sm:$0xf]
  %v9993 = vld [vmem:[%s5 + $0x3c] sm:$0xf]
  %v9994 = vld [vmem:[%s5 + $0x40] sm:$0xf]
  %v9995 = vld [vmem:[%s5 + $0x44] sm:$0xf]
  %v9996 = vld [vmem:[%s5 + $0x48] sm:$0xf]
  %v9997 = vld [vmem:[%s5 + $0x4c] sm:$0xf]
  %v9998 = vld [vmem:[%s5 + $0x50] sm:$0xf]
  %v9999 = vld [vmem:[%s5 + $0x54] sm:$0xf]
  %v10000 = vld [vmem:[%s5 + $0x58] sm:$0xf]
  %v10001 = vld [vmem:[%s5 + $0x5c] sm:$0xf]
  %v10002 = vld [vmem:[%s5 + $0x60] sm:$0xf]
  %v10003 = vld [vmem:[%s5 + $0x64] sm:$0xf]
  %v10004 = vld [vmem:[%s5 + $0x68] sm:$0xf]
  %v10005 = vld [vmem:[%s5 + $0x6c] sm:$0xf]
  %v10006 = vld [vmem:[%s5 + $0x70] sm:$0xf]
  %v10007 = vld [vmem:[%s5 + $0x74] sm:$0xf]
  %v10008 = vld [vmem:[%s5 + $0x78] sm:$0xf]
  %v10009 = vld [vmem:[%s5 + $0x7c] sm:$0xf]
  %v10010 = vld [vmem:[%s5 + $0x80] sm:$0xf]
  %v10011 = vld [vmem:[%s5 + $0x84] sm:$0xf]
  %v10012 = vld [vmem:[%s5 + $0x88] sm:$0xf]
  %v10013 = vld [vmem:[%s5 + $0x8c] sm:$0xf]
  %v10014 = vld [vmem:[%s5 + $0x90] sm:$0xf]
  %v10015 = vld [vmem:[%s5 + $0x94] sm:$0xf]
  %v10016 = vld [vmem:[%s5 + $0x98] sm:$0xf]
  %v10017 = vld [vmem:[%s5 + $0x9c] sm:$0xf]
  %v10018 = vld [vmem:[%s5 + $0xa0] sm:$0xf]
  %v10019 = vld [vmem:[%s5 + $0xa4] sm:$0xf]
  %v10020 = vld [vmem:[%s5 + $0xa8] sm:$0xf]
  %v10021 = vld [vmem:[%s5 + $0xac] sm:$0xf]
  %v10022 = vld [vmem:[%s5 + $0xb0] sm:$0xf]
  %v10023 = vld [vmem:[%s5 + $0xb4] sm:$0xf]
  %v10024 = vld [vmem:[%s5 + $0xb8] sm:$0xf]
  %v10025 = vld [vmem:[%s5 + $0xbc] sm:$0xf]
  %v10026 = vld [vmem:[%s5 + $0xc0] sm:$0xf]
  %v10027 = vld [vmem:[%s5 + $0xc4] sm:$0xf]
  %v10028 = vld [vmem:[%s5 + $0xc8] sm:$0xf]
  %v10029 = vld [vmem:[%s5 + $0xcc] sm:$0xf]
  %v10030 = vld [vmem:[%s5 + $0xd0] sm:$0xf]
  %v10031 = vld [vmem:[%s5 + $0xd4] sm:$0xf]
  %v10032 = vld [vmem:[%s5 + $0xd8] sm:$0xf]
  %v10033 = vld [vmem:[%s5 + $0xdc] sm:$0xf]
  %v10034 = vld [vmem:[%s5 + $0xe0] sm:$0xf]
  %v10035 = vld [vmem:[%s5 + $0xe4] sm:$0xf]
  %v10036 = vld [vmem:[%s5 + $0xe8] sm:$0xf]
  %v10037 = vld [vmem:[%s5 + $0xec] sm:$0xf]
  %v10038 = vld [vmem:[%s5 + $0xf0] sm:$0xf]
  %v10039 = vld [vmem:[%s5 + $0xf4] sm:$0xf]
  %v10040 = vld [vmem:[%s5 + $0xf8] sm:$0xf]
  %v10041 = vld [vmem:[%s5 + $0xfc] sm:$0xf]
  %v10042 = vld [vmem:[%s5 + $0x100] sm:$0xf]
  %v10043 = vld [vmem:[%s5 + $0x104] sm:$0xf]
  %v10044 = vld [vmem:[%s5 + $0x108] sm:$0xf]
  %v10045 = vld [vmem:[%s5 + $0x10c] sm:$0xf]
  %v10046 = vld [vmem:[%s5 + $0x110] sm:$0xf]
  %v10047 = vld [vmem:[%s5 + $0x114] sm:$0xf]
  %v10048 = vld [vmem:[%s5 + $0x118] sm:$0xf]
  %v10049 = vld [vmem:[%s5 + $0x11c] sm:$0xf]
  %v10050 = vld [vmem:[%s5 + $0x120] sm:$0xf]
  %v10051 = vld [vmem:[%s5 + $0x124] sm:$0xf]
  %v10052 = vld [vmem:[%s5 + $0x128] sm:$0xf]
  %v10053 = vld [vmem:[%s5 + $0x12c] sm:$0xf]
  %v10054 = vld [vmem:[%s5 + $0x130] sm:$0xf]
  %v10055 = vld [vmem:[%s5 + $0x134] sm:$0xf]
  %v10056 = vld [vmem:[%s5 + $0x138] sm:$0xf]
  %v10057 = vld [vmem:[%s5 + $0x13c] sm:$0xf]
  %v10058 = vld [vmem:[%s5 + $0x140] sm:$0xf]
  %v10059 = vld [vmem:[%s5 + $0x144] sm:$0xf]
  %v10060 = vld [vmem:[%s5 + $0x148] sm:$0xf]
  %v10061 = vld [vmem:[%s5 + $0x14c] sm:$0xf]
  %v10062 = vld [vmem:[%s5 + $0x150] sm:$0xf]
  %v10063 = vld [vmem:[%s5 + $0x154] sm:$0xf]
  %v10064 = vld [vmem:[%s5 + $0x158] sm:$0xf]
  %v10065 = vld [vmem:[%s5 + $0x15c] sm:$0xf]
  %v10066 = vld [vmem:[%s5 + $0x160] sm:$0xf]
  %v10067 = vld [vmem:[%s5 + $0x164] sm:$0xf]
  %v10068 = vld [vmem:[%s5 + $0x168] sm:$0xf]
  %v10069 = vld [vmem:[%s5 + $0x16c] sm:$0xf]
  %v10070 = vld [vmem:[%s5 + $0x170] sm:$0xf]
  %v10071 = vld [vmem:[%s5 + $0x174] sm:$0xf]
  %v10072 = vld [vmem:[%s5 + $0x178] sm:$0xf]
  %v10073 = vld [vmem:[%s5 + $0x17c] sm:$0xf]
  %v10074 = vld [vmem:[%s6] sm:$0x1]
  %v10076 = vperm.slane %v10074, 0
  %v10174 = vunpack.c.l.b16 %v9978
  %v10175 = vunpack.c.l.b16 %v9979
  %v10176 = vunpack.c.l.b16 %v9980
  %v10177 = vunpack.c.l.b16 %v9981
  %v10178 = vunpack.c.l.b16 %v9982
  %v10179 = vunpack.c.l.b16 %v9983
  %v10180 = vunpack.c.l.b16 %v9984
  %v10181 = vunpack.c.l.b16 %v9985
  %v10182 = vunpack.c.l.b16 %v9986
  %v10183 = vunpack.c.l.b16 %v9987
  %v10184 = vunpack.c.l.b16 %v9988
  %v10185 = vunpack.c.l.b16 %v9989
  %v10186 = vunpack.c.l.b16 %v9990
  %v10187 = vunpack.c.l.b16 %v9991
  %v10188 = vunpack.c.l.b16 %v9992
  %v10189 = vunpack.c.l.b16 %v9993
  %v10190 = vunpack.c.l.b16 %v9994
  %v10191 = vunpack.c.l.b16 %v9995
  %v10192 = vunpack.c.l.b16 %v9996
  %v10193 = vunpack.c.l.b16 %v9997
  %v10194 = vunpack.c.l.b16 %v9998
  %v10195 = vunpack.c.l.b16 %v9999
  %v10196 = vunpack.c.l.b16 %v10000
  %v10197 = vunpack.c.l.b16 %v10001
  %v10198 = vunpack.c.l.b16 %v10002
  %v10199 = vunpack.c.l.b16 %v10003
  %v10200 = vunpack.c.l.b16 %v10004
  %v10201 = vunpack.c.l.b16 %v10005
  %v10202 = vunpack.c.l.b16 %v10006
  %v10203 = vunpack.c.l.b16 %v10007
  %v10204 = vunpack.c.l.b16 %v10008
  %v10205 = vunpack.c.l.b16 %v10009
  %v10206 = vunpack.c.l.b16 %v10010
  %v10207 = vunpack.c.l.b16 %v10011
  %v10208 = vunpack.c.l.b16 %v10012
  %v10209 = vunpack.c.l.b16 %v10013
  %v10210 = vunpack.c.l.b16 %v10014
  %v10211 = vunpack.c.l.b16 %v10015
  %v10212 = vunpack.c.l.b16 %v10016
  %v10213 = vunpack.c.l.b16 %v10017
  %v10214 = vunpack.c.l.b16 %v10018
  %v10215 = vunpack.c.l.b16 %v10019
  %v10216 = vunpack.c.l.b16 %v10020
  %v10217 = vunpack.c.l.b16 %v10021
  %v10218 = vunpack.c.l.b16 %v10022
  %v10219 = vunpack.c.l.b16 %v10023
  %v10220 = vunpack.c.l.b16 %v10024
  %v10221 = vunpack.c.l.b16 %v10025
  %v10222 = vunpack.c.l.b16 %v10026
  %v10223 = vunpack.c.l.b16 %v10027
  %v10224 = vunpack.c.l.b16 %v10028
  %v10225 = vunpack.c.l.b16 %v10029
  %v10226 = vunpack.c.l.b16 %v10030
  %v10227 = vunpack.c.l.b16 %v10031
  %v10228 = vunpack.c.l.b16 %v10032
  %v10229 = vunpack.c.l.b16 %v10033
  %v10230 = vunpack.c.l.b16 %v10034
  %v10231 = vunpack.c.l.b16 %v10035
  %v10232 = vunpack.c.l.b16 %v10036
  %v10233 = vunpack.c.l.b16 %v10037
  %v10234 = vunpack.c.l.b16 %v10038
  %v10235 = vunpack.c.l.b16 %v10039
  %v10236 = vunpack.c.l.b16 %v10040
  %v10237 = vunpack.c.l.b16 %v10041
  %v10238 = vunpack.c.l.b16 %v10042
  %v10239 = vunpack.c.l.b16 %v10043
  %v10240 = vunpack.c.l.b16 %v10044
  %v10241 = vunpack.c.l.b16 %v10045
  %v10242 = vunpack.c.l.b16 %v10046
  %v10243 = vunpack.c.l.b16 %v10047
  %v10244 = vunpack.c.l.b16 %v10048
  %v10245 = vunpack.c.l.b16 %v10049
  %v10246 = vunpack.c.l.b16 %v10050
  %v10247 = vunpack.c.l.b16 %v10051
  %v10248 = vunpack.c.l.b16 %v10052
  %v10249 = vunpack.c.l.b16 %v10053
  %v10250 = vunpack.c.l.b16 %v10054
  %v10251 = vunpack.c.l.b16 %v10055
  %v10252 = vunpack.c.l.b16 %v10056
  %v10253 = vunpack.c.l.b16 %v10057
  %v10254 = vunpack.c.l.b16 %v10058
  %v10255 = vunpack.c.l.b16 %v10059
  %v10256 = vunpack.c.l.b16 %v10060
  %v10257 = vunpack.c.l.b16 %v10061
  %v10258 = vunpack.c.l.b16 %v10062
  %v10259 = vunpack.c.l.b16 %v10063
  %v10260 = vunpack.c.l.b16 %v10064
  %v10261 = vunpack.c.l.b16 %v10065
  %v10262 = vunpack.c.l.b16 %v10066
  %v10263 = vunpack.c.l.b16 %v10067
  %v10264 = vunpack.c.l.b16 %v10068
  %v10265 = vunpack.c.l.b16 %v10069
  %v10266 = vunpack.c.l.b16 %v10070
  %v10267 = vunpack.c.l.b16 %v10071
  %v10268 = vunpack.c.l.b16 %v10072
  %v10269 = vunpack.c.l.b16 %v10073
  %v10270 = vpack.c.b16 %v10175, %v10174
  %v10271 = vpack.c.b16 %v10177, %v10176
  %v10272 = vpack.c.b16 %v10179, %v10178
  %v10273 = vpack.c.b16 %v10181, %v10180
  %v10274 = vpack.c.b16 %v10183, %v10182
  %v10275 = vpack.c.b16 %v10185, %v10184
  %v10276 = vpack.c.b16 %v10187, %v10186
  %v10277 = vpack.c.b16 %v10189, %v10188
  %v10278 = vpack.c.b16 %v10191, %v10190
  %v10279 = vpack.c.b16 %v10193, %v10192
  %v10280 = vpack.c.b16 %v10195, %v10194
  %v10281 = vpack.c.b16 %v10197, %v10196
  %v10282 = vpack.c.b16 %v10199, %v10198
  %v10283 = vpack.c.b16 %v10201, %v10200
  %v10284 = vpack.c.b16 %v10203, %v10202
  %v10285 = vpack.c.b16 %v10205, %v10204
  %v10286 = vpack.c.b16 %v10207, %v10206
  %v10287 = vpack.c.b16 %v10209, %v10208
  %v10288 = vpack.c.b16 %v10211, %v10210
  %v10289 = vpack.c.b16 %v10213, %v10212
  %v10290 = vpack.c.b16 %v10215, %v10214
  %v10291 = vpack.c.b16 %v10217, %v10216
  %v10292 = vpack.c.b16 %v10219, %v10218
  %v10293 = vpack.c.b16 %v10221, %v10220
  %v10294 = vpack.c.b16 %v10223, %v10222
  %v10295 = vpack.c.b16 %v10225, %v10224
  %v10296 = vpack.c.b16 %v10227, %v10226
  %v10297 = vpack.c.b16 %v10229, %v10228
  %v10298 = vpack.c.b16 %v10231, %v10230
  %v10299 = vpack.c.b16 %v10233, %v10232
  %v10300 = vpack.c.b16 %v10235, %v10234
  %v10301 = vpack.c.b16 %v10237, %v10236
  %v10302 = vpack.c.b16 %v10239, %v10238
  %v10303 = vpack.c.b16 %v10241, %v10240
  %v10304 = vpack.c.b16 %v10243, %v10242
  %v10305 = vpack.c.b16 %v10245, %v10244
  %v10306 = vpack.c.b16 %v10247, %v10246
  %v10307 = vpack.c.b16 %v10249, %v10248
  %v10308 = vpack.c.b16 %v10251, %v10250
  %v10309 = vpack.c.b16 %v10253, %v10252
  %v10310 = vpack.c.b16 %v10255, %v10254
  %v10311 = vpack.c.b16 %v10257, %v10256
  %v10312 = vpack.c.b16 %v10259, %v10258
  %v10313 = vpack.c.b16 %v10261, %v10260
  %v10314 = vpack.c.b16 %v10263, %v10262
  %v10315 = vpack.c.b16 %v10265, %v10264
  %v10316 = vpack.c.b16 %v10267, %v10266
  %v10317 = vpack.c.b16 %v10269, %v10268
  %10366 = vmatpush.bf16.msra.mxu0 %v10277
  %10367 = vmatpush.bf16.msra.mxu0 %v10276
  %10368 = vmatpush.bf16.msra.mxu0 %v10275
  %10369 = vmatpush.bf16.msra.mxu0 %v10274
  %10370 = vmatpush.bf16.msra.mxu0 %v10273
  %10371 = vmatpush.bf16.msra.mxu0 %v10272
  %10372 = vmatpush.bf16.msra.mxu0 %v10271
  %10373 = vmatpush.bf16.msra.mxu0 %v10270
  %10374 = vmatmul.bf16.gmra.mxu0 %v8538
  %v10375 = vpop.f32.mrf.mxu0
  %v10376 = vadd.f32 %v10076, %v10375
  %v10377 = vpop.f32.mrf.mxu0
  %v10378 = vadd.f32 %v10076, %v10377
  %10379 = vmatmul.bf16.gmra.mxu0 %v8540
  %v10380 = vpop.f32.mrf.mxu0
  %v10381 = vadd.f32 %v10076, %v10380
  %v10382 = vpop.f32.mrf.mxu0
  %v10383 = vadd.f32 %v10076, %v10382
  %10384 = vmatmul.bf16.gmra.mxu0 %v8542
  %v10385 = vpop.f32.mrf.mxu0
  %v10386 = vadd.f32 %v10076, %v10385
  %v10387 = vpop.f32.mrf.mxu0
  %v10388 = vadd.f32 %v10076, %v10387
  %10389 = vmatmul.bf16.gmra.mxu0 %v8544
  %v10390 = vpop.f32.mrf.mxu0
  %v10391 = vadd.f32 %v10076, %v10390
  %v10392 = vpop.f32.mrf.mxu0
  %v10393 = vadd.f32 %v10076, %v10392
  %10394 = vmatmul.bf16.gmra.mxu0 %v8546
  %v10395 = vpop.f32.mrf.mxu0
  %v10396 = vadd.f32 %v10076, %v10395
  %v10397 = vpop.f32.mrf.mxu0
  %v10398 = vadd.f32 %v10076, %v10397
  %10399 = vmatmul.bf16.gmra.mxu0 %v8548
  %v10400 = vpop.f32.mrf.mxu0
  %v10401 = vadd.f32 %v10076, %v10400
  %v10402 = vpop.f32.mrf.mxu0
  %v10403 = vadd.f32 %v10076, %v10402
  %10404 = vmatmul.bf16.gmra.mxu0 %v8550
  %v10405 = vpop.f32.mrf.mxu0
  %v10406 = vadd.f32 %v10076, %v10405
  %v10407 = vpop.f32.mrf.mxu0
  %v10408 = vadd.f32 %v10076, %v10407
  %10409 = vmatmul.bf16.gmra.mxu0 %v8552
  %v10410 = vpop.f32.mrf.mxu0
  %v10411 = vadd.f32 %v10076, %v10410
  %v10412 = vpop.f32.mrf.mxu0
  %v10413 = vadd.f32 %v10076, %v10412
  %10414 = vmatmul.bf16.gmra.mxu0 %v8554
  %v10415 = vpop.f32.mrf.mxu0
  %v10416 = vadd.f32 %v10076, %v10415
  %v10417 = vpop.f32.mrf.mxu0
  %v10418 = vadd.f32 %v10076, %v10417
  %10419 = vmatmul.bf16.gmra.mxu0 %v8556
  %v10420 = vpop.f32.mrf.mxu0
  %v10421 = vadd.f32 %v10076, %v10420
  %v10422 = vpop.f32.mrf.mxu0
  %v10423 = vadd.f32 %v10076, %v10422
  %10424 = vmatmul.bf16.gmra.mxu0 %v8558
  %v10425 = vpop.f32.mrf.mxu0
  %v10426 = vadd.f32 %v10076, %v10425
  %v10427 = vpop.f32.mrf.mxu0
  %v10428 = vadd.f32 %v10076, %v10427
  %10429 = vmatmul.bf16.gmra.mxu0 %v8560
  %v10430 = vpop.f32.mrf.mxu0
  %v10431 = vadd.f32 %v10076, %v10430
  %v10432 = vpop.f32.mrf.mxu0
  %v10433 = vadd.f32 %v10076, %v10432
  %10434 = vmatmul.bf16.gmra.mxu0 %v8562
  %v10435 = vpop.f32.mrf.mxu0
  %v10436 = vadd.f32 %v10076, %v10435
  %v10437 = vpop.f32.mrf.mxu0
  %v10438 = vadd.f32 %v10076, %v10437
  %10439 = vmatmul.bf16.gmra.mxu0 %v8564
  %v10440 = vpop.f32.mrf.mxu0
  %v10441 = vadd.f32 %v10076, %v10440
  %v10442 = vpop.f32.mrf.mxu0
  %v10443 = vadd.f32 %v10076, %v10442
  %10444 = vmatmul.bf16.gmra.mxu0 %v8566
  %v10445 = vpop.f32.mrf.mxu0
  %v10446 = vadd.f32 %v10076, %v10445
  %v10447 = vpop.f32.mrf.mxu0
  %v10448 = vadd.f32 %v10076, %v10447
  %10449 = vmatmul.bf16.gmra.mxu0 %v8568
  %v10450 = vpop.f32.mrf.mxu0
  %v10451 = vadd.f32 %v10076, %v10450
  %v10452 = vpop.f32.mrf.mxu0
  %v10453 = vadd.f32 %v10076, %v10452
  %10454 = vmatmul.bf16.gmra.mxu0 %v8570
  %v10455 = vpop.f32.mrf.mxu0
  %v10456 = vadd.f32 %v10076, %v10455
  %v10457 = vpop.f32.mrf.mxu0
  %v10458 = vadd.f32 %v10076, %v10457
  %10459 = vmatmul.bf16.gmra.mxu0 %v8572
  %v10460 = vpop.f32.mrf.mxu0
  %v10461 = vadd.f32 %v10076, %v10460
  %v10462 = vpop.f32.mrf.mxu0
  %v10463 = vadd.f32 %v10076, %v10462
  %10464 = vmatmul.bf16.gmra.mxu0 %v8574
  %v10465 = vpop.f32.mrf.mxu0
  %v10466 = vadd.f32 %v10076, %v10465
  %v10467 = vpop.f32.mrf.mxu0
  %v10468 = vadd.f32 %v10076, %v10467
  %10469 = vmatmul.bf16.gmra.mxu0 %v8576
  %v10470 = vpop.f32.mrf.mxu0
  %v10471 = vadd.f32 %v10076, %v10470
  %v10472 = vpop.f32.mrf.mxu0
  %v10473 = vadd.f32 %v10076, %v10472
  %10474 = vmatmul.bf16.gmra.mxu0 %v8578
  %v10475 = vpop.f32.mrf.mxu0
  %v10476 = vadd.f32 %v10076, %v10475
  %v10477 = vpop.f32.mrf.mxu0
  %v10478 = vadd.f32 %v10076, %v10477
  %10479 = vmatmul.bf16.gmra.mxu0 %v8580
  %v10480 = vpop.f32.mrf.mxu0
  %v10481 = vadd.f32 %v10076, %v10480
  %v10482 = vpop.f32.mrf.mxu0
  %v10483 = vadd.f32 %v10076, %v10482
  %10484 = vmatmul.bf16.gmra.mxu0 %v8582
  %v10485 = vpop.f32.mrf.mxu0
  %v10486 = vadd.f32 %v10076, %v10485
  %v10487 = vpop.f32.mrf.mxu0
  %v10488 = vadd.f32 %v10076, %v10487
  %10489 = vmatmul.bf16.gmra.mxu0 %v8584
  %v10490 = vpop.f32.mrf.mxu0
  %v10491 = vadd.f32 %v10076, %v10490
  %v10492 = vpop.f32.mrf.mxu0
  %v10493 = vadd.f32 %v10076, %v10492
  %10494 = vmatmul.bf16.gmra.mxu0 %v8586
  %v10495 = vpop.f32.mrf.mxu0
  %v10496 = vadd.f32 %v10076, %v10495
  %v10497 = vpop.f32.mrf.mxu0
  %v10498 = vadd.f32 %v10076, %v10497
  %10499 = vmatmul.bf16.gmra.mxu0 %v8588
  %v10500 = vpop.f32.mrf.mxu0
  %v10501 = vadd.f32 %v10076, %v10500
  %v10502 = vpop.f32.mrf.mxu0
  %v10503 = vadd.f32 %v10076, %v10502
  %10504 = vmatmul.bf16.gmra.mxu0 %v8590
  %v10505 = vpop.f32.mrf.mxu0
  %v10506 = vadd.f32 %v10076, %v10505
  %v10507 = vpop.f32.mrf.mxu0
  %v10508 = vadd.f32 %v10076, %v10507
  %10509 = vmatmul.bf16.gmra.mxu0 %v8592
  %v10510 = vpop.f32.mrf.mxu0
  %v10511 = vadd.f32 %v10076, %v10510
  %v10512 = vpop.f32.mrf.mxu0
  %v10513 = vadd.f32 %v10076, %v10512
  %10514 = vmatmul.bf16.gmra.mxu0 %v8594
  %v10515 = vpop.f32.mrf.mxu0
  %v10516 = vadd.f32 %v10076, %v10515
  %v10517 = vpop.f32.mrf.mxu0
  %v10518 = vadd.f32 %v10076, %v10517
  %10519 = vmatmul.bf16.gmra.mxu0 %v8596
  %v10520 = vpop.f32.mrf.mxu0
  %v10521 = vadd.f32 %v10076, %v10520
  %v10522 = vpop.f32.mrf.mxu0
  %v10523 = vadd.f32 %v10076, %v10522
  %10524 = vmatmul.bf16.gmra.mxu0 %v8598
  %v10525 = vpop.f32.mrf.mxu0
  %v10526 = vadd.f32 %v10076, %v10525
  %v10527 = vpop.f32.mrf.mxu0
  %v10528 = vadd.f32 %v10076, %v10527
  %10529 = vmatmul.bf16.gmra.mxu0 %v8600
  %v10530 = vpop.f32.mrf.mxu0
  %v10531 = vadd.f32 %v10076, %v10530
  %v10532 = vpop.f32.mrf.mxu0
  %v10533 = vadd.f32 %v10076, %v10532
  %10534 = vmatmul.bf16.gmra.mxu0 %v8602
  %v10535 = vpop.f32.mrf.mxu0
  %v10536 = vadd.f32 %v10076, %v10535
  %v10537 = vpop.f32.mrf.mxu0
  %v10538 = vadd.f32 %v10076, %v10537
  %10539 = vmatmul.bf16.gmra.mxu0 %v8604
  %v10540 = vpop.f32.mrf.mxu0
  %v10541 = vadd.f32 %v10076, %v10540
  %v10542 = vpop.f32.mrf.mxu0
  %v10543 = vadd.f32 %v10076, %v10542
  %10544 = vmatmul.bf16.gmra.mxu0 %v8606
  %v10545 = vpop.f32.mrf.mxu0
  %v10546 = vadd.f32 %v10076, %v10545
  %v10547 = vpop.f32.mrf.mxu0
  %v10548 = vadd.f32 %v10076, %v10547
  %10549 = vmatmul.bf16.gmra.mxu0 %v8608
  %v10550 = vpop.f32.mrf.mxu0
  %v10551 = vadd.f32 %v10076, %v10550
  %v10552 = vpop.f32.mrf.mxu0
  %v10553 = vadd.f32 %v10076, %v10552
  %10554 = vmatmul.bf16.gmra.mxu0 %v8610
  %v10555 = vpop.f32.mrf.mxu0
  %v10556 = vadd.f32 %v10076, %v10555
  %v10557 = vpop.f32.mrf.mxu0
  %v10558 = vadd.f32 %v10076, %v10557
  %10559 = vmatmul.bf16.gmra.mxu0 %v8612
  %v10560 = vpop.f32.mrf.mxu0
  %v10561 = vadd.f32 %v10076, %v10560
  %v10562 = vpop.f32.mrf.mxu0
  %v10563 = vadd.f32 %v10076, %v10562
  %10564 = vmatmul.bf16.gmra.mxu0 %v8614
  %v10565 = vpop.f32.mrf.mxu0
  %v10566 = vadd.f32 %v10076, %v10565
  %v10567 = vpop.f32.mrf.mxu0
  %v10568 = vadd.f32 %v10076, %v10567
  %10569 = vmatmul.bf16.gmra.mxu0 %v8616
  %v10570 = vpop.f32.mrf.mxu0
  %v10571 = vadd.f32 %v10076, %v10570
  %v10572 = vpop.f32.mrf.mxu0
  %v10573 = vadd.f32 %v10076, %v10572
  %10574 = vmatmul.bf16.gmra.mxu0 %v8618
  %v10575 = vpop.f32.mrf.mxu0
  %v10576 = vadd.f32 %v10076, %v10575
  %v10577 = vpop.f32.mrf.mxu0
  %v10578 = vadd.f32 %v10076, %v10577
  %10579 = vmatmul.bf16.gmra.mxu0 %v8620
  %v10580 = vpop.f32.mrf.mxu0
  %v10581 = vadd.f32 %v10076, %v10580
  %v10582 = vpop.f32.mrf.mxu0
  %v10583 = vadd.f32 %v10076, %v10582
  %10584 = vmatmul.bf16.gmra.mxu0 %v8622
  %v10585 = vpop.f32.mrf.mxu0
  %v10586 = vadd.f32 %v10076, %v10585
  %v10587 = vpop.f32.mrf.mxu0
  %v10588 = vadd.f32 %v10076, %v10587
  %10589 = vmatmul.bf16.gmra.mxu0 %v8624
  %v10590 = vpop.f32.mrf.mxu0
  %v10591 = vadd.f32 %v10076, %v10590
  %v10592 = vpop.f32.mrf.mxu0
  %v10593 = vadd.f32 %v10076, %v10592
  %10594 = vmatmul.bf16.gmra.mxu0 %v8626
  %v10595 = vpop.f32.mrf.mxu0
  %v10596 = vadd.f32 %v10076, %v10595
  %v10597 = vpop.f32.mrf.mxu0
  %v10598 = vadd.f32 %v10076, %v10597
  %10599 = vmatmul.bf16.gmra.mxu0 %v8628
  %v10600 = vpop.f32.mrf.mxu0
  %v10601 = vadd.f32 %v10076, %v10600
  %v10602 = vpop.f32.mrf.mxu0
  %v10603 = vadd.f32 %v10076, %v10602
  %10604 = vmatmul.bf16.gmra.mxu0 %v8630
  %v10605 = vpop.f32.mrf.mxu0
  %v10606 = vadd.f32 %v10076, %v10605
  %v10607 = vpop.f32.mrf.mxu0
  %v10608 = vadd.f32 %v10076, %v10607
  %10609 = vmatmul.bf16.gmra.mxu0 %v8632
  %v10610 = vpop.f32.mrf.mxu0
  %v10611 = vadd.f32 %v10076, %v10610
  %v10612 = vpop.f32.mrf.mxu0
  %v10613 = vadd.f32 %v10076, %v10612
  %10614 = vmatmul.bf16.gmra.mxu0 %v8634
  %v10615 = vpop.f32.mrf.mxu0
  %v10616 = vpop.f32.mrf.mxu0
  %10617 = vmatmul.bf16.gmra.mxu0 %v8636
  %v10618 = vpop.f32.mrf.mxu0
  %v10619 = vpop.f32.mrf.mxu0
  %10620 = vmatmul.bf16.gmra.mxu0 %v8638
  %v10621 = vpop.f32.mrf.mxu0
  %v10622 = vpop.f32.mrf.mxu0
  %10623 = vmatmul.bf16.gmra.mxu0 %v8640
  %v10624 = vpop.f32.mrf.mxu0
  %v10625 = vpop.f32.mrf.mxu0
  %10626 = vmatmul.bf16.gmra.mxu0 %v8642
  %v10627 = vpop.f32.mrf.mxu0
  %v10628 = vpop.f32.mrf.mxu0
  %10629 = vmatmul.bf16.gmra.mxu0 %v8644
  %v10630 = vpop.f32.mrf.mxu0
  %v10631 = vpop.f32.mrf.mxu0
  %10632 = vmatmul.bf16.gmra.mxu0 %v8646
  %v10633 = vpop.f32.mrf.mxu0
  %v10634 = vpop.f32.mrf.mxu0
  %10635 = vmatmul.bf16.gmra.mxu0 %v8648
  %v10636 = vpop.f32.mrf.mxu0
  %v10637 = vpop.f32.mrf.mxu0
  %10638 = vmatmul.bf16.gmra.mxu0 %v8650
  %v10639 = vpop.f32.mrf.mxu0
  %v10640 = vpop.f32.mrf.mxu0
  %10641 = vmatmul.bf16.gmra.mxu0 %v8652
  %v10642 = vpop.f32.mrf.mxu0
  %v10643 = vpop.f32.mrf.mxu0
  %10644 = vmatmul.bf16.gmra.mxu0 %v8654
  %v10645 = vpop.f32.mrf.mxu0
  %v10646 = vpop.f32.mrf.mxu0
  %10647 = vmatmul.bf16.gmra.mxu0 %v8656
  %v10648 = vpop.f32.mrf.mxu0
  %v10649 = vpop.f32.mrf.mxu0
  %10650 = vdwg.mxu0
  %10651 = vmatpush.bf16.msra.mxu0 %v10285
  %10652 = vmatpush.bf16.msra.mxu0 %v10284
  %10653 = vmatpush.bf16.msra.mxu0 %v10283
  %10654 = vmatpush.bf16.msra.mxu0 %v10282
  %10655 = vmatpush.bf16.msra.mxu0 %v10281
  %10656 = vmatpush.bf16.msra.mxu0 %v10280
  %10657 = vmatpush.bf16.msra.mxu0 %v10279
  %10658 = vmatpush.bf16.msra.mxu0 %v10278
  %10659 = vmatmul.bf16.gmra.mxu0 %v8539
  %v10660 = vpop.f32.mrf.mxu0
  %v10661 = vadd.f32 %v10376, %v10660
  %v10662 = vpop.f32.mrf.mxu0
  %v10663 = vadd.f32 %v10378, %v10662
  %10664 = vmatmul.bf16.gmra.mxu0 %v8541
  %v10665 = vpop.f32.mrf.mxu0
  %v10666 = vadd.f32 %v10381, %v10665
  %v10667 = vpop.f32.mrf.mxu0
  %v10668 = vadd.f32 %v10383, %v10667
  %10669 = vmatmul.bf16.gmra.mxu0 %v8543
  %v10670 = vpop.f32.mrf.mxu0
  %v10671 = vadd.f32 %v10386, %v10670
  %v10672 = vpop.f32.mrf.mxu0
  %v10673 = vadd.f32 %v10388, %v10672
  %10674 = vmatmul.bf16.gmra.mxu0 %v8545
  %v10675 = vpop.f32.mrf.mxu0
  %v10676 = vadd.f32 %v10391, %v10675
  %v10677 = vpop.f32.mrf.mxu0
  %v10678 = vadd.f32 %v10393, %v10677
  %10679 = vmatmul.bf16.gmra.mxu0 %v8547
  %v10680 = vpop.f32.mrf.mxu0
  %v10681 = vadd.f32 %v10396, %v10680
  %v10682 = vpop.f32.mrf.mxu0
  %v10683 = vadd.f32 %v10398, %v10682
  %10684 = vmatmul.bf16.gmra.mxu0 %v8549
  %v10685 = vpop.f32.mrf.mxu0
  %v10686 = vadd.f32 %v10401, %v10685
  %v10687 = vpop.f32.mrf.mxu0
  %v10688 = vadd.f32 %v10403, %v10687
  %10689 = vmatmul.bf16.gmra.mxu0 %v8551
  %v10690 = vpop.f32.mrf.mxu0
  %v10691 = vadd.f32 %v10406, %v10690
  %v10692 = vpop.f32.mrf.mxu0
  %v10693 = vadd.f32 %v10408, %v10692
  %10694 = vmatmul.bf16.gmra.mxu0 %v8553
  %v10695 = vpop.f32.mrf.mxu0
  %v10696 = vadd.f32 %v10411, %v10695
  %v10697 = vpop.f32.mrf.mxu0
  %v10698 = vadd.f32 %v10413, %v10697
  %10699 = vmatmul.bf16.gmra.mxu0 %v8555
  %v10700 = vpop.f32.mrf.mxu0
  %v10701 = vadd.f32 %v10416, %v10700
  %v10702 = vpop.f32.mrf.mxu0
  %v10703 = vadd.f32 %v10418, %v10702
  %10704 = vmatmul.bf16.gmra.mxu0 %v8557
  %v10705 = vpop.f32.mrf.mxu0
  %v10706 = vadd.f32 %v10421, %v10705
  %v10707 = vpop.f32.mrf.mxu0
  %v10708 = vadd.f32 %v10423, %v10707
  %10709 = vmatmul.bf16.gmra.mxu0 %v8559
  %v10710 = vpop.f32.mrf.mxu0
  %v10711 = vadd.f32 %v10426, %v10710
  %v10712 = vpop.f32.mrf.mxu0
  %v10713 = vadd.f32 %v10428, %v10712
  %10714 = vmatmul.bf16.gmra.mxu0 %v8561
  %v10715 = vpop.f32.mrf.mxu0
  %v10716 = vadd.f32 %v10431, %v10715
  %v10717 = vpop.f32.mrf.mxu0
  %v10718 = vadd.f32 %v10433, %v10717
  %10719 = vmatmul.bf16.gmra.mxu0 %v8563
  %v10720 = vpop.f32.mrf.mxu0
  %v10721 = vadd.f32 %v10436, %v10720
  %v10722 = vpop.f32.mrf.mxu0
  %v10723 = vadd.f32 %v10438, %v10722
  %10724 = vmatmul.bf16.gmra.mxu0 %v8565
  %v10725 = vpop.f32.mrf.mxu0
  %v10726 = vadd.f32 %v10441, %v10725
  %v10727 = vpop.f32.mrf.mxu0
  %v10728 = vadd.f32 %v10443, %v10727
  %10729 = vmatmul.bf16.gmra.mxu0 %v8567
  %v10730 = vpop.f32.mrf.mxu0
  %v10731 = vadd.f32 %v10446, %v10730
  %v10732 = vpop.f32.mrf.mxu0
  %v10733 = vadd.f32 %v10448, %v10732
  %10734 = vmatmul.bf16.gmra.mxu0 %v8569
  %v10735 = vpop.f32.mrf.mxu0
  %v10736 = vadd.f32 %v10451, %v10735
  %v10737 = vpop.f32.mrf.mxu0
  %v10738 = vadd.f32 %v10453, %v10737
  %10739 = vmatmul.bf16.gmra.mxu0 %v8571
  %v10740 = vpop.f32.mrf.mxu0
  %v10741 = vadd.f32 %v10456, %v10740
  %v10742 = vpop.f32.mrf.mxu0
  %v10743 = vadd.f32 %v10458, %v10742
  %10744 = vmatmul.bf16.gmra.mxu0 %v8573
  %v10745 = vpop.f32.mrf.mxu0
  %v10746 = vadd.f32 %v10461, %v10745
  %v10747 = vpop.f32.mrf.mxu0
  %v10748 = vadd.f32 %v10463, %v10747
  %10749 = vmatmul.bf16.gmra.mxu0 %v8575
  %v10750 = vpop.f32.mrf.mxu0
  %v10751 = vadd.f32 %v10466, %v10750
  %v10752 = vpop.f32.mrf.mxu0
  %v10753 = vadd.f32 %v10468, %v10752
  %10754 = vmatmul.bf16.gmra.mxu0 %v8577
  %v10755 = vpop.f32.mrf.mxu0
  %v10756 = vadd.f32 %v10471, %v10755
  %v10757 = vpop.f32.mrf.mxu0
  %v10758 = vadd.f32 %v10473, %v10757
  %10759 = vmatmul.bf16.gmra.mxu0 %v8579
  %v10760 = vpop.f32.mrf.mxu0
  %v10761 = vadd.f32 %v10476, %v10760
  %v10762 = vpop.f32.mrf.mxu0
  %v10763 = vadd.f32 %v10478, %v10762
  %10764 = vmatmul.bf16.gmra.mxu0 %v8581
  %v10765 = vpop.f32.mrf.mxu0
  %v10766 = vadd.f32 %v10481, %v10765
  %v10767 = vpop.f32.mrf.mxu0
  %v10768 = vadd.f32 %v10483, %v10767
  %10769 = vmatmul.bf16.gmra.mxu0 %v8583
  %v10770 = vpop.f32.mrf.mxu0
  %v10771 = vadd.f32 %v10486, %v10770
  %v10772 = vpop.f32.mrf.mxu0
  %v10773 = vadd.f32 %v10488, %v10772
  %10774 = vmatmul.bf16.gmra.mxu0 %v8585
  %v10775 = vpop.f32.mrf.mxu0
  %v10776 = vadd.f32 %v10491, %v10775
  %v10777 = vpop.f32.mrf.mxu0
  %v10778 = vadd.f32 %v10493, %v10777
  %10779 = vmatmul.bf16.gmra.mxu0 %v8587
  %v10780 = vpop.f32.mrf.mxu0
  %v10781 = vadd.f32 %v10496, %v10780
  %v10782 = vpop.f32.mrf.mxu0
  %v10783 = vadd.f32 %v10498, %v10782
  %10784 = vmatmul.bf16.gmra.mxu0 %v8589
  %v10785 = vpop.f32.mrf.mxu0
  %v10786 = vadd.f32 %v10501, %v10785
  %v10787 = vpop.f32.mrf.mxu0
  %v10788 = vadd.f32 %v10503, %v10787
  %10789 = vmatmul.bf16.gmra.mxu0 %v8591
  %v10790 = vpop.f32.mrf.mxu0
  %v10791 = vadd.f32 %v10506, %v10790
  %v10792 = vpop.f32.mrf.mxu0
  %v10793 = vadd.f32 %v10508, %v10792
  %10794 = vmatmul.bf16.gmra.mxu0 %v8593
  %v10795 = vpop.f32.mrf.mxu0
  %v10796 = vadd.f32 %v10511, %v10795
  %v10797 = vpop.f32.mrf.mxu0
  %v10798 = vadd.f32 %v10513, %v10797
  %10799 = vmatmul.bf16.gmra.mxu0 %v8595
  %v10800 = vpop.f32.mrf.mxu0
  %v10801 = vadd.f32 %v10516, %v10800
  %v10802 = vpop.f32.mrf.mxu0
  %v10803 = vadd.f32 %v10518, %v10802
  %10804 = vmatmul.bf16.gmra.mxu0 %v8597
  %v10805 = vpop.f32.mrf.mxu0
  %v10806 = vadd.f32 %v10521, %v10805
  %v10807 = vpop.f32.mrf.mxu0
  %v10808 = vadd.f32 %v10523, %v10807
  %10809 = vmatmul.bf16.gmra.mxu0 %v8599
  %v10810 = vpop.f32.mrf.mxu0
  %v10811 = vadd.f32 %v10526, %v10810
  %v10812 = vpop.f32.mrf.mxu0
  %v10813 = vadd.f32 %v10528, %v10812
  %10814 = vmatmul.bf16.gmra.mxu0 %v8601
  %v10815 = vpop.f32.mrf.mxu0
  %v10816 = vadd.f32 %v10531, %v10815
  %v10817 = vpop.f32.mrf.mxu0
  %v10818 = vadd.f32 %v10533, %v10817
  %10819 = vmatmul.bf16.gmra.mxu0 %v8603
  %v10820 = vpop.f32.mrf.mxu0
  %v10821 = vadd.f32 %v10536, %v10820
  %v10822 = vpop.f32.mrf.mxu0
  %v10823 = vadd.f32 %v10538, %v10822
  %10824 = vmatmul.bf16.gmra.mxu0 %v8605
  %v10825 = vpop.f32.mrf.mxu0
  %v10826 = vadd.f32 %v10541, %v10825
  %v10827 = vpop.f32.mrf.mxu0
  %v10828 = vadd.f32 %v10543, %v10827
  %10829 = vmatmul.bf16.gmra.mxu0 %v8607
  %v10830 = vpop.f32.mrf.mxu0
  %v10831 = vadd.f32 %v10546, %v10830
  %v10832 = vpop.f32.mrf.mxu0
  %v10833 = vadd.f32 %v10548, %v10832
  %10834 = vmatmul.bf16.gmra.mxu0 %v8609
  %v10835 = vpop.f32.mrf.mxu0
  %v10836 = vadd.f32 %v10551, %v10835
  %v10837 = vpop.f32.mrf.mxu0
  %v10838 = vadd.f32 %v10553, %v10837
  %10839 = vmatmul.bf16.gmra.mxu0 %v8611
  %v10840 = vpop.f32.mrf.mxu0
  %v10841 = vadd.f32 %v10556, %v10840
  %v10842 = vpop.f32.mrf.mxu0
  %v10843 = vadd.f32 %v10558, %v10842
  %10844 = vmatmul.bf16.gmra.mxu0 %v8613
  %v10845 = vpop.f32.mrf.mxu0
  %v10846 = vadd.f32 %v10561, %v10845
  %v10847 = vpop.f32.mrf.mxu0
  %v10848 = vadd.f32 %v10563, %v10847
  %10849 = vmatmul.bf16.gmra.mxu0 %v8615
  %v10850 = vpop.f32.mrf.mxu0
  %v10851 = vadd.f32 %v10566, %v10850
  %v10852 = vpop.f32.mrf.mxu0
  %v10853 = vadd.f32 %v10568, %v10852
  %10854 = vmatmul.bf16.gmra.mxu0 %v8617
  %v10855 = vpop.f32.mrf.mxu0
  %v10856 = vadd.f32 %v10571, %v10855
  %v10857 = vpop.f32.mrf.mxu0
  %v10858 = vadd.f32 %v10573, %v10857
  %10859 = vmatmul.bf16.gmra.mxu0 %v8619
  %v10860 = vpop.f32.mrf.mxu0
  %v10861 = vadd.f32 %v10576, %v10860
  %v10862 = vpop.f32.mrf.mxu0
  %v10863 = vadd.f32 %v10578, %v10862
  %10864 = vmatmul.bf16.gmra.mxu0 %v8621
  %v10865 = vpop.f32.mrf.mxu0
  %v10866 = vadd.f32 %v10581, %v10865
  %v10867 = vpop.f32.mrf.mxu0
  %v10868 = vadd.f32 %v10583, %v10867
  %10869 = vmatmul.bf16.gmra.mxu0 %v8623
  %v10870 = vpop.f32.mrf.mxu0
  %v10871 = vadd.f32 %v10586, %v10870
  %v10872 = vpop.f32.mrf.mxu0
  %v10873 = vadd.f32 %v10588, %v10872
  %10874 = vmatmul.bf16.gmra.mxu0 %v8625
  %v10875 = vpop.f32.mrf.mxu0
  %v10876 = vadd.f32 %v10591, %v10875
  %v10877 = vpop.f32.mrf.mxu0
  %v10878 = vadd.f32 %v10593, %v10877
  %10879 = vmatmul.bf16.gmra.mxu0 %v8627
  %v10880 = vpop.f32.mrf.mxu0
  %v10881 = vadd.f32 %v10596, %v10880
  %v10882 = vpop.f32.mrf.mxu0
  %v10883 = vadd.f32 %v10598, %v10882
  %10884 = vmatmul.bf16.gmra.mxu0 %v8629
  %v10885 = vpop.f32.mrf.mxu0
  %v10886 = vadd.f32 %v10601, %v10885
  %v10887 = vpop.f32.mrf.mxu0
  %v10888 = vadd.f32 %v10603, %v10887
  %10889 = vmatmul.bf16.gmra.mxu0 %v8631
  %v10890 = vpop.f32.mrf.mxu0
  %v10891 = vadd.f32 %v10606, %v10890
  %v10892 = vpop.f32.mrf.mxu0
  %v10893 = vadd.f32 %v10608, %v10892
  %10894 = vmatmul.bf16.gmra.mxu0 %v8633
  %v10895 = vpop.f32.mrf.mxu0
  %v10896 = vadd.f32 %v10611, %v10895
  %v10897 = vpop.f32.mrf.mxu0
  %v10898 = vadd.f32 %v10613, %v10897
  %10899 = vmatmul.bf16.gmra.mxu0 %v8635
  %v10900 = vpop.f32.mrf.mxu0
  %v10901 = vpop.f32.mrf.mxu0
  %10902 = vmatmul.bf16.gmra.mxu0 %v8637
  %v10903 = vpop.f32.mrf.mxu0
  %v10904 = vpop.f32.mrf.mxu0
  %10905 = vmatmul.bf16.gmra.mxu0 %v8639
  %v10906 = vpop.f32.mrf.mxu0
  %v10907 = vpop.f32.mrf.mxu0
  %10908 = vmatmul.bf16.gmra.mxu0 %v8641
  %v10909 = vpop.f32.mrf.mxu0
  %v10910 = vpop.f32.mrf.mxu0
  %10911 = vmatmul.bf16.gmra.mxu0 %v8643
  %v10912 = vpop.f32.mrf.mxu0
  %v10913 = vpop.f32.mrf.mxu0
  %10914 = vmatmul.bf16.gmra.mxu0 %v8645
  %v10915 = vpop.f32.mrf.mxu0
  %v10916 = vpop.f32.mrf.mxu0
  %10917 = vmatmul.bf16.gmra.mxu0 %v8647
  %v10918 = vpop.f32.mrf.mxu0
  %v10919 = vpop.f32.mrf.mxu0
  %10920 = vmatmul.bf16.gmra.mxu0 %v8649
  %v10921 = vpop.f32.mrf.mxu0
  %v10922 = vpop.f32.mrf.mxu0
  %10923 = vmatmul.bf16.gmra.mxu0 %v8651
  %v10924 = vpop.f32.mrf.mxu0
  %v10925 = vpop.f32.mrf.mxu0
  %10926 = vmatmul.bf16.gmra.mxu0 %v8653
  %v10927 = vpop.f32.mrf.mxu0
  %v10928 = vpop.f32.mrf.mxu0
  %10929 = vmatmul.bf16.gmra.mxu0 %v8655
  %v10930 = vpop.f32.mrf.mxu0
  %v10931 = vpop.f32.mrf.mxu0
  %10932 = vmatmul.bf16.gmra.mxu0 %v8657
  %v10933 = vpop.f32.mrf.mxu0
  %v10934 = vpop.f32.mrf.mxu0
  %10935 = vdwg.mxu0
  %10936 = vmatpush.bf16.msra.mxu0 %v10293
  %10937 = vmatpush.bf16.msra.mxu0 %v10292
  %10938 = vmatpush.bf16.msra.mxu0 %v10291
  %10939 = vmatpush.bf16.msra.mxu0 %v10290
  %10940 = vmatpush.bf16.msra.mxu0 %v10289
  %10941 = vmatpush.bf16.msra.mxu0 %v10288
  %10942 = vmatpush.bf16.msra.mxu0 %v10287
  %10943 = vmatpush.bf16.msra.mxu0 %v10286
  %10944 = vmatmul.bf16.gmra.mxu0 %v9138
  %v10945 = vpop.f32.mrf.mxu0
  %v10946 = vadd.f32 %v10661, %v10945
  %v10947 = vpop.f32.mrf.mxu0
  %v10948 = vadd.f32 %v10663, %v10947
  %10949 = vmatmul.bf16.gmra.mxu0 %v9140
  %v10950 = vpop.f32.mrf.mxu0
  %v10951 = vadd.f32 %v10666, %v10950
  %v10952 = vpop.f32.mrf.mxu0
  %v10953 = vadd.f32 %v10668, %v10952
  %10954 = vmatmul.bf16.gmra.mxu0 %v9142
  %v10955 = vpop.f32.mrf.mxu0
  %v10956 = vadd.f32 %v10671, %v10955
  %v10957 = vpop.f32.mrf.mxu0
  %v10958 = vadd.f32 %v10673, %v10957
  %10959 = vmatmul.bf16.gmra.mxu0 %v9144
  %v10960 = vpop.f32.mrf.mxu0
  %v10961 = vadd.f32 %v10676, %v10960
  %v10962 = vpop.f32.mrf.mxu0
  %v10963 = vadd.f32 %v10678, %v10962
  %10964 = vmatmul.bf16.gmra.mxu0 %v9146
  %v10965 = vpop.f32.mrf.mxu0
  %v10966 = vadd.f32 %v10681, %v10965
  %v10967 = vpop.f32.mrf.mxu0
  %v10968 = vadd.f32 %v10683, %v10967
  %10969 = vmatmul.bf16.gmra.mxu0 %v9148
  %v10970 = vpop.f32.mrf.mxu0
  %v10971 = vadd.f32 %v10686, %v10970
  %v10972 = vpop.f32.mrf.mxu0
  %v10973 = vadd.f32 %v10688, %v10972
  %10974 = vmatmul.bf16.gmra.mxu0 %v9150
  %v10975 = vpop.f32.mrf.mxu0
  %v10976 = vadd.f32 %v10691, %v10975
  %v10977 = vpop.f32.mrf.mxu0
  %v10978 = vadd.f32 %v10693, %v10977
  %10979 = vmatmul.bf16.gmra.mxu0 %v9152
  %v10980 = vpop.f32.mrf.mxu0
  %v10981 = vadd.f32 %v10696, %v10980
  %v10982 = vpop.f32.mrf.mxu0
  %v10983 = vadd.f32 %v10698, %v10982
  %10984 = vmatmul.bf16.gmra.mxu0 %v9154
  %v10985 = vpop.f32.mrf.mxu0
  %v10986 = vadd.f32 %v10701, %v10985
  %v10987 = vpop.f32.mrf.mxu0
  %v10988 = vadd.f32 %v10703, %v10987
  %10989 = vmatmul.bf16.gmra.mxu0 %v9156
  %v10990 = vpop.f32.mrf.mxu0
  %v10991 = vadd.f32 %v10706, %v10990
  %v10992 = vpop.f32.mrf.mxu0
  %v10993 = vadd.f32 %v10708, %v10992
  %10994 = vmatmul.bf16.gmra.mxu0 %v9158
  %v10995 = vpop.f32.mrf.mxu0
  %v10996 = vadd.f32 %v10711, %v10995
  %v10997 = vpop.f32.mrf.mxu0
  %v10998 = vadd.f32 %v10713, %v10997
  %10999 = vmatmul.bf16.gmra.mxu0 %v9160
  %v11000 = vpop.f32.mrf.mxu0
  %v11001 = vadd.f32 %v10716, %v11000
  %v11002 = vpop.f32.mrf.mxu0
  %v11003 = vadd.f32 %v10718, %v11002
  %11004 = vmatmul.bf16.gmra.mxu0 %v9162
  %v11005 = vpop.f32.mrf.mxu0
  %v11006 = vadd.f32 %v10721, %v11005
  %v11007 = vpop.f32.mrf.mxu0
  %v11008 = vadd.f32 %v10723, %v11007
  %11009 = vmatmul.bf16.gmra.mxu0 %v9164
  %v11010 = vpop.f32.mrf.mxu0
  %v11011 = vadd.f32 %v10726, %v11010
  %v11012 = vpop.f32.mrf.mxu0
  %v11013 = vadd.f32 %v10728, %v11012
  %11014 = vmatmul.bf16.gmra.mxu0 %v9166
  %v11015 = vpop.f32.mrf.mxu0
  %v11016 = vadd.f32 %v10731, %v11015
  %v11017 = vpop.f32.mrf.mxu0
  %v11018 = vadd.f32 %v10733, %v11017
  %11019 = vmatmul.bf16.gmra.mxu0 %v9168
  %v11020 = vpop.f32.mrf.mxu0
  %v11021 = vadd.f32 %v10736, %v11020
  %v11022 = vpop.f32.mrf.mxu0
  %v11023 = vadd.f32 %v10738, %v11022
  %11024 = vmatmul.bf16.gmra.mxu0 %v9170
  %v11025 = vpop.f32.mrf.mxu0
  %v11026 = vadd.f32 %v10741, %v11025
  %v11027 = vpop.f32.mrf.mxu0
  %v11028 = vadd.f32 %v10743, %v11027
  %11029 = vmatmul.bf16.gmra.mxu0 %v9172
  %v11030 = vpop.f32.mrf.mxu0
  %v11031 = vadd.f32 %v10746, %v11030
  %v11032 = vpop.f32.mrf.mxu0
  %v11033 = vadd.f32 %v10748, %v11032
  %11034 = vmatmul.bf16.gmra.mxu0 %v9174
  %v11035 = vpop.f32.mrf.mxu0
  %v11036 = vadd.f32 %v10751, %v11035
  %v11037 = vpop.f32.mrf.mxu0
  %v11038 = vadd.f32 %v10753, %v11037
  %11039 = vmatmul.bf16.gmra.mxu0 %v9176
  %v11040 = vpop.f32.mrf.mxu0
  %v11041 = vadd.f32 %v10756, %v11040
  %v11042 = vpop.f32.mrf.mxu0
  %v11043 = vadd.f32 %v10758, %v11042
  %11044 = vmatmul.bf16.gmra.mxu0 %v9178
  %v11045 = vpop.f32.mrf.mxu0
  %v11046 = vadd.f32 %v10761, %v11045
  %v11047 = vpop.f32.mrf.mxu0
  %v11048 = vadd.f32 %v10763, %v11047
  %11049 = vmatmul.bf16.gmra.mxu0 %v9180
  %v11050 = vpop.f32.mrf.mxu0
  %v11051 = vadd.f32 %v10766, %v11050
  %v11052 = vpop.f32.mrf.mxu0
  %v11053 = vadd.f32 %v10768, %v11052
  %11054 = vmatmul.bf16.gmra.mxu0 %v9182
  %v11055 = vpop.f32.mrf.mxu0
  %v11056 = vadd.f32 %v10771, %v11055
  %v11057 = vpop.f32.mrf.mxu0
  %v11058 = vadd.f32 %v10773, %v11057
  %11059 = vmatmul.bf16.gmra.mxu0 %v9184
  %v11060 = vpop.f32.mrf.mxu0
  %v11061 = vadd.f32 %v10776, %v11060
  %v11062 = vpop.f32.mrf.mxu0
  %v11063 = vadd.f32 %v10778, %v11062
  %11064 = vmatmul.bf16.gmra.mxu0 %v9186
  %v11065 = vpop.f32.mrf.mxu0
  %v11066 = vadd.f32 %v10781, %v11065
  %v11067 = vpop.f32.mrf.mxu0
  %v11068 = vadd.f32 %v10783, %v11067
  %11069 = vmatmul.bf16.gmra.mxu0 %v9188
  %v11070 = vpop.f32.mrf.mxu0
  %v11071 = vadd.f32 %v10786, %v11070
  %v11072 = vpop.f32.mrf.mxu0
  %v11073 = vadd.f32 %v10788, %v11072
  %11074 = vmatmul.bf16.gmra.mxu0 %v9190
  %v11075 = vpop.f32.mrf.mxu0
  %v11076 = vadd.f32 %v10791, %v11075
  %v11077 = vpop.f32.mrf.mxu0
  %v11078 = vadd.f32 %v10793, %v11077
  %11079 = vmatmul.bf16.gmra.mxu0 %v9192
  %v11080 = vpop.f32.mrf.mxu0
  %v11081 = vadd.f32 %v10796, %v11080
  %v11082 = vpop.f32.mrf.mxu0
  %v11083 = vadd.f32 %v10798, %v11082
  %11084 = vmatmul.bf16.gmra.mxu0 %v9194
  %v11085 = vpop.f32.mrf.mxu0
  %v11086 = vadd.f32 %v10801, %v11085
  %v11087 = vpop.f32.mrf.mxu0
  %v11088 = vadd.f32 %v10803, %v11087
  %11089 = vmatmul.bf16.gmra.mxu0 %v9196
  %v11090 = vpop.f32.mrf.mxu0
  %v11091 = vadd.f32 %v10806, %v11090
  %v11092 = vpop.f32.mrf.mxu0
  %v11093 = vadd.f32 %v10808, %v11092
  %11094 = vmatmul.bf16.gmra.mxu0 %v9198
  %v11095 = vpop.f32.mrf.mxu0
  %v11096 = vadd.f32 %v10811, %v11095
  %v11097 = vpop.f32.mrf.mxu0
  %v11098 = vadd.f32 %v10813, %v11097
  %11099 = vmatmul.bf16.gmra.mxu0 %v9200
  %v11100 = vpop.f32.mrf.mxu0
  %v11101 = vadd.f32 %v10816, %v11100
  %v11102 = vpop.f32.mrf.mxu0
  %v11103 = vadd.f32 %v10818, %v11102
  %11104 = vmatmul.bf16.gmra.mxu0 %v9202
  %v11105 = vpop.f32.mrf.mxu0
  %v11106 = vadd.f32 %v10821, %v11105
  %v11107 = vpop.f32.mrf.mxu0
  %v11108 = vadd.f32 %v10823, %v11107
  %11109 = vmatmul.bf16.gmra.mxu0 %v9204
  %v11110 = vpop.f32.mrf.mxu0
  %v11111 = vadd.f32 %v10826, %v11110
  %v11112 = vpop.f32.mrf.mxu0
  %v11113 = vadd.f32 %v10828, %v11112
  %11114 = vmatmul.bf16.gmra.mxu0 %v9206
  %v11115 = vpop.f32.mrf.mxu0
  %v11116 = vadd.f32 %v10831, %v11115
  %v11117 = vpop.f32.mrf.mxu0
  %v11118 = vadd.f32 %v10833, %v11117
  %11119 = vmatmul.bf16.gmra.mxu0 %v9208
  %v11120 = vpop.f32.mrf.mxu0
  %v11121 = vadd.f32 %v10836, %v11120
  %v11122 = vpop.f32.mrf.mxu0
  %v11123 = vadd.f32 %v10838, %v11122
  %11124 = vmatmul.bf16.gmra.mxu0 %v9210
  %v11125 = vpop.f32.mrf.mxu0
  %v11126 = vadd.f32 %v10841, %v11125
  %v11127 = vpop.f32.mrf.mxu0
  %v11128 = vadd.f32 %v10843, %v11127
  %11129 = vmatmul.bf16.gmra.mxu0 %v9212
  %v11130 = vpop.f32.mrf.mxu0
  %v11131 = vadd.f32 %v10846, %v11130
  %v11132 = vpop.f32.mrf.mxu0
  %v11133 = vadd.f32 %v10848, %v11132
  %11134 = vmatmul.bf16.gmra.mxu0 %v9214
  %v11135 = vpop.f32.mrf.mxu0
  %v11136 = vadd.f32 %v10851, %v11135
  %v11137 = vpop.f32.mrf.mxu0
  %v11138 = vadd.f32 %v10853, %v11137
  %11139 = vmatmul.bf16.gmra.mxu0 %v9216
  %v11140 = vpop.f32.mrf.mxu0
  %v11141 = vadd.f32 %v10856, %v11140
  %v11142 = vpop.f32.mrf.mxu0
  %v11143 = vadd.f32 %v10858, %v11142
  %11144 = vmatmul.bf16.gmra.mxu0 %v9218
  %v11145 = vpop.f32.mrf.mxu0
  %v11146 = vadd.f32 %v10861, %v11145
  %v11147 = vpop.f32.mrf.mxu0
  %v11148 = vadd.f32 %v10863, %v11147
  %11149 = vmatmul.bf16.gmra.mxu0 %v9220
  %v11150 = vpop.f32.mrf.mxu0
  %v11151 = vadd.f32 %v10866, %v11150
  %v11152 = vpop.f32.mrf.mxu0
  %v11153 = vadd.f32 %v10868, %v11152
  %11154 = vmatmul.bf16.gmra.mxu0 %v9222
  %v11155 = vpop.f32.mrf.mxu0
  %v11156 = vadd.f32 %v10871, %v11155
  %v11157 = vpop.f32.mrf.mxu0
  %v11158 = vadd.f32 %v10873, %v11157
  %11159 = vmatmul.bf16.gmra.mxu0 %v9224
  %v11160 = vpop.f32.mrf.mxu0
  %v11161 = vadd.f32 %v10876, %v11160
  %v11162 = vpop.f32.mrf.mxu0
  %v11163 = vadd.f32 %v10878, %v11162
  %11164 = vmatmul.bf16.gmra.mxu0 %v9226
  %v11165 = vpop.f32.mrf.mxu0
  %v11166 = vadd.f32 %v10881, %v11165
  %v11167 = vpop.f32.mrf.mxu0
  %v11168 = vadd.f32 %v10883, %v11167
  %11169 = vmatmul.bf16.gmra.mxu0 %v9228
  %v11170 = vpop.f32.mrf.mxu0
  %v11171 = vadd.f32 %v10886, %v11170
  %v11172 = vpop.f32.mrf.mxu0
  %v11173 = vadd.f32 %v10888, %v11172
  %11174 = vmatmul.bf16.gmra.mxu0 %v9230
  %v11175 = vpop.f32.mrf.mxu0
  %v11176 = vadd.f32 %v10891, %v11175
  %v11177 = vpop.f32.mrf.mxu0
  %v11178 = vadd.f32 %v10893, %v11177
  %11179 = vmatmul.bf16.gmra.mxu0 %v9232
  %v11180 = vpop.f32.mrf.mxu0
  %v11181 = vadd.f32 %v10896, %v11180
  %v11182 = vpop.f32.mrf.mxu0
  %v11183 = vadd.f32 %v10898, %v11182
  %11184 = vmatmul.bf16.gmra.mxu0 %v9234
  %v11185 = vpop.f32.mrf.mxu0
  %v11186 = vpop.f32.mrf.mxu0
  %11187 = vmatmul.bf16.gmra.mxu0 %v9236
  %v11188 = vpop.f32.mrf.mxu0
  %v11189 = vpop.f32.mrf.mxu0
  %11190 = vmatmul.bf16.gmra.mxu0 %v9238
  %v11191 = vpop.f32.mrf.mxu0
  %v11192 = vpop.f32.mrf.mxu0
  %11193 = vmatmul.bf16.gmra.mxu0 %v9240
  %v11194 = vpop.f32.mrf.mxu0
  %v11195 = vpop.f32.mrf.mxu0
  %11196 = vmatmul.bf16.gmra.mxu0 %v9242
  %v11197 = vpop.f32.mrf.mxu0
  %v11198 = vpop.f32.mrf.mxu0
  %11199 = vmatmul.bf16.gmra.mxu0 %v9244
  %v11200 = vpop.f32.mrf.mxu0
  %v11201 = vpop.f32.mrf.mxu0
  %11202 = vmatmul.bf16.gmra.mxu0 %v9246
  %v11203 = vpop.f32.mrf.mxu0
  %v11204 = vpop.f32.mrf.mxu0
  %11205 = vmatmul.bf16.gmra.mxu0 %v9248
  %v11206 = vpop.f32.mrf.mxu0
  %v11207 = vpop.f32.mrf.mxu0
  %11208 = vmatmul.bf16.gmra.mxu0 %v9250
  %v11209 = vpop.f32.mrf.mxu0
  %v11210 = vpop.f32.mrf.mxu0
  %11211 = vmatmul.bf16.gmra.mxu0 %v9252
  %v11212 = vpop.f32.mrf.mxu0
  %v11213 = vpop.f32.mrf.mxu0
  %11214 = vmatmul.bf16.gmra.mxu0 %v9254
  %v11215 = vpop.f32.mrf.mxu0
  %v11216 = vpop.f32.mrf.mxu0
  %11217 = vmatmul.bf16.gmra.mxu0 %v9256
  %v11218 = vpop.f32.mrf.mxu0
  %v11219 = vpop.f32.mrf.mxu0
  %11220 = vdwg.mxu0
  %11221 = vmatpush.bf16.msra.mxu0 %v10301
  %11222 = vmatpush.bf16.msra.mxu0 %v10300
  %11223 = vmatpush.bf16.msra.mxu0 %v10299
  %11224 = vmatpush.bf16.msra.mxu0 %v10298
  %11225 = vmatpush.bf16.msra.mxu0 %v10297
  %11226 = vmatpush.bf16.msra.mxu0 %v10296
  %11227 = vmatpush.bf16.msra.mxu0 %v10295
  %11228 = vmatpush.bf16.msra.mxu0 %v10294
  %11229 = vmatmul.bf16.gmra.mxu0 %v9139
  %v11230 = vpop.f32.mrf.mxu0
  %v11231 = vadd.f32 %v10946, %v11230
  %v11232 = vpop.f32.mrf.mxu0
  %v11233 = vadd.f32 %v10948, %v11232
  %11234 = vmatmul.bf16.gmra.mxu0 %v9141
  %v11235 = vpop.f32.mrf.mxu0
  %v11236 = vadd.f32 %v10951, %v11235
  %v11237 = vpop.f32.mrf.mxu0
  %v11238 = vadd.f32 %v10953, %v11237
  %11239 = vmatmul.bf16.gmra.mxu0 %v9143
  %v11240 = vpop.f32.mrf.mxu0
  %v11241 = vadd.f32 %v10956, %v11240
  %v11242 = vpop.f32.mrf.mxu0
  %v11243 = vadd.f32 %v10958, %v11242
  %11244 = vmatmul.bf16.gmra.mxu0 %v9145
  %v11245 = vpop.f32.mrf.mxu0
  %v11246 = vadd.f32 %v10961, %v11245
  %v11247 = vpop.f32.mrf.mxu0
  %v11248 = vadd.f32 %v10963, %v11247
  %11249 = vmatmul.bf16.gmra.mxu0 %v9147
  %v11250 = vpop.f32.mrf.mxu0
  %v11251 = vadd.f32 %v10966, %v11250
  %v11252 = vpop.f32.mrf.mxu0
  %v11253 = vadd.f32 %v10968, %v11252
  %11254 = vmatmul.bf16.gmra.mxu0 %v9149
  %v11255 = vpop.f32.mrf.mxu0
  %v11256 = vadd.f32 %v10971, %v11255
  %v11257 = vpop.f32.mrf.mxu0
  %v11258 = vadd.f32 %v10973, %v11257
  %11259 = vmatmul.bf16.gmra.mxu0 %v9151
  %v11260 = vpop.f32.mrf.mxu0
  %v11261 = vadd.f32 %v10976, %v11260
  %v11262 = vpop.f32.mrf.mxu0
  %v11263 = vadd.f32 %v10978, %v11262
  %11264 = vmatmul.bf16.gmra.mxu0 %v9153
  %v11265 = vpop.f32.mrf.mxu0
  %v11266 = vadd.f32 %v10981, %v11265
  %v11267 = vpop.f32.mrf.mxu0
  %v11268 = vadd.f32 %v10983, %v11267
  %11269 = vmatmul.bf16.gmra.mxu0 %v9155
  %v11270 = vpop.f32.mrf.mxu0
  %v11271 = vadd.f32 %v10986, %v11270
  %v11272 = vpop.f32.mrf.mxu0
  %v11273 = vadd.f32 %v10988, %v11272
  %11274 = vmatmul.bf16.gmra.mxu0 %v9157
  %v11275 = vpop.f32.mrf.mxu0
  %v11276 = vadd.f32 %v10991, %v11275
  %v11277 = vpop.f32.mrf.mxu0
  %v11278 = vadd.f32 %v10993, %v11277
  %11279 = vmatmul.bf16.gmra.mxu0 %v9159
  %v11280 = vpop.f32.mrf.mxu0
  %v11281 = vadd.f32 %v10996, %v11280
  %v11282 = vpop.f32.mrf.mxu0
  %v11283 = vadd.f32 %v10998, %v11282
  %11284 = vmatmul.bf16.gmra.mxu0 %v9161
  %v11285 = vpop.f32.mrf.mxu0
  %v11286 = vadd.f32 %v11001, %v11285
  %v11287 = vpop.f32.mrf.mxu0
  %v11288 = vadd.f32 %v11003, %v11287
  %11289 = vmatmul.bf16.gmra.mxu0 %v9163
  %v11290 = vpop.f32.mrf.mxu0
  %v11291 = vadd.f32 %v11006, %v11290
  %v11292 = vpop.f32.mrf.mxu0
  %v11293 = vadd.f32 %v11008, %v11292
  %11294 = vmatmul.bf16.gmra.mxu0 %v9165
  %v11295 = vpop.f32.mrf.mxu0
  %v11296 = vadd.f32 %v11011, %v11295
  %v11297 = vpop.f32.mrf.mxu0
  %v11298 = vadd.f32 %v11013, %v11297
  %11299 = vmatmul.bf16.gmra.mxu0 %v9167
  %v11300 = vpop.f32.mrf.mxu0
  %v11301 = vadd.f32 %v11016, %v11300
  %v11302 = vpop.f32.mrf.mxu0
  %v11303 = vadd.f32 %v11018, %v11302
  %11304 = vmatmul.bf16.gmra.mxu0 %v9169
  %v11305 = vpop.f32.mrf.mxu0
  %v11306 = vadd.f32 %v11021, %v11305
  %v11307 = vpop.f32.mrf.mxu0
  %v11308 = vadd.f32 %v11023, %v11307
  %11309 = vmatmul.bf16.gmra.mxu0 %v9171
  %v11310 = vpop.f32.mrf.mxu0
  %v11311 = vadd.f32 %v11026, %v11310
  %v11312 = vpop.f32.mrf.mxu0
  %v11313 = vadd.f32 %v11028, %v11312
  %11314 = vmatmul.bf16.gmra.mxu0 %v9173
  %v11315 = vpop.f32.mrf.mxu0
  %v11316 = vadd.f32 %v11031, %v11315
  %v11317 = vpop.f32.mrf.mxu0
  %v11318 = vadd.f32 %v11033, %v11317
  %11319 = vmatmul.bf16.gmra.mxu0 %v9175
  %v11320 = vpop.f32.mrf.mxu0
  %v11321 = vadd.f32 %v11036, %v11320
  %v11322 = vpop.f32.mrf.mxu0
  %v11323 = vadd.f32 %v11038, %v11322
  %11324 = vmatmul.bf16.gmra.mxu0 %v9177
  %v11325 = vpop.f32.mrf.mxu0
  %v11326 = vadd.f32 %v11041, %v11325
  %v11327 = vpop.f32.mrf.mxu0
  %v11328 = vadd.f32 %v11043, %v11327
  %11329 = vmatmul.bf16.gmra.mxu0 %v9179
  %v11330 = vpop.f32.mrf.mxu0
  %v11331 = vadd.f32 %v11046, %v11330
  %v11332 = vpop.f32.mrf.mxu0
  %v11333 = vadd.f32 %v11048, %v11332
  %11334 = vmatmul.bf16.gmra.mxu0 %v9181
  %v11335 = vpop.f32.mrf.mxu0
  %v11336 = vadd.f32 %v11051, %v11335
  %v11337 = vpop.f32.mrf.mxu0
  %v11338 = vadd.f32 %v11053, %v11337
  %11339 = vmatmul.bf16.gmra.mxu0 %v9183
  %v11340 = vpop.f32.mrf.mxu0
  %v11341 = vadd.f32 %v11056, %v11340
  %v11342 = vpop.f32.mrf.mxu0
  %v11343 = vadd.f32 %v11058, %v11342
  %11344 = vmatmul.bf16.gmra.mxu0 %v9185
  %v11345 = vpop.f32.mrf.mxu0
  %v11346 = vadd.f32 %v11061, %v11345
  %v11347 = vpop.f32.mrf.mxu0
  %v11348 = vadd.f32 %v11063, %v11347
  %11349 = vmatmul.bf16.gmra.mxu0 %v9187
  %v11350 = vpop.f32.mrf.mxu0
  %v11351 = vadd.f32 %v11066, %v11350
  %v11352 = vpop.f32.mrf.mxu0
  %v11353 = vadd.f32 %v11068, %v11352
  %11354 = vmatmul.bf16.gmra.mxu0 %v9189
  %v11355 = vpop.f32.mrf.mxu0
  %v11356 = vadd.f32 %v11071, %v11355
  %v11357 = vpop.f32.mrf.mxu0
  %v11358 = vadd.f32 %v11073, %v11357
  %11359 = vmatmul.bf16.gmra.mxu0 %v9191
  %v11360 = vpop.f32.mrf.mxu0
  %v11361 = vadd.f32 %v11076, %v11360
  %v11362 = vpop.f32.mrf.mxu0
  %v11363 = vadd.f32 %v11078, %v11362
  %11364 = vmatmul.bf16.gmra.mxu0 %v9193
  %v11365 = vpop.f32.mrf.mxu0
  %v11366 = vadd.f32 %v11081, %v11365
  %v11367 = vpop.f32.mrf.mxu0
  %v11368 = vadd.f32 %v11083, %v11367
  %11369 = vmatmul.bf16.gmra.mxu0 %v9195
  %v11370 = vpop.f32.mrf.mxu0
  %v11371 = vadd.f32 %v11086, %v11370
  %v11372 = vpop.f32.mrf.mxu0
  %v11373 = vadd.f32 %v11088, %v11372
  %11374 = vmatmul.bf16.gmra.mxu0 %v9197
  %v11375 = vpop.f32.mrf.mxu0
  %v11376 = vadd.f32 %v11091, %v11375
  %v11377 = vpop.f32.mrf.mxu0
  %v11378 = vadd.f32 %v11093, %v11377
  %11379 = vmatmul.bf16.gmra.mxu0 %v9199
  %v11380 = vpop.f32.mrf.mxu0
  %v11381 = vadd.f32 %v11096, %v11380
  %v11382 = vpop.f32.mrf.mxu0
  %v11383 = vadd.f32 %v11098, %v11382
  %11384 = vmatmul.bf16.gmra.mxu0 %v9201
  %v11385 = vpop.f32.mrf.mxu0
  %v11386 = vadd.f32 %v11101, %v11385
  %v11387 = vpop.f32.mrf.mxu0
  %v11388 = vadd.f32 %v11103, %v11387
  %11389 = vmatmul.bf16.gmra.mxu0 %v9203
  %v11390 = vpop.f32.mrf.mxu0
  %v11391 = vadd.f32 %v11106, %v11390
  %v11392 = vpop.f32.mrf.mxu0
  %v11393 = vadd.f32 %v11108, %v11392
  %11394 = vmatmul.bf16.gmra.mxu0 %v9205
  %v11395 = vpop.f32.mrf.mxu0
  %v11396 = vadd.f32 %v11111, %v11395
  %v11397 = vpop.f32.mrf.mxu0
  %v11398 = vadd.f32 %v11113, %v11397
  %11399 = vmatmul.bf16.gmra.mxu0 %v9207
  %v11400 = vpop.f32.mrf.mxu0
  %v11401 = vadd.f32 %v11116, %v11400
  %v11402 = vpop.f32.mrf.mxu0
  %v11403 = vadd.f32 %v11118, %v11402
  %11404 = vmatmul.bf16.gmra.mxu0 %v9209
  %v11405 = vpop.f32.mrf.mxu0
  %v11406 = vadd.f32 %v11121, %v11405
  %v11407 = vpop.f32.mrf.mxu0
  %v11408 = vadd.f32 %v11123, %v11407
  %11409 = vmatmul.bf16.gmra.mxu0 %v9211
  %v11410 = vpop.f32.mrf.mxu0
  %v11411 = vadd.f32 %v11126, %v11410
  %v11412 = vpop.f32.mrf.mxu0
  %v11413 = vadd.f32 %v11128, %v11412
  %11414 = vmatmul.bf16.gmra.mxu0 %v9213
  %v11415 = vpop.f32.mrf.mxu0
  %v11416 = vadd.f32 %v11131, %v11415
  %v11417 = vpop.f32.mrf.mxu0
  %v11418 = vadd.f32 %v11133, %v11417
  %11419 = vmatmul.bf16.gmra.mxu0 %v9215
  %v11420 = vpop.f32.mrf.mxu0
  %v11421 = vadd.f32 %v11136, %v11420
  %v11422 = vpop.f32.mrf.mxu0
  %v11423 = vadd.f32 %v11138, %v11422
  %11424 = vmatmul.bf16.gmra.mxu0 %v9217
  %v11425 = vpop.f32.mrf.mxu0
  %v11426 = vadd.f32 %v11141, %v11425
  %v11427 = vpop.f32.mrf.mxu0
  %v11428 = vadd.f32 %v11143, %v11427
  %11429 = vmatmul.bf16.gmra.mxu0 %v9219
  %v11430 = vpop.f32.mrf.mxu0
  %v11431 = vadd.f32 %v11146, %v11430
  %v11432 = vpop.f32.mrf.mxu0
  %v11433 = vadd.f32 %v11148, %v11432
  %11434 = vmatmul.bf16.gmra.mxu0 %v9221
  %v11435 = vpop.f32.mrf.mxu0
  %v11436 = vadd.f32 %v11151, %v11435
  %v11437 = vpop.f32.mrf.mxu0
  %v11438 = vadd.f32 %v11153, %v11437
  %11439 = vmatmul.bf16.gmra.mxu0 %v9223
  %v11440 = vpop.f32.mrf.mxu0
  %v11441 = vadd.f32 %v11156, %v11440
  %v11442 = vpop.f32.mrf.mxu0
  %v11443 = vadd.f32 %v11158, %v11442
  %11444 = vmatmul.bf16.gmra.mxu0 %v9225
  %v11445 = vpop.f32.mrf.mxu0
  %v11446 = vadd.f32 %v11161, %v11445
  %v11447 = vpop.f32.mrf.mxu0
  %v11448 = vadd.f32 %v11163, %v11447
  %11449 = vmatmul.bf16.gmra.mxu0 %v9227
  %v11450 = vpop.f32.mrf.mxu0
  %v11451 = vadd.f32 %v11166, %v11450
  %v11452 = vpop.f32.mrf.mxu0
  %v11453 = vadd.f32 %v11168, %v11452
  %11454 = vmatmul.bf16.gmra.mxu0 %v9229
  %v11455 = vpop.f32.mrf.mxu0
  %v11456 = vadd.f32 %v11171, %v11455
  %v11457 = vpop.f32.mrf.mxu0
  %v11458 = vadd.f32 %v11173, %v11457
  %11459 = vmatmul.bf16.gmra.mxu0 %v9231
  %v11460 = vpop.f32.mrf.mxu0
  %v11461 = vadd.f32 %v11176, %v11460
  %v11462 = vpop.f32.mrf.mxu0
  %v11463 = vadd.f32 %v11178, %v11462
  %11464 = vmatmul.bf16.gmra.mxu0 %v9233
  %v11465 = vpop.f32.mrf.mxu0
  %v11466 = vadd.f32 %v11181, %v11465
  %v11467 = vpop.f32.mrf.mxu0
  %v11468 = vadd.f32 %v11183, %v11467
  %11469 = vmatmul.bf16.gmra.mxu0 %v9235
  %v11470 = vpop.f32.mrf.mxu0
  %v11471 = vpop.f32.mrf.mxu0
  %11472 = vmatmul.bf16.gmra.mxu0 %v9237
  %v11473 = vpop.f32.mrf.mxu0
  %v11474 = vpop.f32.mrf.mxu0
  %11475 = vmatmul.bf16.gmra.mxu0 %v9239
  %v11476 = vpop.f32.mrf.mxu0
  %v11477 = vpop.f32.mrf.mxu0
  %11478 = vmatmul.bf16.gmra.mxu0 %v9241
  %v11479 = vpop.f32.mrf.mxu0
  %v11480 = vpop.f32.mrf.mxu0
  %11481 = vmatmul.bf16.gmra.mxu0 %v9243
  %v11482 = vpop.f32.mrf.mxu0
  %v11483 = vpop.f32.mrf.mxu0
  %11484 = vmatmul.bf16.gmra.mxu0 %v9245
  %v11485 = vpop.f32.mrf.mxu0
  %v11486 = vpop.f32.mrf.mxu0
  %11487 = vmatmul.bf16.gmra.mxu0 %v9247
  %v11488 = vpop.f32.mrf.mxu0
  %v11489 = vpop.f32.mrf.mxu0
  %11490 = vmatmul.bf16.gmra.mxu0 %v9249
  %v11491 = vpop.f32.mrf.mxu0
  %v11492 = vpop.f32.mrf.mxu0
  %11493 = vmatmul.bf16.gmra.mxu0 %v9251
  %v11494 = vpop.f32.mrf.mxu0
  %v11495 = vpop.f32.mrf.mxu0
  %11496 = vmatmul.bf16.gmra.mxu0 %v9253
  %v11497 = vpop.f32.mrf.mxu0
  %v11498 = vpop.f32.mrf.mxu0
  %11499 = vmatmul.bf16.gmra.mxu0 %v9255
  %v11500 = vpop.f32.mrf.mxu0
  %v11501 = vpop.f32.mrf.mxu0
  %11502 = vmatmul.bf16.gmra.mxu0 %v9257
  %v11503 = vpop.f32.mrf.mxu0
  %v11504 = vpop.f32.mrf.mxu0
  %11505 = vdwg.mxu0
  %11506 = vmatpush.bf16.msra.mxu0 %v10309
  %11507 = vmatpush.bf16.msra.mxu0 %v10308
  %11508 = vmatpush.bf16.msra.mxu0 %v10307
  %11509 = vmatpush.bf16.msra.mxu0 %v10306
  %11510 = vmatpush.bf16.msra.mxu0 %v10305
  %11511 = vmatpush.bf16.msra.mxu0 %v10304
  %11512 = vmatpush.bf16.msra.mxu0 %v10303
  %11513 = vmatpush.bf16.msra.mxu0 %v10302
  %11514 = vmatmul.bf16.gmra.mxu0 %v9738
  %v11515 = vpop.f32.mrf.mxu0
  %v11516 = vadd.f32 %v11231, %v11515
  %v11517 = vpop.f32.mrf.mxu0
  %v11518 = vadd.f32 %v11233, %v11517
  %11519 = vmatmul.bf16.gmra.mxu0 %v9740
  %v11520 = vpop.f32.mrf.mxu0
  %v11521 = vadd.f32 %v11236, %v11520
  %v11522 = vpop.f32.mrf.mxu0
  %v11523 = vadd.f32 %v11238, %v11522
  %11524 = vmatmul.bf16.gmra.mxu0 %v9742
  %v11525 = vpop.f32.mrf.mxu0
  %v11526 = vadd.f32 %v11241, %v11525
  %v11527 = vpop.f32.mrf.mxu0
  %v11528 = vadd.f32 %v11243, %v11527
  %11529 = vmatmul.bf16.gmra.mxu0 %v9744
  %v11530 = vpop.f32.mrf.mxu0
  %v11531 = vadd.f32 %v11246, %v11530
  %v11532 = vpop.f32.mrf.mxu0
  %v11533 = vadd.f32 %v11248, %v11532
  %11534 = vmatmul.bf16.gmra.mxu0 %v9746
  %v11535 = vpop.f32.mrf.mxu0
  %v11536 = vadd.f32 %v11251, %v11535
  %v11537 = vpop.f32.mrf.mxu0
  %v11538 = vadd.f32 %v11253, %v11537
  %11539 = vmatmul.bf16.gmra.mxu0 %v9748
  %v11540 = vpop.f32.mrf.mxu0
  %v11541 = vadd.f32 %v11256, %v11540
  %v11542 = vpop.f32.mrf.mxu0
  %v11543 = vadd.f32 %v11258, %v11542
  %11544 = vmatmul.bf16.gmra.mxu0 %v9750
  %v11545 = vpop.f32.mrf.mxu0
  %v11546 = vadd.f32 %v11261, %v11545
  %v11547 = vpop.f32.mrf.mxu0
  %v11548 = vadd.f32 %v11263, %v11547
  %11549 = vmatmul.bf16.gmra.mxu0 %v9752
  %v11550 = vpop.f32.mrf.mxu0
  %v11551 = vadd.f32 %v11266, %v11550
  %v11552 = vpop.f32.mrf.mxu0
  %v11553 = vadd.f32 %v11268, %v11552
  %11554 = vmatmul.bf16.gmra.mxu0 %v9754
  %v11555 = vpop.f32.mrf.mxu0
  %v11556 = vadd.f32 %v11271, %v11555
  %v11557 = vpop.f32.mrf.mxu0
  %v11558 = vadd.f32 %v11273, %v11557
  %11559 = vmatmul.bf16.gmra.mxu0 %v9756
  %v11560 = vpop.f32.mrf.mxu0
  %v11561 = vadd.f32 %v11276, %v11560
  %v11562 = vpop.f32.mrf.mxu0
  %v11563 = vadd.f32 %v11278, %v11562
  %11564 = vmatmul.bf16.gmra.mxu0 %v9758
  %v11565 = vpop.f32.mrf.mxu0
  %v11566 = vadd.f32 %v11281, %v11565
  %v11567 = vpop.f32.mrf.mxu0
  %v11568 = vadd.f32 %v11283, %v11567
  %11569 = vmatmul.bf16.gmra.mxu0 %v9760
  %v11570 = vpop.f32.mrf.mxu0
  %v11571 = vadd.f32 %v11286, %v11570
  %v11572 = vpop.f32.mrf.mxu0
  %v11573 = vadd.f32 %v11288, %v11572
  %11574 = vmatmul.bf16.gmra.mxu0 %v9762
  %v11575 = vpop.f32.mrf.mxu0
  %v11576 = vadd.f32 %v11291, %v11575
  %v11577 = vpop.f32.mrf.mxu0
  %v11578 = vadd.f32 %v11293, %v11577
  %11579 = vmatmul.bf16.gmra.mxu0 %v9764
  %v11580 = vpop.f32.mrf.mxu0
  %v11581 = vadd.f32 %v11296, %v11580
  %v11582 = vpop.f32.mrf.mxu0
  %v11583 = vadd.f32 %v11298, %v11582
  %11584 = vmatmul.bf16.gmra.mxu0 %v9766
  %v11585 = vpop.f32.mrf.mxu0
  %v11586 = vadd.f32 %v11301, %v11585
  %v11587 = vpop.f32.mrf.mxu0
  %v11588 = vadd.f32 %v11303, %v11587
  %11589 = vmatmul.bf16.gmra.mxu0 %v9768
  %v11590 = vpop.f32.mrf.mxu0
  %v11591 = vadd.f32 %v11306, %v11590
  %v11592 = vpop.f32.mrf.mxu0
  %v11593 = vadd.f32 %v11308, %v11592
  %11594 = vmatmul.bf16.gmra.mxu0 %v9770
  %v11595 = vpop.f32.mrf.mxu0
  %v11596 = vadd.f32 %v11311, %v11595
  %v11597 = vpop.f32.mrf.mxu0
  %v11598 = vadd.f32 %v11313, %v11597
  %11599 = vmatmul.bf16.gmra.mxu0 %v9772
  %v11600 = vpop.f32.mrf.mxu0
  %v11601 = vadd.f32 %v11316, %v11600
  %v11602 = vpop.f32.mrf.mxu0
  %v11603 = vadd.f32 %v11318, %v11602
  %11604 = vmatmul.bf16.gmra.mxu0 %v9774
  %v11605 = vpop.f32.mrf.mxu0
  %v11606 = vadd.f32 %v11321, %v11605
  %v11607 = vpop.f32.mrf.mxu0
  %v11608 = vadd.f32 %v11323, %v11607
  %11609 = vmatmul.bf16.gmra.mxu0 %v9776
  %v11610 = vpop.f32.mrf.mxu0
  %v11611 = vadd.f32 %v11326, %v11610
  %v11612 = vpop.f32.mrf.mxu0
  %v11613 = vadd.f32 %v11328, %v11612
  %11614 = vmatmul.bf16.gmra.mxu0 %v9778
  %v11615 = vpop.f32.mrf.mxu0
  %v11616 = vadd.f32 %v11331, %v11615
  %v11617 = vpop.f32.mrf.mxu0
  %v11618 = vadd.f32 %v11333, %v11617
  %11619 = vmatmul.bf16.gmra.mxu0 %v9780
  %v11620 = vpop.f32.mrf.mxu0
  %v11621 = vadd.f32 %v11336, %v11620
  %v11622 = vpop.f32.mrf.mxu0
  %v11623 = vadd.f32 %v11338, %v11622
  %11624 = vmatmul.bf16.gmra.mxu0 %v9782
  %v11625 = vpop.f32.mrf.mxu0
  %v11626 = vadd.f32 %v11341, %v11625
  %v11627 = vpop.f32.mrf.mxu0
  %v11628 = vadd.f32 %v11343, %v11627
  %11629 = vmatmul.bf16.gmra.mxu0 %v9784
  %v11630 = vpop.f32.mrf.mxu0
  %v11631 = vadd.f32 %v11346, %v11630
  %v11632 = vpop.f32.mrf.mxu0
  %v11633 = vadd.f32 %v11348, %v11632
  %11634 = vmatmul.bf16.gmra.mxu0 %v9786
  %v11635 = vpop.f32.mrf.mxu0
  %v11636 = vadd.f32 %v11351, %v11635
  %v11637 = vpop.f32.mrf.mxu0
  %v11638 = vadd.f32 %v11353, %v11637
  %11639 = vmatmul.bf16.gmra.mxu0 %v9788
  %v11640 = vpop.f32.mrf.mxu0
  %v11641 = vadd.f32 %v11356, %v11640
  %v11642 = vpop.f32.mrf.mxu0
  %v11643 = vadd.f32 %v11358, %v11642
  %11644 = vmatmul.bf16.gmra.mxu0 %v9790
  %v11645 = vpop.f32.mrf.mxu0
  %v11646 = vadd.f32 %v11361, %v11645
  %v11647 = vpop.f32.mrf.mxu0
  %v11648 = vadd.f32 %v11363, %v11647
  %11649 = vmatmul.bf16.gmra.mxu0 %v9792
  %v11650 = vpop.f32.mrf.mxu0
  %v11651 = vadd.f32 %v11366, %v11650
  %v11652 = vpop.f32.mrf.mxu0
  %v11653 = vadd.f32 %v11368, %v11652
  %11654 = vmatmul.bf16.gmra.mxu0 %v9794
  %v11655 = vpop.f32.mrf.mxu0
  %v11656 = vadd.f32 %v11371, %v11655
  %v11657 = vpop.f32.mrf.mxu0
  %v11658 = vadd.f32 %v11373, %v11657
  %11659 = vmatmul.bf16.gmra.mxu0 %v9796
  %v11660 = vpop.f32.mrf.mxu0
  %v11661 = vadd.f32 %v11376, %v11660
  %v11662 = vpop.f32.mrf.mxu0
  %v11663 = vadd.f32 %v11378, %v11662
  %11664 = vmatmul.bf16.gmra.mxu0 %v9798
  %v11665 = vpop.f32.mrf.mxu0
  %v11666 = vadd.f32 %v11381, %v11665
  %v11667 = vpop.f32.mrf.mxu0
  %v11668 = vadd.f32 %v11383, %v11667
  %11669 = vmatmul.bf16.gmra.mxu0 %v9800
  %v11670 = vpop.f32.mrf.mxu0
  %v11671 = vadd.f32 %v11386, %v11670
  %v11672 = vpop.f32.mrf.mxu0
  %v11673 = vadd.f32 %v11388, %v11672
  %11674 = vmatmul.bf16.gmra.mxu0 %v9802
  %v11675 = vpop.f32.mrf.mxu0
  %v11676 = vadd.f32 %v11391, %v11675
  %v11677 = vpop.f32.mrf.mxu0
  %v11678 = vadd.f32 %v11393, %v11677
  %11679 = vmatmul.bf16.gmra.mxu0 %v9804
  %v11680 = vpop.f32.mrf.mxu0
  %v11681 = vadd.f32 %v11396, %v11680
  %v11682 = vpop.f32.mrf.mxu0
  %v11683 = vadd.f32 %v11398, %v11682
  %11684 = vmatmul.bf16.gmra.mxu0 %v9806
  %v11685 = vpop.f32.mrf.mxu0
  %v11686 = vadd.f32 %v11401, %v11685
  %v11687 = vpop.f32.mrf.mxu0
  %v11688 = vadd.f32 %v11403, %v11687
  %11689 = vmatmul.bf16.gmra.mxu0 %v9808
  %v11690 = vpop.f32.mrf.mxu0
  %v11691 = vadd.f32 %v11406, %v11690
  %v11692 = vpop.f32.mrf.mxu0
  %v11693 = vadd.f32 %v11408, %v11692
  %11694 = vmatmul.bf16.gmra.mxu0 %v9810
  %v11695 = vpop.f32.mrf.mxu0
  %v11696 = vadd.f32 %v11411, %v11695
  %v11697 = vpop.f32.mrf.mxu0
  %v11698 = vadd.f32 %v11413, %v11697
  %11699 = vmatmul.bf16.gmra.mxu0 %v9812
  %v11700 = vpop.f32.mrf.mxu0
  %v11701 = vadd.f32 %v11416, %v11700
  %v11702 = vpop.f32.mrf.mxu0
  %v11703 = vadd.f32 %v11418, %v11702
  %11704 = vmatmul.bf16.gmra.mxu0 %v9814
  %v11705 = vpop.f32.mrf.mxu0
  %v11706 = vadd.f32 %v11421, %v11705
  %v11707 = vpop.f32.mrf.mxu0
  %v11708 = vadd.f32 %v11423, %v11707
  %11709 = vmatmul.bf16.gmra.mxu0 %v9816
  %v11710 = vpop.f32.mrf.mxu0
  %v11711 = vadd.f32 %v11426, %v11710
  %v11712 = vpop.f32.mrf.mxu0
  %v11713 = vadd.f32 %v11428, %v11712
  %11714 = vmatmul.bf16.gmra.mxu0 %v9818
  %v11715 = vpop.f32.mrf.mxu0
  %v11716 = vadd.f32 %v11431, %v11715
  %v11717 = vpop.f32.mrf.mxu0
  %v11718 = vadd.f32 %v11433, %v11717
  %11719 = vmatmul.bf16.gmra.mxu0 %v9820
  %v11720 = vpop.f32.mrf.mxu0
  %v11721 = vadd.f32 %v11436, %v11720
  %v11722 = vpop.f32.mrf.mxu0
  %v11723 = vadd.f32 %v11438, %v11722
  %11724 = vmatmul.bf16.gmra.mxu0 %v9822
  %v11725 = vpop.f32.mrf.mxu0
  %v11726 = vadd.f32 %v11441, %v11725
  %v11727 = vpop.f32.mrf.mxu0
  %v11728 = vadd.f32 %v11443, %v11727
  %11729 = vmatmul.bf16.gmra.mxu0 %v9824
  %v11730 = vpop.f32.mrf.mxu0
  %v11731 = vadd.f32 %v11446, %v11730
  %v11732 = vpop.f32.mrf.mxu0
  %v11733 = vadd.f32 %v11448, %v11732
  %11734 = vmatmul.bf16.gmra.mxu0 %v9826
  %v11735 = vpop.f32.mrf.mxu0
  %v11736 = vadd.f32 %v11451, %v11735
  %v11737 = vpop.f32.mrf.mxu0
  %v11738 = vadd.f32 %v11453, %v11737
  %11739 = vmatmul.bf16.gmra.mxu0 %v9828
  %v11740 = vpop.f32.mrf.mxu0
  %v11741 = vadd.f32 %v11456, %v11740
  %v11742 = vpop.f32.mrf.mxu0
  %v11743 = vadd.f32 %v11458, %v11742
  %11744 = vmatmul.bf16.gmra.mxu0 %v9830
  %v11745 = vpop.f32.mrf.mxu0
  %v11746 = vadd.f32 %v11461, %v11745
  %v11747 = vpop.f32.mrf.mxu0
  %v11748 = vadd.f32 %v11463, %v11747
  %11749 = vmatmul.bf16.gmra.mxu0 %v9832
  %v11750 = vpop.f32.mrf.mxu0
  %v11751 = vadd.f32 %v11466, %v11750
  %v11752 = vpop.f32.mrf.mxu0
  %v11753 = vadd.f32 %v11468, %v11752
  %11754 = vmatmul.bf16.gmra.mxu0 %v9834
  %v11755 = vpop.f32.mrf.mxu0
  %v11756 = vpop.f32.mrf.mxu0
  %11757 = vmatmul.bf16.gmra.mxu0 %v9836
  %v11758 = vpop.f32.mrf.mxu0
  %v11759 = vpop.f32.mrf.mxu0
  %11760 = vmatmul.bf16.gmra.mxu0 %v9838
  %v11761 = vpop.f32.mrf.mxu0
  %v11762 = vpop.f32.mrf.mxu0
  %11763 = vmatmul.bf16.gmra.mxu0 %v9840
  %v11764 = vpop.f32.mrf.mxu0
  %v11765 = vpop.f32.mrf.mxu0
  %11766 = vmatmul.bf16.gmra.mxu0 %v9842
  %v11767 = vpop.f32.mrf.mxu0
  %v11768 = vpop.f32.mrf.mxu0
  %11769 = vmatmul.bf16.gmra.mxu0 %v9844
  %v11770 = vpop.f32.mrf.mxu0
  %v11771 = vpop.f32.mrf.mxu0
  %11772 = vmatmul.bf16.gmra.mxu0 %v9846
  %v11773 = vpop.f32.mrf.mxu0
  %v11774 = vpop.f32.mrf.mxu0
  %11775 = vmatmul.bf16.gmra.mxu0 %v9848
  %v11776 = vpop.f32.mrf.mxu0
  %v11777 = vpop.f32.mrf.mxu0
  %11778 = vmatmul.bf16.gmra.mxu0 %v9850
  %v11779 = vpop.f32.mrf.mxu0
  %v11780 = vpop.f32.mrf.mxu0
  %11781 = vmatmul.bf16.gmra.mxu0 %v9852
  %v11782 = vpop.f32.mrf.mxu0
  %v11783 = vpop.f32.mrf.mxu0
  %11784 = vmatmul.bf16.gmra.mxu0 %v9854
  %v11785 = vpop.f32.mrf.mxu0
  %v11786 = vpop.f32.mrf.mxu0
  %11787 = vmatmul.bf16.gmra.mxu0 %v9856
  %v11788 = vpop.f32.mrf.mxu0
  %v11789 = vpop.f32.mrf.mxu0
  %11790 = vdwg.mxu0
  %11791 = vmatpush.bf16.msra.mxu0 %v10317
  %11792 = vmatpush.bf16.msra.mxu0 %v10316
  %11793 = vmatpush.bf16.msra.mxu0 %v10315
  %11794 = vmatpush.bf16.msra.mxu0 %v10314
  %11795 = vmatpush.bf16.msra.mxu0 %v10313
  %11796 = vmatpush.bf16.msra.mxu0 %v10312
  %11797 = vmatpush.bf16.msra.mxu0 %v10311
  %11798 = vmatpush.bf16.msra.mxu0 %v10310
  %11799 = vmatmul.bf16.gmra.mxu0 %v9739
  %v11800 = vpop.f32.mrf.mxu0
  %v11801 = vadd.f32 %v11516, %v11800
  %v11802 = vpop.f32.mrf.mxu0
  %v11803 = vadd.f32 %v11518, %v11802
  %11804 = vmatmul.bf16.gmra.mxu0 %v9741
  %v11805 = vpop.f32.mrf.mxu0
  %v11806 = vadd.f32 %v11521, %v11805
  %v11807 = vpop.f32.mrf.mxu0
  %v11808 = vadd.f32 %v11523, %v11807
  %11809 = vmatmul.bf16.gmra.mxu0 %v9743
  %v11810 = vpop.f32.mrf.mxu0
  %v11811 = vadd.f32 %v11526, %v11810
  %v11812 = vpop.f32.mrf.mxu0
  %v11813 = vadd.f32 %v11528, %v11812
  %11814 = vmatmul.bf16.gmra.mxu0 %v9745
  %v11815 = vpop.f32.mrf.mxu0
  %v11816 = vadd.f32 %v11531, %v11815
  %v11817 = vpop.f32.mrf.mxu0
  %v11818 = vadd.f32 %v11533, %v11817
  %11819 = vmatmul.bf16.gmra.mxu0 %v9747
  %v11820 = vpop.f32.mrf.mxu0
  %v11821 = vadd.f32 %v11536, %v11820
  %v11822 = vpop.f32.mrf.mxu0
  %v11823 = vadd.f32 %v11538, %v11822
  %11824 = vmatmul.bf16.gmra.mxu0 %v9749
  %v11825 = vpop.f32.mrf.mxu0
  %v11826 = vadd.f32 %v11541, %v11825
  %v11827 = vpop.f32.mrf.mxu0
  %v11828 = vadd.f32 %v11543, %v11827
  %11829 = vmatmul.bf16.gmra.mxu0 %v9751
  %v11830 = vpop.f32.mrf.mxu0
  %v11831 = vadd.f32 %v11546, %v11830
  %v11832 = vpop.f32.mrf.mxu0
  %v11833 = vadd.f32 %v11548, %v11832
  %11834 = vmatmul.bf16.gmra.mxu0 %v9753
  %v11835 = vpop.f32.mrf.mxu0
  %v11836 = vadd.f32 %v11551, %v11835
  %v11837 = vpop.f32.mrf.mxu0
  %v11838 = vadd.f32 %v11553, %v11837
  %11839 = vmatmul.bf16.gmra.mxu0 %v9755
  %v11840 = vpop.f32.mrf.mxu0
  %v11841 = vadd.f32 %v11556, %v11840
  %v11842 = vpop.f32.mrf.mxu0
  %v11843 = vadd.f32 %v11558, %v11842
  %11844 = vmatmul.bf16.gmra.mxu0 %v9757
  %v11845 = vpop.f32.mrf.mxu0
  %v11846 = vadd.f32 %v11561, %v11845
  %v11847 = vpop.f32.mrf.mxu0
  %v11848 = vadd.f32 %v11563, %v11847
  %11849 = vmatmul.bf16.gmra.mxu0 %v9759
  %v11850 = vpop.f32.mrf.mxu0
  %v11851 = vadd.f32 %v11566, %v11850
  %v11852 = vpop.f32.mrf.mxu0
  %v11853 = vadd.f32 %v11568, %v11852
  %11854 = vmatmul.bf16.gmra.mxu0 %v9761
  %v11855 = vpop.f32.mrf.mxu0
  %v11856 = vadd.f32 %v11571, %v11855
  %v11857 = vpop.f32.mrf.mxu0
  %v11858 = vadd.f32 %v11573, %v11857
  %11859 = vmatmul.bf16.gmra.mxu0 %v9763
  %v11860 = vpop.f32.mrf.mxu0
  %v11861 = vadd.f32 %v11576, %v11860
  %v11862 = vpop.f32.mrf.mxu0
  %v11863 = vadd.f32 %v11578, %v11862
  %11864 = vmatmul.bf16.gmra.mxu0 %v9765
  %v11865 = vpop.f32.mrf.mxu0
  %v11866 = vadd.f32 %v11581, %v11865
  %v11867 = vpop.f32.mrf.mxu0
  %v11868 = vadd.f32 %v11583, %v11867
  %11869 = vmatmul.bf16.gmra.mxu0 %v9767
  %v11870 = vpop.f32.mrf.mxu0
  %v11871 = vadd.f32 %v11586, %v11870
  %v11872 = vpop.f32.mrf.mxu0
  %v11873 = vadd.f32 %v11588, %v11872
  %11874 = vmatmul.bf16.gmra.mxu0 %v9769
  %v11875 = vpop.f32.mrf.mxu0
  %v11876 = vadd.f32 %v11591, %v11875
  %v11877 = vpop.f32.mrf.mxu0
  %v11878 = vadd.f32 %v11593, %v11877
  %11879 = vmatmul.bf16.gmra.mxu0 %v9771
  %v11880 = vpop.f32.mrf.mxu0
  %v11881 = vadd.f32 %v11596, %v11880
  %v11882 = vpop.f32.mrf.mxu0
  %v11883 = vadd.f32 %v11598, %v11882
  %11884 = vmatmul.bf16.gmra.mxu0 %v9773
  %v11885 = vpop.f32.mrf.mxu0
  %v11886 = vadd.f32 %v11601, %v11885
  %v11887 = vpop.f32.mrf.mxu0
  %v11888 = vadd.f32 %v11603, %v11887
  %11889 = vmatmul.bf16.gmra.mxu0 %v9775
  %v11890 = vpop.f32.mrf.mxu0
  %v11891 = vadd.f32 %v11606, %v11890
  %v11892 = vpop.f32.mrf.mxu0
  %v11893 = vadd.f32 %v11608, %v11892
  %11894 = vmatmul.bf16.gmra.mxu0 %v9777
  %v11895 = vpop.f32.mrf.mxu0
  %v11896 = vadd.f32 %v11611, %v11895
  %v11897 = vpop.f32.mrf.mxu0
  %v11898 = vadd.f32 %v11613, %v11897
  %11899 = vmatmul.bf16.gmra.mxu0 %v9779
  %v11900 = vpop.f32.mrf.mxu0
  %v11901 = vadd.f32 %v11616, %v11900
  %v11902 = vpop.f32.mrf.mxu0
  %v11903 = vadd.f32 %v11618, %v11902
  %11904 = vmatmul.bf16.gmra.mxu0 %v9781
  %v11905 = vpop.f32.mrf.mxu0
  %v11906 = vadd.f32 %v11621, %v11905
  %v11907 = vpop.f32.mrf.mxu0
  %v11908 = vadd.f32 %v11623, %v11907
  %11909 = vmatmul.bf16.gmra.mxu0 %v9783
  %v11910 = vpop.f32.mrf.mxu0
  %v11911 = vadd.f32 %v11626, %v11910
  %v11912 = vpop.f32.mrf.mxu0
  %v11913 = vadd.f32 %v11628, %v11912
  %11914 = vmatmul.bf16.gmra.mxu0 %v9785
  %v11915 = vpop.f32.mrf.mxu0
  %v11916 = vadd.f32 %v11631, %v11915
  %v11917 = vpop.f32.mrf.mxu0
  %v11918 = vadd.f32 %v11633, %v11917
  %11919 = vmatmul.bf16.gmra.mxu0 %v9787
  %v11920 = vpop.f32.mrf.mxu0
  %v11921 = vadd.f32 %v11636, %v11920
  %v11922 = vpop.f32.mrf.mxu0
  %v11923 = vadd.f32 %v11638, %v11922
  %11924 = vmatmul.bf16.gmra.mxu0 %v9789
  %v11925 = vpop.f32.mrf.mxu0
  %v11926 = vadd.f32 %v11641, %v11925
  %v11927 = vpop.f32.mrf.mxu0
  %v11928 = vadd.f32 %v11643, %v11927
  %11929 = vmatmul.bf16.gmra.mxu0 %v9791
  %v11930 = vpop.f32.mrf.mxu0
  %v11931 = vadd.f32 %v11646, %v11930
  %v11932 = vpop.f32.mrf.mxu0
  %v11933 = vadd.f32 %v11648, %v11932
  %11934 = vmatmul.bf16.gmra.mxu0 %v9793
  %v11935 = vpop.f32.mrf.mxu0
  %v11936 = vadd.f32 %v11651, %v11935
  %v11937 = vpop.f32.mrf.mxu0
  %v11938 = vadd.f32 %v11653, %v11937
  %11939 = vmatmul.bf16.gmra.mxu0 %v9795
  %v11940 = vpop.f32.mrf.mxu0
  %v11941 = vadd.f32 %v11656, %v11940
  %v11942 = vpop.f32.mrf.mxu0
  %v11943 = vadd.f32 %v11658, %v11942
  %11944 = vmatmul.bf16.gmra.mxu0 %v9797
  %v11945 = vpop.f32.mrf.mxu0
  %v11946 = vadd.f32 %v11661, %v11945
  %v11947 = vpop.f32.mrf.mxu0
  %v11948 = vadd.f32 %v11663, %v11947
  %11949 = vmatmul.bf16.gmra.mxu0 %v9799
  %v11950 = vpop.f32.mrf.mxu0
  %v11951 = vadd.f32 %v11666, %v11950
  %v11952 = vpop.f32.mrf.mxu0
  %v11953 = vadd.f32 %v11668, %v11952
  %11954 = vmatmul.bf16.gmra.mxu0 %v9801
  %v11955 = vpop.f32.mrf.mxu0
  %v11956 = vadd.f32 %v11671, %v11955
  %v11957 = vpop.f32.mrf.mxu0
  %v11958 = vadd.f32 %v11673, %v11957
  %11959 = vmatmul.bf16.gmra.mxu0 %v9803
  %v11960 = vpop.f32.mrf.mxu0
  %v11961 = vadd.f32 %v11676, %v11960
  %v11962 = vpop.f32.mrf.mxu0
  %v11963 = vadd.f32 %v11678, %v11962
  %11964 = vmatmul.bf16.gmra.mxu0 %v9805
  %v11965 = vpop.f32.mrf.mxu0
  %v11966 = vadd.f32 %v11681, %v11965
  %v11967 = vpop.f32.mrf.mxu0
  %v11968 = vadd.f32 %v11683, %v11967
  %11969 = vmatmul.bf16.gmra.mxu0 %v9807
  %v11970 = vpop.f32.mrf.mxu0
  %v11971 = vadd.f32 %v11686, %v11970
  %v11972 = vpop.f32.mrf.mxu0
  %v11973 = vadd.f32 %v11688, %v11972
  %11974 = vmatmul.bf16.gmra.mxu0 %v9809
  %v11975 = vpop.f32.mrf.mxu0
  %v11976 = vadd.f32 %v11691, %v11975
  %v11977 = vpop.f32.mrf.mxu0
  %v11978 = vadd.f32 %v11693, %v11977
  %11979 = vmatmul.bf16.gmra.mxu0 %v9811
  %v11980 = vpop.f32.mrf.mxu0
  %v11981 = vadd.f32 %v11696, %v11980
  %v11982 = vpop.f32.mrf.mxu0
  %v11983 = vadd.f32 %v11698, %v11982
  %11984 = vmatmul.bf16.gmra.mxu0 %v9813
  %v11985 = vpop.f32.mrf.mxu0
  %v11986 = vadd.f32 %v11701, %v11985
  %v11987 = vpop.f32.mrf.mxu0
  %v11988 = vadd.f32 %v11703, %v11987
  %11989 = vmatmul.bf16.gmra.mxu0 %v9815
  %v11990 = vpop.f32.mrf.mxu0
  %v11991 = vadd.f32 %v11706, %v11990
  %v11992 = vpop.f32.mrf.mxu0
  %v11993 = vadd.f32 %v11708, %v11992
  %11994 = vmatmul.bf16.gmra.mxu0 %v9817
  %v11995 = vpop.f32.mrf.mxu0
  %v11996 = vadd.f32 %v11711, %v11995
  %v11997 = vpop.f32.mrf.mxu0
  %v11998 = vadd.f32 %v11713, %v11997
  %11999 = vmatmul.bf16.gmra.mxu0 %v9819
  %v12000 = vpop.f32.mrf.mxu0
  %v12001 = vadd.f32 %v11716, %v12000
  %v12002 = vpop.f32.mrf.mxu0
  %v12003 = vadd.f32 %v11718, %v12002
  %12004 = vmatmul.bf16.gmra.mxu0 %v9821
  %v12005 = vpop.f32.mrf.mxu0
  %v12006 = vadd.f32 %v11721, %v12005
  %v12007 = vpop.f32.mrf.mxu0
  %v12008 = vadd.f32 %v11723, %v12007
  %12009 = vmatmul.bf16.gmra.mxu0 %v9823
  %v12010 = vpop.f32.mrf.mxu0
  %v12011 = vadd.f32 %v11726, %v12010
  %v12012 = vpop.f32.mrf.mxu0
  %v12013 = vadd.f32 %v11728, %v12012
  %12014 = vmatmul.bf16.gmra.mxu0 %v9825
  %v12015 = vpop.f32.mrf.mxu0
  %v12016 = vadd.f32 %v11731, %v12015
  %v12017 = vpop.f32.mrf.mxu0
  %v12018 = vadd.f32 %v11733, %v12017
  %12019 = vmatmul.bf16.gmra.mxu0 %v9827
  %v12020 = vpop.f32.mrf.mxu0
  %v12021 = vadd.f32 %v11736, %v12020
  %v12022 = vpop.f32.mrf.mxu0
  %v12023 = vadd.f32 %v11738, %v12022
  %12024 = vmatmul.bf16.gmra.mxu0 %v9829
  %v12025 = vpop.f32.mrf.mxu0
  %v12026 = vadd.f32 %v11741, %v12025
  %v12027 = vpop.f32.mrf.mxu0
  %v12028 = vadd.f32 %v11743, %v12027
  %12029 = vmatmul.bf16.gmra.mxu0 %v9831
  %v12030 = vpop.f32.mrf.mxu0
  %v12031 = vadd.f32 %v11746, %v12030
  %v12032 = vpop.f32.mrf.mxu0
  %v12033 = vadd.f32 %v11748, %v12032
  %12034 = vmatmul.bf16.gmra.mxu0 %v9833
  %v12035 = vpop.f32.mrf.mxu0
  %v12036 = vadd.f32 %v11751, %v12035
  %v12037 = vpop.f32.mrf.mxu0
  %v12038 = vadd.f32 %v11753, %v12037
  %12039 = vmatmul.bf16.gmra.mxu0 %v9835
  %v12040 = vpop.f32.mrf.mxu0
  %v12041 = vpop.f32.mrf.mxu0
  %12042 = vmatmul.bf16.gmra.mxu0 %v9837
  %v12043 = vpop.f32.mrf.mxu0
  %v12044 = vpop.f32.mrf.mxu0
  %12045 = vmatmul.bf16.gmra.mxu0 %v9839
  %v12046 = vpop.f32.mrf.mxu0
  %v12047 = vpop.f32.mrf.mxu0
  %12048 = vmatmul.bf16.gmra.mxu0 %v9841
  %v12049 = vpop.f32.mrf.mxu0
  %v12050 = vpop.f32.mrf.mxu0
  %12051 = vmatmul.bf16.gmra.mxu0 %v9843
  %v12052 = vpop.f32.mrf.mxu0
  %v12053 = vpop.f32.mrf.mxu0
  %12054 = vmatmul.bf16.gmra.mxu0 %v9845
  %v12055 = vpop.f32.mrf.mxu0
  %v12056 = vpop.f32.mrf.mxu0
  %12057 = vmatmul.bf16.gmra.mxu0 %v9847
  %v12058 = vpop.f32.mrf.mxu0
  %v12059 = vpop.f32.mrf.mxu0
  %12060 = vmatmul.bf16.gmra.mxu0 %v9849
  %v12061 = vpop.f32.mrf.mxu0
  %v12062 = vpop.f32.mrf.mxu0
  %12063 = vmatmul.bf16.gmra.mxu0 %v9851
  %v12064 = vpop.f32.mrf.mxu0
  %v12065 = vpop.f32.mrf.mxu0
  %12066 = vmatmul.bf16.gmra.mxu0 %v9853
  %v12067 = vpop.f32.mrf.mxu0
  %v12068 = vpop.f32.mrf.mxu0
  %12069 = vmatmul.bf16.gmra.mxu0 %v9855
  %v12070 = vpop.f32.mrf.mxu0
  %v12071 = vpop.f32.mrf.mxu0
  %12072 = vmatmul.bf16.gmra.mxu0 %v9857
  %v12073 = vpop.f32.mrf.mxu0
  %v12074 = vpop.f32.mrf.mxu0
  %12075 = vdwg.mxu0
  %v12076 = vmax.f32 %v11801, 0.0
  %v12077 = vmax.f32 %v11803, 0.0
  %v12078 = vmax.f32 %v11806, 0.0
  %v12079 = vmax.f32 %v11808, 0.0
  %v12080 = vmax.f32 %v11811, 0.0
  %v12081 = vmax.f32 %v11813, 0.0
  %v12082 = vmax.f32 %v11816, 0.0
  %v12083 = vmax.f32 %v11818, 0.0
  %v12084 = vmax.f32 %v11821, 0.0
  %v12085 = vmax.f32 %v11823, 0.0
  %v12086 = vmax.f32 %v11826, 0.0
  %v12087 = vmax.f32 %v11828, 0.0
  %v12088 = vmax.f32 %v11831, 0.0
  %v12089 = vmax.f32 %v11833, 0.0
  %v12090 = vmax.f32 %v11836, 0.0
  %v12091 = vmax.f32 %v11838, 0.0
  %v12092 = vmax.f32 %v11841, 0.0
  %v12093 = vmax.f32 %v11843, 0.0
  %v12094 = vmax.f32 %v11846, 0.0
  %v12095 = vmax.f32 %v11848, 0.0
  %v12096 = vmax.f32 %v11851, 0.0
  %v12097 = vmax.f32 %v11853, 0.0
  %v12098 = vmax.f32 %v11856, 0.0
  %v12099 = vmax.f32 %v11858, 0.0
  %v12100 = vmax.f32 %v11861, 0.0
  %v12101 = vmax.f32 %v11863, 0.0
  %v12102 = vmax.f32 %v11866, 0.0
  %v12103 = vmax.f32 %v11868, 0.0
  %v12104 = vmax.f32 %v11871, 0.0
  %v12105 = vmax.f32 %v11873, 0.0
  %v12106 = vmax.f32 %v11876, 0.0
  %v12107 = vmax.f32 %v11878, 0.0
  %v12108 = vmax.f32 %v11881, 0.0
  %v12109 = vmax.f32 %v11883, 0.0
  %v12110 = vmax.f32 %v11886, 0.0
  %v12111 = vmax.f32 %v11888, 0.0
  %v12112 = vmax.f32 %v11891, 0.0
  %v12113 = vmax.f32 %v11893, 0.0
  %v12114 = vmax.f32 %v11896, 0.0
  %v12115 = vmax.f32 %v11898, 0.0
  %v12116 = vmax.f32 %v11901, 0.0
  %v12117 = vmax.f32 %v11903, 0.0
  %v12118 = vmax.f32 %v11906, 0.0
  %v12119 = vmax.f32 %v11908, 0.0
  %v12120 = vmax.f32 %v11911, 0.0
  %v12121 = vmax.f32 %v11913, 0.0
  %v12122 = vmax.f32 %v11916, 0.0
  %v12123 = vmax.f32 %v11918, 0.0
  %v12124 = vmax.f32 %v11921, 0.0
  %v12125 = vmax.f32 %v11923, 0.0
  %v12126 = vmax.f32 %v11926, 0.0
  %v12127 = vmax.f32 %v11928, 0.0
  %v12128 = vmax.f32 %v11931, 0.0
  %v12129 = vmax.f32 %v11933, 0.0
  %v12130 = vmax.f32 %v11936, 0.0
  %v12131 = vmax.f32 %v11938, 0.0
  %v12132 = vmax.f32 %v11941, 0.0
  %v12133 = vmax.f32 %v11943, 0.0
  %v12134 = vmax.f32 %v11946, 0.0
  %v12135 = vmax.f32 %v11948, 0.0
  %v12136 = vmax.f32 %v11951, 0.0
  %v12137 = vmax.f32 %v11953, 0.0
  %v12138 = vmax.f32 %v11956, 0.0
  %v12139 = vmax.f32 %v11958, 0.0
  %v12140 = vmax.f32 %v11961, 0.0
  %v12141 = vmax.f32 %v11963, 0.0
  %v12142 = vmax.f32 %v11966, 0.0
  %v12143 = vmax.f32 %v11968, 0.0
  %v12144 = vmax.f32 %v11971, 0.0
  %v12145 = vmax.f32 %v11973, 0.0
  %v12146 = vmax.f32 %v11976, 0.0
  %v12147 = vmax.f32 %v11978, 0.0
  %v12148 = vmax.f32 %v11981, 0.0
  %v12149 = vmax.f32 %v11983, 0.0
  %v12150 = vmax.f32 %v11986, 0.0
  %v12151 = vmax.f32 %v11988, 0.0
  %v12152 = vmax.f32 %v11991, 0.0
  %v12153 = vmax.f32 %v11993, 0.0
  %v12154 = vmax.f32 %v11996, 0.0
  %v12155 = vmax.f32 %v11998, 0.0
  %v12156 = vmax.f32 %v12001, 0.0
  %v12157 = vmax.f32 %v12003, 0.0
  %v12158 = vmax.f32 %v12006, 0.0
  %v12159 = vmax.f32 %v12008, 0.0
  %v12160 = vmax.f32 %v12011, 0.0
  %v12161 = vmax.f32 %v12013, 0.0
  %v12162 = vmax.f32 %v12016, 0.0
  %v12163 = vmax.f32 %v12018, 0.0
  %v12164 = vmax.f32 %v12021, 0.0
  %v12165 = vmax.f32 %v12023, 0.0
  %v12166 = vmax.f32 %v12026, 0.0
  %v12167 = vmax.f32 %v12028, 0.0
  %v12168 = vmax.f32 %v12031, 0.0
  %v12169 = vmax.f32 %v12033, 0.0
  %v12170 = vmax.f32 %v12036, 0.0
  %v12171 = vmax.f32 %v12038, 0.0
  %v12172 = vadd.f32 %v12076, %v12084
  %v12173 = vadd.f32 %v12172, %v12092
  %v12174 = vadd.f32 %v12173, %v12100
  %v12175 = vadd.f32 %v12174, %v12108
  %v12176 = vadd.f32 %v12175, %v12116
  %v12177 = vadd.f32 %v12176, %v12124
  %v12178 = vadd.f32 %v12177, %v12132
  %v12179 = vadd.f32 %v12178, %v12140
  %v12180 = vadd.f32 %v12179, %v12148
  %v12181 = vadd.f32 %v12180, %v12156
  %v12182 = vadd.f32 %v12181, %v12164
  %v12183 = vadd.f32 %v12077, %v12085
  %v12184 = vadd.f32 %v12183, %v12093
  %v12185 = vadd.f32 %v12184, %v12101
  %v12186 = vadd.f32 %v12185, %v12109
  %v12187 = vadd.f32 %v12186, %v12117
  %v12188 = vadd.f32 %v12187, %v12125
  %v12189 = vadd.f32 %v12188, %v12133
  %v12190 = vadd.f32 %v12189, %v12141
  %v12191 = vadd.f32 %v12190, %v12149
  %v12192 = vadd.f32 %v12191, %v12157
  %v12193 = vadd.f32 %v12192, %v12165
  %v12194 = vadd.f32 %v12078, %v12086
  %v12195 = vadd.f32 %v12194, %v12094
  %v12196 = vadd.f32 %v12195, %v12102
  %v12197 = vadd.f32 %v12196, %v12110
  %v12198 = vadd.f32 %v12197, %v12118
  %v12199 = vadd.f32 %v12198, %v12126
  %v12200 = vadd.f32 %v12199, %v12134
  %v12201 = vadd.f32 %v12200, %v12142
  %v12202 = vadd.f32 %v12201, %v12150
  %v12203 = vadd.f32 %v12202, %v12158
  %v12204 = vadd.f32 %v12203, %v12166
  %v12205 = vadd.f32 %v12079, %v12087
  %v12206 = vadd.f32 %v12205, %v12095
  %v12207 = vadd.f32 %v12206, %v12103
  %v12208 = vadd.f32 %v12207, %v12111
  %v12209 = vadd.f32 %v12208, %v12119
  %v12210 = vadd.f32 %v12209, %v12127
  %v12211 = vadd.f32 %v12210, %v12135
  %v12212 = vadd.f32 %v12211, %v12143
  %v12213 = vadd.f32 %v12212, %v12151
  %v12214 = vadd.f32 %v12213, %v12159
  %v12215 = vadd.f32 %v12214, %v12167
  %v12216 = vadd.f32 %v12080, %v12088
  %v12217 = vadd.f32 %v12216, %v12096
  %v12218 = vadd.f32 %v12217, %v12104
  %v12219 = vadd.f32 %v12218, %v12112
  %v12220 = vadd.f32 %v12219, %v12120
  %v12221 = vadd.f32 %v12220, %v12128
  %v12222 = vadd.f32 %v12221, %v12136
  %v12223 = vadd.f32 %v12222, %v12144
  %v12224 = vadd.f32 %v12223, %v12152
  %v12225 = vadd.f32 %v12224, %v12160
  %v12226 = vadd.f32 %v12225, %v12168
  %v12227 = vadd.f32 %v12081, %v12089
  %v12228 = vadd.f32 %v12227, %v12097
  %v12229 = vadd.f32 %v12228, %v12105
  %v12230 = vadd.f32 %v12229, %v12113
  %v12231 = vadd.f32 %v12230, %v12121
  %v12232 = vadd.f32 %v12231, %v12129
  %v12233 = vadd.f32 %v12232, %v12137
  %v12234 = vadd.f32 %v12233, %v12145
  %v12235 = vadd.f32 %v12234, %v12153
  %v12236 = vadd.f32 %v12235, %v12161
  %v12237 = vadd.f32 %v12236, %v12169
  %v12238 = vadd.f32 %v12082, %v12090
  %v12239 = vadd.f32 %v12238, %v12098
  %v12240 = vadd.f32 %v12239, %v12106
  %v12241 = vadd.f32 %v12240, %v12114
  %v12242 = vadd.f32 %v12241, %v12122
  %v12243 = vadd.f32 %v12242, %v12130
  %v12244 = vadd.f32 %v12243, %v12138
  %v12245 = vadd.f32 %v12244, %v12146
  %v12246 = vadd.f32 %v12245, %v12154
  %v12247 = vadd.f32 %v12246, %v12162
  %v12248 = vadd.f32 %v12247, %v12170
  %v12249 = vadd.f32 %v12083, %v12091
  %v12250 = vadd.f32 %v12249, %v12099
  %v12251 = vadd.f32 %v12250, %v12107
  %v12252 = vadd.f32 %v12251, %v12115
  %v12253 = vadd.f32 %v12252, %v12123
  %v12254 = vadd.f32 %v12253, %v12131
  %v12255 = vadd.f32 %v12254, %v12139
  %v12256 = vadd.f32 %v12255, %v12147
  %v12257 = vadd.f32 %v12256, %v12155
  %v12258 = vadd.f32 %v12257, %v12163
  %v12259 = vadd.f32 %v12258, %v12171
  %v12260 = vrot.slane %v12182, 4
  %v12261 = vadd.f32 %v12182, %v12260
  %v12262 = vrot.slane %v12261, 2
  %v12263 = vadd.f32 %v12261, %v12262
  %v12264 = vrot.slane %v12263, 1
  %v12265 = vadd.f32 %v12263, %v12264
  %v12266 = vrot.slane %v12193, 4
  %v12267 = vadd.f32 %v12193, %v12266
  %v12268 = vrot.slane %v12267, 2
  %v12269 = vadd.f32 %v12267, %v12268
  %v12270 = vrot.slane %v12269, 1
  %v12271 = vadd.f32 %v12269, %v12270
  %v12272 = vrot.slane %v12204, 4
  %v12273 = vadd.f32 %v12204, %v12272
  %v12274 = vrot.slane %v12273, 2
  %v12275 = vadd.f32 %v12273, %v12274
  %v12276 = vrot.slane %v12275, 1
  %v12277 = vadd.f32 %v12275, %v12276
  %v12278 = vrot.slane %v12215, 4
  %v12279 = vadd.f32 %v12215, %v12278
  %v12280 = vrot.slane %v12279, 2
  %v12281 = vadd.f32 %v12279, %v12280
  %v12282 = vrot.slane %v12281, 1
  %v12283 = vadd.f32 %v12281, %v12282
  %v12284 = vrot.slane %v12226, 4
  %v12285 = vadd.f32 %v12226, %v12284
  %v12286 = vrot.slane %v12285, 2
  %v12287 = vadd.f32 %v12285, %v12286
  %v12288 = vrot.slane %v12287, 1
  %v12289 = vadd.f32 %v12287, %v12288
  %v12290 = vrot.slane %v12237, 4
  %v12291 = vadd.f32 %v12237, %v12290
  %v12292 = vrot.slane %v12291, 2
  %v12293 = vadd.f32 %v12291, %v12292
  %v12294 = vrot.slane %v12293, 1
  %v12295 = vadd.f32 %v12293, %v12294
  %v12296 = vrot.slane %v12248, 4
  %v12297 = vadd.f32 %v12248, %v12296
  %v12298 = vrot.slane %v12297, 2
  %v12299 = vadd.f32 %v12297, %v12298
  %v12300 = vrot.slane %v12299, 1
  %v12301 = vadd.f32 %v12299, %v12300
  %v12302 = vrot.slane %v12259, 4
  %v12303 = vadd.f32 %v12259, %v12302
  %v12304 = vrot.slane %v12303, 2
  %v12305 = vadd.f32 %v12303, %v12304
  %v12306 = vrot.slane %v12305, 1
  %v12307 = vadd.f32 %v12305, %v12306
  %v12308 = vmul.f32 %v12265, 0.010416667
  %v12309 = vmul.f32 %v12271, 0.010416667
  %v12310 = vmul.f32 %v12277, 0.010416667
  %v12311 = vmul.f32 %v12283, 0.010416667
  %v12312 = vmul.f32 %v12289, 0.010416667
  %v12313 = vmul.f32 %v12295, 0.010416667
  %v12314 = vmul.f32 %v12301, 0.010416667
  %v12315 = vmul.f32 %v12307, 0.010416667
  %vm12324 = vcmask 1041409
  %v12325 = vsel %vm12324, %v12309, %v12308
  %vm12326 = vcmask 1042434
  %v12327 = vsel %vm12326, %v12310, %v12325
  %vm12328 = vcmask 1043459
  %v12329 = vsel %vm12328, %v12311, %v12327
  %vm12330 = vcmask 1044484
  %v12331 = vsel %vm12330, %v12312, %v12329
  %vm12332 = vcmask 1045509
  %v12333 = vsel %vm12332, %v12313, %v12331
  %vm12334 = vcmask 1046534
  %v12335 = vsel %vm12334, %v12314, %v12333
  %vm12336 = vcmask 1047559
  %v12337 = vsel %vm12336, %v12315, %v12335
  %12339 = vst [vmem:[%s7] sm:$0xff] %v12337
  // Predicated region
  $region30: #{fcn_forward_pallas.2} parent=0 // pred_check
    _
  $region31: #{fcn_forward_pallas.2} parent=0 // pred_check_branch
    %12341 = sbr.rel (0) target = $region33
  $region32: #{fcn_forward_pallas.2} parent=0 // pred_region
    _
  $region33: #{fcn_forward_pallas.2} parent=0 // pred_fallthru
    _
  // Predicated region
  $region34: #{fcn_forward_pallas.2} parent=0 // pred_check
    _
  $region35: #{fcn_forward_pallas.2} parent=0 // pred_check_branch
    %12343 = sbr.rel (0) target = $region37
  $region36: #{fcn_forward_pallas.2} parent=0 // pred_region
    _
  $region37: #{fcn_forward_pallas.2} parent=0 // pred_fallthru
    _

</llo_original>
